<compile_context>
chip_gen: v7x
topology: tpu7x:2x2x1
jax: 0.10.0
libtpu: 0.0.40
codegen_flags: <defaults>
</compile_context>

<pallas_src>
import math

import jax
import jax.numpy as jnp
from jax import lax
from jax.experimental import pallas as pl
from jax.experimental.pallas import tpu as pltpu


def _round_up(x, m):
    return ((x + m - 1) // m) * m


# --------------------------------------------------------------------------
# Pallas kernel: single-layer GRU (batch_first), returns final hidden state.
# PyTorch GRU cell:
#   r = sigmoid(x W_ir^T + b_ir + h W_hr^T + b_hr)
#   z = sigmoid(x W_iz^T + b_iz + h W_hz^T + b_hz)
#   n = tanh   (x W_in^T + b_in + r * (h W_hn^T + b_hn))
#   h = (1 - z) * n + z * h
# --------------------------------------------------------------------------
def gru_last_hidden_kernel(x_ref, wi_ref, wh_ref, bi_ref, bhn_ref,
                           hlast_ref, gi_ref):
    TB, G = gi_ref.shape                  # (T*Bp, 3*Hp)
    Bp = hlast_ref.shape[0]
    Hp = hlast_ref.shape[1]
    T = TB // Bp

    # ---- Hoisted input-path projection: ONE big matmul for all timesteps ----
    # x_ref: (T*Bp, Npp) bf16, wi_ref: (Npp, 3*Hp) bf16 -> f32 accumulate.
    gi_ref[...] = (jnp.dot(x_ref[...], wi_ref[...],
                           preferred_element_type=jnp.float32)
                   + bi_ref[...])

    wh = wh_ref[...]                      # (Hp, 3*Hp) bf16, loop-invariant
    bhn = bhn_ref[...]                    # (1, Hp) f32, loop-invariant

    # ---- Serial recurrence: one fused hidden-path matmul per step ----------
    # T is small and static -> fully unrolled Python loop (static, aligned
    # slices of gi; scheduler gets cross-iteration visibility).
    h = jnp.zeros((Bp, Hp), jnp.float32)
    for t in range(T):
        gi_t = gi_ref[t * Bp:(t + 1) * Bp, :]                  # (Bp, 3*Hp) f32
        gh = jnp.dot(h.astype(jnp.bfloat16), wh,
                     preferred_element_type=jnp.float32)       # (Bp, 3*Hp) f32
        r = jax.nn.sigmoid(gi_t[:, 0:Hp] + gh[:, 0:Hp])
        z = jax.nn.sigmoid(gi_t[:, Hp:2 * Hp] + gh[:, Hp:2 * Hp])
        n = jnp.tanh(gi_t[:, 2 * Hp:] + r * (gh[:, 2 * Hp:] + bhn))
        h = (1.0 - z) * n + z * h

    hlast_ref[...] = h
    # TODO(synk): for much larger T/B, stream gi (emit_pipeline) and/or keep
    # the fused hidden weights MXU-resident via matmul_push_rhs; unnecessary
    # at this problem size.


def gru_last_hidden(x_patches, w_ih, w_hh, b_ih, b_hh, hidden_dim):
    """x_patches: (B_eff, T, Np) f32.  Returns final hidden state (B_eff, H)."""
    B_eff, T, Np = x_patches.shape
    H = hidden_dim
    Bp = _round_up(max(B_eff, 8), 8)
    Npp = _round_up(Np, 128)
    Hp = _round_up(H, 128)
    G = 3 * Hp

    # Time-major, zero-padded input.  Zero-padding is GRU-safe: padded hidden
    # lanes stay exactly 0 (padded weight rows/cols and biases are 0, so
    # n_pad = 0 and h_pad stays 0 through the recurrence).
    x = jnp.transpose(x_patches, (1, 0, 2))                    # (T, B_eff, Np)
    x = jnp.pad(x, ((0, 0), (0, Bp - B_eff), (0, Npp - Np)))
    x2d = x.reshape(T * Bp, Npp).astype(jnp.bfloat16)          # (T*Bp, Npp)

    def pad_wT(w, rows, cols):    # torch layout (out, in) -> padded (in, out)
        wt = w.T
        return jnp.pad(wt, ((0, rows - wt.shape[0]), (0, cols - wt.shape[1])))

    def pad_b(b):
        return jnp.pad(b, (0, Hp - H))

    # Fused gate weights: lane blocks [0:Hp]=r, [Hp:2Hp]=z, [2Hp:3Hp]=n.
    wi = jnp.concatenate([pad_wT(w_ih[0:H], Npp, Hp),
                          pad_wT(w_ih[H:2 * H], Npp, Hp),
                          pad_wT(w_ih[2 * H:3 * H], Npp, Hp)],
                         axis=1).astype(jnp.bfloat16)          # (Npp, 3*Hp)
    wh = jnp.concatenate([pad_wT(w_hh[0:H], Hp, Hp),
                          pad_wT(w_hh[H:2 * H], Hp, Hp),
                          pad_wT(w_hh[2 * H:3 * H], Hp, Hp)],
                         axis=1).astype(jnp.bfloat16)          # (Hp, 3*Hp)
    # Folded biases: r/z gates absorb input+hidden biases; n gate absorbs only
    # b_in here (b_hn must stay inside r*(...) to match PyTorch semantics).
    bi = jnp.concatenate([pad_b(b_ih[0:H] + b_hh[0:H]),
                          pad_b(b_ih[H:2 * H] + b_hh[H:2 * H]),
                          pad_b(b_ih[2 * H:3 * H])]).reshape(1, G)
    bhn = pad_b(b_hh[2 * H:3 * H]).reshape(1, Hp)

    vmem = pl.BlockSpec(memory_space=pltpu.MemorySpace.VMEM)
    h_last = pl.pallas_call(
        gru_last_hidden_kernel,
        out_shape=jax.ShapeDtypeStruct((Bp, Hp), jnp.float32),
        in_specs=[vmem] * 5,
        out_specs=vmem,
        scratch_shapes=[pltpu.VMEM((T * Bp, G), jnp.float32)],
        compiler_params=pltpu.CompilerParams(dimension_semantics=()),
    )(x2d, wi, wh, bi, bhn)
    # TODO(synk): if B*input_dim grows, add a "parallel" grid over Bp blocks
    # (uses both v7x TensorCores); pointless at Bp=24.
    return h_last[:B_eff, :H]


# --------------------------------------------------------------------------
# Full model (parameters initialized deterministically, PyTorch-style bounds)
# --------------------------------------------------------------------------
class GRUPatchModelPallas:
    def __init__(self, key, input_dim=6, hidden_dim=30, N_patch=5, step=1,
                 seq_len=40, patch_axis=0):
        assert patch_axis in (0, 1)
        self.input_dim = input_dim
        self.hidden_dim = hidden_dim
        self.N_patch = N_patch
        self.step = step
        self.patch_axis = patch_axis
        self.patch_num = math.floor((seq_len - N_patch) / step) + 1

        def u(k, shape, bound):
            return jax.random.uniform(k, shape, jnp.float32, -bound, bound)

        ks = jax.random.split(key, 10)
        H = hidden_dim
        kg = 1.0 / math.sqrt(H)
        # GRU params (torch layout)
        self.w_ih = u(ks[0], (3 * H, N_patch), kg)
        self.w_hh = u(ks[1], (3 * H, H), kg)
        self.b_ih = u(ks[2], (3 * H,), kg)
        self.b_hh = u(ks[3], (3 * H,), kg)
        # Flatten_Head: per-feature Linear(H, 1) stacked -> (F, H), (F,)
        kl = 1.0 / math.sqrt(H)
        self.W_head = u(ks[4], (input_dim, H), kl)
        self.b_head = u(ks[5], (input_dim,), kl)
        # BatchNorm1d(num_feature) eval-mode (default init / running stats)
        self.bn_gamma = jnp.ones((input_dim,), jnp.float32)
        self.bn_beta = jnp.zeros((input_dim,), jnp.float32)
        self.bn_mean = jnp.zeros((input_dim,), jnp.float32)
        self.bn_var = jnp.ones((input_dim,), jnp.float32)
        self.bn_eps = 1e-5
        # outlinear: Linear(input_dim, 1)
        ko = 1.0 / math.sqrt(input_dim)
        self.W_out = u(ks[6], (1, input_dim), ko)
        self.b_out = u(ks[7], (1,), ko)
        # TODO(synk): nn.Dropout(0.1) and training-mode BatchNorm batch stats are
        # omitted (inference semantics: identity / running stats).

    def __call__(self, x1):
        # x1: (B, seq_len, input_dim)  [matches torch forward's expected input]
        B, S, F = x1.shape
        xp = jnp.transpose(x1, (0, 2, 1))                              # (B, F, S)
        # unfold(dimension=-1, size=N_patch, step=step)
        win_idx = (jnp.arange(self.patch_num) * self.step)[:, None] + \
                  jnp.arange(self.N_patch)[None, :]                    # (T, Np)
        patches = xp[:, :, win_idx]                                    # (B, F, T, Np)
        if self.patch_axis == 1:
            patches = jnp.transpose(patches, (0, 1, 3, 2))
        x_seq = patches.reshape(B * F, patches.shape[2], patches.shape[3])

        # ---- Pallas GRU (only the last time step is needed: last_day=True) ----
        h_last = gru_last_hidden(x_seq, self.w_ih, self.w_hh,
                                 self.b_ih, self.b_hh, self.hidden_dim)
        h_last = h_last.reshape(B, F, self.hidden_dim)                 # (B, F, H)

        # ---- Flatten_Head (tiny; plain JAX glue) ----
        z = jnp.einsum('bfh,fh->bf', h_last, self.W_head) + self.b_head
        z = (z - self.bn_mean) * lax.rsqrt(self.bn_var + self.bn_eps) \
            * self.bn_gamma + self.bn_beta
        z = jax.nn.relu(z)
        out = z @ self.W_out.T + self.b_out                            # (B, 1)
        return out, 0


# --------------------------------------------------------------------------
# Pure-JAX reference GRU (f32; for correctness check of the kernel)
# --------------------------------------------------------------------------
def gru_ref_last_hidden(x_patches, w_ih, w_hh, b_ih, b_hh, H):
    def cell(h, x_t):
        gi = x_t @ w_ih.T + b_ih
        gh = h @ w_hh.T + b_hh
        r = jax.nn.sigmoid(gi[:, :H] + gh[:, :H])
        z = jax.nn.sigmoid(gi[:, H:2 * H] + gh[:, H:2 * H])
        n = jnp.tanh(gi[:, 2 * H:] + r * gh[:, 2 * H:])
        return (1.0 - z) * n + z * h, None
    h0 = jnp.zeros((x_patches.shape[0], H), jnp.float32)
    h_last, _ = lax.scan(cell, h0, jnp.transpose(x_patches, (1, 0, 2)))
    return h_last


if __name__ == "__main__":
    B, seq_len, input_dim, hidden_dim, N_patch = 4, 40, 6, 30, 5
    key = jax.random.PRNGKey(0)
    x1 = jax.random.normal(key, (B, seq_len, input_dim), jnp.float32)

    model = GRUPatchModelPallas(jax.random.PRNGKey(42),
                                input_dim=input_dim, hidden_dim=hidden_dim,
                                N_patch=N_patch, step=1, seq_len=seq_len,
                                patch_axis=0)

    out, aux = model(x1)
    out = jax.block_until_ready(out)
    assert out.shape == (B, 1) and aux == 0

    # sanity-check the Pallas GRU against a pure-f32 JAX reference
    # (tolerance accounts for bf16 MXU matmul operands inside the kernel)
    xp = jnp.transpose(x1, (0, 2, 1))
    win_idx = jnp.arange(model.patch_num)[:, None] + jnp.arange(N_patch)[None, :]
    x_seq = xp[:, :, win_idx].reshape(B * input_dim, model.patch_num, N_patch)
    h_pl = gru_last_hidden(x_seq, model.w_ih, model.w_hh, model.b_ih,
                           model.b_hh, hidden_dim)
    h_rf = gru_ref_last_hidden(x_seq, model.w_ih, model.w_hh, model.b_ih,
                               model.b_hh, hidden_dim)
    h_pl = jax.block_until_ready(h_pl)
    assert jnp.allclose(h_pl, h_rf, atol=2e-2, rtol=2e-2), "GRU kernel mismatch"

    print("KERNEL_OK")
</pallas_src>

<mosaic_0001>
module attributes {stable_mosaic.version = 11 : i64} {
  func.func @gru_last_hidden_kernel(%arg0: memref<864x128xbf16, #tpu.memory_space<vmem>>, %arg1: memref<128x384xbf16, #tpu.memory_space<vmem>>, %arg2: memref<128x384xbf16, #tpu.memory_space<vmem>>, %arg3: memref<1x384xf32, #tpu.memory_space<vmem>>, %arg4: memref<1x128xf32, #tpu.memory_space<vmem>>, %arg5: memref<24x128xf32, #tpu.memory_space<vmem>>, %arg6: memref<864x384xf32, #tpu.memory_space<vmem>>) attributes {dimension_semantics = [], scalar_prefetch = 0 : i64, scratch_operands = 1 : i64, tpu.core_type = #tpu.core_type<tc>} {
    %c0 = arith.constant 0 : index
    %c0_0 = arith.constant 0 : index
    %0 = vector.load %arg0[%c0, %c0_0] : memref<864x128xbf16, #tpu.memory_space<vmem>>, vector<864x128xbf16>
    %c0_1 = arith.constant 0 : index
    %c0_2 = arith.constant 0 : index
    %1 = vector.load %arg1[%c0_1, %c0_2] : memref<128x384xbf16, #tpu.memory_space<vmem>>, vector<128x384xbf16>
    %cst = arith.constant dense<0.000000e+00> : vector<864x384xf32>
    %2 = tpu.matmul %0, %1, %cst {dimension_numbers = #tpu.dot_dimension_numbers<[1], [0], [0], [1], [0, 0, 1, 1], [], []>} : vector<864x128xbf16>, vector<128x384xbf16>, vector<864x384xf32> -> vector<864x384xf32>
    %c0_3 = arith.constant 0 : index
    %c0_4 = arith.constant 0 : index
    %3 = vector.load %arg3[%c0_3, %c0_4] : memref<1x384xf32, #tpu.memory_space<vmem>>, vector<1x384xf32>
    %4 = vector.broadcast %3 : vector<1x384xf32> to vector<864x384xf32>
    %5 = arith.addf %2, %4 : vector<864x384xf32>
    %c0_5 = arith.constant 0 : index
    %c0_6 = arith.constant 0 : index
    %6 = vector.load %arg6[%c0_5, %c0_6] : memref<864x384xf32, #tpu.memory_space<vmem>>, vector<864x384xf32>
    tpu.vector_store %arg6[%c0_5, %c0_6], %5 {strides = array<i32>} : memref<864x384xf32, #tpu.memory_space<vmem>>, vector<864x384xf32>,
    %c0_7 = arith.constant 0 : index
    %c0_8 = arith.constant 0 : index
    %7 = vector.load %arg2[%c0_7, %c0_8] : memref<128x384xbf16, #tpu.memory_space<vmem>>, vector<128x384xbf16>
    %c0_9 = arith.constant 0 : index
    %c0_10 = arith.constant 0 : index
    %8 = vector.load %arg4[%c0_9, %c0_10] : memref<1x128xf32, #tpu.memory_space<vmem>>, vector<1x128xf32>
    %cst_11 = arith.constant 0.000000e+00 : f32
    %9 = vector.broadcast %cst_11 : f32 to vector<24x128xf32>
    %c0_12 = arith.constant 0 : index
    %c0_13 = arith.constant 0 : index
    %10 = vector.load %arg6[%c0_12, %c0_13] : memref<864x384xf32, #tpu.memory_space<vmem>>, vector<24x384xf32>
    %11 = arith.truncf %9 : vector<24x128xf32> to vector<24x128xbf16>
    %cst_14 = arith.constant dense<0.000000e+00> : vector<24x384xf32>
    %12 = tpu.matmul %11, %7, %cst_14 {dimension_numbers = #tpu.dot_dimension_numbers<[1], [0], [0], [1], [0, 0, 1, 1], [], []>} : vector<24x128xbf16>, vector<128x384xbf16>, vector<24x384xf32> -> vector<24x384xf32>
    %13 = vector.extract_strided_slice %10 {offsets = [0, 0], sizes = [24, 128], strides = [1, 1]} : vector<24x384xf32> to vector<24x128xf32>
    %14 = vector.extract_strided_slice %12 {offsets = [0, 0], sizes = [24, 128], strides = [1, 1]} : vector<24x384xf32> to vector<24x128xf32>
    %15 = arith.addf %13, %14 : vector<24x128xf32>
    %16 = arith.negf %15 : vector<24x128xf32>
    %17 = math.exp %16 : vector<24x128xf32>
    %cst_15 = arith.constant 1.000000e+00 : f32
    %18 = vector.broadcast %cst_15 : f32 to vector<24x128xf32>
    %19 = arith.addf %18, %17 : vector<24x128xf32>
    %20 = arith.divf %18, %19 : vector<24x128xf32>
    %21 = vector.extract_strided_slice %10 {offsets = [0, 128], sizes = [24, 128], strides = [1, 1]} : vector<24x384xf32> to vector<24x128xf32>
    %22 = vector.extract_strided_slice %12 {offsets = [0, 128], sizes = [24, 128], strides = [1, 1]} : vector<24x384xf32> to vector<24x128xf32>
    %23 = arith.addf %21, %22 : vector<24x128xf32>
    %24 = arith.negf %23 : vector<24x128xf32>
    %25 = math.exp %24 : vector<24x128xf32>
    %cst_16 = arith.constant 1.000000e+00 : f32
    %26 = vector.broadcast %cst_16 : f32 to vector<24x128xf32>
    %27 = arith.addf %26, %25 : vector<24x128xf32>
    %28 = arith.divf %26, %27 : vector<24x128xf32>
    %29 = vector.extract_strided_slice %10 {offsets = [0, 256], sizes = [24, 128], strides = [1, 1]} : vector<24x384xf32> to vector<24x128xf32>
    %30 = vector.extract_strided_slice %12 {offsets = [0, 256], sizes = [24, 128], strides = [1, 1]} : vector<24x384xf32> to vector<24x128xf32>
    %31 = vector.broadcast %8 : vector<1x128xf32> to vector<24x128xf32>
    %32 = arith.addf %30, %31 : vector<24x128xf32>
    %33 = arith.mulf %20, %32 : vector<24x128xf32>
    %34 = arith.addf %29, %33 : vector<24x128xf32>
    %35 = math.tanh %34 : vector<24x128xf32>
    %cst_17 = arith.constant 1.000000e+00 : f32
    %36 = vector.broadcast %cst_17 : f32 to vector<24x128xf32>
    %37 = arith.subf %36, %28 : vector<24x128xf32>
    %38 = arith.mulf %37, %35 : vector<24x128xf32>
    %39 = arith.mulf %28, %9 : vector<24x128xf32>
    %40 = arith.addf %38, %39 : vector<24x128xf32>
    %c24 = arith.constant 24 : index
    %c0_18 = arith.constant 0 : index
    %41 = vector.load %arg6[%c24, %c0_18] : memref<864x384xf32, #tpu.memory_space<vmem>>, vector<24x384xf32>
    %42 = arith.truncf %40 : vector<24x128xf32> to vector<24x128xbf16>
    %cst_19 = arith.constant dense<0.000000e+00> : vector<24x384xf32>
    %43 = tpu.matmul %42, %7, %cst_19 {dimension_numbers = #tpu.dot_dimension_numbers<[1], [0], [0], [1], [0, 0, 1, 1], [], []>} : vector<24x128xbf16>, vector<128x384xbf16>, vector<24x384xf32> -> vector<24x384xf32>
    %44 = vector.extract_strided_slice %41 {offsets = [0, 0], sizes = [24, 128], strides = [1, 1]} : vector<24x384xf32> to vector<24x128xf32>
    %45 = vector.extract_strided_slice %43 {offsets = [0, 0], sizes = [24, 128], strides = [1, 1]} : vector<24x384xf32> to vector<24x128xf32>
    %46 = arith.addf %44, %45 : vector<24x128xf32>
    %47 = arith.negf %46 : vector<24x128xf32>
    %48 = math.exp %47 : vector<24x128xf32>
    %cst_20 = arith.constant 1.000000e+00 : f32
    %49 = vector.broadcast %cst_20 : f32 to vector<24x128xf32>
    %50 = arith.addf %49, %48 : vector<24x128xf32>
    %51 = arith.divf %49, %50 : vector<24x128xf32>
    %52 = vector.extract_strided_slice %41 {offsets = [0, 128], sizes = [24, 128], strides = [1, 1]} : vector<24x384xf32> to vector<24x128xf32>
    %53 = vector.extract_strided_slice %43 {offsets = [0, 128], sizes = [24, 128], strides = [1, 1]} : vector<24x384xf32> to vector<24x128xf32>
    %54 = arith.addf %52, %53 : vector<24x128xf32>
    %55 = arith.negf %54 : vector<24x128xf32>
    %56 = math.exp %55 : vector<24x128xf32>
    %cst_21 = arith.constant 1.000000e+00 : f32
    %57 = vector.broadcast %cst_21 : f32 to vector<24x128xf32>
    %58 = arith.addf %57, %56 : vector<24x128xf32>
    %59 = arith.divf %57, %58 : vector<24x128xf32>
    %60 = vector.extract_strided_slice %41 {offsets = [0, 256], sizes = [24, 128], strides = [1, 1]} : vector<24x384xf32> to vector<24x128xf32>
    %61 = vector.extract_strided_slice %43 {offsets = [0, 256], sizes = [24, 128], strides = [1, 1]} : vector<24x384xf32> to vector<24x128xf32>
    %62 = vector.broadcast %8 : vector<1x128xf32> to vector<24x128xf32>
    %63 = arith.addf %61, %62 : vector<24x128xf32>
    %64 = arith.mulf %51, %63 : vector<24x128xf32>
    %65 = arith.addf %60, %64 : vector<24x128xf32>
    %66 = math.tanh %65 : vector<24x128xf32>
    %cst_22 = arith.constant 1.000000e+00 : f32
    %67 = vector.broadcast %cst_22 : f32 to vector<24x128xf32>
    %68 = arith.subf %67, %59 : vector<24x128xf32>
    %69 = arith.mulf %68, %66 : vector<24x128xf32>
    %70 = arith.mulf %59, %40 : vector<24x128xf32>
    %71 = arith.addf %69, %70 : vector<24x128xf32>
    %c48 = arith.constant 48 : index
    %c0_23 = arith.constant 0 : index
    %72 = vector.load %arg6[%c48, %c0_23] : memref<864x384xf32, #tpu.memory_space<vmem>>, vector<24x384xf32>
    %73 = arith.truncf %71 : vector<24x128xf32> to vector<24x128xbf16>
    %cst_24 = arith.constant dense<0.000000e+00> : vector<24x384xf32>
    %74 = tpu.matmul %73, %7, %cst_24 {dimension_numbers = #tpu.dot_dimension_numbers<[1], [0], [0], [1], [0, 0, 1, 1], [], []>} : vector<24x128xbf16>, vector<128x384xbf16>, vector<24x384xf32> -> vector<24x384xf32>
    %75 = vector.extract_strided_slice %72 {offsets = [0, 0], sizes = [24, 128], strides = [1, 1]} : vector<24x384xf32> to vector<24x128xf32>
    %76 = vector.extract_strided_slice %74 {offsets = [0, 0], sizes = [24, 128], strides = [1, 1]} : vector<24x384xf32> to vector<24x128xf32>
    %77 = arith.addf %75, %76 : vector<24x128xf32>
    %78 = arith.negf %77 : vector<24x128xf32>
    %79 = math.exp %78 : vector<24x128xf32>
    %cst_25 = arith.constant 1.000000e+00 : f32
    %80 = vector.broadcast %cst_25 : f32 to vector<24x128xf32>
    %81 = arith.addf %80, %79 : vector<24x128xf32>
    %82 = arith.divf %80, %81 : vector<24x128xf32>
    %83 = vector.extract_strided_slice %72 {offsets = [0, 128], sizes = [24, 128], strides = [1, 1]} : vector<24x384xf32> to vector<24x128xf32>
    %84 = vector.extract_strided_slice %74 {offsets = [0, 128], sizes = [24, 128], strides = [1, 1]} : vector<24x384xf32> to vector<24x128xf32>
    %85 = arith.addf %83, %84 : vector<24x128xf32>
    %86 = arith.negf %85 : vector<24x128xf32>
    %87 = math.exp %86 : vector<24x128xf32>
    %cst_26 = arith.constant 1.000000e+00 : f32
    %88 = vector.broadcast %cst_26 : f32 to vector<24x128xf32>
    %89 = arith.addf %88, %87 : vector<24x128xf32>
    %90 = arith.divf %88, %89 : vector<24x128xf32>
    %91 = vector.extract_strided_slice %72 {offsets = [0, 256], sizes = [24, 128], strides = [1, 1]} : vector<24x384xf32> to vector<24x128xf32>
    %92 = vector.extract_strided_slice %74 {offsets = [0, 256], sizes = [24, 128], strides = [1, 1]} : vector<24x384xf32> to vector<24x128xf32>
    %93 = vector.broadcast %8 : vector<1x128xf32> to vector<24x128xf32>
    %94 = arith.addf %92, %93 : vector<24x128xf32>
    %95 = arith.mulf %82, %94 : vector<24x128xf32>
    %96 = arith.addf %91, %95 : vector<24x128xf32>
    %97 = math.tanh %96 : vector<24x128xf32>
    %cst_27 = arith.constant 1.000000e+00 : f32
    %98 = vector.broadcast %cst_27 : f32 to vector<24x128xf32>
    %99 = arith.subf %98, %90 : vector<24x128xf32>
    %100 = arith.mulf %99, %97 : vector<24x128xf32>
    %101 = arith.mulf %90, %71 : vector<24x128xf32>
    %102 = arith.addf %100, %101 : vector<24x128xf32>
    %c72 = arith.constant 72 : index
    %c0_28 = arith.constant 0 : index
    %103 = vector.load %arg6[%c72, %c0_28] : memref<864x384xf32, #tpu.memory_space<vmem>>, vector<24x384xf32>
    %104 = arith.truncf %102 : vector<24x128xf32> to vector<24x128xbf16>
    %cst_29 = arith.constant dense<0.000000e+00> : vector<24x384xf32>
    %105 = tpu.matmul %104, %7, %cst_29 {dimension_numbers = #tpu.dot_dimension_numbers<[1], [0], [0], [1], [0, 0, 1, 1], [], []>} : vector<24x128xbf16>, vector<128x384xbf16>, vector<24x384xf32> -> vector<24x384xf32>
    %106 = vector.extract_strided_slice %103 {offsets = [0, 0], sizes = [24, 128], strides = [1, 1]} : vector<24x384xf32> to vector<24x128xf32>
    %107 = vector.extract_strided_slice %105 {offsets = [0, 0], sizes = [24, 128], strides = [1, 1]} : vector<24x384xf32> to vector<24x128xf32>
    %108 = arith.addf %106, %107 : vector<24x128xf32>
    %109 = arith.negf %108 : vector<24x128xf32>
    %110 = math.exp %109 : vector<24x128xf32>
    %cst_30 = arith.constant 1.000000e+00 : f32
    %111 = vector.broadcast %cst_30 : f32 to vector<24x128xf32>
    %112 = arith.addf %111, %110 : vector<24x128xf32>
    %113 = arith.divf %111, %112 : vector<24x128xf32>
    %114 = vector.extract_strided_slice %103 {offsets = [0, 128], sizes = [24, 128], strides = [1, 1]} : vector<24x384xf32> to vector<24x128xf32>
    %115 = vector.extract_strided_slice %105 {offsets = [0, 128], sizes = [24, 128], strides = [1, 1]} : vector<24x384xf32> to vector<24x128xf32>
    %116 = arith.addf %114, %115 : vector<24x128xf32>
    %117 = arith.negf %116 : vector<24x128xf32>
    %118 = math.exp %117 : vector<24x128xf32>
    %cst_31 = arith.constant 1.000000e+00 : f32
    %119 = vector.broadcast %cst_31 : f32 to vector<24x128xf32>
    %120 = arith.addf %119, %118 : vector<24x128xf32>
    %121 = arith.divf %119, %120 : vector<24x128xf32>
    %122 = vector.extract_strided_slice %103 {offsets = [0, 256], sizes = [24, 128], strides = [1, 1]} : vector<24x384xf32> to vector<24x128xf32>
    %123 = vector.extract_strided_slice %105 {offsets = [0, 256], sizes = [24, 128], strides = [1, 1]} : vector<24x384xf32> to vector<24x128xf32>
    %124 = vector.broadcast %8 : vector<1x128xf32> to vector<24x128xf32>
    %125 = arith.addf %123, %124 : vector<24x128xf32>
    %126 = arith.mulf %113, %125 : vector<24x128xf32>
    %127 = arith.addf %122, %126 : vector<24x128xf32>
    %128 = math.tanh %127 : vector<24x128xf32>
    %cst_32 = arith.constant 1.000000e+00 : f32
    %129 = vector.broadcast %cst_32 : f32 to vector<24x128xf32>
    %130 = arith.subf %129, %121 : vector<24x128xf32>
    %131 = arith.mulf %130, %128 : vector<24x128xf32>
    %132 = arith.mulf %121, %102 : vector<24x128xf32>
    %133 = arith.addf %131, %132 : vector<24x128xf32>
    %c96 = arith.constant 96 : index
    %c0_33 = arith.constant 0 : index
    %134 = vector.load %arg6[%c96, %c0_33] : memref<864x384xf32, #tpu.memory_space<vmem>>, vector<24x384xf32>
    %135 = arith.truncf %133 : vector<24x128xf32> to vector<24x128xbf16>
    %cst_34 = arith.constant dense<0.000000e+00> : vector<24x384xf32>
    %136 = tpu.matmul %135, %7, %cst_34 {dimension_numbers = #tpu.dot_dimension_numbers<[1], [0], [0], [1], [0, 0, 1, 1], [], []>} : vector<24x128xbf16>, vector<128x384xbf16>, vector<24x384xf32> -> vector<24x384xf32>
    %137 = vector.extract_strided_slice %134 {offsets = [0, 0], sizes = [24, 128], strides = [1, 1]} : vector<24x384xf32> to vector<24x128xf32>
    %138 = vector.extract_strided_slice %136 {offsets = [0, 0], sizes = [24, 128], strides = [1, 1]} : vector<24x384xf32> to vector<24x128xf32>
    %139 = arith.addf %137, %138 : vector<24x128xf32>
    %140 = arith.negf %139 : vector<24x128xf32>
    %141 = math.exp %140 : vector<24x128xf32>
    %cst_35 = arith.constant 1.000000e+00 : f32
    %142 = vector.broadcast %cst_35 : f32 to vector<24x128xf32>
    %143 = arith.addf %142, %141 : vector<24x128xf32>
    %144 = arith.divf %142, %143 : vector<24x128xf32>
    %145 = vector.extract_strided_slice %134 {offsets = [0, 128], sizes = [24, 128], strides = [1, 1]} : vector<24x384xf32> to vector<24x128xf32>
    %146 = vector.extract_strided_slice %136 {offsets = [0, 128], sizes = [24, 128], strides = [1, 1]} : vector<24x384xf32> to vector<24x128xf32>
    %147 = arith.addf %145, %146 : vector<24x128xf32>
    %148 = arith.negf %147 : vector<24x128xf32>
    %149 = math.exp %148 : vector<24x128xf32>
    %cst_36 = arith.constant 1.000000e+00 : f32
    %150 = vector.broadcast %cst_36 : f32 to vector<24x128xf32>
    %151 = arith.addf %150, %149 : vector<24x128xf32>
    %152 = arith.divf %150, %151 : vector<24x128xf32>
    %153 = vector.extract_strided_slice %134 {offsets = [0, 256], sizes = [24, 128], strides = [1, 1]} : vector<24x384xf32> to vector<24x128xf32>
    %154 = vector.extract_strided_slice %136 {offsets = [0, 256], sizes = [24, 128], strides = [1, 1]} : vector<24x384xf32> to vector<24x128xf32>
    %155 = vector.broadcast %8 : vector<1x128xf32> to vector<24x128xf32>
    %156 = arith.addf %154, %155 : vector<24x128xf32>
    %157 = arith.mulf %144, %156 : vector<24x128xf32>
    %158 = arith.addf %153, %157 : vector<24x128xf32>
    %159 = math.tanh %158 : vector<24x128xf32>
    %cst_37 = arith.constant 1.000000e+00 : f32
    %160 = vector.broadcast %cst_37 : f32 to vector<24x128xf32>
    %161 = arith.subf %160, %152 : vector<24x128xf32>
    %162 = arith.mulf %161, %159 : vector<24x128xf32>
    %163 = arith.mulf %152, %133 : vector<24x128xf32>
    %164 = arith.addf %162, %163 : vector<24x128xf32>
    %c120 = arith.constant 120 : index
    %c0_38 = arith.constant 0 : index
    %165 = vector.load %arg6[%c120, %c0_38] : memref<864x384xf32, #tpu.memory_space<vmem>>, vector<24x384xf32>
    %166 = arith.truncf %164 : vector<24x128xf32> to vector<24x128xbf16>
    %cst_39 = arith.constant dense<0.000000e+00> : vector<24x384xf32>
    %167 = tpu.matmul %166, %7, %cst_39 {dimension_numbers = #tpu.dot_dimension_numbers<[1], [0], [0], [1], [0, 0, 1, 1], [], []>} : vector<24x128xbf16>, vector<128x384xbf16>, vector<24x384xf32> -> vector<24x384xf32>
    %168 = vector.extract_strided_slice %165 {offsets = [0, 0], sizes = [24, 128], strides = [1, 1]} : vector<24x384xf32> to vector<24x128xf32>
    %169 = vector.extract_strided_slice %167 {offsets = [0, 0], sizes = [24, 128], strides = [1, 1]} : vector<24x384xf32> to vector<24x128xf32>
    %170 = arith.addf %168, %169 : vector<24x128xf32>
    %171 = arith.negf %170 : vector<24x128xf32>
    %172 = math.exp %171 : vector<24x128xf32>
    %cst_40 = arith.constant 1.000000e+00 : f32
    %173 = vector.broadcast %cst_40 : f32 to vector<24x128xf32>
    %174 = arith.addf %173, %172 : vector<24x128xf32>
    %175 = arith.divf %173, %174 : vector<24x128xf32>
    %176 = vector.extract_strided_slice %165 {offsets = [0, 128], sizes = [24, 128], strides = [1, 1]} : vector<24x384xf32> to vector<24x128xf32>
    %177 = vector.extract_strided_slice %167 {offsets = [0, 128], sizes = [24, 128], strides = [1, 1]} : vector<24x384xf32> to vector<24x128xf32>
    %178 = arith.addf %176, %177 : vector<24x128xf32>
    %179 = arith.negf %178 : vector<24x128xf32>
    %180 = math.exp %179 : vector<24x128xf32>
    %cst_41 = arith.constant 1.000000e+00 : f32
    %181 = vector.broadcast %cst_41 : f32 to vector<24x128xf32>
    %182 = arith.addf %181, %180 : vector<24x128xf32>
    %183 = arith.divf %181, %182 : vector<24x128xf32>
    %184 = vector.extract_strided_slice %165 {offsets = [0, 256], sizes = [24, 128], strides = [1, 1]} : vector<24x384xf32> to vector<24x128xf32>
    %185 = vector.extract_strided_slice %167 {offsets = [0, 256], sizes = [24, 128], strides = [1, 1]} : vector<24x384xf32> to vector<24x128xf32>
    %186 = vector.broadcast %8 : vector<1x128xf32> to vector<24x128xf32>
    %187 = arith.addf %185, %186 : vector<24x128xf32>
    %188 = arith.mulf %175, %187 : vector<24x128xf32>
    %189 = arith.addf %184, %188 : vector<24x128xf32>
    %190 = math.tanh %189 : vector<24x128xf32>
    %cst_42 = arith.constant 1.000000e+00 : f32
    %191 = vector.broadcast %cst_42 : f32 to vector<24x128xf32>
    %192 = arith.subf %191, %183 : vector<24x128xf32>
    %193 = arith.mulf %192, %190 : vector<24x128xf32>
    %194 = arith.mulf %183, %164 : vector<24x128xf32>
    %195 = arith.addf %193, %194 : vector<24x128xf32>
    %c144 = arith.constant 144 : index
    %c0_43 = arith.constant 0 : index
    %196 = vector.load %arg6[%c144, %c0_43] : memref<864x384xf32, #tpu.memory_space<vmem>>, vector<24x384xf32>
    %197 = arith.truncf %195 : vector<24x128xf32> to vector<24x128xbf16>
    %cst_44 = arith.constant dense<0.000000e+00> : vector<24x384xf32>
    %198 = tpu.matmul %197, %7, %cst_44 {dimension_numbers = #tpu.dot_dimension_numbers<[1], [0], [0], [1], [0, 0, 1, 1], [], []>} : vector<24x128xbf16>, vector<128x384xbf16>, vector<24x384xf32> -> vector<24x384xf32>
    %199 = vector.extract_strided_slice %196 {offsets = [0, 0], sizes = [24, 128], strides = [1, 1]} : vector<24x384xf32> to vector<24x128xf32>
    %200 = vector.extract_strided_slice %198 {offsets = [0, 0], sizes = [24, 128], strides = [1, 1]} : vector<24x384xf32> to vector<24x128xf32>
    %201 = arith.addf %199, %200 : vector<24x128xf32>
    %202 = arith.negf %201 : vector<24x128xf32>
    %203 = math.exp %202 : vector<24x128xf32>
    %cst_45 = arith.constant 1.000000e+00 : f32
    %204 = vector.broadcast %cst_45 : f32 to vector<24x128xf32>
    %205 = arith.addf %204, %203 : vector<24x128xf32>
    %206 = arith.divf %204, %205 : vector<24x128xf32>
    %207 = vector.extract_strided_slice %196 {offsets = [0, 128], sizes = [24, 128], strides = [1, 1]} : vector<24x384xf32> to vector<24x128xf32>
    %208 = vector.extract_strided_slice %198 {offsets = [0, 128], sizes = [24, 128], strides = [1, 1]} : vector<24x384xf32> to vector<24x128xf32>
    %209 = arith.addf %207, %208 : vector<24x128xf32>
    %210 = arith.negf %209 : vector<24x128xf32>
    %211 = math.exp %210 : vector<24x128xf32>
    %cst_46 = arith.constant 1.000000e+00 : f32
    %212 = vector.broadcast %cst_46 : f32 to vector<24x128xf32>
    %213 = arith.addf %212, %211 : vector<24x128xf32>
    %214 = arith.divf %212, %213 : vector<24x128xf32>
    %215 = vector.extract_strided_slice %196 {offsets = [0, 256], sizes = [24, 128], strides = [1, 1]} : vector<24x384xf32> to vector<24x128xf32>
    %216 = vector.extract_strided_slice %198 {offsets = [0, 256], sizes = [24, 128], strides = [1, 1]} : vector<24x384xf32> to vector<24x128xf32>
    %217 = vector.broadcast %8 : vector<1x128xf32> to vector<24x128xf32>
    %218 = arith.addf %216, %217 : vector<24x128xf32>
    %219 = arith.mulf %206, %218 : vector<24x128xf32>
    %220 = arith.addf %215, %219 : vector<24x128xf32>
    %221 = math.tanh %220 : vector<24x128xf32>
    %cst_47 = arith.constant 1.000000e+00 : f32
    %222 = vector.broadcast %cst_47 : f32 to vector<24x128xf32>
    %223 = arith.subf %222, %214 : vector<24x128xf32>
    %224 = arith.mulf %223, %221 : vector<24x128xf32>
    %225 = arith.mulf %214, %195 : vector<24x128xf32>
    %226 = arith.addf %224, %225 : vector<24x128xf32>
    %c168 = arith.constant 168 : index
    %c0_48 = arith.constant 0 : index
    %227 = vector.load %arg6[%c168, %c0_48] : memref<864x384xf32, #tpu.memory_space<vmem>>, vector<24x384xf32>
    %228 = arith.truncf %226 : vector<24x128xf32> to vector<24x128xbf16>
    %cst_49 = arith.constant dense<0.000000e+00> : vector<24x384xf32>
    %229 = tpu.matmul %228, %7, %cst_49 {dimension_numbers = #tpu.dot_dimension_numbers<[1], [0], [0], [1], [0, 0, 1, 1], [], []>} : vector<24x128xbf16>, vector<128x384xbf16>, vector<24x384xf32> -> vector<24x384xf32>
    %230 = vector.extract_strided_slice %227 {offsets = [0, 0], sizes = [24, 128], strides = [1, 1]} : vector<24x384xf32> to vector<24x128xf32>
    %231 = vector.extract_strided_slice %229 {offsets = [0, 0], sizes = [24, 128], strides = [1, 1]} : vector<24x384xf32> to vector<24x128xf32>
    %232 = arith.addf %230, %231 : vector<24x128xf32>
    %233 = arith.negf %232 : vector<24x128xf32>
    %234 = math.exp %233 : vector<24x128xf32>
    %cst_50 = arith.constant 1.000000e+00 : f32
    %235 = vector.broadcast %cst_50 : f32 to vector<24x128xf32>
    %236 = arith.addf %235, %234 : vector<24x128xf32>
    %237 = arith.divf %235, %236 : vector<24x128xf32>
    %238 = vector.extract_strided_slice %227 {offsets = [0, 128], sizes = [24, 128], strides = [1, 1]} : vector<24x384xf32> to vector<24x128xf32>
    %239 = vector.extract_strided_slice %229 {offsets = [0, 128], sizes = [24, 128], strides = [1, 1]} : vector<24x384xf32> to vector<24x128xf32>
    %240 = arith.addf %238, %239 : vector<24x128xf32>
    %241 = arith.negf %240 : vector<24x128xf32>
    %242 = math.exp %241 : vector<24x128xf32>
    %cst_51 = arith.constant 1.000000e+00 : f32
    %243 = vector.broadcast %cst_51 : f32 to vector<24x128xf32>
    %244 = arith.addf %243, %242 : vector<24x128xf32>
    %245 = arith.divf %243, %244 : vector<24x128xf32>
    %246 = vector.extract_strided_slice %227 {offsets = [0, 256], sizes = [24, 128], strides = [1, 1]} : vector<24x384xf32> to vector<24x128xf32>
    %247 = vector.extract_strided_slice %229 {offsets = [0, 256], sizes = [24, 128], strides = [1, 1]} : vector<24x384xf32> to vector<24x128xf32>
    %248 = vector.broadcast %8 : vector<1x128xf32> to vector<24x128xf32>
    %249 = arith.addf %247, %248 : vector<24x128xf32>
    %250 = arith.mulf %237, %249 : vector<24x128xf32>
    %251 = arith.addf %246, %250 : vector<24x128xf32>
    %252 = math.tanh %251 : vector<24x128xf32>
    %cst_52 = arith.constant 1.000000e+00 : f32
    %253 = vector.broadcast %cst_52 : f32 to vector<24x128xf32>
    %254 = arith.subf %253, %245 : vector<24x128xf32>
    %255 = arith.mulf %254, %252 : vector<24x128xf32>
    %256 = arith.mulf %245, %226 : vector<24x128xf32>
    %257 = arith.addf %255, %256 : vector<24x128xf32>
    %c192 = arith.constant 192 : index
    %c0_53 = arith.constant 0 : index
    %258 = vector.load %arg6[%c192, %c0_53] : memref<864x384xf32, #tpu.memory_space<vmem>>, vector<24x384xf32>
    %259 = arith.truncf %257 : vector<24x128xf32> to vector<24x128xbf16>
    %cst_54 = arith.constant dense<0.000000e+00> : vector<24x384xf32>
    %260 = tpu.matmul %259, %7, %cst_54 {dimension_numbers = #tpu.dot_dimension_numbers<[1], [0], [0], [1], [0, 0, 1, 1], [], []>} : vector<24x128xbf16>, vector<128x384xbf16>, vector<24x384xf32> -> vector<24x384xf32>
    %261 = vector.extract_strided_slice %258 {offsets = [0, 0], sizes = [24, 128], strides = [1, 1]} : vector<24x384xf32> to vector<24x128xf32>
    %262 = vector.extract_strided_slice %260 {offsets = [0, 0], sizes = [24, 128], strides = [1, 1]} : vector<24x384xf32> to vector<24x128xf32>
    %263 = arith.addf %261, %262 : vector<24x128xf32>
    %264 = arith.negf %263 : vector<24x128xf32>
    %265 = math.exp %264 : vector<24x128xf32>
    %cst_55 = arith.constant 1.000000e+00 : f32
    %266 = vector.broadcast %cst_55 : f32 to vector<24x128xf32>
    %267 = arith.addf %266, %265 : vector<24x128xf32>
    %268 = arith.divf %266, %267 : vector<24x128xf32>
    %269 = vector.extract_strided_slice %258 {offsets = [0, 128], sizes = [24, 128], strides = [1, 1]} : vector<24x384xf32> to vector<24x128xf32>
    %270 = vector.extract_strided_slice %260 {offsets = [0, 128], sizes = [24, 128], strides = [1, 1]} : vector<24x384xf32> to vector<24x128xf32>
    %271 = arith.addf %269, %270 : vector<24x128xf32>
    %272 = arith.negf %271 : vector<24x128xf32>
    %273 = math.exp %272 : vector<24x128xf32>
    %cst_56 = arith.constant 1.000000e+00 : f32
    %274 = vector.broadcast %cst_56 : f32 to vector<24x128xf32>
    %275 = arith.addf %274, %273 : vector<24x128xf32>
    %276 = arith.divf %274, %275 : vector<24x128xf32>
    %277 = vector.extract_strided_slice %258 {offsets = [0, 256], sizes = [24, 128], strides = [1, 1]} : vector<24x384xf32> to vector<24x128xf32>
    %278 = vector.extract_strided_slice %260 {offsets = [0, 256], sizes = [24, 128], strides = [1, 1]} : vector<24x384xf32> to vector<24x128xf32>
    %279 = vector.broadcast %8 : vector<1x128xf32> to vector<24x128xf32>
    %280 = arith.addf %278, %279 : vector<24x128xf32>
    %281 = arith.mulf %268, %280 : vector<24x128xf32>
    %282 = arith.addf %277, %281 : vector<24x128xf32>
    %283 = math.tanh %282 : vector<24x128xf32>
    %cst_57 = arith.constant 1.000000e+00 : f32
    %284 = vector.broadcast %cst_57 : f32 to vector<24x128xf32>
    %285 = arith.subf %284, %276 : vector<24x128xf32>
    %286 = arith.mulf %285, %283 : vector<24x128xf32>
    %287 = arith.mulf %276, %257 : vector<24x128xf32>
    %288 = arith.addf %286, %287 : vector<24x128xf32>
    %c216 = arith.constant 216 : index
    %c0_58 = arith.constant 0 : index
    %289 = vector.load %arg6[%c216, %c0_58] : memref<864x384xf32, #tpu.memory_space<vmem>>, vector<24x384xf32>
    %290 = arith.truncf %288 : vector<24x128xf32> to vector<24x128xbf16>
    %cst_59 = arith.constant dense<0.000000e+00> : vector<24x384xf32>
    %291 = tpu.matmul %290, %7, %cst_59 {dimension_numbers = #tpu.dot_dimension_numbers<[1], [0], [0], [1], [0, 0, 1, 1], [], []>} : vector<24x128xbf16>, vector<128x384xbf16>, vector<24x384xf32> -> vector<24x384xf32>
    %292 = vector.extract_strided_slice %289 {offsets = [0, 0], sizes = [24, 128], strides = [1, 1]} : vector<24x384xf32> to vector<24x128xf32>
    %293 = vector.extract_strided_slice %291 {offsets = [0, 0], sizes = [24, 128], strides = [1, 1]} : vector<24x384xf32> to vector<24x128xf32>
    %294 = arith.addf %292, %293 : vector<24x128xf32>
    %295 = arith.negf %294 : vector<24x128xf32>
    %296 = math.exp %295 : vector<24x128xf32>
    %cst_60 = arith.constant 1.000000e+00 : f32
    %297 = vector.broadcast %cst_60 : f32 to vector<24x128xf32>
    %298 = arith.addf %297, %296 : vector<24x128xf32>
    %299 = arith.divf %297, %298 : vector<24x128xf32>
    %300 = vector.extract_strided_slice %289 {offsets = [0, 128], sizes = [24, 128], strides = [1, 1]} : vector<24x384xf32> to vector<24x128xf32>
    %301 = vector.extract_strided_slice %291 {offsets = [0, 128], sizes = [24, 128], strides = [1, 1]} : vector<24x384xf32> to vector<24x128xf32>
    %302 = arith.addf %300, %301 : vector<24x128xf32>
    %303 = arith.negf %302 : vector<24x128xf32>
    %304 = math.exp %303 : vector<24x128xf32>
    %cst_61 = arith.constant 1.000000e+00 : f32
    %305 = vector.broadcast %cst_61 : f32 to vector<24x128xf32>
    %306 = arith.addf %305, %304 : vector<24x128xf32>
    %307 = arith.divf %305, %306 : vector<24x128xf32>
    %308 = vector.extract_strided_slice %289 {offsets = [0, 256], sizes = [24, 128], strides = [1, 1]} : vector<24x384xf32> to vector<24x128xf32>
    %309 = vector.extract_strided_slice %291 {offsets = [0, 256], sizes = [24, 128], strides = [1, 1]} : vector<24x384xf32> to vector<24x128xf32>
    %310 = vector.broadcast %8 : vector<1x128xf32> to vector<24x128xf32>
    %311 = arith.addf %309, %310 : vector<24x128xf32>
    %312 = arith.mulf %299, %311 : vector<24x128xf32>
    %313 = arith.addf %308, %312 : vector<24x128xf32>
    %314 = math.tanh %313 : vector<24x128xf32>
    %cst_62 = arith.constant 1.000000e+00 : f32
    %315 = vector.broadcast %cst_62 : f32 to vector<24x128xf32>
    %316 = arith.subf %315, %307 : vector<24x128xf32>
    %317 = arith.mulf %316, %314 : vector<24x128xf32>
    %318 = arith.mulf %307, %288 : vector<24x128xf32>
    %319 = arith.addf %317, %318 : vector<24x128xf32>
    %c240 = arith.constant 240 : index
    %c0_63 = arith.constant 0 : index
    %320 = vector.load %arg6[%c240, %c0_63] : memref<864x384xf32, #tpu.memory_space<vmem>>, vector<24x384xf32>
    %321 = arith.truncf %319 : vector<24x128xf32> to vector<24x128xbf16>
    %cst_64 = arith.constant dense<0.000000e+00> : vector<24x384xf32>
    %322 = tpu.matmul %321, %7, %cst_64 {dimension_numbers = #tpu.dot_dimension_numbers<[1], [0], [0], [1], [0, 0, 1, 1], [], []>} : vector<24x128xbf16>, vector<128x384xbf16>, vector<24x384xf32> -> vector<24x384xf32>
    %323 = vector.extract_strided_slice %320 {offsets = [0, 0], sizes = [24, 128], strides = [1, 1]} : vector<24x384xf32> to vector<24x128xf32>
    %324 = vector.extract_strided_slice %322 {offsets = [0, 0], sizes = [24, 128], strides = [1, 1]} : vector<24x384xf32> to vector<24x128xf32>
    %325 = arith.addf %323, %324 : vector<24x128xf32>
    %326 = arith.negf %325 : vector<24x128xf32>
    %327 = math.exp %326 : vector<24x128xf32>
    %cst_65 = arith.constant 1.000000e+00 : f32
    %328 = vector.broadcast %cst_65 : f32 to vector<24x128xf32>
    %329 = arith.addf %328, %327 : vector<24x128xf32>
    %330 = arith.divf %328, %329 : vector<24x128xf32>
    %331 = vector.extract_strided_slice %320 {offsets = [0, 128], sizes = [24, 128], strides = [1, 1]} : vector<24x384xf32> to vector<24x128xf32>
    %332 = vector.extract_strided_slice %322 {offsets = [0, 128], sizes = [24, 128], strides = [1, 1]} : vector<24x384xf32> to vector<24x128xf32>
    %333 = arith.addf %331, %332 : vector<24x128xf32>
    %334 = arith.negf %333 : vector<24x128xf32>
    %335 = math.exp %334 : vector<24x128xf32>
    %cst_66 = arith.constant 1.000000e+00 : f32
    %336 = vector.broadcast %cst_66 : f32 to vector<24x128xf32>
    %337 = arith.addf %336, %335 : vector<24x128xf32>
    %338 = arith.divf %336, %337 : vector<24x128xf32>
    %339 = vector.extract_strided_slice %320 {offsets = [0, 256], sizes = [24, 128], strides = [1, 1]} : vector<24x384xf32> to vector<24x128xf32>
    %340 = vector.extract_strided_slice %322 {offsets = [0, 256], sizes = [24, 128], strides = [1, 1]} : vector<24x384xf32> to vector<24x128xf32>
    %341 = vector.broadcast %8 : vector<1x128xf32> to vector<24x128xf32>
    %342 = arith.addf %340, %341 : vector<24x128xf32>
    %343 = arith.mulf %330, %342 : vector<24x128xf32>
    %344 = arith.addf %339, %343 : vector<24x128xf32>
    %345 = math.tanh %344 : vector<24x128xf32>
    %cst_67 = arith.constant 1.000000e+00 : f32
    %346 = vector.broadcast %cst_67 : f32 to vector<24x128xf32>
    %347 = arith.subf %346, %338 : vector<24x128xf32>
    %348 = arith.mulf %347, %345 : vector<24x128xf32>
    %349 = arith.mulf %338, %319 : vector<24x128xf32>
    %350 = arith.addf %348, %349 : vector<24x128xf32>
    %c264 = arith.constant 264 : index
    %c0_68 = arith.constant 0 : index
    %351 = vector.load %arg6[%c264, %c0_68] : memref<864x384xf32, #tpu.memory_space<vmem>>, vector<24x384xf32>
    %352 = arith.truncf %350 : vector<24x128xf32> to vector<24x128xbf16>
    %cst_69 = arith.constant dense<0.000000e+00> : vector<24x384xf32>
    %353 = tpu.matmul %352, %7, %cst_69 {dimension_numbers = #tpu.dot_dimension_numbers<[1], [0], [0], [1], [0, 0, 1, 1], [], []>} : vector<24x128xbf16>, vector<128x384xbf16>, vector<24x384xf32> -> vector<24x384xf32>
    %354 = vector.extract_strided_slice %351 {offsets = [0, 0], sizes = [24, 128], strides = [1, 1]} : vector<24x384xf32> to vector<24x128xf32>
    %355 = vector.extract_strided_slice %353 {offsets = [0, 0], sizes = [24, 128], strides = [1, 1]} : vector<24x384xf32> to vector<24x128xf32>
    %356 = arith.addf %354, %355 : vector<24x128xf32>
    %357 = arith.negf %356 : vector<24x128xf32>
    %358 = math.exp %357 : vector<24x128xf32>
    %cst_70 = arith.constant 1.000000e+00 : f32
    %359 = vector.broadcast %cst_70 : f32 to vector<24x128xf32>
    %360 = arith.addf %359, %358 : vector<24x128xf32>
    %361 = arith.divf %359, %360 : vector<24x128xf32>
    %362 = vector.extract_strided_slice %351 {offsets = [0, 128], sizes = [24, 128], strides = [1, 1]} : vector<24x384xf32> to vector<24x128xf32>
    %363 = vector.extract_strided_slice %353 {offsets = [0, 128], sizes = [24, 128], strides = [1, 1]} : vector<24x384xf32> to vector<24x128xf32>
    %364 = arith.addf %362, %363 : vector<24x128xf32>
    %365 = arith.negf %364 : vector<24x128xf32>
    %366 = math.exp %365 : vector<24x128xf32>
    %cst_71 = arith.constant 1.000000e+00 : f32
    %367 = vector.broadcast %cst_71 : f32 to vector<24x128xf32>
    %368 = arith.addf %367, %366 : vector<24x128xf32>
    %369 = arith.divf %367, %368 : vector<24x128xf32>
    %370 = vector.extract_strided_slice %351 {offsets = [0, 256], sizes = [24, 128], strides = [1, 1]} : vector<24x384xf32> to vector<24x128xf32>
    %371 = vector.extract_strided_slice %353 {offsets = [0, 256], sizes = [24, 128], strides = [1, 1]} : vector<24x384xf32> to vector<24x128xf32>
    %372 = vector.broadcast %8 : vector<1x128xf32> to vector<24x128xf32>
    %373 = arith.addf %371, %372 : vector<24x128xf32>
    %374 = arith.mulf %361, %373 : vector<24x128xf32>
    %375 = arith.addf %370, %374 : vector<24x128xf32>
    %376 = math.tanh %375 : vector<24x128xf32>
    %cst_72 = arith.constant 1.000000e+00 : f32
    %377 = vector.broadcast %cst_72 : f32 to vector<24x128xf32>
    %378 = arith.subf %377, %369 : vector<24x128xf32>
    %379 = arith.mulf %378, %376 : vector<24x128xf32>
    %380 = arith.mulf %369, %350 : vector<24x128xf32>
    %381 = arith.addf %379, %380 : vector<24x128xf32>
    %c288 = arith.constant 288 : index
    %c0_73 = arith.constant 0 : index
    %382 = vector.load %arg6[%c288, %c0_73] : memref<864x384xf32, #tpu.memory_space<vmem>>, vector<24x384xf32>
    %383 = arith.truncf %381 : vector<24x128xf32> to vector<24x128xbf16>
    %cst_74 = arith.constant dense<0.000000e+00> : vector<24x384xf32>
    %384 = tpu.matmul %383, %7, %cst_74 {dimension_numbers = #tpu.dot_dimension_numbers<[1], [0], [0], [1], [0, 0, 1, 1], [], []>} : vector<24x128xbf16>, vector<128x384xbf16>, vector<24x384xf32> -> vector<24x384xf32>
    %385 = vector.extract_strided_slice %382 {offsets = [0, 0], sizes = [24, 128], strides = [1, 1]} : vector<24x384xf32> to vector<24x128xf32>
    %386 = vector.extract_strided_slice %384 {offsets = [0, 0], sizes = [24, 128], strides = [1, 1]} : vector<24x384xf32> to vector<24x128xf32>
    %387 = arith.addf %385, %386 : vector<24x128xf32>
    %388 = arith.negf %387 : vector<24x128xf32>
    %389 = math.exp %388 : vector<24x128xf32>
    %cst_75 = arith.constant 1.000000e+00 : f32
    %390 = vector.broadcast %cst_75 : f32 to vector<24x128xf32>
    %391 = arith.addf %390, %389 : vector<24x128xf32>
    %392 = arith.divf %390, %391 : vector<24x128xf32>
    %393 = vector.extract_strided_slice %382 {offsets = [0, 128], sizes = [24, 128], strides = [1, 1]} : vector<24x384xf32> to vector<24x128xf32>
    %394 = vector.extract_strided_slice %384 {offsets = [0, 128], sizes = [24, 128], strides = [1, 1]} : vector<24x384xf32> to vector<24x128xf32>
    %395 = arith.addf %393, %394 : vector<24x128xf32>
    %396 = arith.negf %395 : vector<24x128xf32>
    %397 = math.exp %396 : vector<24x128xf32>
    %cst_76 = arith.constant 1.000000e+00 : f32
    %398 = vector.broadcast %cst_76 : f32 to vector<24x128xf32>
    %399 = arith.addf %398, %397 : vector<24x128xf32>
    %400 = arith.divf %398, %399 : vector<24x128xf32>
    %401 = vector.extract_strided_slice %382 {offsets = [0, 256], sizes = [24, 128], strides = [1, 1]} : vector<24x384xf32> to vector<24x128xf32>
    %402 = vector.extract_strided_slice %384 {offsets = [0, 256], sizes = [24, 128], strides = [1, 1]} : vector<24x384xf32> to vector<24x128xf32>
    %403 = vector.broadcast %8 : vector<1x128xf32> to vector<24x128xf32>
    %404 = arith.addf %402, %403 : vector<24x128xf32>
    %405 = arith.mulf %392, %404 : vector<24x128xf32>
    %406 = arith.addf %401, %405 : vector<24x128xf32>
    %407 = math.tanh %406 : vector<24x128xf32>
    %cst_77 = arith.constant 1.000000e+00 : f32
    %408 = vector.broadcast %cst_77 : f32 to vector<24x128xf32>
    %409 = arith.subf %408, %400 : vector<24x128xf32>
    %410 = arith.mulf %409, %407 : vector<24x128xf32>
    %411 = arith.mulf %400, %381 : vector<24x128xf32>
    %412 = arith.addf %410, %411 : vector<24x128xf32>
    %c312 = arith.constant 312 : index
    %c0_78 = arith.constant 0 : index
    %413 = vector.load %arg6[%c312, %c0_78] : memref<864x384xf32, #tpu.memory_space<vmem>>, vector<24x384xf32>
    %414 = arith.truncf %412 : vector<24x128xf32> to vector<24x128xbf16>
    %cst_79 = arith.constant dense<0.000000e+00> : vector<24x384xf32>
    %415 = tpu.matmul %414, %7, %cst_79 {dimension_numbers = #tpu.dot_dimension_numbers<[1], [0], [0], [1], [0, 0, 1, 1], [], []>} : vector<24x128xbf16>, vector<128x384xbf16>, vector<24x384xf32> -> vector<24x384xf32>
    %416 = vector.extract_strided_slice %413 {offsets = [0, 0], sizes = [24, 128], strides = [1, 1]} : vector<24x384xf32> to vector<24x128xf32>
    %417 = vector.extract_strided_slice %415 {offsets = [0, 0], sizes = [24, 128], strides = [1, 1]} : vector<24x384xf32> to vector<24x128xf32>
    %418 = arith.addf %416, %417 : vector<24x128xf32>
    %419 = arith.negf %418 : vector<24x128xf32>
    %420 = math.exp %419 : vector<24x128xf32>
    %cst_80 = arith.constant 1.000000e+00 : f32
    %421 = vector.broadcast %cst_80 : f32 to vector<24x128xf32>
    %422 = arith.addf %421, %420 : vector<24x128xf32>
    %423 = arith.divf %421, %422 : vector<24x128xf32>
    %424 = vector.extract_strided_slice %413 {offsets = [0, 128], sizes = [24, 128], strides = [1, 1]} : vector<24x384xf32> to vector<24x128xf32>
    %425 = vector.extract_strided_slice %415 {offsets = [0, 128], sizes = [24, 128], strides = [1, 1]} : vector<24x384xf32> to vector<24x128xf32>
    %426 = arith.addf %424, %425 : vector<24x128xf32>
    %427 = arith.negf %426 : vector<24x128xf32>
    %428 = math.exp %427 : vector<24x128xf32>
    %cst_81 = arith.constant 1.000000e+00 : f32
    %429 = vector.broadcast %cst_81 : f32 to vector<24x128xf32>
    %430 = arith.addf %429, %428 : vector<24x128xf32>
    %431 = arith.divf %429, %430 : vector<24x128xf32>
    %432 = vector.extract_strided_slice %413 {offsets = [0, 256], sizes = [24, 128], strides = [1, 1]} : vector<24x384xf32> to vector<24x128xf32>
    %433 = vector.extract_strided_slice %415 {offsets = [0, 256], sizes = [24, 128], strides = [1, 1]} : vector<24x384xf32> to vector<24x128xf32>
    %434 = vector.broadcast %8 : vector<1x128xf32> to vector<24x128xf32>
    %435 = arith.addf %433, %434 : vector<24x128xf32>
    %436 = arith.mulf %423, %435 : vector<24x128xf32>
    %437 = arith.addf %432, %436 : vector<24x128xf32>
    %438 = math.tanh %437 : vector<24x128xf32>
    %cst_82 = arith.constant 1.000000e+00 : f32
    %439 = vector.broadcast %cst_82 : f32 to vector<24x128xf32>
    %440 = arith.subf %439, %431 : vector<24x128xf32>
    %441 = arith.mulf %440, %438 : vector<24x128xf32>
    %442 = arith.mulf %431, %412 : vector<24x128xf32>
    %443 = arith.addf %441, %442 : vector<24x128xf32>
    %c336 = arith.constant 336 : index
    %c0_83 = arith.constant 0 : index
    %444 = vector.load %arg6[%c336, %c0_83] : memref<864x384xf32, #tpu.memory_space<vmem>>, vector<24x384xf32>
    %445 = arith.truncf %443 : vector<24x128xf32> to vector<24x128xbf16>
    %cst_84 = arith.constant dense<0.000000e+00> : vector<24x384xf32>
    %446 = tpu.matmul %445, %7, %cst_84 {dimension_numbers = #tpu.dot_dimension_numbers<[1], [0], [0], [1], [0, 0, 1, 1], [], []>} : vector<24x128xbf16>, vector<128x384xbf16>, vector<24x384xf32> -> vector<24x384xf32>
    %447 = vector.extract_strided_slice %444 {offsets = [0, 0], sizes = [24, 128], strides = [1, 1]} : vector<24x384xf32> to vector<24x128xf32>
    %448 = vector.extract_strided_slice %446 {offsets = [0, 0], sizes = [24, 128], strides = [1, 1]} : vector<24x384xf32> to vector<24x128xf32>
    %449 = arith.addf %447, %448 : vector<24x128xf32>
    %450 = arith.negf %449 : vector<24x128xf32>
    %451 = math.exp %450 : vector<24x128xf32>
    %cst_85 = arith.constant 1.000000e+00 : f32
    %452 = vector.broadcast %cst_85 : f32 to vector<24x128xf32>
    %453 = arith.addf %452, %451 : vector<24x128xf32>
    %454 = arith.divf %452, %453 : vector<24x128xf32>
    %455 = vector.extract_strided_slice %444 {offsets = [0, 128], sizes = [24, 128], strides = [1, 1]} : vector<24x384xf32> to vector<24x128xf32>
    %456 = vector.extract_strided_slice %446 {offsets = [0, 128], sizes = [24, 128], strides = [1, 1]} : vector<24x384xf32> to vector<24x128xf32>
    %457 = arith.addf %455, %456 : vector<24x128xf32>
    %458 = arith.negf %457 : vector<24x128xf32>
    %459 = math.exp %458 : vector<24x128xf32>
    %cst_86 = arith.constant 1.000000e+00 : f32
    %460 = vector.broadcast %cst_86 : f32 to vector<24x128xf32>
    %461 = arith.addf %460, %459 : vector<24x128xf32>
    %462 = arith.divf %460, %461 : vector<24x128xf32>
    %463 = vector.extract_strided_slice %444 {offsets = [0, 256], sizes = [24, 128], strides = [1, 1]} : vector<24x384xf32> to vector<24x128xf32>
    %464 = vector.extract_strided_slice %446 {offsets = [0, 256], sizes = [24, 128], strides = [1, 1]} : vector<24x384xf32> to vector<24x128xf32>
    %465 = vector.broadcast %8 : vector<1x128xf32> to vector<24x128xf32>
    %466 = arith.addf %464, %465 : vector<24x128xf32>
    %467 = arith.mulf %454, %466 : vector<24x128xf32>
    %468 = arith.addf %463, %467 : vector<24x128xf32>
    %469 = math.tanh %468 : vector<24x128xf32>
    %cst_87 = arith.constant 1.000000e+00 : f32
    %470 = vector.broadcast %cst_87 : f32 to vector<24x128xf32>
    %471 = arith.subf %470, %462 : vector<24x128xf32>
    %472 = arith.mulf %471, %469 : vector<24x128xf32>
    %473 = arith.mulf %462, %443 : vector<24x128xf32>
    %474 = arith.addf %472, %473 : vector<24x128xf32>
    %c360 = arith.constant 360 : index
    %c0_88 = arith.constant 0 : index
    %475 = vector.load %arg6[%c360, %c0_88] : memref<864x384xf32, #tpu.memory_space<vmem>>, vector<24x384xf32>
    %476 = arith.truncf %474 : vector<24x128xf32> to vector<24x128xbf16>
    %cst_89 = arith.constant dense<0.000000e+00> : vector<24x384xf32>
    %477 = tpu.matmul %476, %7, %cst_89 {dimension_numbers = #tpu.dot_dimension_numbers<[1], [0], [0], [1], [0, 0, 1, 1], [], []>} : vector<24x128xbf16>, vector<128x384xbf16>, vector<24x384xf32> -> vector<24x384xf32>
    %478 = vector.extract_strided_slice %475 {offsets = [0, 0], sizes = [24, 128], strides = [1, 1]} : vector<24x384xf32> to vector<24x128xf32>
    %479 = vector.extract_strided_slice %477 {offsets = [0, 0], sizes = [24, 128], strides = [1, 1]} : vector<24x384xf32> to vector<24x128xf32>
    %480 = arith.addf %478, %479 : vector<24x128xf32>
    %481 = arith.negf %480 : vector<24x128xf32>
    %482 = math.exp %481 : vector<24x128xf32>
    %cst_90 = arith.constant 1.000000e+00 : f32
    %483 = vector.broadcast %cst_90 : f32 to vector<24x128xf32>
    %484 = arith.addf %483, %482 : vector<24x128xf32>
    %485 = arith.divf %483, %484 : vector<24x128xf32>
    %486 = vector.extract_strided_slice %475 {offsets = [0, 128], sizes = [24, 128], strides = [1, 1]} : vector<24x384xf32> to vector<24x128xf32>
    %487 = vector.extract_strided_slice %477 {offsets = [0, 128], sizes = [24, 128], strides = [1, 1]} : vector<24x384xf32> to vector<24x128xf32>
    %488 = arith.addf %486, %487 : vector<24x128xf32>
    %489 = arith.negf %488 : vector<24x128xf32>
    %490 = math.exp %489 : vector<24x128xf32>
    %cst_91 = arith.constant 1.000000e+00 : f32
    %491 = vector.broadcast %cst_91 : f32 to vector<24x128xf32>
    %492 = arith.addf %491, %490 : vector<24x128xf32>
    %493 = arith.divf %491, %492 : vector<24x128xf32>
    %494 = vector.extract_strided_slice %475 {offsets = [0, 256], sizes = [24, 128], strides = [1, 1]} : vector<24x384xf32> to vector<24x128xf32>
    %495 = vector.extract_strided_slice %477 {offsets = [0, 256], sizes = [24, 128], strides = [1, 1]} : vector<24x384xf32> to vector<24x128xf32>
    %496 = vector.broadcast %8 : vector<1x128xf32> to vector<24x128xf32>
    %497 = arith.addf %495, %496 : vector<24x128xf32>
    %498 = arith.mulf %485, %497 : vector<24x128xf32>
    %499 = arith.addf %494, %498 : vector<24x128xf32>
    %500 = math.tanh %499 : vector<24x128xf32>
    %cst_92 = arith.constant 1.000000e+00 : f32
    %501 = vector.broadcast %cst_92 : f32 to vector<24x128xf32>
    %502 = arith.subf %501, %493 : vector<24x128xf32>
    %503 = arith.mulf %502, %500 : vector<24x128xf32>
    %504 = arith.mulf %493, %474 : vector<24x128xf32>
    %505 = arith.addf %503, %504 : vector<24x128xf32>
    %c384 = arith.constant 384 : index
    %c0_93 = arith.constant 0 : index
    %506 = vector.load %arg6[%c384, %c0_93] : memref<864x384xf32, #tpu.memory_space<vmem>>, vector<24x384xf32>
    %507 = arith.truncf %505 : vector<24x128xf32> to vector<24x128xbf16>
    %cst_94 = arith.constant dense<0.000000e+00> : vector<24x384xf32>
    %508 = tpu.matmul %507, %7, %cst_94 {dimension_numbers = #tpu.dot_dimension_numbers<[1], [0], [0], [1], [0, 0, 1, 1], [], []>} : vector<24x128xbf16>, vector<128x384xbf16>, vector<24x384xf32> -> vector<24x384xf32>
    %509 = vector.extract_strided_slice %506 {offsets = [0, 0], sizes = [24, 128], strides = [1, 1]} : vector<24x384xf32> to vector<24x128xf32>
    %510 = vector.extract_strided_slice %508 {offsets = [0, 0], sizes = [24, 128], strides = [1, 1]} : vector<24x384xf32> to vector<24x128xf32>
    %511 = arith.addf %509, %510 : vector<24x128xf32>
    %512 = arith.negf %511 : vector<24x128xf32>
    %513 = math.exp %512 : vector<24x128xf32>
    %cst_95 = arith.constant 1.000000e+00 : f32
    %514 = vector.broadcast %cst_95 : f32 to vector<24x128xf32>
    %515 = arith.addf %514, %513 : vector<24x128xf32>
    %516 = arith.divf %514, %515 : vector<24x128xf32>
    %517 = vector.extract_strided_slice %506 {offsets = [0, 128], sizes = [24, 128], strides = [1, 1]} : vector<24x384xf32> to vector<24x128xf32>
    %518 = vector.extract_strided_slice %508 {offsets = [0, 128], sizes = [24, 128], strides = [1, 1]} : vector<24x384xf32> to vector<24x128xf32>
    %519 = arith.addf %517, %518 : vector<24x128xf32>
    %520 = arith.negf %519 : vector<24x128xf32>
    %521 = math.exp %520 : vector<24x128xf32>
    %cst_96 = arith.constant 1.000000e+00 : f32
    %522 = vector.broadcast %cst_96 : f32 to vector<24x128xf32>
    %523 = arith.addf %522, %521 : vector<24x128xf32>
    %524 = arith.divf %522, %523 : vector<24x128xf32>
    %525 = vector.extract_strided_slice %506 {offsets = [0, 256], sizes = [24, 128], strides = [1, 1]} : vector<24x384xf32> to vector<24x128xf32>
    %526 = vector.extract_strided_slice %508 {offsets = [0, 256], sizes = [24, 128], strides = [1, 1]} : vector<24x384xf32> to vector<24x128xf32>
    %527 = vector.broadcast %8 : vector<1x128xf32> to vector<24x128xf32>
    %528 = arith.addf %526, %527 : vector<24x128xf32>
    %529 = arith.mulf %516, %528 : vector<24x128xf32>
    %530 = arith.addf %525, %529 : vector<24x128xf32>
    %531 = math.tanh %530 : vector<24x128xf32>
    %cst_97 = arith.constant 1.000000e+00 : f32
    %532 = vector.broadcast %cst_97 : f32 to vector<24x128xf32>
    %533 = arith.subf %532, %524 : vector<24x128xf32>
    %534 = arith.mulf %533, %531 : vector<24x128xf32>
    %535 = arith.mulf %524, %505 : vector<24x128xf32>
    %536 = arith.addf %534, %535 : vector<24x128xf32>
    %c408 = arith.constant 408 : index
    %c0_98 = arith.constant 0 : index
    %537 = vector.load %arg6[%c408, %c0_98] : memref<864x384xf32, #tpu.memory_space<vmem>>, vector<24x384xf32>
    %538 = arith.truncf %536 : vector<24x128xf32> to vector<24x128xbf16>
    %cst_99 = arith.constant dense<0.000000e+00> : vector<24x384xf32>
    %539 = tpu.matmul %538, %7, %cst_99 {dimension_numbers = #tpu.dot_dimension_numbers<[1], [0], [0], [1], [0, 0, 1, 1], [], []>} : vector<24x128xbf16>, vector<128x384xbf16>, vector<24x384xf32> -> vector<24x384xf32>
    %540 = vector.extract_strided_slice %537 {offsets = [0, 0], sizes = [24, 128], strides = [1, 1]} : vector<24x384xf32> to vector<24x128xf32>
    %541 = vector.extract_strided_slice %539 {offsets = [0, 0], sizes = [24, 128], strides = [1, 1]} : vector<24x384xf32> to vector<24x128xf32>
    %542 = arith.addf %540, %541 : vector<24x128xf32>
    %543 = arith.negf %542 : vector<24x128xf32>
    %544 = math.exp %543 : vector<24x128xf32>
    %cst_100 = arith.constant 1.000000e+00 : f32
    %545 = vector.broadcast %cst_100 : f32 to vector<24x128xf32>
    %546 = arith.addf %545, %544 : vector<24x128xf32>
    %547 = arith.divf %545, %546 : vector<24x128xf32>
    %548 = vector.extract_strided_slice %537 {offsets = [0, 128], sizes = [24, 128], strides = [1, 1]} : vector<24x384xf32> to vector<24x128xf32>
    %549 = vector.extract_strided_slice %539 {offsets = [0, 128], sizes = [24, 128], strides = [1, 1]} : vector<24x384xf32> to vector<24x128xf32>
    %550 = arith.addf %548, %549 : vector<24x128xf32>
    %551 = arith.negf %550 : vector<24x128xf32>
    %552 = math.exp %551 : vector<24x128xf32>
    %cst_101 = arith.constant 1.000000e+00 : f32
    %553 = vector.broadcast %cst_101 : f32 to vector<24x128xf32>
    %554 = arith.addf %553, %552 : vector<24x128xf32>
    %555 = arith.divf %553, %554 : vector<24x128xf32>
    %556 = vector.extract_strided_slice %537 {offsets = [0, 256], sizes = [24, 128], strides = [1, 1]} : vector<24x384xf32> to vector<24x128xf32>
    %557 = vector.extract_strided_slice %539 {offsets = [0, 256], sizes = [24, 128], strides = [1, 1]} : vector<24x384xf32> to vector<24x128xf32>
    %558 = vector.broadcast %8 : vector<1x128xf32> to vector<24x128xf32>
    %559 = arith.addf %557, %558 : vector<24x128xf32>
    %560 = arith.mulf %547, %559 : vector<24x128xf32>
    %561 = arith.addf %556, %560 : vector<24x128xf32>
    %562 = math.tanh %561 : vector<24x128xf32>
    %cst_102 = arith.constant 1.000000e+00 : f32
    %563 = vector.broadcast %cst_102 : f32 to vector<24x128xf32>
    %564 = arith.subf %563, %555 : vector<24x128xf32>
    %565 = arith.mulf %564, %562 : vector<24x128xf32>
    %566 = arith.mulf %555, %536 : vector<24x128xf32>
    %567 = arith.addf %565, %566 : vector<24x128xf32>
    %c432 = arith.constant 432 : index
    %c0_103 = arith.constant 0 : index
    %568 = vector.load %arg6[%c432, %c0_103] : memref<864x384xf32, #tpu.memory_space<vmem>>, vector<24x384xf32>
    %569 = arith.truncf %567 : vector<24x128xf32> to vector<24x128xbf16>
    %cst_104 = arith.constant dense<0.000000e+00> : vector<24x384xf32>
    %570 = tpu.matmul %569, %7, %cst_104 {dimension_numbers = #tpu.dot_dimension_numbers<[1], [0], [0], [1], [0, 0, 1, 1], [], []>} : vector<24x128xbf16>, vector<128x384xbf16>, vector<24x384xf32> -> vector<24x384xf32>
    %571 = vector.extract_strided_slice %568 {offsets = [0, 0], sizes = [24, 128], strides = [1, 1]} : vector<24x384xf32> to vector<24x128xf32>
    %572 = vector.extract_strided_slice %570 {offsets = [0, 0], sizes = [24, 128], strides = [1, 1]} : vector<24x384xf32> to vector<24x128xf32>
    %573 = arith.addf %571, %572 : vector<24x128xf32>
    %574 = arith.negf %573 : vector<24x128xf32>
    %575 = math.exp %574 : vector<24x128xf32>
    %cst_105 = arith.constant 1.000000e+00 : f32
    %576 = vector.broadcast %cst_105 : f32 to vector<24x128xf32>
    %577 = arith.addf %576, %575 : vector<24x128xf32>
    %578 = arith.divf %576, %577 : vector<24x128xf32>
    %579 = vector.extract_strided_slice %568 {offsets = [0, 128], sizes = [24, 128], strides = [1, 1]} : vector<24x384xf32> to vector<24x128xf32>
    %580 = vector.extract_strided_slice %570 {offsets = [0, 128], sizes = [24, 128], strides = [1, 1]} : vector<24x384xf32> to vector<24x128xf32>
    %581 = arith.addf %579, %580 : vector<24x128xf32>
    %582 = arith.negf %581 : vector<24x128xf32>
    %583 = math.exp %582 : vector<24x128xf32>
    %cst_106 = arith.constant 1.000000e+00 : f32
    %584 = vector.broadcast %cst_106 : f32 to vector<24x128xf32>
    %585 = arith.addf %584, %583 : vector<24x128xf32>
    %586 = arith.divf %584, %585 : vector<24x128xf32>
    %587 = vector.extract_strided_slice %568 {offsets = [0, 256], sizes = [24, 128], strides = [1, 1]} : vector<24x384xf32> to vector<24x128xf32>
    %588 = vector.extract_strided_slice %570 {offsets = [0, 256], sizes = [24, 128], strides = [1, 1]} : vector<24x384xf32> to vector<24x128xf32>
    %589 = vector.broadcast %8 : vector<1x128xf32> to vector<24x128xf32>
    %590 = arith.addf %588, %589 : vector<24x128xf32>
    %591 = arith.mulf %578, %590 : vector<24x128xf32>
    %592 = arith.addf %587, %591 : vector<24x128xf32>
    %593 = math.tanh %592 : vector<24x128xf32>
    %cst_107 = arith.constant 1.000000e+00 : f32
    %594 = vector.broadcast %cst_107 : f32 to vector<24x128xf32>
    %595 = arith.subf %594, %586 : vector<24x128xf32>
    %596 = arith.mulf %595, %593 : vector<24x128xf32>
    %597 = arith.mulf %586, %567 : vector<24x128xf32>
    %598 = arith.addf %596, %597 : vector<24x128xf32>
    %c456 = arith.constant 456 : index
    %c0_108 = arith.constant 0 : index
    %599 = vector.load %arg6[%c456, %c0_108] : memref<864x384xf32, #tpu.memory_space<vmem>>, vector<24x384xf32>
    %600 = arith.truncf %598 : vector<24x128xf32> to vector<24x128xbf16>
    %cst_109 = arith.constant dense<0.000000e+00> : vector<24x384xf32>
    %601 = tpu.matmul %600, %7, %cst_109 {dimension_numbers = #tpu.dot_dimension_numbers<[1], [0], [0], [1], [0, 0, 1, 1], [], []>} : vector<24x128xbf16>, vector<128x384xbf16>, vector<24x384xf32> -> vector<24x384xf32>
    %602 = vector.extract_strided_slice %599 {offsets = [0, 0], sizes = [24, 128], strides = [1, 1]} : vector<24x384xf32> to vector<24x128xf32>
    %603 = vector.extract_strided_slice %601 {offsets = [0, 0], sizes = [24, 128], strides = [1, 1]} : vector<24x384xf32> to vector<24x128xf32>
    %604 = arith.addf %602, %603 : vector<24x128xf32>
    %605 = arith.negf %604 : vector<24x128xf32>
    %606 = math.exp %605 : vector<24x128xf32>
    %cst_110 = arith.constant 1.000000e+00 : f32
    %607 = vector.broadcast %cst_110 : f32 to vector<24x128xf32>
    %608 = arith.addf %607, %606 : vector<24x128xf32>
    %609 = arith.divf %607, %608 : vector<24x128xf32>
    %610 = vector.extract_strided_slice %599 {offsets = [0, 128], sizes = [24, 128], strides = [1, 1]} : vector<24x384xf32> to vector<24x128xf32>
    %611 = vector.extract_strided_slice %601 {offsets = [0, 128], sizes = [24, 128], strides = [1, 1]} : vector<24x384xf32> to vector<24x128xf32>
    %612 = arith.addf %610, %611 : vector<24x128xf32>
    %613 = arith.negf %612 : vector<24x128xf32>
    %614 = math.exp %613 : vector<24x128xf32>
    %cst_111 = arith.constant 1.000000e+00 : f32
    %615 = vector.broadcast %cst_111 : f32 to vector<24x128xf32>
    %616 = arith.addf %615, %614 : vector<24x128xf32>
    %617 = arith.divf %615, %616 : vector<24x128xf32>
    %618 = vector.extract_strided_slice %599 {offsets = [0, 256], sizes = [24, 128], strides = [1, 1]} : vector<24x384xf32> to vector<24x128xf32>
    %619 = vector.extract_strided_slice %601 {offsets = [0, 256], sizes = [24, 128], strides = [1, 1]} : vector<24x384xf32> to vector<24x128xf32>
    %620 = vector.broadcast %8 : vector<1x128xf32> to vector<24x128xf32>
    %621 = arith.addf %619, %620 : vector<24x128xf32>
    %622 = arith.mulf %609, %621 : vector<24x128xf32>
    %623 = arith.addf %618, %622 : vector<24x128xf32>
    %624 = math.tanh %623 : vector<24x128xf32>
    %cst_112 = arith.constant 1.000000e+00 : f32
    %625 = vector.broadcast %cst_112 : f32 to vector<24x128xf32>
    %626 = arith.subf %625, %617 : vector<24x128xf32>
    %627 = arith.mulf %626, %624 : vector<24x128xf32>
    %628 = arith.mulf %617, %598 : vector<24x128xf32>
    %629 = arith.addf %627, %628 : vector<24x128xf32>
    %c480 = arith.constant 480 : index
    %c0_113 = arith.constant 0 : index
    %630 = vector.load %arg6[%c480, %c0_113] : memref<864x384xf32, #tpu.memory_space<vmem>>, vector<24x384xf32>
    %631 = arith.truncf %629 : vector<24x128xf32> to vector<24x128xbf16>
    %cst_114 = arith.constant dense<0.000000e+00> : vector<24x384xf32>
    %632 = tpu.matmul %631, %7, %cst_114 {dimension_numbers = #tpu.dot_dimension_numbers<[1], [0], [0], [1], [0, 0, 1, 1], [], []>} : vector<24x128xbf16>, vector<128x384xbf16>, vector<24x384xf32> -> vector<24x384xf32>
    %633 = vector.extract_strided_slice %630 {offsets = [0, 0], sizes = [24, 128], strides = [1, 1]} : vector<24x384xf32> to vector<24x128xf32>
    %634 = vector.extract_strided_slice %632 {offsets = [0, 0], sizes = [24, 128], strides = [1, 1]} : vector<24x384xf32> to vector<24x128xf32>
    %635 = arith.addf %633, %634 : vector<24x128xf32>
    %636 = arith.negf %635 : vector<24x128xf32>
    %637 = math.exp %636 : vector<24x128xf32>
    %cst_115 = arith.constant 1.000000e+00 : f32
    %638 = vector.broadcast %cst_115 : f32 to vector<24x128xf32>
    %639 = arith.addf %638, %637 : vector<24x128xf32>
    %640 = arith.divf %638, %639 : vector<24x128xf32>
    %641 = vector.extract_strided_slice %630 {offsets = [0, 128], sizes = [24, 128], strides = [1, 1]} : vector<24x384xf32> to vector<24x128xf32>
    %642 = vector.extract_strided_slice %632 {offsets = [0, 128], sizes = [24, 128], strides = [1, 1]} : vector<24x384xf32> to vector<24x128xf32>
    %643 = arith.addf %641, %642 : vector<24x128xf32>
    %644 = arith.negf %643 : vector<24x128xf32>
    %645 = math.exp %644 : vector<24x128xf32>
    %cst_116 = arith.constant 1.000000e+00 : f32
    %646 = vector.broadcast %cst_116 : f32 to vector<24x128xf32>
    %647 = arith.addf %646, %645 : vector<24x128xf32>
    %648 = arith.divf %646, %647 : vector<24x128xf32>
    %649 = vector.extract_strided_slice %630 {offsets = [0, 256], sizes = [24, 128], strides = [1, 1]} : vector<24x384xf32> to vector<24x128xf32>
    %650 = vector.extract_strided_slice %632 {offsets = [0, 256], sizes = [24, 128], strides = [1, 1]} : vector<24x384xf32> to vector<24x128xf32>
    %651 = vector.broadcast %8 : vector<1x128xf32> to vector<24x128xf32>
    %652 = arith.addf %650, %651 : vector<24x128xf32>
    %653 = arith.mulf %640, %652 : vector<24x128xf32>
    %654 = arith.addf %649, %653 : vector<24x128xf32>
    %655 = math.tanh %654 : vector<24x128xf32>
    %cst_117 = arith.constant 1.000000e+00 : f32
    %656 = vector.broadcast %cst_117 : f32 to vector<24x128xf32>
    %657 = arith.subf %656, %648 : vector<24x128xf32>
    %658 = arith.mulf %657, %655 : vector<24x128xf32>
    %659 = arith.mulf %648, %629 : vector<24x128xf32>
    %660 = arith.addf %658, %659 : vector<24x128xf32>
    %c504 = arith.constant 504 : index
    %c0_118 = arith.constant 0 : index
    %661 = vector.load %arg6[%c504, %c0_118] : memref<864x384xf32, #tpu.memory_space<vmem>>, vector<24x384xf32>
    %662 = arith.truncf %660 : vector<24x128xf32> to vector<24x128xbf16>
    %cst_119 = arith.constant dense<0.000000e+00> : vector<24x384xf32>
    %663 = tpu.matmul %662, %7, %cst_119 {dimension_numbers = #tpu.dot_dimension_numbers<[1], [0], [0], [1], [0, 0, 1, 1], [], []>} : vector<24x128xbf16>, vector<128x384xbf16>, vector<24x384xf32> -> vector<24x384xf32>
    %664 = vector.extract_strided_slice %661 {offsets = [0, 0], sizes = [24, 128], strides = [1, 1]} : vector<24x384xf32> to vector<24x128xf32>
    %665 = vector.extract_strided_slice %663 {offsets = [0, 0], sizes = [24, 128], strides = [1, 1]} : vector<24x384xf32> to vector<24x128xf32>
    %666 = arith.addf %664, %665 : vector<24x128xf32>
    %667 = arith.negf %666 : vector<24x128xf32>
    %668 = math.exp %667 : vector<24x128xf32>
    %cst_120 = arith.constant 1.000000e+00 : f32
    %669 = vector.broadcast %cst_120 : f32 to vector<24x128xf32>
    %670 = arith.addf %669, %668 : vector<24x128xf32>
    %671 = arith.divf %669, %670 : vector<24x128xf32>
    %672 = vector.extract_strided_slice %661 {offsets = [0, 128], sizes = [24, 128], strides = [1, 1]} : vector<24x384xf32> to vector<24x128xf32>
    %673 = vector.extract_strided_slice %663 {offsets = [0, 128], sizes = [24, 128], strides = [1, 1]} : vector<24x384xf32> to vector<24x128xf32>
    %674 = arith.addf %672, %673 : vector<24x128xf32>
    %675 = arith.negf %674 : vector<24x128xf32>
    %676 = math.exp %675 : vector<24x128xf32>
    %cst_121 = arith.constant 1.000000e+00 : f32
    %677 = vector.broadcast %cst_121 : f32 to vector<24x128xf32>
    %678 = arith.addf %677, %676 : vector<24x128xf32>
    %679 = arith.divf %677, %678 : vector<24x128xf32>
    %680 = vector.extract_strided_slice %661 {offsets = [0, 256], sizes = [24, 128], strides = [1, 1]} : vector<24x384xf32> to vector<24x128xf32>
    %681 = vector.extract_strided_slice %663 {offsets = [0, 256], sizes = [24, 128], strides = [1, 1]} : vector<24x384xf32> to vector<24x128xf32>
    %682 = vector.broadcast %8 : vector<1x128xf32> to vector<24x128xf32>
    %683 = arith.addf %681, %682 : vector<24x128xf32>
    %684 = arith.mulf %671, %683 : vector<24x128xf32>
    %685 = arith.addf %680, %684 : vector<24x128xf32>
    %686 = math.tanh %685 : vector<24x128xf32>
    %cst_122 = arith.constant 1.000000e+00 : f32
    %687 = vector.broadcast %cst_122 : f32 to vector<24x128xf32>
    %688 = arith.subf %687, %679 : vector<24x128xf32>
    %689 = arith.mulf %688, %686 : vector<24x128xf32>
    %690 = arith.mulf %679, %660 : vector<24x128xf32>
    %691 = arith.addf %689, %690 : vector<24x128xf32>
    %c528 = arith.constant 528 : index
    %c0_123 = arith.constant 0 : index
    %692 = vector.load %arg6[%c528, %c0_123] : memref<864x384xf32, #tpu.memory_space<vmem>>, vector<24x384xf32>
    %693 = arith.truncf %691 : vector<24x128xf32> to vector<24x128xbf16>
    %cst_124 = arith.constant dense<0.000000e+00> : vector<24x384xf32>
    %694 = tpu.matmul %693, %7, %cst_124 {dimension_numbers = #tpu.dot_dimension_numbers<[1], [0], [0], [1], [0, 0, 1, 1], [], []>} : vector<24x128xbf16>, vector<128x384xbf16>, vector<24x384xf32> -> vector<24x384xf32>
    %695 = vector.extract_strided_slice %692 {offsets = [0, 0], sizes = [24, 128], strides = [1, 1]} : vector<24x384xf32> to vector<24x128xf32>
    %696 = vector.extract_strided_slice %694 {offsets = [0, 0], sizes = [24, 128], strides = [1, 1]} : vector<24x384xf32> to vector<24x128xf32>
    %697 = arith.addf %695, %696 : vector<24x128xf32>
    %698 = arith.negf %697 : vector<24x128xf32>
    %699 = math.exp %698 : vector<24x128xf32>
    %cst_125 = arith.constant 1.000000e+00 : f32
    %700 = vector.broadcast %cst_125 : f32 to vector<24x128xf32>
    %701 = arith.addf %700, %699 : vector<24x128xf32>
    %702 = arith.divf %700, %701 : vector<24x128xf32>
    %703 = vector.extract_strided_slice %692 {offsets = [0, 128], sizes = [24, 128], strides = [1, 1]} : vector<24x384xf32> to vector<24x128xf32>
    %704 = vector.extract_strided_slice %694 {offsets = [0, 128], sizes = [24, 128], strides = [1, 1]} : vector<24x384xf32> to vector<24x128xf32>
    %705 = arith.addf %703, %704 : vector<24x128xf32>
    %706 = arith.negf %705 : vector<24x128xf32>
    %707 = math.exp %706 : vector<24x128xf32>
    %cst_126 = arith.constant 1.000000e+00 : f32
    %708 = vector.broadcast %cst_126 : f32 to vector<24x128xf32>
    %709 = arith.addf %708, %707 : vector<24x128xf32>
    %710 = arith.divf %708, %709 : vector<24x128xf32>
    %711 = vector.extract_strided_slice %692 {offsets = [0, 256], sizes = [24, 128], strides = [1, 1]} : vector<24x384xf32> to vector<24x128xf32>
    %712 = vector.extract_strided_slice %694 {offsets = [0, 256], sizes = [24, 128], strides = [1, 1]} : vector<24x384xf32> to vector<24x128xf32>
    %713 = vector.broadcast %8 : vector<1x128xf32> to vector<24x128xf32>
    %714 = arith.addf %712, %713 : vector<24x128xf32>
    %715 = arith.mulf %702, %714 : vector<24x128xf32>
    %716 = arith.addf %711, %715 : vector<24x128xf32>
    %717 = math.tanh %716 : vector<24x128xf32>
    %cst_127 = arith.constant 1.000000e+00 : f32
    %718 = vector.broadcast %cst_127 : f32 to vector<24x128xf32>
    %719 = arith.subf %718, %710 : vector<24x128xf32>
    %720 = arith.mulf %719, %717 : vector<24x128xf32>
    %721 = arith.mulf %710, %691 : vector<24x128xf32>
    %722 = arith.addf %720, %721 : vector<24x128xf32>
    %c552 = arith.constant 552 : index
    %c0_128 = arith.constant 0 : index
    %723 = vector.load %arg6[%c552, %c0_128] : memref<864x384xf32, #tpu.memory_space<vmem>>, vector<24x384xf32>
    %724 = arith.truncf %722 : vector<24x128xf32> to vector<24x128xbf16>
    %cst_129 = arith.constant dense<0.000000e+00> : vector<24x384xf32>
    %725 = tpu.matmul %724, %7, %cst_129 {dimension_numbers = #tpu.dot_dimension_numbers<[1], [0], [0], [1], [0, 0, 1, 1], [], []>} : vector<24x128xbf16>, vector<128x384xbf16>, vector<24x384xf32> -> vector<24x384xf32>
    %726 = vector.extract_strided_slice %723 {offsets = [0, 0], sizes = [24, 128], strides = [1, 1]} : vector<24x384xf32> to vector<24x128xf32>
    %727 = vector.extract_strided_slice %725 {offsets = [0, 0], sizes = [24, 128], strides = [1, 1]} : vector<24x384xf32> to vector<24x128xf32>
    %728 = arith.addf %726, %727 : vector<24x128xf32>
    %729 = arith.negf %728 : vector<24x128xf32>
    %730 = math.exp %729 : vector<24x128xf32>
    %cst_130 = arith.constant 1.000000e+00 : f32
    %731 = vector.broadcast %cst_130 : f32 to vector<24x128xf32>
    %732 = arith.addf %731, %730 : vector<24x128xf32>
    %733 = arith.divf %731, %732 : vector<24x128xf32>
    %734 = vector.extract_strided_slice %723 {offsets = [0, 128], sizes = [24, 128], strides = [1, 1]} : vector<24x384xf32> to vector<24x128xf32>
    %735 = vector.extract_strided_slice %725 {offsets = [0, 128], sizes = [24, 128], strides = [1, 1]} : vector<24x384xf32> to vector<24x128xf32>
    %736 = arith.addf %734, %735 : vector<24x128xf32>
    %737 = arith.negf %736 : vector<24x128xf32>
    %738 = math.exp %737 : vector<24x128xf32>
    %cst_131 = arith.constant 1.000000e+00 : f32
    %739 = vector.broadcast %cst_131 : f32 to vector<24x128xf32>
    %740 = arith.addf %739, %738 : vector<24x128xf32>
    %741 = arith.divf %739, %740 : vector<24x128xf32>
    %742 = vector.extract_strided_slice %723 {offsets = [0, 256], sizes = [24, 128], strides = [1, 1]} : vector<24x384xf32> to vector<24x128xf32>
    %743 = vector.extract_strided_slice %725 {offsets = [0, 256], sizes = [24, 128], strides = [1, 1]} : vector<24x384xf32> to vector<24x128xf32>
    %744 = vector.broadcast %8 : vector<1x128xf32> to vector<24x128xf32>
    %745 = arith.addf %743, %744 : vector<24x128xf32>
    %746 = arith.mulf %733, %745 : vector<24x128xf32>
    %747 = arith.addf %742, %746 : vector<24x128xf32>
    %748 = math.tanh %747 : vector<24x128xf32>
    %cst_132 = arith.constant 1.000000e+00 : f32
    %749 = vector.broadcast %cst_132 : f32 to vector<24x128xf32>
    %750 = arith.subf %749, %741 : vector<24x128xf32>
    %751 = arith.mulf %750, %748 : vector<24x128xf32>
    %752 = arith.mulf %741, %722 : vector<24x128xf32>
    %753 = arith.addf %751, %752 : vector<24x128xf32>
    %c576 = arith.constant 576 : index
    %c0_133 = arith.constant 0 : index
    %754 = vector.load %arg6[%c576, %c0_133] : memref<864x384xf32, #tpu.memory_space<vmem>>, vector<24x384xf32>
    %755 = arith.truncf %753 : vector<24x128xf32> to vector<24x128xbf16>
    %cst_134 = arith.constant dense<0.000000e+00> : vector<24x384xf32>
    %756 = tpu.matmul %755, %7, %cst_134 {dimension_numbers = #tpu.dot_dimension_numbers<[1], [0], [0], [1], [0, 0, 1, 1], [], []>} : vector<24x128xbf16>, vector<128x384xbf16>, vector<24x384xf32> -> vector<24x384xf32>
    %757 = vector.extract_strided_slice %754 {offsets = [0, 0], sizes = [24, 128], strides = [1, 1]} : vector<24x384xf32> to vector<24x128xf32>
    %758 = vector.extract_strided_slice %756 {offsets = [0, 0], sizes = [24, 128], strides = [1, 1]} : vector<24x384xf32> to vector<24x128xf32>
    %759 = arith.addf %757, %758 : vector<24x128xf32>
    %760 = arith.negf %759 : vector<24x128xf32>
    %761 = math.exp %760 : vector<24x128xf32>
    %cst_135 = arith.constant 1.000000e+00 : f32
    %762 = vector.broadcast %cst_135 : f32 to vector<24x128xf32>
    %763 = arith.addf %762, %761 : vector<24x128xf32>
    %764 = arith.divf %762, %763 : vector<24x128xf32>
    %765 = vector.extract_strided_slice %754 {offsets = [0, 128], sizes = [24, 128], strides = [1, 1]} : vector<24x384xf32> to vector<24x128xf32>
    %766 = vector.extract_strided_slice %756 {offsets = [0, 128], sizes = [24, 128], strides = [1, 1]} : vector<24x384xf32> to vector<24x128xf32>
    %767 = arith.addf %765, %766 : vector<24x128xf32>
    %768 = arith.negf %767 : vector<24x128xf32>
    %769 = math.exp %768 : vector<24x128xf32>
    %cst_136 = arith.constant 1.000000e+00 : f32
    %770 = vector.broadcast %cst_136 : f32 to vector<24x128xf32>
    %771 = arith.addf %770, %769 : vector<24x128xf32>
    %772 = arith.divf %770, %771 : vector<24x128xf32>
    %773 = vector.extract_strided_slice %754 {offsets = [0, 256], sizes = [24, 128], strides = [1, 1]} : vector<24x384xf32> to vector<24x128xf32>
    %774 = vector.extract_strided_slice %756 {offsets = [0, 256], sizes = [24, 128], strides = [1, 1]} : vector<24x384xf32> to vector<24x128xf32>
    %775 = vector.broadcast %8 : vector<1x128xf32> to vector<24x128xf32>
    %776 = arith.addf %774, %775 : vector<24x128xf32>
    %777 = arith.mulf %764, %776 : vector<24x128xf32>
    %778 = arith.addf %773, %777 : vector<24x128xf32>
    %779 = math.tanh %778 : vector<24x128xf32>
    %cst_137 = arith.constant 1.000000e+00 : f32
    %780 = vector.broadcast %cst_137 : f32 to vector<24x128xf32>
    %781 = arith.subf %780, %772 : vector<24x128xf32>
    %782 = arith.mulf %781, %779 : vector<24x128xf32>
    %783 = arith.mulf %772, %753 : vector<24x128xf32>
    %784 = arith.addf %782, %783 : vector<24x128xf32>
    %c600 = arith.constant 600 : index
    %c0_138 = arith.constant 0 : index
    %785 = vector.load %arg6[%c600, %c0_138] : memref<864x384xf32, #tpu.memory_space<vmem>>, vector<24x384xf32>
    %786 = arith.truncf %784 : vector<24x128xf32> to vector<24x128xbf16>
    %cst_139 = arith.constant dense<0.000000e+00> : vector<24x384xf32>
    %787 = tpu.matmul %786, %7, %cst_139 {dimension_numbers = #tpu.dot_dimension_numbers<[1], [0], [0], [1], [0, 0, 1, 1], [], []>} : vector<24x128xbf16>, vector<128x384xbf16>, vector<24x384xf32> -> vector<24x384xf32>
    %788 = vector.extract_strided_slice %785 {offsets = [0, 0], sizes = [24, 128], strides = [1, 1]} : vector<24x384xf32> to vector<24x128xf32>
    %789 = vector.extract_strided_slice %787 {offsets = [0, 0], sizes = [24, 128], strides = [1, 1]} : vector<24x384xf32> to vector<24x128xf32>
    %790 = arith.addf %788, %789 : vector<24x128xf32>
    %791 = arith.negf %790 : vector<24x128xf32>
    %792 = math.exp %791 : vector<24x128xf32>
    %cst_140 = arith.constant 1.000000e+00 : f32
    %793 = vector.broadcast %cst_140 : f32 to vector<24x128xf32>
    %794 = arith.addf %793, %792 : vector<24x128xf32>
    %795 = arith.divf %793, %794 : vector<24x128xf32>
    %796 = vector.extract_strided_slice %785 {offsets = [0, 128], sizes = [24, 128], strides = [1, 1]} : vector<24x384xf32> to vector<24x128xf32>
    %797 = vector.extract_strided_slice %787 {offsets = [0, 128], sizes = [24, 128], strides = [1, 1]} : vector<24x384xf32> to vector<24x128xf32>
    %798 = arith.addf %796, %797 : vector<24x128xf32>
    %799 = arith.negf %798 : vector<24x128xf32>
    %800 = math.exp %799 : vector<24x128xf32>
    %cst_141 = arith.constant 1.000000e+00 : f32
    %801 = vector.broadcast %cst_141 : f32 to vector<24x128xf32>
    %802 = arith.addf %801, %800 : vector<24x128xf32>
    %803 = arith.divf %801, %802 : vector<24x128xf32>
    %804 = vector.extract_strided_slice %785 {offsets = [0, 256], sizes = [24, 128], strides = [1, 1]} : vector<24x384xf32> to vector<24x128xf32>
    %805 = vector.extract_strided_slice %787 {offsets = [0, 256], sizes = [24, 128], strides = [1, 1]} : vector<24x384xf32> to vector<24x128xf32>
    %806 = vector.broadcast %8 : vector<1x128xf32> to vector<24x128xf32>
    %807 = arith.addf %805, %806 : vector<24x128xf32>
    %808 = arith.mulf %795, %807 : vector<24x128xf32>
    %809 = arith.addf %804, %808 : vector<24x128xf32>
    %810 = math.tanh %809 : vector<24x128xf32>
    %cst_142 = arith.constant 1.000000e+00 : f32
    %811 = vector.broadcast %cst_142 : f32 to vector<24x128xf32>
    %812 = arith.subf %811, %803 : vector<24x128xf32>
    %813 = arith.mulf %812, %810 : vector<24x128xf32>
    %814 = arith.mulf %803, %784 : vector<24x128xf32>
    %815 = arith.addf %813, %814 : vector<24x128xf32>
    %c624 = arith.constant 624 : index
    %c0_143 = arith.constant 0 : index
    %816 = vector.load %arg6[%c624, %c0_143] : memref<864x384xf32, #tpu.memory_space<vmem>>, vector<24x384xf32>
    %817 = arith.truncf %815 : vector<24x128xf32> to vector<24x128xbf16>
    %cst_144 = arith.constant dense<0.000000e+00> : vector<24x384xf32>
    %818 = tpu.matmul %817, %7, %cst_144 {dimension_numbers = #tpu.dot_dimension_numbers<[1], [0], [0], [1], [0, 0, 1, 1], [], []>} : vector<24x128xbf16>, vector<128x384xbf16>, vector<24x384xf32> -> vector<24x384xf32>
    %819 = vector.extract_strided_slice %816 {offsets = [0, 0], sizes = [24, 128], strides = [1, 1]} : vector<24x384xf32> to vector<24x128xf32>
    %820 = vector.extract_strided_slice %818 {offsets = [0, 0], sizes = [24, 128], strides = [1, 1]} : vector<24x384xf32> to vector<24x128xf32>
    %821 = arith.addf %819, %820 : vector<24x128xf32>
    %822 = arith.negf %821 : vector<24x128xf32>
    %823 = math.exp %822 : vector<24x128xf32>
    %cst_145 = arith.constant 1.000000e+00 : f32
    %824 = vector.broadcast %cst_145 : f32 to vector<24x128xf32>
    %825 = arith.addf %824, %823 : vector<24x128xf32>
    %826 = arith.divf %824, %825 : vector<24x128xf32>
    %827 = vector.extract_strided_slice %816 {offsets = [0, 128], sizes = [24, 128], strides = [1, 1]} : vector<24x384xf32> to vector<24x128xf32>
    %828 = vector.extract_strided_slice %818 {offsets = [0, 128], sizes = [24, 128], strides = [1, 1]} : vector<24x384xf32> to vector<24x128xf32>
    %829 = arith.addf %827, %828 : vector<24x128xf32>
    %830 = arith.negf %829 : vector<24x128xf32>
    %831 = math.exp %830 : vector<24x128xf32>
    %cst_146 = arith.constant 1.000000e+00 : f32
    %832 = vector.broadcast %cst_146 : f32 to vector<24x128xf32>
    %833 = arith.addf %832, %831 : vector<24x128xf32>
    %834 = arith.divf %832, %833 : vector<24x128xf32>
    %835 = vector.extract_strided_slice %816 {offsets = [0, 256], sizes = [24, 128], strides = [1, 1]} : vector<24x384xf32> to vector<24x128xf32>
    %836 = vector.extract_strided_slice %818 {offsets = [0, 256], sizes = [24, 128], strides = [1, 1]} : vector<24x384xf32> to vector<24x128xf32>
    %837 = vector.broadcast %8 : vector<1x128xf32> to vector<24x128xf32>
    %838 = arith.addf %836, %837 : vector<24x128xf32>
    %839 = arith.mulf %826, %838 : vector<24x128xf32>
    %840 = arith.addf %835, %839 : vector<24x128xf32>
    %841 = math.tanh %840 : vector<24x128xf32>
    %cst_147 = arith.constant 1.000000e+00 : f32
    %842 = vector.broadcast %cst_147 : f32 to vector<24x128xf32>
    %843 = arith.subf %842, %834 : vector<24x128xf32>
    %844 = arith.mulf %843, %841 : vector<24x128xf32>
    %845 = arith.mulf %834, %815 : vector<24x128xf32>
    %846 = arith.addf %844, %845 : vector<24x128xf32>
    %c648 = arith.constant 648 : index
    %c0_148 = arith.constant 0 : index
    %847 = vector.load %arg6[%c648, %c0_148] : memref<864x384xf32, #tpu.memory_space<vmem>>, vector<24x384xf32>
    %848 = arith.truncf %846 : vector<24x128xf32> to vector<24x128xbf16>
    %cst_149 = arith.constant dense<0.000000e+00> : vector<24x384xf32>
    %849 = tpu.matmul %848, %7, %cst_149 {dimension_numbers = #tpu.dot_dimension_numbers<[1], [0], [0], [1], [0, 0, 1, 1], [], []>} : vector<24x128xbf16>, vector<128x384xbf16>, vector<24x384xf32> -> vector<24x384xf32>
    %850 = vector.extract_strided_slice %847 {offsets = [0, 0], sizes = [24, 128], strides = [1, 1]} : vector<24x384xf32> to vector<24x128xf32>
    %851 = vector.extract_strided_slice %849 {offsets = [0, 0], sizes = [24, 128], strides = [1, 1]} : vector<24x384xf32> to vector<24x128xf32>
    %852 = arith.addf %850, %851 : vector<24x128xf32>
    %853 = arith.negf %852 : vector<24x128xf32>
    %854 = math.exp %853 : vector<24x128xf32>
    %cst_150 = arith.constant 1.000000e+00 : f32
    %855 = vector.broadcast %cst_150 : f32 to vector<24x128xf32>
    %856 = arith.addf %855, %854 : vector<24x128xf32>
    %857 = arith.divf %855, %856 : vector<24x128xf32>
    %858 = vector.extract_strided_slice %847 {offsets = [0, 128], sizes = [24, 128], strides = [1, 1]} : vector<24x384xf32> to vector<24x128xf32>
    %859 = vector.extract_strided_slice %849 {offsets = [0, 128], sizes = [24, 128], strides = [1, 1]} : vector<24x384xf32> to vector<24x128xf32>
    %860 = arith.addf %858, %859 : vector<24x128xf32>
    %861 = arith.negf %860 : vector<24x128xf32>
    %862 = math.exp %861 : vector<24x128xf32>
    %cst_151 = arith.constant 1.000000e+00 : f32
    %863 = vector.broadcast %cst_151 : f32 to vector<24x128xf32>
    %864 = arith.addf %863, %862 : vector<24x128xf32>
    %865 = arith.divf %863, %864 : vector<24x128xf32>
    %866 = vector.extract_strided_slice %847 {offsets = [0, 256], sizes = [24, 128], strides = [1, 1]} : vector<24x384xf32> to vector<24x128xf32>
    %867 = vector.extract_strided_slice %849 {offsets = [0, 256], sizes = [24, 128], strides = [1, 1]} : vector<24x384xf32> to vector<24x128xf32>
    %868 = vector.broadcast %8 : vector<1x128xf32> to vector<24x128xf32>
    %869 = arith.addf %867, %868 : vector<24x128xf32>
    %870 = arith.mulf %857, %869 : vector<24x128xf32>
    %871 = arith.addf %866, %870 : vector<24x128xf32>
    %872 = math.tanh %871 : vector<24x128xf32>
    %cst_152 = arith.constant 1.000000e+00 : f32
    %873 = vector.broadcast %cst_152 : f32 to vector<24x128xf32>
    %874 = arith.subf %873, %865 : vector<24x128xf32>
    %875 = arith.mulf %874, %872 : vector<24x128xf32>
    %876 = arith.mulf %865, %846 : vector<24x128xf32>
    %877 = arith.addf %875, %876 : vector<24x128xf32>
    %c672 = arith.constant 672 : index
    %c0_153 = arith.constant 0 : index
    %878 = vector.load %arg6[%c672, %c0_153] : memref<864x384xf32, #tpu.memory_space<vmem>>, vector<24x384xf32>
    %879 = arith.truncf %877 : vector<24x128xf32> to vector<24x128xbf16>
    %cst_154 = arith.constant dense<0.000000e+00> : vector<24x384xf32>
    %880 = tpu.matmul %879, %7, %cst_154 {dimension_numbers = #tpu.dot_dimension_numbers<[1], [0], [0], [1], [0, 0, 1, 1], [], []>} : vector<24x128xbf16>, vector<128x384xbf16>, vector<24x384xf32> -> vector<24x384xf32>
    %881 = vector.extract_strided_slice %878 {offsets = [0, 0], sizes = [24, 128], strides = [1, 1]} : vector<24x384xf32> to vector<24x128xf32>
    %882 = vector.extract_strided_slice %880 {offsets = [0, 0], sizes = [24, 128], strides = [1, 1]} : vector<24x384xf32> to vector<24x128xf32>
    %883 = arith.addf %881, %882 : vector<24x128xf32>
    %884 = arith.negf %883 : vector<24x128xf32>
    %885 = math.exp %884 : vector<24x128xf32>
    %cst_155 = arith.constant 1.000000e+00 : f32
    %886 = vector.broadcast %cst_155 : f32 to vector<24x128xf32>
    %887 = arith.addf %886, %885 : vector<24x128xf32>
    %888 = arith.divf %886, %887 : vector<24x128xf32>
    %889 = vector.extract_strided_slice %878 {offsets = [0, 128], sizes = [24, 128], strides = [1, 1]} : vector<24x384xf32> to vector<24x128xf32>
    %890 = vector.extract_strided_slice %880 {offsets = [0, 128], sizes = [24, 128], strides = [1, 1]} : vector<24x384xf32> to vector<24x128xf32>
    %891 = arith.addf %889, %890 : vector<24x128xf32>
    %892 = arith.negf %891 : vector<24x128xf32>
    %893 = math.exp %892 : vector<24x128xf32>
    %cst_156 = arith.constant 1.000000e+00 : f32
    %894 = vector.broadcast %cst_156 : f32 to vector<24x128xf32>
    %895 = arith.addf %894, %893 : vector<24x128xf32>
    %896 = arith.divf %894, %895 : vector<24x128xf32>
    %897 = vector.extract_strided_slice %878 {offsets = [0, 256], sizes = [24, 128], strides = [1, 1]} : vector<24x384xf32> to vector<24x128xf32>
    %898 = vector.extract_strided_slice %880 {offsets = [0, 256], sizes = [24, 128], strides = [1, 1]} : vector<24x384xf32> to vector<24x128xf32>
    %899 = vector.broadcast %8 : vector<1x128xf32> to vector<24x128xf32>
    %900 = arith.addf %898, %899 : vector<24x128xf32>
    %901 = arith.mulf %888, %900 : vector<24x128xf32>
    %902 = arith.addf %897, %901 : vector<24x128xf32>
    %903 = math.tanh %902 : vector<24x128xf32>
    %cst_157 = arith.constant 1.000000e+00 : f32
    %904 = vector.broadcast %cst_157 : f32 to vector<24x128xf32>
    %905 = arith.subf %904, %896 : vector<24x128xf32>
    %906 = arith.mulf %905, %903 : vector<24x128xf32>
    %907 = arith.mulf %896, %877 : vector<24x128xf32>
    %908 = arith.addf %906, %907 : vector<24x128xf32>
    %c696 = arith.constant 696 : index
    %c0_158 = arith.constant 0 : index
    %909 = vector.load %arg6[%c696, %c0_158] : memref<864x384xf32, #tpu.memory_space<vmem>>, vector<24x384xf32>
    %910 = arith.truncf %908 : vector<24x128xf32> to vector<24x128xbf16>
    %cst_159 = arith.constant dense<0.000000e+00> : vector<24x384xf32>
    %911 = tpu.matmul %910, %7, %cst_159 {dimension_numbers = #tpu.dot_dimension_numbers<[1], [0], [0], [1], [0, 0, 1, 1], [], []>} : vector<24x128xbf16>, vector<128x384xbf16>, vector<24x384xf32> -> vector<24x384xf32>
    %912 = vector.extract_strided_slice %909 {offsets = [0, 0], sizes = [24, 128], strides = [1, 1]} : vector<24x384xf32> to vector<24x128xf32>
    %913 = vector.extract_strided_slice %911 {offsets = [0, 0], sizes = [24, 128], strides = [1, 1]} : vector<24x384xf32> to vector<24x128xf32>
    %914 = arith.addf %912, %913 : vector<24x128xf32>
    %915 = arith.negf %914 : vector<24x128xf32>
    %916 = math.exp %915 : vector<24x128xf32>
    %cst_160 = arith.constant 1.000000e+00 : f32
    %917 = vector.broadcast %cst_160 : f32 to vector<24x128xf32>
    %918 = arith.addf %917, %916 : vector<24x128xf32>
    %919 = arith.divf %917, %918 : vector<24x128xf32>
    %920 = vector.extract_strided_slice %909 {offsets = [0, 128], sizes = [24, 128], strides = [1, 1]} : vector<24x384xf32> to vector<24x128xf32>
    %921 = vector.extract_strided_slice %911 {offsets = [0, 128], sizes = [24, 128], strides = [1, 1]} : vector<24x384xf32> to vector<24x128xf32>
    %922 = arith.addf %920, %921 : vector<24x128xf32>
    %923 = arith.negf %922 : vector<24x128xf32>
    %924 = math.exp %923 : vector<24x128xf32>
    %cst_161 = arith.constant 1.000000e+00 : f32
    %925 = vector.broadcast %cst_161 : f32 to vector<24x128xf32>
    %926 = arith.addf %925, %924 : vector<24x128xf32>
    %927 = arith.divf %925, %926 : vector<24x128xf32>
    %928 = vector.extract_strided_slice %909 {offsets = [0, 256], sizes = [24, 128], strides = [1, 1]} : vector<24x384xf32> to vector<24x128xf32>
    %929 = vector.extract_strided_slice %911 {offsets = [0, 256], sizes = [24, 128], strides = [1, 1]} : vector<24x384xf32> to vector<24x128xf32>
    %930 = vector.broadcast %8 : vector<1x128xf32> to vector<24x128xf32>
    %931 = arith.addf %929, %930 : vector<24x128xf32>
    %932 = arith.mulf %919, %931 : vector<24x128xf32>
    %933 = arith.addf %928, %932 : vector<24x128xf32>
    %934 = math.tanh %933 : vector<24x128xf32>
    %cst_162 = arith.constant 1.000000e+00 : f32
    %935 = vector.broadcast %cst_162 : f32 to vector<24x128xf32>
    %936 = arith.subf %935, %927 : vector<24x128xf32>
    %937 = arith.mulf %936, %934 : vector<24x128xf32>
    %938 = arith.mulf %927, %908 : vector<24x128xf32>
    %939 = arith.addf %937, %938 : vector<24x128xf32>
    %c720 = arith.constant 720 : index
    %c0_163 = arith.constant 0 : index
    %940 = vector.load %arg6[%c720, %c0_163] : memref<864x384xf32, #tpu.memory_space<vmem>>, vector<24x384xf32>
    %941 = arith.truncf %939 : vector<24x128xf32> to vector<24x128xbf16>
    %cst_164 = arith.constant dense<0.000000e+00> : vector<24x384xf32>
    %942 = tpu.matmul %941, %7, %cst_164 {dimension_numbers = #tpu.dot_dimension_numbers<[1], [0], [0], [1], [0, 0, 1, 1], [], []>} : vector<24x128xbf16>, vector<128x384xbf16>, vector<24x384xf32> -> vector<24x384xf32>
    %943 = vector.extract_strided_slice %940 {offsets = [0, 0], sizes = [24, 128], strides = [1, 1]} : vector<24x384xf32> to vector<24x128xf32>
    %944 = vector.extract_strided_slice %942 {offsets = [0, 0], sizes = [24, 128], strides = [1, 1]} : vector<24x384xf32> to vector<24x128xf32>
    %945 = arith.addf %943, %944 : vector<24x128xf32>
    %946 = arith.negf %945 : vector<24x128xf32>
    %947 = math.exp %946 : vector<24x128xf32>
    %cst_165 = arith.constant 1.000000e+00 : f32
    %948 = vector.broadcast %cst_165 : f32 to vector<24x128xf32>
    %949 = arith.addf %948, %947 : vector<24x128xf32>
    %950 = arith.divf %948, %949 : vector<24x128xf32>
    %951 = vector.extract_strided_slice %940 {offsets = [0, 128], sizes = [24, 128], strides = [1, 1]} : vector<24x384xf32> to vector<24x128xf32>
    %952 = vector.extract_strided_slice %942 {offsets = [0, 128], sizes = [24, 128], strides = [1, 1]} : vector<24x384xf32> to vector<24x128xf32>
    %953 = arith.addf %951, %952 : vector<24x128xf32>
    %954 = arith.negf %953 : vector<24x128xf32>
    %955 = math.exp %954 : vector<24x128xf32>
    %cst_166 = arith.constant 1.000000e+00 : f32
    %956 = vector.broadcast %cst_166 : f32 to vector<24x128xf32>
    %957 = arith.addf %956, %955 : vector<24x128xf32>
    %958 = arith.divf %956, %957 : vector<24x128xf32>
    %959 = vector.extract_strided_slice %940 {offsets = [0, 256], sizes = [24, 128], strides = [1, 1]} : vector<24x384xf32> to vector<24x128xf32>
    %960 = vector.extract_strided_slice %942 {offsets = [0, 256], sizes = [24, 128], strides = [1, 1]} : vector<24x384xf32> to vector<24x128xf32>
    %961 = vector.broadcast %8 : vector<1x128xf32> to vector<24x128xf32>
    %962 = arith.addf %960, %961 : vector<24x128xf32>
    %963 = arith.mulf %950, %962 : vector<24x128xf32>
    %964 = arith.addf %959, %963 : vector<24x128xf32>
    %965 = math.tanh %964 : vector<24x128xf32>
    %cst_167 = arith.constant 1.000000e+00 : f32
    %966 = vector.broadcast %cst_167 : f32 to vector<24x128xf32>
    %967 = arith.subf %966, %958 : vector<24x128xf32>
    %968 = arith.mulf %967, %965 : vector<24x128xf32>
    %969 = arith.mulf %958, %939 : vector<24x128xf32>
    %970 = arith.addf %968, %969 : vector<24x128xf32>
    %c744 = arith.constant 744 : index
    %c0_168 = arith.constant 0 : index
    %971 = vector.load %arg6[%c744, %c0_168] : memref<864x384xf32, #tpu.memory_space<vmem>>, vector<24x384xf32>
    %972 = arith.truncf %970 : vector<24x128xf32> to vector<24x128xbf16>
    %cst_169 = arith.constant dense<0.000000e+00> : vector<24x384xf32>
    %973 = tpu.matmul %972, %7, %cst_169 {dimension_numbers = #tpu.dot_dimension_numbers<[1], [0], [0], [1], [0, 0, 1, 1], [], []>} : vector<24x128xbf16>, vector<128x384xbf16>, vector<24x384xf32> -> vector<24x384xf32>
    %974 = vector.extract_strided_slice %971 {offsets = [0, 0], sizes = [24, 128], strides = [1, 1]} : vector<24x384xf32> to vector<24x128xf32>
    %975 = vector.extract_strided_slice %973 {offsets = [0, 0], sizes = [24, 128], strides = [1, 1]} : vector<24x384xf32> to vector<24x128xf32>
    %976 = arith.addf %974, %975 : vector<24x128xf32>
    %977 = arith.negf %976 : vector<24x128xf32>
    %978 = math.exp %977 : vector<24x128xf32>
    %cst_170 = arith.constant 1.000000e+00 : f32
    %979 = vector.broadcast %cst_170 : f32 to vector<24x128xf32>
    %980 = arith.addf %979, %978 : vector<24x128xf32>
    %981 = arith.divf %979, %980 : vector<24x128xf32>
    %982 = vector.extract_strided_slice %971 {offsets = [0, 128], sizes = [24, 128], strides = [1, 1]} : vector<24x384xf32> to vector<24x128xf32>
    %983 = vector.extract_strided_slice %973 {offsets = [0, 128], sizes = [24, 128], strides = [1, 1]} : vector<24x384xf32> to vector<24x128xf32>
    %984 = arith.addf %982, %983 : vector<24x128xf32>
    %985 = arith.negf %984 : vector<24x128xf32>
    %986 = math.exp %985 : vector<24x128xf32>
    %cst_171 = arith.constant 1.000000e+00 : f32
    %987 = vector.broadcast %cst_171 : f32 to vector<24x128xf32>
    %988 = arith.addf %987, %986 : vector<24x128xf32>
    %989 = arith.divf %987, %988 : vector<24x128xf32>
    %990 = vector.extract_strided_slice %971 {offsets = [0, 256], sizes = [24, 128], strides = [1, 1]} : vector<24x384xf32> to vector<24x128xf32>
    %991 = vector.extract_strided_slice %973 {offsets = [0, 256], sizes = [24, 128], strides = [1, 1]} : vector<24x384xf32> to vector<24x128xf32>
    %992 = vector.broadcast %8 : vector<1x128xf32> to vector<24x128xf32>
    %993 = arith.addf %991, %992 : vector<24x128xf32>
    %994 = arith.mulf %981, %993 : vector<24x128xf32>
    %995 = arith.addf %990, %994 : vector<24x128xf32>
    %996 = math.tanh %995 : vector<24x128xf32>
    %cst_172 = arith.constant 1.000000e+00 : f32
    %997 = vector.broadcast %cst_172 : f32 to vector<24x128xf32>
    %998 = arith.subf %997, %989 : vector<24x128xf32>
    %999 = arith.mulf %998, %996 : vector<24x128xf32>
    %1000 = arith.mulf %989, %970 : vector<24x128xf32>
    %1001 = arith.addf %999, %1000 : vector<24x128xf32>
    %c768 = arith.constant 768 : index
    %c0_173 = arith.constant 0 : index
    %1002 = vector.load %arg6[%c768, %c0_173] : memref<864x384xf32, #tpu.memory_space<vmem>>, vector<24x384xf32>
    %1003 = arith.truncf %1001 : vector<24x128xf32> to vector<24x128xbf16>
    %cst_174 = arith.constant dense<0.000000e+00> : vector<24x384xf32>
    %1004 = tpu.matmul %1003, %7, %cst_174 {dimension_numbers = #tpu.dot_dimension_numbers<[1], [0], [0], [1], [0, 0, 1, 1], [], []>} : vector<24x128xbf16>, vector<128x384xbf16>, vector<24x384xf32> -> vector<24x384xf32>
    %1005 = vector.extract_strided_slice %1002 {offsets = [0, 0], sizes = [24, 128], strides = [1, 1]} : vector<24x384xf32> to vector<24x128xf32>
    %1006 = vector.extract_strided_slice %1004 {offsets = [0, 0], sizes = [24, 128], strides = [1, 1]} : vector<24x384xf32> to vector<24x128xf32>
    %1007 = arith.addf %1005, %1006 : vector<24x128xf32>
    %1008 = arith.negf %1007 : vector<24x128xf32>
    %1009 = math.exp %1008 : vector<24x128xf32>
    %cst_175 = arith.constant 1.000000e+00 : f32
    %1010 = vector.broadcast %cst_175 : f32 to vector<24x128xf32>
    %1011 = arith.addf %1010, %1009 : vector<24x128xf32>
    %1012 = arith.divf %1010, %1011 : vector<24x128xf32>
    %1013 = vector.extract_strided_slice %1002 {offsets = [0, 128], sizes = [24, 128], strides = [1, 1]} : vector<24x384xf32> to vector<24x128xf32>
    %1014 = vector.extract_strided_slice %1004 {offsets = [0, 128], sizes = [24, 128], strides = [1, 1]} : vector<24x384xf32> to vector<24x128xf32>
    %1015 = arith.addf %1013, %1014 : vector<24x128xf32>
    %1016 = arith.negf %1015 : vector<24x128xf32>
    %1017 = math.exp %1016 : vector<24x128xf32>
    %cst_176 = arith.constant 1.000000e+00 : f32
    %1018 = vector.broadcast %cst_176 : f32 to vector<24x128xf32>
    %1019 = arith.addf %1018, %1017 : vector<24x128xf32>
    %1020 = arith.divf %1018, %1019 : vector<24x128xf32>
    %1021 = vector.extract_strided_slice %1002 {offsets = [0, 256], sizes = [24, 128], strides = [1, 1]} : vector<24x384xf32> to vector<24x128xf32>
    %1022 = vector.extract_strided_slice %1004 {offsets = [0, 256], sizes = [24, 128], strides = [1, 1]} : vector<24x384xf32> to vector<24x128xf32>
    %1023 = vector.broadcast %8 : vector<1x128xf32> to vector<24x128xf32>
    %1024 = arith.addf %1022, %1023 : vector<24x128xf32>
    %1025 = arith.mulf %1012, %1024 : vector<24x128xf32>
    %1026 = arith.addf %1021, %1025 : vector<24x128xf32>
    %1027 = math.tanh %1026 : vector<24x128xf32>
    %cst_177 = arith.constant 1.000000e+00 : f32
    %1028 = vector.broadcast %cst_177 : f32 to vector<24x128xf32>
    %1029 = arith.subf %1028, %1020 : vector<24x128xf32>
    %1030 = arith.mulf %1029, %1027 : vector<24x128xf32>
    %1031 = arith.mulf %1020, %1001 : vector<24x128xf32>
    %1032 = arith.addf %1030, %1031 : vector<24x128xf32>
    %c792 = arith.constant 792 : index
    %c0_178 = arith.constant 0 : index
    %1033 = vector.load %arg6[%c792, %c0_178] : memref<864x384xf32, #tpu.memory_space<vmem>>, vector<24x384xf32>
    %1034 = arith.truncf %1032 : vector<24x128xf32> to vector<24x128xbf16>
    %cst_179 = arith.constant dense<0.000000e+00> : vector<24x384xf32>
    %1035 = tpu.matmul %1034, %7, %cst_179 {dimension_numbers = #tpu.dot_dimension_numbers<[1], [0], [0], [1], [0, 0, 1, 1], [], []>} : vector<24x128xbf16>, vector<128x384xbf16>, vector<24x384xf32> -> vector<24x384xf32>
    %1036 = vector.extract_strided_slice %1033 {offsets = [0, 0], sizes = [24, 128], strides = [1, 1]} : vector<24x384xf32> to vector<24x128xf32>
    %1037 = vector.extract_strided_slice %1035 {offsets = [0, 0], sizes = [24, 128], strides = [1, 1]} : vector<24x384xf32> to vector<24x128xf32>
    %1038 = arith.addf %1036, %1037 : vector<24x128xf32>
    %1039 = arith.negf %1038 : vector<24x128xf32>
    %1040 = math.exp %1039 : vector<24x128xf32>
    %cst_180 = arith.constant 1.000000e+00 : f32
    %1041 = vector.broadcast %cst_180 : f32 to vector<24x128xf32>
    %1042 = arith.addf %1041, %1040 : vector<24x128xf32>
    %1043 = arith.divf %1041, %1042 : vector<24x128xf32>
    %1044 = vector.extract_strided_slice %1033 {offsets = [0, 128], sizes = [24, 128], strides = [1, 1]} : vector<24x384xf32> to vector<24x128xf32>
    %1045 = vector.extract_strided_slice %1035 {offsets = [0, 128], sizes = [24, 128], strides = [1, 1]} : vector<24x384xf32> to vector<24x128xf32>
    %1046 = arith.addf %1044, %1045 : vector<24x128xf32>
    %1047 = arith.negf %1046 : vector<24x128xf32>
    %1048 = math.exp %1047 : vector<24x128xf32>
    %cst_181 = arith.constant 1.000000e+00 : f32
    %1049 = vector.broadcast %cst_181 : f32 to vector<24x128xf32>
    %1050 = arith.addf %1049, %1048 : vector<24x128xf32>
    %1051 = arith.divf %1049, %1050 : vector<24x128xf32>
    %1052 = vector.extract_strided_slice %1033 {offsets = [0, 256], sizes = [24, 128], strides = [1, 1]} : vector<24x384xf32> to vector<24x128xf32>
    %1053 = vector.extract_strided_slice %1035 {offsets = [0, 256], sizes = [24, 128], strides = [1, 1]} : vector<24x384xf32> to vector<24x128xf32>
    %1054 = vector.broadcast %8 : vector<1x128xf32> to vector<24x128xf32>
    %1055 = arith.addf %1053, %1054 : vector<24x128xf32>
    %1056 = arith.mulf %1043, %1055 : vector<24x128xf32>
    %1057 = arith.addf %1052, %1056 : vector<24x128xf32>
    %1058 = math.tanh %1057 : vector<24x128xf32>
    %cst_182 = arith.constant 1.000000e+00 : f32
    %1059 = vector.broadcast %cst_182 : f32 to vector<24x128xf32>
    %1060 = arith.subf %1059, %1051 : vector<24x128xf32>
    %1061 = arith.mulf %1060, %1058 : vector<24x128xf32>
    %1062 = arith.mulf %1051, %1032 : vector<24x128xf32>
    %1063 = arith.addf %1061, %1062 : vector<24x128xf32>
    %c816 = arith.constant 816 : index
    %c0_183 = arith.constant 0 : index
    %1064 = vector.load %arg6[%c816, %c0_183] : memref<864x384xf32, #tpu.memory_space<vmem>>, vector<24x384xf32>
    %1065 = arith.truncf %1063 : vector<24x128xf32> to vector<24x128xbf16>
    %cst_184 = arith.constant dense<0.000000e+00> : vector<24x384xf32>
    %1066 = tpu.matmul %1065, %7, %cst_184 {dimension_numbers = #tpu.dot_dimension_numbers<[1], [0], [0], [1], [0, 0, 1, 1], [], []>} : vector<24x128xbf16>, vector<128x384xbf16>, vector<24x384xf32> -> vector<24x384xf32>
    %1067 = vector.extract_strided_slice %1064 {offsets = [0, 0], sizes = [24, 128], strides = [1, 1]} : vector<24x384xf32> to vector<24x128xf32>
    %1068 = vector.extract_strided_slice %1066 {offsets = [0, 0], sizes = [24, 128], strides = [1, 1]} : vector<24x384xf32> to vector<24x128xf32>
    %1069 = arith.addf %1067, %1068 : vector<24x128xf32>
    %1070 = arith.negf %1069 : vector<24x128xf32>
    %1071 = math.exp %1070 : vector<24x128xf32>
    %cst_185 = arith.constant 1.000000e+00 : f32
    %1072 = vector.broadcast %cst_185 : f32 to vector<24x128xf32>
    %1073 = arith.addf %1072, %1071 : vector<24x128xf32>
    %1074 = arith.divf %1072, %1073 : vector<24x128xf32>
    %1075 = vector.extract_strided_slice %1064 {offsets = [0, 128], sizes = [24, 128], strides = [1, 1]} : vector<24x384xf32> to vector<24x128xf32>
    %1076 = vector.extract_strided_slice %1066 {offsets = [0, 128], sizes = [24, 128], strides = [1, 1]} : vector<24x384xf32> to vector<24x128xf32>
    %1077 = arith.addf %1075, %1076 : vector<24x128xf32>
    %1078 = arith.negf %1077 : vector<24x128xf32>
    %1079 = math.exp %1078 : vector<24x128xf32>
    %cst_186 = arith.constant 1.000000e+00 : f32
    %1080 = vector.broadcast %cst_186 : f32 to vector<24x128xf32>
    %1081 = arith.addf %1080, %1079 : vector<24x128xf32>
    %1082 = arith.divf %1080, %1081 : vector<24x128xf32>
    %1083 = vector.extract_strided_slice %1064 {offsets = [0, 256], sizes = [24, 128], strides = [1, 1]} : vector<24x384xf32> to vector<24x128xf32>
    %1084 = vector.extract_strided_slice %1066 {offsets = [0, 256], sizes = [24, 128], strides = [1, 1]} : vector<24x384xf32> to vector<24x128xf32>
    %1085 = vector.broadcast %8 : vector<1x128xf32> to vector<24x128xf32>
    %1086 = arith.addf %1084, %1085 : vector<24x128xf32>
    %1087 = arith.mulf %1074, %1086 : vector<24x128xf32>
    %1088 = arith.addf %1083, %1087 : vector<24x128xf32>
    %1089 = math.tanh %1088 : vector<24x128xf32>
    %cst_187 = arith.constant 1.000000e+00 : f32
    %1090 = vector.broadcast %cst_187 : f32 to vector<24x128xf32>
    %1091 = arith.subf %1090, %1082 : vector<24x128xf32>
    %1092 = arith.mulf %1091, %1089 : vector<24x128xf32>
    %1093 = arith.mulf %1082, %1063 : vector<24x128xf32>
    %1094 = arith.addf %1092, %1093 : vector<24x128xf32>
    %c840 = arith.constant 840 : index
    %c0_188 = arith.constant 0 : index
    %1095 = vector.load %arg6[%c840, %c0_188] : memref<864x384xf32, #tpu.memory_space<vmem>>, vector<24x384xf32>
    %1096 = arith.truncf %1094 : vector<24x128xf32> to vector<24x128xbf16>
    %cst_189 = arith.constant dense<0.000000e+00> : vector<24x384xf32>
    %1097 = tpu.matmul %1096, %7, %cst_189 {dimension_numbers = #tpu.dot_dimension_numbers<[1], [0], [0], [1], [0, 0, 1, 1], [], []>} : vector<24x128xbf16>, vector<128x384xbf16>, vector<24x384xf32> -> vector<24x384xf32>
    %1098 = vector.extract_strided_slice %1095 {offsets = [0, 0], sizes = [24, 128], strides = [1, 1]} : vector<24x384xf32> to vector<24x128xf32>
    %1099 = vector.extract_strided_slice %1097 {offsets = [0, 0], sizes = [24, 128], strides = [1, 1]} : vector<24x384xf32> to vector<24x128xf32>
    %1100 = arith.addf %1098, %1099 : vector<24x128xf32>
    %1101 = arith.negf %1100 : vector<24x128xf32>
    %1102 = math.exp %1101 : vector<24x128xf32>
    %cst_190 = arith.constant 1.000000e+00 : f32
    %1103 = vector.broadcast %cst_190 : f32 to vector<24x128xf32>
    %1104 = arith.addf %1103, %1102 : vector<24x128xf32>
    %1105 = arith.divf %1103, %1104 : vector<24x128xf32>
    %1106 = vector.extract_strided_slice %1095 {offsets = [0, 128], sizes = [24, 128], strides = [1, 1]} : vector<24x384xf32> to vector<24x128xf32>
    %1107 = vector.extract_strided_slice %1097 {offsets = [0, 128], sizes = [24, 128], strides = [1, 1]} : vector<24x384xf32> to vector<24x128xf32>
    %1108 = arith.addf %1106, %1107 : vector<24x128xf32>
    %1109 = arith.negf %1108 : vector<24x128xf32>
    %1110 = math.exp %1109 : vector<24x128xf32>
    %cst_191 = arith.constant 1.000000e+00 : f32
    %1111 = vector.broadcast %cst_191 : f32 to vector<24x128xf32>
    %1112 = arith.addf %1111, %1110 : vector<24x128xf32>
    %1113 = arith.divf %1111, %1112 : vector<24x128xf32>
    %1114 = vector.extract_strided_slice %1095 {offsets = [0, 256], sizes = [24, 128], strides = [1, 1]} : vector<24x384xf32> to vector<24x128xf32>
    %1115 = vector.extract_strided_slice %1097 {offsets = [0, 256], sizes = [24, 128], strides = [1, 1]} : vector<24x384xf32> to vector<24x128xf32>
    %1116 = vector.broadcast %8 : vector<1x128xf32> to vector<24x128xf32>
    %1117 = arith.addf %1115, %1116 : vector<24x128xf32>
    %1118 = arith.mulf %1105, %1117 : vector<24x128xf32>
    %1119 = arith.addf %1114, %1118 : vector<24x128xf32>
    %1120 = math.tanh %1119 : vector<24x128xf32>
    %cst_192 = arith.constant 1.000000e+00 : f32
    %1121 = vector.broadcast %cst_192 : f32 to vector<24x128xf32>
    %1122 = arith.subf %1121, %1113 : vector<24x128xf32>
    %1123 = arith.mulf %1122, %1120 : vector<24x128xf32>
    %1124 = arith.mulf %1113, %1094 : vector<24x128xf32>
    %1125 = arith.addf %1123, %1124 : vector<24x128xf32>
    %c0_193 = arith.constant 0 : index
    %c0_194 = arith.constant 0 : index
    %1126 = vector.load %arg5[%c0_193, %c0_194] : memref<24x128xf32, #tpu.memory_space<vmem>>, vector<24x128xf32>
    tpu.vector_store %arg5[%c0_193, %c0_194], %1125 {strides = array<i32>} : memref<24x128xf32, #tpu.memory_space<vmem>>, vector<24x128xf32>,
    return
  }
}

</mosaic_0001>

<llo_original>
// kernel: tpu_custom_call.1
$region0: #{tpu_custom_call.1}
  #allocation0 [shape = 'u32[]', space=smem, size = 0x4, offset = 0x4, fixed_abs, tag = 'smem constant byte address 0x4 - core index']
  #allocation1 [shape = 'u32[144,128]{1,0:T(1,128)}', space=vmem, size = 0x12000, scoped, tag = 'internal scratch']
  #allocation2 [shape = 'f32[864,384]{1,0:T(8,128)}', space=vmem, size = 0x144000, scoped, tag = 'scratch operand']
  %s0 = inlined_call_operand.hbm [shape: bf16[864,128], index: 0, kind: input, shape index: {}]
  %s1 = inlined_call_operand.hbm [shape: bf16[128,384], index: 1, kind: input, shape index: {}]
  %s2 = inlined_call_operand.hbm [shape: bf16[128,384], index: 2, kind: input, shape index: {}]
  %s3 = inlined_call_operand.vmem [shape: f32[1,384], index: 3, kind: input, shape index: {}]
  %s4 = inlined_call_operand.vmem [shape: f32[1,128], index: 4, kind: input, shape index: {}]
  %s5 = inlined_call_operand.hbm [shape: f32[24,128], index: 5, kind: output, shape index: {}]
  %s6 = sld [smem:[#allocation0]]
  $region42: #{tpu_custom_call.1} parent=0
    _
  %s8 = ssub.s32 1, %s6
  %s9 = scalar_select 0, %s8, %s6
  $region1: #{tpu_custom_call.1} parent=0
    #allocation3 [shape = 'u8[221184]{0}', space=vmem, size = 0x36000, scoped, tag = 'input window, operand 0, single buffered']
    #allocation4 [shape = 's32[1]{0}', space=sflag, size = 0x4, scoped, tag = 'scoped memory for tpu_custom_call.1']
    #allocation5 [shape = 's32[1]{0}', space=sflag, size = 0x4, scoped, tag = 'scoped memory for tpu_custom_call.1']
    #allocation6 [shape = 'u8[98304]{0}', space=vmem, size = 0x18000, scoped, tag = 'input window, operand 1, single buffered']
    #allocation7 [shape = 's32[1]{0}', space=sflag, size = 0x4, scoped, tag = 'scoped memory for tpu_custom_call.1']
    #allocation8 [shape = 'u8[98304]{0}', space=vmem, size = 0x18000, scoped, tag = 'input window, operand 2, single buffered']
    #allocation9 [shape = 'u8[12288]{0}', space=vmem, size = 0x3000, scoped, tag = 'output window, operand 0, single buffered']
    %10 = vsyncpa [#allocation4], 0
    %11 = vsyncpa [#allocation7], 0
    %12 = vsyncpa [#allocation5], 0
    // Predicated region
    $region2: #{tpu_custom_call.1} parent=1 // pred_check
      _
    $region3: #{tpu_custom_call.1} parent=1 // pred_check_branch
      %14 = sbr.rel (0) target = $region5
    $region4: #{tpu_custom_call.1} parent=1 // pred_region
      %s16 = ssub.s32 6912, 6912
      %17 = vsyncadd [#allocation4], %s16
      %s18 = sshll.u32 [#allocation3], 4
      %s19 = int_to_ptr.vmem [resolvable:$true] %s18
      %24 = dma.hbm_to_vmem [thread:$0]  %s0, 6912, %s19, [#allocation4], 64, 64, 4
    $region5: #{tpu_custom_call.1} parent=1 // pred_fallthru
      _
    // Predicated region
    $region6: #{tpu_custom_call.1} parent=1 // pred_check
      _
    $region7: #{tpu_custom_call.1} parent=1 // pred_check_branch
      %26 = sbr.rel (0) target = $region9
    $region8: #{tpu_custom_call.1} parent=1 // pred_region
      %s28 = ssub.s32 3072, 3072
      %29 = vsyncadd [#allocation7], %s28
      %s30 = sshll.u32 [#allocation6], 4
      %s31 = int_to_ptr.vmem [resolvable:$true] %s30
      %36 = dma.hbm_to_vmem [thread:$0]  %s1, 3072, %s31, [#allocation7], 192, 192, 12
    $region9: #{tpu_custom_call.1} parent=1 // pred_fallthru
      _
    // Predicated region
    $region10: #{tpu_custom_call.1} parent=1 // pred_check
      _
    $region11: #{tpu_custom_call.1} parent=1 // pred_check_branch
      %38 = sbr.rel (0) target = $region13
    $region12: #{tpu_custom_call.1} parent=1 // pred_region
      %s40 = ssub.s32 3072, 3072
      %41 = vsyncadd [#allocation7], %s40
      %s42 = sshll.u32 [#allocation8], 4
      %s43 = int_to_ptr.vmem [resolvable:$true] %s42
      %48 = dma.hbm_to_vmem [thread:$0]  %s2, 3072, %s43, [#allocation7], 192, 192, 12
    $region13: #{tpu_custom_call.1} parent=1 // pred_fallthru
      _
    // Predicated region
    $region14: #{tpu_custom_call.1} parent=1 // pred_check
      _
    $region15: #{tpu_custom_call.1} parent=1 // pred_check_branch
      %50 = sbr.rel (0) target = $region17
    $region16: #{tpu_custom_call.1} parent=1 // pred_region
      _
    $region17: #{tpu_custom_call.1} parent=1 // pred_fallthru
      _
    // Predicated region
    $region18: #{tpu_custom_call.1} parent=1 // pred_check
      _
    $region19: #{tpu_custom_call.1} parent=1 // pred_check_branch
      %52 = sbr.rel (0) target = $region21
    $region20: #{tpu_custom_call.1} parent=1 // pred_region
      _
    $region21: #{tpu_custom_call.1} parent=1 // pred_fallthru
      _
    // Predicated region
    $region22: #{tpu_custom_call.1} parent=1 // pred_check
      _
    $region23: #{tpu_custom_call.1} parent=1 // pred_check_branch
      %54 = sbr.rel (0) target = $region25
    $region24: #{tpu_custom_call.1} parent=1 // pred_region
      %55 = dma.done [#allocation4], 6912
    $region25: #{tpu_custom_call.1} parent=1 // pred_fallthru
      _
    // Predicated region
    $region26: #{tpu_custom_call.1} parent=1 // pred_check
      _
    $region27: #{tpu_custom_call.1} parent=1 // pred_check_branch
      %57 = sbr.rel (0) target = $region29
    $region28: #{tpu_custom_call.1} parent=1 // pred_region
      %58 = dma.done [#allocation7], 3072
    $region29: #{tpu_custom_call.1} parent=1 // pred_fallthru
      _
    // Predicated region
    $region30: #{tpu_custom_call.1} parent=1 // pred_check
      _
    $region31: #{tpu_custom_call.1} parent=1 // pred_check_branch
      %60 = sbr.rel (0) target = $region33
    $region32: #{tpu_custom_call.1} parent=1 // pred_region
      %61 = dma.done [#allocation7], 3072
    $region33: #{tpu_custom_call.1} parent=1 // pred_fallthru
      _
    %v63 = vld [vmem:[#allocation3] sm:$0xf]
    %v64 = vld [vmem:[#allocation3 + $0x4] sm:$0xf]
    %v65 = vld [vmem:[#allocation3 + $0x8] sm:$0xf]
    %v66 = vld [vmem:[#allocation3 + $0xc] sm:$0xf]
    %v67 = vld [vmem:[#allocation3 + $0x10] sm:$0xf]
    %v68 = vld [vmem:[#allocation3 + $0x14] sm:$0xf]
    %v69 = vld [vmem:[#allocation3 + $0x18] sm:$0xf]
    %v70 = vld [vmem:[#allocation3 + $0x1c] sm:$0xf]
    %v71 = vld [vmem:[#allocation3 + $0x20] sm:$0xf]
    %v72 = vld [vmem:[#allocation3 + $0x24] sm:$0xf]
    %v73 = vld [vmem:[#allocation3 + $0x28] sm:$0xf]
    %v74 = vld [vmem:[#allocation3 + $0x2c] sm:$0xf]
    %v75 = vld [vmem:[#allocation3 + $0x30] sm:$0xf]
    %v76 = vld [vmem:[#allocation3 + $0x34] sm:$0xf]
    %v77 = vld [vmem:[#allocation3 + $0x38] sm:$0xf]
    %v78 = vld [vmem:[#allocation3 + $0x3c] sm:$0xf]
    %v79 = vld [vmem:[#allocation3 + $0x40] sm:$0xf]
    %v80 = vld [vmem:[#allocation3 + $0x44] sm:$0xf]
    %v81 = vld [vmem:[#allocation3 + $0x48] sm:$0xf]
    %v82 = vld [vmem:[#allocation3 + $0x4c] sm:$0xf]
    %v83 = vld [vmem:[#allocation3 + $0x50] sm:$0xf]
    %v84 = vld [vmem:[#allocation3 + $0x54] sm:$0xf]
    %v85 = vld [vmem:[#allocation3 + $0x58] sm:$0xf]
    %v86 = vld [vmem:[#allocation3 + $0x5c] sm:$0xf]
    %v87 = vld [vmem:[#allocation3 + $0x60] sm:$0xf]
    %v88 = vld [vmem:[#allocation3 + $0x64] sm:$0xf]
    %v89 = vld [vmem:[#allocation3 + $0x68] sm:$0xf]
    %v90 = vld [vmem:[#allocation3 + $0x6c] sm:$0xf]
    %v91 = vld [vmem:[#allocation3 + $0x70] sm:$0xf]
    %v92 = vld [vmem:[#allocation3 + $0x74] sm:$0xf]
    %v93 = vld [vmem:[#allocation3 + $0x78] sm:$0xf]
    %v94 = vld [vmem:[#allocation3 + $0x7c] sm:$0xf]
    %v95 = vld [vmem:[#allocation3 + $0x80] sm:$0xf]
    %v96 = vld [vmem:[#allocation3 + $0x84] sm:$0xf]
    %v97 = vld [vmem:[#allocation3 + $0x88] sm:$0xf]
    %v98 = vld [vmem:[#allocation3 + $0x8c] sm:$0xf]
    %v99 = vld [vmem:[#allocation3 + $0x90] sm:$0xf]
    %v100 = vld [vmem:[#allocation3 + $0x94] sm:$0xf]
    %v101 = vld [vmem:[#allocation3 + $0x98] sm:$0xf]
    %v102 = vld [vmem:[#allocation3 + $0x9c] sm:$0xf]
    %v103 = vld [vmem:[#allocation3 + $0xa0] sm:$0xf]
    %v104 = vld [vmem:[#allocation3 + $0xa4] sm:$0xf]
    %v105 = vld [vmem:[#allocation3 + $0xa8] sm:$0xf]
    %v106 = vld [vmem:[#allocation3 + $0xac] sm:$0xf]
    %v107 = vld [vmem:[#allocation3 + $0xb0] sm:$0xf]
    %v108 = vld [vmem:[#allocation3 + $0xb4] sm:$0xf]
    %v109 = vld [vmem:[#allocation3 + $0xb8] sm:$0xf]
    %v110 = vld [vmem:[#allocation3 + $0xbc] sm:$0xf]
    %v111 = vld [vmem:[#allocation3 + $0xc0] sm:$0xf]
    %v112 = vld [vmem:[#allocation3 + $0xc4] sm:$0xf]
    %v113 = vld [vmem:[#allocation3 + $0xc8] sm:$0xf]
    %v114 = vld [vmem:[#allocation3 + $0xcc] sm:$0xf]
    %v115 = vld [vmem:[#allocation3 + $0xd0] sm:$0xf]
    %v116 = vld [vmem:[#allocation3 + $0xd4] sm:$0xf]
    %v117 = vld [vmem:[#allocation3 + $0xd8] sm:$0xf]
    %v118 = vld [vmem:[#allocation3 + $0xdc] sm:$0xf]
    %v119 = vld [vmem:[#allocation3 + $0xe0] sm:$0xf]
    %v120 = vld [vmem:[#allocation3 + $0xe4] sm:$0xf]
    %v121 = vld [vmem:[#allocation3 + $0xe8] sm:$0xf]
    %v122 = vld [vmem:[#allocation3 + $0xec] sm:$0xf]
    %v123 = vld [vmem:[#allocation3 + $0xf0] sm:$0xf]
    %v124 = vld [vmem:[#allocation3 + $0xf4] sm:$0xf]
    %v125 = vld [vmem:[#allocation3 + $0xf8] sm:$0xf]
    %v126 = vld [vmem:[#allocation3 + $0xfc] sm:$0xf]
    %v127 = vld [vmem:[#allocation3 + $0x100] sm:$0xf]
    %v128 = vld [vmem:[#allocation3 + $0x104] sm:$0xf]
    %v129 = vld [vmem:[#allocation3 + $0x108] sm:$0xf]
    %v130 = vld [vmem:[#allocation3 + $0x10c] sm:$0xf]
    %v131 = vld [vmem:[#allocation3 + $0x110] sm:$0xf]
    %v132 = vld [vmem:[#allocation3 + $0x114] sm:$0xf]
    %v133 = vld [vmem:[#allocation3 + $0x118] sm:$0xf]
    %v134 = vld [vmem:[#allocation3 + $0x11c] sm:$0xf]
    %v135 = vld [vmem:[#allocation3 + $0x120] sm:$0xf]
    %v136 = vld [vmem:[#allocation3 + $0x124] sm:$0xf]
    %v137 = vld [vmem:[#allocation3 + $0x128] sm:$0xf]
    %v138 = vld [vmem:[#allocation3 + $0x12c] sm:$0xf]
    %v139 = vld [vmem:[#allocation3 + $0x130] sm:$0xf]
    %v140 = vld [vmem:[#allocation3 + $0x134] sm:$0xf]
    %v141 = vld [vmem:[#allocation3 + $0x138] sm:$0xf]
    %v142 = vld [vmem:[#allocation3 + $0x13c] sm:$0xf]
    %v143 = vld [vmem:[#allocation3 + $0x140] sm:$0xf]
    %v144 = vld [vmem:[#allocation3 + $0x144] sm:$0xf]
    %v145 = vld [vmem:[#allocation3 + $0x148] sm:$0xf]
    %v146 = vld [vmem:[#allocation3 + $0x14c] sm:$0xf]
    %v147 = vld [vmem:[#allocation3 + $0x150] sm:$0xf]
    %v148 = vld [vmem:[#allocation3 + $0x154] sm:$0xf]
    %v149 = vld [vmem:[#allocation3 + $0x158] sm:$0xf]
    %v150 = vld [vmem:[#allocation3 + $0x15c] sm:$0xf]
    %v151 = vld [vmem:[#allocation3 + $0x160] sm:$0xf]
    %v152 = vld [vmem:[#allocation3 + $0x164] sm:$0xf]
    %v153 = vld [vmem:[#allocation3 + $0x168] sm:$0xf]
    %v154 = vld [vmem:[#allocation3 + $0x16c] sm:$0xf]
    %v155 = vld [vmem:[#allocation3 + $0x170] sm:$0xf]
    %v156 = vld [vmem:[#allocation3 + $0x174] sm:$0xf]
    %v157 = vld [vmem:[#allocation3 + $0x178] sm:$0xf]
    %v158 = vld [vmem:[#allocation3 + $0x17c] sm:$0xf]
    %v159 = vld [vmem:[#allocation3 + $0x180] sm:$0xf]
    %v160 = vld [vmem:[#allocation3 + $0x184] sm:$0xf]
    %v161 = vld [vmem:[#allocation3 + $0x188] sm:$0xf]
    %v162 = vld [vmem:[#allocation3 + $0x18c] sm:$0xf]
    %v163 = vld [vmem:[#allocation3 + $0x190] sm:$0xf]
    %v164 = vld [vmem:[#allocation3 + $0x194] sm:$0xf]
    %v165 = vld [vmem:[#allocation3 + $0x198] sm:$0xf]
    %v166 = vld [vmem:[#allocation3 + $0x19c] sm:$0xf]
    %v167 = vld [vmem:[#allocation3 + $0x1a0] sm:$0xf]
    %v168 = vld [vmem:[#allocation3 + $0x1a4] sm:$0xf]
    %v169 = vld [vmem:[#allocation3 + $0x1a8] sm:$0xf]
    %v170 = vld [vmem:[#allocation3 + $0x1ac] sm:$0xf]
    %v171 = vld [vmem:[#allocation6] sm:$0xff]
    %v172 = vld [vmem:[#allocation6 + $0x8] sm:$0xf]
    %v173 = vld [vmem:[#allocation6 + $0xc] sm:$0xff]
    %v174 = vld [vmem:[#allocation6 + $0x14] sm:$0xf]
    %v175 = vld [vmem:[#allocation6 + $0x18] sm:$0xff]
    %v176 = vld [vmem:[#allocation6 + $0x20] sm:$0xf]
    %v177 = vld [vmem:[#allocation6 + $0x24] sm:$0xff]
    %v178 = vld [vmem:[#allocation6 + $0x2c] sm:$0xf]
    %v179 = vld [vmem:[#allocation6 + $0x30] sm:$0xff]
    %v180 = vld [vmem:[#allocation6 + $0x38] sm:$0xf]
    %v181 = vld [vmem:[#allocation6 + $0x3c] sm:$0xff]
    %v182 = vld [vmem:[#allocation6 + $0x44] sm:$0xf]
    %v183 = vld [vmem:[#allocation6 + $0x48] sm:$0xff]
    %v184 = vld [vmem:[#allocation6 + $0x50] sm:$0xf]
    %v185 = vld [vmem:[#allocation6 + $0x54] sm:$0xff]
    %v186 = vld [vmem:[#allocation6 + $0x5c] sm:$0xf]
    %v187 = vld [vmem:[#allocation6 + $0x60] sm:$0xff]
    %v188 = vld [vmem:[#allocation6 + $0x68] sm:$0xf]
    %v189 = vld [vmem:[#allocation6 + $0x6c] sm:$0xff]
    %v190 = vld [vmem:[#allocation6 + $0x74] sm:$0xf]
    %v191 = vld [vmem:[#allocation6 + $0x78] sm:$0xff]
    %v192 = vld [vmem:[#allocation6 + $0x80] sm:$0xf]
    %v193 = vld [vmem:[#allocation6 + $0x84] sm:$0xff]
    %v194 = vld [vmem:[#allocation6 + $0x8c] sm:$0xf]
    %v195 = vld [vmem:[#allocation6 + $0x90] sm:$0xff]
    %v196 = vld [vmem:[#allocation6 + $0x98] sm:$0xf]
    %v197 = vld [vmem:[#allocation6 + $0x9c] sm:$0xff]
    %v198 = vld [vmem:[#allocation6 + $0xa4] sm:$0xf]
    %v199 = vld [vmem:[#allocation6 + $0xa8] sm:$0xff]
    %v200 = vld [vmem:[#allocation6 + $0xb0] sm:$0xf]
    %v201 = vld [vmem:[#allocation6 + $0xb4] sm:$0xff]
    %v202 = vld [vmem:[#allocation6 + $0xbc] sm:$0xf]
    %v203 = vld [vmem:[%s3] sm:$0x7]
    %v205 = vlaneseq
    %v206 = vshrl.u32 %v205, 7
    %v207 = vsub.s32 0, %v206
    %v208 = vrot.slane %v203, %v207
    %v209 = vlaneseq
    %v210 = vshrl.u32 %v209, 7
    %v211 = vsub.s32 1, %v210
    %v212 = vrot.slane %v203, %v211
    %v213 = vlaneseq
    %v214 = vshrl.u32 %v213, 7
    %v215 = vsub.s32 2, %v214
    %v216 = vrot.slane %v203, %v215
    %v328 = vunpack.c.l.b16 %v63
    %v329 = vunpack.c.l.b16 %v64
    %v330 = vunpack.c.l.b16 %v65
    %v331 = vunpack.c.l.b16 %v66
    %v332 = vunpack.c.l.b16 %v67
    %v333 = vunpack.c.l.b16 %v68
    %v334 = vunpack.c.l.b16 %v69
    %v335 = vunpack.c.l.b16 %v70
    %v336 = vunpack.c.l.b16 %v71
    %v337 = vunpack.c.l.b16 %v72
    %v338 = vunpack.c.l.b16 %v73
    %v339 = vunpack.c.l.b16 %v74
    %v340 = vunpack.c.l.b16 %v75
    %v341 = vunpack.c.l.b16 %v76
    %v342 = vunpack.c.l.b16 %v77
    %v343 = vunpack.c.l.b16 %v78
    %v344 = vunpack.c.l.b16 %v79
    %v345 = vunpack.c.l.b16 %v80
    %v346 = vunpack.c.l.b16 %v81
    %v347 = vunpack.c.l.b16 %v82
    %v348 = vunpack.c.l.b16 %v83
    %v349 = vunpack.c.l.b16 %v84
    %v350 = vunpack.c.l.b16 %v85
    %v351 = vunpack.c.l.b16 %v86
    %v352 = vunpack.c.l.b16 %v87
    %v353 = vunpack.c.l.b16 %v88
    %v354 = vunpack.c.l.b16 %v89
    %v355 = vunpack.c.l.b16 %v90
    %v356 = vunpack.c.l.b16 %v91
    %v357 = vunpack.c.l.b16 %v92
    %v358 = vunpack.c.l.b16 %v93
    %v359 = vunpack.c.l.b16 %v94
    %v360 = vunpack.c.l.b16 %v95
    %v361 = vunpack.c.l.b16 %v96
    %v362 = vunpack.c.l.b16 %v97
    %v363 = vunpack.c.l.b16 %v98
    %v364 = vunpack.c.l.b16 %v99
    %v365 = vunpack.c.l.b16 %v100
    %v366 = vunpack.c.l.b16 %v101
    %v367 = vunpack.c.l.b16 %v102
    %v368 = vunpack.c.l.b16 %v103
    %v369 = vunpack.c.l.b16 %v104
    %v370 = vunpack.c.l.b16 %v105
    %v371 = vunpack.c.l.b16 %v106
    %v372 = vunpack.c.l.b16 %v107
    %v373 = vunpack.c.l.b16 %v108
    %v374 = vunpack.c.l.b16 %v109
    %v375 = vunpack.c.l.b16 %v110
    %v376 = vunpack.c.l.b16 %v111
    %v377 = vunpack.c.l.b16 %v112
    %v378 = vunpack.c.l.b16 %v113
    %v379 = vunpack.c.l.b16 %v114
    %v380 = vunpack.c.l.b16 %v115
    %v381 = vunpack.c.l.b16 %v116
    %v382 = vunpack.c.l.b16 %v117
    %v383 = vunpack.c.l.b16 %v118
    %v384 = vunpack.c.l.b16 %v119
    %v385 = vunpack.c.l.b16 %v120
    %v386 = vunpack.c.l.b16 %v121
    %v387 = vunpack.c.l.b16 %v122
    %v388 = vunpack.c.l.b16 %v123
    %v389 = vunpack.c.l.b16 %v124
    %v390 = vunpack.c.l.b16 %v125
    %v391 = vunpack.c.l.b16 %v126
    %v392 = vunpack.c.l.b16 %v127
    %v393 = vunpack.c.l.b16 %v128
    %v394 = vunpack.c.l.b16 %v129
    %v395 = vunpack.c.l.b16 %v130
    %v396 = vunpack.c.l.b16 %v131
    %v397 = vunpack.c.l.b16 %v132
    %v398 = vunpack.c.l.b16 %v133
    %v399 = vunpack.c.l.b16 %v134
    %v400 = vunpack.c.l.b16 %v135
    %v401 = vunpack.c.l.b16 %v136
    %v402 = vunpack.c.l.b16 %v137
    %v403 = vunpack.c.l.b16 %v138
    %v404 = vunpack.c.l.b16 %v139
    %v405 = vunpack.c.l.b16 %v140
    %v406 = vunpack.c.l.b16 %v141
    %v407 = vunpack.c.l.b16 %v142
    %v408 = vunpack.c.l.b16 %v143
    %v409 = vunpack.c.l.b16 %v144
    %v410 = vunpack.c.l.b16 %v145
    %v411 = vunpack.c.l.b16 %v146
    %v412 = vunpack.c.l.b16 %v147
    %v413 = vunpack.c.l.b16 %v148
    %v414 = vunpack.c.l.b16 %v149
    %v415 = vunpack.c.l.b16 %v150
    %v416 = vunpack.c.l.b16 %v151
    %v417 = vunpack.c.l.b16 %v152
    %v418 = vunpack.c.l.b16 %v153
    %v419 = vunpack.c.l.b16 %v154
    %v420 = vunpack.c.l.b16 %v155
    %v421 = vunpack.c.l.b16 %v156
    %v422 = vunpack.c.l.b16 %v157
    %v423 = vunpack.c.l.b16 %v158
    %v424 = vunpack.c.l.b16 %v159
    %v425 = vunpack.c.l.b16 %v160
    %v426 = vunpack.c.l.b16 %v161
    %v427 = vunpack.c.l.b16 %v162
    %v428 = vunpack.c.l.b16 %v163
    %v429 = vunpack.c.l.b16 %v164
    %v430 = vunpack.c.l.b16 %v165
    %v431 = vunpack.c.l.b16 %v166
    %v432 = vunpack.c.l.b16 %v167
    %v433 = vunpack.c.l.b16 %v168
    %v434 = vunpack.c.l.b16 %v169
    %v435 = vunpack.c.l.b16 %v170
    %v436 = vpack.c.b16 %v329, %v328
    %v437 = vpack.c.b16 %v331, %v330
    %v438 = vpack.c.b16 %v333, %v332
    %v439 = vpack.c.b16 %v335, %v334
    %v440 = vpack.c.b16 %v337, %v336
    %v441 = vpack.c.b16 %v339, %v338
    %v442 = vpack.c.b16 %v341, %v340
    %v443 = vpack.c.b16 %v343, %v342
    %v444 = vpack.c.b16 %v345, %v344
    %v445 = vpack.c.b16 %v347, %v346
    %v446 = vpack.c.b16 %v349, %v348
    %v447 = vpack.c.b16 %v351, %v350
    %v448 = vpack.c.b16 %v353, %v352
    %v449 = vpack.c.b16 %v355, %v354
    %v450 = vpack.c.b16 %v357, %v356
    %v451 = vpack.c.b16 %v359, %v358
    %v452 = vpack.c.b16 %v361, %v360
    %v453 = vpack.c.b16 %v363, %v362
    %v454 = vpack.c.b16 %v365, %v364
    %v455 = vpack.c.b16 %v367, %v366
    %v456 = vpack.c.b16 %v369, %v368
    %v457 = vpack.c.b16 %v371, %v370
    %v458 = vpack.c.b16 %v373, %v372
    %v459 = vpack.c.b16 %v375, %v374
    %v460 = vpack.c.b16 %v377, %v376
    %v461 = vpack.c.b16 %v379, %v378
    %v462 = vpack.c.b16 %v381, %v380
    %v463 = vpack.c.b16 %v383, %v382
    %v464 = vpack.c.b16 %v385, %v384
    %v465 = vpack.c.b16 %v387, %v386
    %v466 = vpack.c.b16 %v389, %v388
    %v467 = vpack.c.b16 %v391, %v390
    %v468 = vpack.c.b16 %v393, %v392
    %v469 = vpack.c.b16 %v395, %v394
    %v470 = vpack.c.b16 %v397, %v396
    %v471 = vpack.c.b16 %v399, %v398
    %v472 = vpack.c.b16 %v401, %v400
    %v473 = vpack.c.b16 %v403, %v402
    %v474 = vpack.c.b16 %v405, %v404
    %v475 = vpack.c.b16 %v407, %v406
    %v476 = vpack.c.b16 %v409, %v408
    %v477 = vpack.c.b16 %v411, %v410
    %v478 = vpack.c.b16 %v413, %v412
    %v479 = vpack.c.b16 %v415, %v414
    %v480 = vpack.c.b16 %v417, %v416
    %v481 = vpack.c.b16 %v419, %v418
    %v482 = vpack.c.b16 %v421, %v420
    %v483 = vpack.c.b16 %v423, %v422
    %v484 = vpack.c.b16 %v425, %v424
    %v485 = vpack.c.b16 %v427, %v426
    %v486 = vpack.c.b16 %v429, %v428
    %v487 = vpack.c.b16 %v431, %v430
    %v488 = vpack.c.b16 %v433, %v432
    %v489 = vpack.c.b16 %v435, %v434
    %v576 = vunpack.c.l.b16 %v171
    %v577 = vunpack.c.h.b16 %v171
    %v578 = vunpack.c.l.b16 %v172
    %v579 = vunpack.c.l.b16 %v173
    %v580 = vunpack.c.h.b16 %v173
    %v581 = vunpack.c.l.b16 %v174
    %v582 = vunpack.c.l.b16 %v175
    %v583 = vunpack.c.h.b16 %v175
    %v584 = vunpack.c.l.b16 %v176
    %v585 = vunpack.c.l.b16 %v177
    %v586 = vunpack.c.h.b16 %v177
    %v587 = vunpack.c.l.b16 %v178
    %v588 = vunpack.c.l.b16 %v179
    %v589 = vunpack.c.h.b16 %v179
    %v590 = vunpack.c.l.b16 %v180
    %v591 = vunpack.c.l.b16 %v181
    %v592 = vunpack.c.h.b16 %v181
    %v593 = vunpack.c.l.b16 %v182
    %v594 = vunpack.c.l.b16 %v183
    %v595 = vunpack.c.h.b16 %v183
    %v596 = vunpack.c.l.b16 %v184
    %v597 = vunpack.c.l.b16 %v185
    %v598 = vunpack.c.h.b16 %v185
    %v599 = vunpack.c.l.b16 %v186
    %v600 = vunpack.c.l.b16 %v187
    %v601 = vunpack.c.h.b16 %v187
    %v602 = vunpack.c.l.b16 %v188
    %v603 = vunpack.c.l.b16 %v189
    %v604 = vunpack.c.h.b16 %v189
    %v605 = vunpack.c.l.b16 %v190
    %v606 = vunpack.c.l.b16 %v191
    %v607 = vunpack.c.h.b16 %v191
    %v608 = vunpack.c.l.b16 %v192
    %v609 = vunpack.c.l.b16 %v193
    %v610 = vunpack.c.h.b16 %v193
    %v611 = vunpack.c.l.b16 %v194
    %v612 = vunpack.c.l.b16 %v195
    %v613 = vunpack.c.h.b16 %v195
    %v614 = vunpack.c.l.b16 %v196
    %v615 = vunpack.c.l.b16 %v197
    %v616 = vunpack.c.h.b16 %v197
    %v617 = vunpack.c.l.b16 %v198
    %v618 = vunpack.c.l.b16 %v199
    %v619 = vunpack.c.h.b16 %v199
    %v620 = vunpack.c.l.b16 %v200
    %v621 = vunpack.c.l.b16 %v201
    %v622 = vunpack.c.h.b16 %v201
    %v623 = vunpack.c.l.b16 %v202
    %v624 = vpack.c.b16 %v579, %v576
    %v625 = vpack.c.b16 %v580, %v577
    %v626 = vpack.c.b16 %v581, %v578
    %v627 = vpack.c.b16 %v585, %v582
    %v628 = vpack.c.b16 %v586, %v583
    %v629 = vpack.c.b16 %v587, %v584
    %v630 = vpack.c.b16 %v591, %v588
    %v631 = vpack.c.b16 %v592, %v589
    %v632 = vpack.c.b16 %v593, %v590
    %v633 = vpack.c.b16 %v597, %v594
    %v634 = vpack.c.b16 %v598, %v595
    %v635 = vpack.c.b16 %v599, %v596
    %v636 = vpack.c.b16 %v603, %v600
    %v637 = vpack.c.b16 %v604, %v601
    %v638 = vpack.c.b16 %v605, %v602
    %v639 = vpack.c.b16 %v609, %v606
    %v640 = vpack.c.b16 %v610, %v607
    %v641 = vpack.c.b16 %v611, %v608
    %v642 = vpack.c.b16 %v615, %v612
    %v643 = vpack.c.b16 %v616, %v613
    %v644 = vpack.c.b16 %v617, %v614
    %v645 = vpack.c.b16 %v621, %v618
    %v646 = vpack.c.b16 %v622, %v619
    %v647 = vpack.c.b16 %v623, %v620
    %672 = vmatprep.subr.bf16.mxu0 %v625
    %673 = vmatpush1.bf16.msra.mxu0 %v624
    %674 = vmatprep.subr.bf16.mxu0 %v628
    %675 = vmatpush1.bf16.msra.mxu0 %v627
    %676 = vmatprep.subr.bf16.mxu0 %v631
    %677 = vmatpush1.bf16.msra.mxu0 %v630
    %678 = vmatprep.subr.bf16.mxu0 %v634
    %679 = vmatpush1.bf16.msra.mxu0 %v633
    %680 = vmatprep.subr.bf16.mxu0 %v637
    %681 = vmatpush1.bf16.msra.mxu0 %v636
    %682 = vmatprep.subr.bf16.mxu0 %v640
    %683 = vmatpush1.bf16.msra.mxu0 %v639
    %684 = vmatprep.subr.bf16.mxu0 %v643
    %685 = vmatpush1.bf16.msra.mxu0 %v642
    %686 = vmatprep.subr.bf16.mxu0 %v646
    %687 = vmatpush1.bf16.msra.mxu0 %v645
    %688 = vmatprep.subr.bf16.mxu0 0
    %689 = vmatpush1.bf16.msra.mxu0 0
    %690 = vmatprep.subr.bf16.mxu0 0
    %691 = vmatpush1.bf16.msra.mxu0 0
    %692 = vmatprep.subr.bf16.mxu0 0
    %693 = vmatpush1.bf16.msra.mxu0 0
    %694 = vmatprep.subr.bf16.mxu0 0
    %695 = vmatpush1.bf16.msra.mxu0 0
    %696 = vmatprep.subr.bf16.mxu0 0
    %697 = vmatpush1.bf16.msra.mxu0 0
    %698 = vmatprep.subr.bf16.mxu0 0
    %699 = vmatpush1.bf16.msra.mxu0 0
    %700 = vmatprep.subr.bf16.mxu0 0
    %701 = vmatpush1.bf16.msra.mxu0 0
    %702 = vmatprep.subr.bf16.mxu0 0
    %703 = vmatpush1.bf16.msra.mxu0 0
    %704 = vmatprep.mubr.bf16.mxu0 0
    %705 = vmatmul.mubr.bf16.gmra.mrb[0].mxu0 %v436
    %v706 = vpop.f32.mrb[0].mxu0
    %v707 = vadd.f32 %v208, %v706
    %v708 = vpop.f32.mrb[0].mxu0
    %v709 = vadd.f32 %v212, %v708
    %v710 = vpop.f32.mrb[0].mxu0
    %v711 = vadd.f32 %v208, %v710
    %v712 = vpop.f32.mrb[0].mxu0
    %v713 = vadd.f32 %v212, %v712
    %714 = vmatprep.mubr.bf16.mxu0 0
    %715 = vmatmul.mubr.bf16.gmra.mrb[0].mxu0 %v437
    %v716 = vpop.f32.mrb[0].mxu0
    %v717 = vadd.f32 %v208, %v716
    %v718 = vpop.f32.mrb[0].mxu0
    %v719 = vadd.f32 %v212, %v718
    %v720 = vpop.f32.mrb[0].mxu0
    %v721 = vadd.f32 %v208, %v720
    %v722 = vpop.f32.mrb[0].mxu0
    %v723 = vadd.f32 %v212, %v722
    %724 = vmatprep.mubr.bf16.mxu0 0
    %725 = vmatmul.mubr.bf16.gmra.mrb[0].mxu0 %v438
    %v726 = vpop.f32.mrb[0].mxu0
    %v727 = vadd.f32 %v208, %v726
    %v728 = vpop.f32.mrb[0].mxu0
    %v729 = vadd.f32 %v212, %v728
    %v730 = vpop.f32.mrb[0].mxu0
    %v731 = vadd.f32 %v208, %v730
    %v732 = vpop.f32.mrb[0].mxu0
    %v733 = vadd.f32 %v212, %v732
    %734 = vmatprep.mubr.bf16.mxu0 0
    %735 = vmatmul.mubr.bf16.gmra.mrb[0].mxu0 %v439
    %v736 = vpop.f32.mrb[0].mxu0
    %v737 = vadd.f32 %v208, %v736
    %v738 = vpop.f32.mrb[0].mxu0
    %v739 = vadd.f32 %v212, %v738
    %v740 = vpop.f32.mrb[0].mxu0
    %v741 = vadd.f32 %v208, %v740
    %v742 = vpop.f32.mrb[0].mxu0
    %v743 = vadd.f32 %v212, %v742
    %744 = vmatprep.mubr.bf16.mxu0 0
    %745 = vmatmul.mubr.bf16.gmra.mrb[0].mxu0 %v440
    %v746 = vpop.f32.mrb[0].mxu0
    %v747 = vadd.f32 %v208, %v746
    %v748 = vpop.f32.mrb[0].mxu0
    %v749 = vadd.f32 %v212, %v748
    %v750 = vpop.f32.mrb[0].mxu0
    %v751 = vadd.f32 %v208, %v750
    %v752 = vpop.f32.mrb[0].mxu0
    %v753 = vadd.f32 %v212, %v752
    %754 = vmatprep.mubr.bf16.mxu0 0
    %755 = vmatmul.mubr.bf16.gmra.mrb[0].mxu0 %v441
    %v756 = vpop.f32.mrb[0].mxu0
    %v757 = vadd.f32 %v208, %v756
    %v758 = vpop.f32.mrb[0].mxu0
    %v759 = vadd.f32 %v212, %v758
    %v760 = vpop.f32.mrb[0].mxu0
    %v761 = vadd.f32 %v208, %v760
    %v762 = vpop.f32.mrb[0].mxu0
    %v763 = vadd.f32 %v212, %v762
    %764 = vmatprep.mubr.bf16.mxu0 0
    %765 = vmatmul.mubr.bf16.gmra.mrb[0].mxu0 %v442
    %v766 = vpop.f32.mrb[0].mxu0
    %v767 = vadd.f32 %v208, %v766
    %v768 = vpop.f32.mrb[0].mxu0
    %v769 = vadd.f32 %v212, %v768
    %v770 = vpop.f32.mrb[0].mxu0
    %v771 = vadd.f32 %v208, %v770
    %v772 = vpop.f32.mrb[0].mxu0
    %v773 = vadd.f32 %v212, %v772
    %774 = vmatprep.mubr.bf16.mxu0 0
    %775 = vmatmul.mubr.bf16.gmra.mrb[0].mxu0 %v443
    %v776 = vpop.f32.mrb[0].mxu0
    %v777 = vadd.f32 %v208, %v776
    %v778 = vpop.f32.mrb[0].mxu0
    %v779 = vadd.f32 %v212, %v778
    %v780 = vpop.f32.mrb[0].mxu0
    %v781 = vadd.f32 %v208, %v780
    %v782 = vpop.f32.mrb[0].mxu0
    %v783 = vadd.f32 %v212, %v782
    %784 = vmatprep.mubr.bf16.mxu0 0
    %785 = vmatmul.mubr.bf16.gmra.mrb[0].mxu0 %v444
    %v786 = vpop.f32.mrb[0].mxu0
    %v787 = vadd.f32 %v208, %v786
    %v788 = vpop.f32.mrb[0].mxu0
    %v789 = vadd.f32 %v212, %v788
    %v790 = vpop.f32.mrb[0].mxu0
    %v791 = vadd.f32 %v208, %v790
    %v792 = vpop.f32.mrb[0].mxu0
    %v793 = vadd.f32 %v212, %v792
    %794 = vmatprep.mubr.bf16.mxu0 0
    %795 = vmatmul.mubr.bf16.gmra.mrb[0].mxu0 %v445
    %v796 = vpop.f32.mrb[0].mxu0
    %v797 = vadd.f32 %v208, %v796
    %v798 = vpop.f32.mrb[0].mxu0
    %v799 = vadd.f32 %v212, %v798
    %v800 = vpop.f32.mrb[0].mxu0
    %v801 = vadd.f32 %v208, %v800
    %v802 = vpop.f32.mrb[0].mxu0
    %v803 = vadd.f32 %v212, %v802
    %804 = vmatprep.mubr.bf16.mxu0 0
    %805 = vmatmul.mubr.bf16.gmra.mrb[0].mxu0 %v446
    %v806 = vpop.f32.mrb[0].mxu0
    %v807 = vadd.f32 %v208, %v806
    %v808 = vpop.f32.mrb[0].mxu0
    %v809 = vadd.f32 %v212, %v808
    %v810 = vpop.f32.mrb[0].mxu0
    %v811 = vadd.f32 %v208, %v810
    %v812 = vpop.f32.mrb[0].mxu0
    %v813 = vadd.f32 %v212, %v812
    %814 = vmatprep.mubr.bf16.mxu0 0
    %815 = vmatmul.mubr.bf16.gmra.mrb[0].mxu0 %v447
    %v816 = vpop.f32.mrb[0].mxu0
    %v817 = vadd.f32 %v208, %v816
    %v818 = vpop.f32.mrb[0].mxu0
    %v819 = vadd.f32 %v212, %v818
    %v820 = vpop.f32.mrb[0].mxu0
    %v821 = vadd.f32 %v208, %v820
    %v822 = vpop.f32.mrb[0].mxu0
    %v823 = vadd.f32 %v212, %v822
    %824 = vmatprep.mubr.bf16.mxu0 0
    %825 = vmatmul.mubr.bf16.gmra.mrb[0].mxu0 %v448
    %v826 = vpop.f32.mrb[0].mxu0
    %v827 = vadd.f32 %v208, %v826
    %v828 = vpop.f32.mrb[0].mxu0
    %v829 = vadd.f32 %v212, %v828
    %v830 = vpop.f32.mrb[0].mxu0
    %v831 = vadd.f32 %v208, %v830
    %v832 = vpop.f32.mrb[0].mxu0
    %v833 = vadd.f32 %v212, %v832
    %834 = vmatprep.mubr.bf16.mxu0 0
    %835 = vmatmul.mubr.bf16.gmra.mrb[0].mxu0 %v449
    %v836 = vpop.f32.mrb[0].mxu0
    %v837 = vadd.f32 %v208, %v836
    %v838 = vpop.f32.mrb[0].mxu0
    %v839 = vadd.f32 %v212, %v838
    %v840 = vpop.f32.mrb[0].mxu0
    %v841 = vadd.f32 %v208, %v840
    %v842 = vpop.f32.mrb[0].mxu0
    %v843 = vadd.f32 %v212, %v842
    %844 = vmatprep.mubr.bf16.mxu0 0
    %845 = vmatmul.mubr.bf16.gmra.mrb[0].mxu0 %v450
    %v846 = vpop.f32.mrb[0].mxu0
    %v847 = vadd.f32 %v208, %v846
    %v848 = vpop.f32.mrb[0].mxu0
    %v849 = vadd.f32 %v212, %v848
    %v850 = vpop.f32.mrb[0].mxu0
    %v851 = vadd.f32 %v208, %v850
    %v852 = vpop.f32.mrb[0].mxu0
    %v853 = vadd.f32 %v212, %v852
    %854 = vmatprep.mubr.bf16.mxu0 0
    %855 = vmatmul.mubr.bf16.gmra.mrb[0].mxu0 %v451
    %v856 = vpop.f32.mrb[0].mxu0
    %v857 = vadd.f32 %v208, %v856
    %v858 = vpop.f32.mrb[0].mxu0
    %v859 = vadd.f32 %v212, %v858
    %v860 = vpop.f32.mrb[0].mxu0
    %v861 = vadd.f32 %v208, %v860
    %v862 = vpop.f32.mrb[0].mxu0
    %v863 = vadd.f32 %v212, %v862
    %864 = vmatprep.mubr.bf16.mxu0 0
    %865 = vmatmul.mubr.bf16.gmra.mrb[0].mxu0 %v452
    %v866 = vpop.f32.mrb[0].mxu0
    %v867 = vadd.f32 %v208, %v866
    %v868 = vpop.f32.mrb[0].mxu0
    %v869 = vadd.f32 %v212, %v868
    %v870 = vpop.f32.mrb[0].mxu0
    %v871 = vadd.f32 %v208, %v870
    %v872 = vpop.f32.mrb[0].mxu0
    %v873 = vadd.f32 %v212, %v872
    %874 = vmatprep.mubr.bf16.mxu0 0
    %875 = vmatmul.mubr.bf16.gmra.mrb[0].mxu0 %v453
    %v876 = vpop.f32.mrb[0].mxu0
    %v877 = vadd.f32 %v208, %v876
    %v878 = vpop.f32.mrb[0].mxu0
    %v879 = vadd.f32 %v212, %v878
    %v880 = vpop.f32.mrb[0].mxu0
    %v881 = vadd.f32 %v208, %v880
    %v882 = vpop.f32.mrb[0].mxu0
    %v883 = vadd.f32 %v212, %v882
    %884 = vmatprep.mubr.bf16.mxu0 0
    %885 = vmatmul.mubr.bf16.gmra.mrb[0].mxu0 %v454
    %v886 = vpop.f32.mrb[0].mxu0
    %v887 = vadd.f32 %v208, %v886
    %v888 = vpop.f32.mrb[0].mxu0
    %v889 = vadd.f32 %v212, %v888
    %v890 = vpop.f32.mrb[0].mxu0
    %v891 = vadd.f32 %v208, %v890
    %v892 = vpop.f32.mrb[0].mxu0
    %v893 = vadd.f32 %v212, %v892
    %894 = vmatprep.mubr.bf16.mxu0 0
    %895 = vmatmul.mubr.bf16.gmra.mrb[0].mxu0 %v455
    %v896 = vpop.f32.mrb[0].mxu0
    %v897 = vadd.f32 %v208, %v896
    %v898 = vpop.f32.mrb[0].mxu0
    %v899 = vadd.f32 %v212, %v898
    %v900 = vpop.f32.mrb[0].mxu0
    %v901 = vadd.f32 %v208, %v900
    %v902 = vpop.f32.mrb[0].mxu0
    %v903 = vadd.f32 %v212, %v902
    %904 = vmatprep.mubr.bf16.mxu0 0
    %905 = vmatmul.mubr.bf16.gmra.mrb[0].mxu0 %v456
    %v906 = vpop.f32.mrb[0].mxu0
    %v907 = vadd.f32 %v208, %v906
    %v908 = vpop.f32.mrb[0].mxu0
    %v909 = vadd.f32 %v212, %v908
    %v910 = vpop.f32.mrb[0].mxu0
    %v911 = vadd.f32 %v208, %v910
    %v912 = vpop.f32.mrb[0].mxu0
    %v913 = vadd.f32 %v212, %v912
    %914 = vmatprep.mubr.bf16.mxu0 0
    %915 = vmatmul.mubr.bf16.gmra.mrb[0].mxu0 %v457
    %v916 = vpop.f32.mrb[0].mxu0
    %v917 = vadd.f32 %v208, %v916
    %v918 = vpop.f32.mrb[0].mxu0
    %v919 = vadd.f32 %v212, %v918
    %v920 = vpop.f32.mrb[0].mxu0
    %v921 = vadd.f32 %v208, %v920
    %v922 = vpop.f32.mrb[0].mxu0
    %v923 = vadd.f32 %v212, %v922
    %924 = vmatprep.mubr.bf16.mxu0 0
    %925 = vmatmul.mubr.bf16.gmra.mrb[0].mxu0 %v458
    %v926 = vpop.f32.mrb[0].mxu0
    %v927 = vadd.f32 %v208, %v926
    %v928 = vpop.f32.mrb[0].mxu0
    %v929 = vadd.f32 %v212, %v928
    %v930 = vpop.f32.mrb[0].mxu0
    %v931 = vadd.f32 %v208, %v930
    %v932 = vpop.f32.mrb[0].mxu0
    %v933 = vadd.f32 %v212, %v932
    %934 = vmatprep.mubr.bf16.mxu0 0
    %935 = vmatmul.mubr.bf16.gmra.mrb[0].mxu0 %v459
    %v936 = vpop.f32.mrb[0].mxu0
    %v937 = vadd.f32 %v208, %v936
    %v938 = vpop.f32.mrb[0].mxu0
    %v939 = vadd.f32 %v212, %v938
    %v940 = vpop.f32.mrb[0].mxu0
    %v941 = vadd.f32 %v208, %v940
    %v942 = vpop.f32.mrb[0].mxu0
    %v943 = vadd.f32 %v212, %v942
    %944 = vmatprep.mubr.bf16.mxu0 0
    %945 = vmatmul.mubr.bf16.gmra.mrb[0].mxu0 %v460
    %v946 = vpop.f32.mrb[0].mxu0
    %v947 = vadd.f32 %v208, %v946
    %v948 = vpop.f32.mrb[0].mxu0
    %v949 = vadd.f32 %v212, %v948
    %v950 = vpop.f32.mrb[0].mxu0
    %v951 = vadd.f32 %v208, %v950
    %v952 = vpop.f32.mrb[0].mxu0
    %v953 = vadd.f32 %v212, %v952
    %954 = vmatprep.mubr.bf16.mxu0 0
    %955 = vmatmul.mubr.bf16.gmra.mrb[0].mxu0 %v461
    %v956 = vpop.f32.mrb[0].mxu0
    %v957 = vadd.f32 %v208, %v956
    %v958 = vpop.f32.mrb[0].mxu0
    %v959 = vadd.f32 %v212, %v958
    %v960 = vpop.f32.mrb[0].mxu0
    %v961 = vadd.f32 %v208, %v960
    %v962 = vpop.f32.mrb[0].mxu0
    %v963 = vadd.f32 %v212, %v962
    %964 = vmatprep.mubr.bf16.mxu0 0
    %965 = vmatmul.mubr.bf16.gmra.mrb[0].mxu0 %v462
    %v966 = vpop.f32.mrb[0].mxu0
    %v967 = vadd.f32 %v208, %v966
    %v968 = vpop.f32.mrb[0].mxu0
    %v969 = vadd.f32 %v212, %v968
    %v970 = vpop.f32.mrb[0].mxu0
    %v971 = vadd.f32 %v208, %v970
    %v972 = vpop.f32.mrb[0].mxu0
    %v973 = vadd.f32 %v212, %v972
    %974 = vmatprep.mubr.bf16.mxu0 0
    %975 = vmatmul.mubr.bf16.gmra.mrb[0].mxu0 %v463
    %v976 = vpop.f32.mrb[0].mxu0
    %v977 = vadd.f32 %v208, %v976
    %v978 = vpop.f32.mrb[0].mxu0
    %v979 = vadd.f32 %v212, %v978
    %v980 = vpop.f32.mrb[0].mxu0
    %v981 = vadd.f32 %v208, %v980
    %v982 = vpop.f32.mrb[0].mxu0
    %v983 = vadd.f32 %v212, %v982
    %984 = vmatprep.mubr.bf16.mxu0 0
    %985 = vmatmul.mubr.bf16.gmra.mrb[0].mxu0 %v464
    %v986 = vpop.f32.mrb[0].mxu0
    %v987 = vadd.f32 %v208, %v986
    %v988 = vpop.f32.mrb[0].mxu0
    %v989 = vadd.f32 %v212, %v988
    %v990 = vpop.f32.mrb[0].mxu0
    %v991 = vadd.f32 %v208, %v990
    %v992 = vpop.f32.mrb[0].mxu0
    %v993 = vadd.f32 %v212, %v992
    %994 = vmatprep.mubr.bf16.mxu0 0
    %995 = vmatmul.mubr.bf16.gmra.mrb[0].mxu0 %v465
    %v996 = vpop.f32.mrb[0].mxu0
    %v997 = vadd.f32 %v208, %v996
    %v998 = vpop.f32.mrb[0].mxu0
    %v999 = vadd.f32 %v212, %v998
    %v1000 = vpop.f32.mrb[0].mxu0
    %v1001 = vadd.f32 %v208, %v1000
    %v1002 = vpop.f32.mrb[0].mxu0
    %v1003 = vadd.f32 %v212, %v1002
    %1004 = vmatprep.mubr.bf16.mxu0 0
    %1005 = vmatmul.mubr.bf16.gmra.mrb[0].mxu0 %v466
    %v1006 = vpop.f32.mrb[0].mxu0
    %v1007 = vadd.f32 %v208, %v1006
    %v1008 = vpop.f32.mrb[0].mxu0
    %v1009 = vadd.f32 %v212, %v1008
    %v1010 = vpop.f32.mrb[0].mxu0
    %v1011 = vadd.f32 %v208, %v1010
    %v1012 = vpop.f32.mrb[0].mxu0
    %v1013 = vadd.f32 %v212, %v1012
    %1014 = vmatprep.mubr.bf16.mxu0 0
    %1015 = vmatmul.mubr.bf16.gmra.mrb[0].mxu0 %v467
    %v1016 = vpop.f32.mrb[0].mxu0
    %v1017 = vadd.f32 %v208, %v1016
    %v1018 = vpop.f32.mrb[0].mxu0
    %v1019 = vadd.f32 %v212, %v1018
    %v1020 = vpop.f32.mrb[0].mxu0
    %v1021 = vadd.f32 %v208, %v1020
    %v1022 = vpop.f32.mrb[0].mxu0
    %v1023 = vadd.f32 %v212, %v1022
    %1024 = vmatprep.mubr.bf16.mxu0 0
    %1025 = vmatmul.mubr.bf16.gmra.mrb[0].mxu0 %v468
    %v1026 = vpop.f32.mrb[0].mxu0
    %v1027 = vadd.f32 %v208, %v1026
    %v1028 = vpop.f32.mrb[0].mxu0
    %v1029 = vadd.f32 %v212, %v1028
    %v1030 = vpop.f32.mrb[0].mxu0
    %v1031 = vadd.f32 %v208, %v1030
    %v1032 = vpop.f32.mrb[0].mxu0
    %v1033 = vadd.f32 %v212, %v1032
    %1034 = vmatprep.mubr.bf16.mxu0 0
    %1035 = vmatmul.mubr.bf16.gmra.mrb[0].mxu0 %v469
    %v1036 = vpop.f32.mrb[0].mxu0
    %v1037 = vadd.f32 %v208, %v1036
    %v1038 = vpop.f32.mrb[0].mxu0
    %v1039 = vadd.f32 %v212, %v1038
    %v1040 = vpop.f32.mrb[0].mxu0
    %v1041 = vadd.f32 %v208, %v1040
    %v1042 = vpop.f32.mrb[0].mxu0
    %v1043 = vadd.f32 %v212, %v1042
    %1044 = vmatprep.mubr.bf16.mxu0 0
    %1045 = vmatmul.mubr.bf16.gmra.mrb[0].mxu0 %v470
    %v1046 = vpop.f32.mrb[0].mxu0
    %v1047 = vadd.f32 %v208, %v1046
    %v1048 = vpop.f32.mrb[0].mxu0
    %v1049 = vadd.f32 %v212, %v1048
    %v1050 = vpop.f32.mrb[0].mxu0
    %v1051 = vadd.f32 %v208, %v1050
    %v1052 = vpop.f32.mrb[0].mxu0
    %v1053 = vadd.f32 %v212, %v1052
    %1054 = vmatprep.mubr.bf16.mxu0 0
    %1055 = vmatmul.mubr.bf16.gmra.mrb[0].mxu0 %v471
    %v1056 = vpop.f32.mrb[0].mxu0
    %v1057 = vadd.f32 %v208, %v1056
    %v1058 = vpop.f32.mrb[0].mxu0
    %v1059 = vadd.f32 %v212, %v1058
    %v1060 = vpop.f32.mrb[0].mxu0
    %v1061 = vadd.f32 %v208, %v1060
    %v1062 = vpop.f32.mrb[0].mxu0
    %v1063 = vadd.f32 %v212, %v1062
    %1064 = vmatprep.mubr.bf16.mxu0 0
    %1065 = vmatmul.mubr.bf16.gmra.mrb[0].mxu0 %v472
    %v1066 = vpop.f32.mrb[0].mxu0
    %v1067 = vadd.f32 %v208, %v1066
    %v1068 = vpop.f32.mrb[0].mxu0
    %v1069 = vadd.f32 %v212, %v1068
    %v1070 = vpop.f32.mrb[0].mxu0
    %v1071 = vadd.f32 %v208, %v1070
    %v1072 = vpop.f32.mrb[0].mxu0
    %v1073 = vadd.f32 %v212, %v1072
    %1074 = vmatprep.mubr.bf16.mxu0 0
    %1075 = vmatmul.mubr.bf16.gmra.mrb[0].mxu0 %v473
    %v1076 = vpop.f32.mrb[0].mxu0
    %v1077 = vadd.f32 %v208, %v1076
    %v1078 = vpop.f32.mrb[0].mxu0
    %v1079 = vadd.f32 %v212, %v1078
    %v1080 = vpop.f32.mrb[0].mxu0
    %v1081 = vadd.f32 %v208, %v1080
    %v1082 = vpop.f32.mrb[0].mxu0
    %v1083 = vadd.f32 %v212, %v1082
    %1084 = vmatprep.mubr.bf16.mxu0 0
    %1085 = vmatmul.mubr.bf16.gmra.mrb[0].mxu0 %v474
    %v1086 = vpop.f32.mrb[0].mxu0
    %v1087 = vadd.f32 %v208, %v1086
    %v1088 = vpop.f32.mrb[0].mxu0
    %v1089 = vadd.f32 %v212, %v1088
    %v1090 = vpop.f32.mrb[0].mxu0
    %v1091 = vadd.f32 %v208, %v1090
    %v1092 = vpop.f32.mrb[0].mxu0
    %v1093 = vadd.f32 %v212, %v1092
    %1094 = vmatprep.mubr.bf16.mxu0 0
    %1095 = vmatmul.mubr.bf16.gmra.mrb[0].mxu0 %v475
    %v1096 = vpop.f32.mrb[0].mxu0
    %v1097 = vadd.f32 %v208, %v1096
    %v1098 = vpop.f32.mrb[0].mxu0
    %v1099 = vadd.f32 %v212, %v1098
    %v1100 = vpop.f32.mrb[0].mxu0
    %v1101 = vadd.f32 %v208, %v1100
    %v1102 = vpop.f32.mrb[0].mxu0
    %v1103 = vadd.f32 %v212, %v1102
    %1104 = vmatprep.mubr.bf16.mxu0 0
    %1105 = vmatmul.mubr.bf16.gmra.mrb[0].mxu0 %v476
    %v1106 = vpop.f32.mrb[0].mxu0
    %v1107 = vadd.f32 %v208, %v1106
    %v1108 = vpop.f32.mrb[0].mxu0
    %v1109 = vadd.f32 %v212, %v1108
    %v1110 = vpop.f32.mrb[0].mxu0
    %v1111 = vadd.f32 %v208, %v1110
    %v1112 = vpop.f32.mrb[0].mxu0
    %v1113 = vadd.f32 %v212, %v1112
    %1114 = vmatprep.mubr.bf16.mxu0 0
    %1115 = vmatmul.mubr.bf16.gmra.mrb[0].mxu0 %v477
    %v1116 = vpop.f32.mrb[0].mxu0
    %v1117 = vadd.f32 %v208, %v1116
    %v1118 = vpop.f32.mrb[0].mxu0
    %v1119 = vadd.f32 %v212, %v1118
    %v1120 = vpop.f32.mrb[0].mxu0
    %v1121 = vadd.f32 %v208, %v1120
    %v1122 = vpop.f32.mrb[0].mxu0
    %v1123 = vadd.f32 %v212, %v1122
    %1124 = vmatprep.mubr.bf16.mxu0 0
    %1125 = vmatmul.mubr.bf16.gmra.mrb[0].mxu0 %v478
    %v1126 = vpop.f32.mrb[0].mxu0
    %v1127 = vadd.f32 %v208, %v1126
    %v1128 = vpop.f32.mrb[0].mxu0
    %v1129 = vadd.f32 %v212, %v1128
    %v1130 = vpop.f32.mrb[0].mxu0
    %v1131 = vadd.f32 %v208, %v1130
    %v1132 = vpop.f32.mrb[0].mxu0
    %v1133 = vadd.f32 %v212, %v1132
    %1134 = vmatprep.mubr.bf16.mxu0 0
    %1135 = vmatmul.mubr.bf16.gmra.mrb[0].mxu0 %v479
    %v1136 = vpop.f32.mrb[0].mxu0
    %v1137 = vadd.f32 %v208, %v1136
    %v1138 = vpop.f32.mrb[0].mxu0
    %v1139 = vadd.f32 %v212, %v1138
    %v1140 = vpop.f32.mrb[0].mxu0
    %v1141 = vadd.f32 %v208, %v1140
    %v1142 = vpop.f32.mrb[0].mxu0
    %v1143 = vadd.f32 %v212, %v1142
    %1144 = vmatprep.mubr.bf16.mxu0 0
    %1145 = vmatmul.mubr.bf16.gmra.mrb[0].mxu0 %v480
    %v1146 = vpop.f32.mrb[0].mxu0
    %v1147 = vadd.f32 %v208, %v1146
    %v1148 = vpop.f32.mrb[0].mxu0
    %v1149 = vadd.f32 %v212, %v1148
    %v1150 = vpop.f32.mrb[0].mxu0
    %v1151 = vadd.f32 %v208, %v1150
    %v1152 = vpop.f32.mrb[0].mxu0
    %v1153 = vadd.f32 %v212, %v1152
    %1154 = vmatprep.mubr.bf16.mxu0 0
    %1155 = vmatmul.mubr.bf16.gmra.mrb[0].mxu0 %v481
    %v1156 = vpop.f32.mrb[0].mxu0
    %v1157 = vadd.f32 %v208, %v1156
    %v1158 = vpop.f32.mrb[0].mxu0
    %v1159 = vadd.f32 %v212, %v1158
    %v1160 = vpop.f32.mrb[0].mxu0
    %v1161 = vadd.f32 %v208, %v1160
    %v1162 = vpop.f32.mrb[0].mxu0
    %v1163 = vadd.f32 %v212, %v1162
    %1164 = vmatprep.mubr.bf16.mxu0 0
    %1165 = vmatmul.mubr.bf16.gmra.mrb[0].mxu0 %v482
    %v1166 = vpop.f32.mrb[0].mxu0
    %v1167 = vadd.f32 %v208, %v1166
    %v1168 = vpop.f32.mrb[0].mxu0
    %v1169 = vadd.f32 %v212, %v1168
    %v1170 = vpop.f32.mrb[0].mxu0
    %v1171 = vadd.f32 %v208, %v1170
    %v1172 = vpop.f32.mrb[0].mxu0
    %v1173 = vadd.f32 %v212, %v1172
    %1174 = vmatprep.mubr.bf16.mxu0 0
    %1175 = vmatmul.mubr.bf16.gmra.mrb[0].mxu0 %v483
    %v1176 = vpop.f32.mrb[0].mxu0
    %v1177 = vadd.f32 %v208, %v1176
    %v1178 = vpop.f32.mrb[0].mxu0
    %v1179 = vadd.f32 %v212, %v1178
    %v1180 = vpop.f32.mrb[0].mxu0
    %v1181 = vadd.f32 %v208, %v1180
    %v1182 = vpop.f32.mrb[0].mxu0
    %v1183 = vadd.f32 %v212, %v1182
    %1184 = vmatprep.mubr.bf16.mxu0 0
    %1185 = vmatmul.mubr.bf16.gmra.mrb[0].mxu0 %v484
    %v1186 = vpop.f32.mrb[0].mxu0
    %v1187 = vadd.f32 %v208, %v1186
    %v1188 = vpop.f32.mrb[0].mxu0
    %v1189 = vadd.f32 %v212, %v1188
    %v1190 = vpop.f32.mrb[0].mxu0
    %v1191 = vadd.f32 %v208, %v1190
    %v1192 = vpop.f32.mrb[0].mxu0
    %v1193 = vadd.f32 %v212, %v1192
    %1194 = vmatprep.mubr.bf16.mxu0 0
    %1195 = vmatmul.mubr.bf16.gmra.mrb[0].mxu0 %v485
    %v1196 = vpop.f32.mrb[0].mxu0
    %v1197 = vadd.f32 %v208, %v1196
    %v1198 = vpop.f32.mrb[0].mxu0
    %v1199 = vadd.f32 %v212, %v1198
    %v1200 = vpop.f32.mrb[0].mxu0
    %v1201 = vadd.f32 %v208, %v1200
    %v1202 = vpop.f32.mrb[0].mxu0
    %v1203 = vadd.f32 %v212, %v1202
    %1204 = vmatprep.mubr.bf16.mxu0 0
    %1205 = vmatmul.mubr.bf16.gmra.mrb[0].mxu0 %v486
    %v1206 = vpop.f32.mrb[0].mxu0
    %v1207 = vadd.f32 %v208, %v1206
    %v1208 = vpop.f32.mrb[0].mxu0
    %v1209 = vadd.f32 %v212, %v1208
    %v1210 = vpop.f32.mrb[0].mxu0
    %v1211 = vadd.f32 %v208, %v1210
    %v1212 = vpop.f32.mrb[0].mxu0
    %v1213 = vadd.f32 %v212, %v1212
    %1214 = vmatprep.mubr.bf16.mxu0 0
    %1215 = vmatmul.mubr.bf16.gmra.mrb[0].mxu0 %v487
    %v1216 = vpop.f32.mrb[0].mxu0
    %v1217 = vadd.f32 %v208, %v1216
    %v1218 = vpop.f32.mrb[0].mxu0
    %v1219 = vadd.f32 %v212, %v1218
    %v1220 = vpop.f32.mrb[0].mxu0
    %v1221 = vadd.f32 %v208, %v1220
    %v1222 = vpop.f32.mrb[0].mxu0
    %v1223 = vadd.f32 %v212, %v1222
    %1224 = vmatprep.mubr.bf16.mxu0 0
    %1225 = vmatmul.mubr.bf16.gmra.mrb[0].mxu0 %v488
    %v1226 = vpop.f32.mrb[0].mxu0
    %v1227 = vadd.f32 %v208, %v1226
    %v1228 = vpop.f32.mrb[0].mxu0
    %v1229 = vadd.f32 %v212, %v1228
    %v1230 = vpop.f32.mrb[0].mxu0
    %v1231 = vadd.f32 %v208, %v1230
    %v1232 = vpop.f32.mrb[0].mxu0
    %v1233 = vadd.f32 %v212, %v1232
    %1234 = vmatprep.mubr.bf16.mxu0 0
    %1235 = vmatmul.mubr.bf16.gmra.mrb[0].mxu0 %v489
    %v1236 = vpop.f32.mrb[0].mxu0
    %v1237 = vadd.f32 %v208, %v1236
    %v1238 = vpop.f32.mrb[0].mxu0
    %v1239 = vadd.f32 %v212, %v1238
    %v1240 = vpop.f32.mrb[0].mxu0
    %v1241 = vadd.f32 %v208, %v1240
    %v1242 = vpop.f32.mrb[0].mxu0
    %v1243 = vadd.f32 %v212, %v1242
    %1244 = vdwg.mxu0
    %1245 = vmatprep.subr.bf16.mxu0 0
    %1246 = vmatpush1.bf16.msra.mxu0 %v626
    %1247 = vmatprep.subr.bf16.mxu0 0
    %1248 = vmatpush1.bf16.msra.mxu0 %v629
    %1249 = vmatprep.subr.bf16.mxu0 0
    %1250 = vmatpush1.bf16.msra.mxu0 %v632
    %1251 = vmatprep.subr.bf16.mxu0 0
    %1252 = vmatpush1.bf16.msra.mxu0 %v635
    %1253 = vmatprep.subr.bf16.mxu0 0
    %1254 = vmatpush1.bf16.msra.mxu0 %v638
    %1255 = vmatprep.subr.bf16.mxu0 0
    %1256 = vmatpush1.bf16.msra.mxu0 %v641
    %1257 = vmatprep.subr.bf16.mxu0 0
    %1258 = vmatpush1.bf16.msra.mxu0 %v644
    %1259 = vmatprep.subr.bf16.mxu0 0
    %1260 = vmatpush1.bf16.msra.mxu0 %v647
    %1261 = vmatprep.subr.bf16.mxu0 0
    %1262 = vmatpush1.bf16.msra.mxu0 0
    %1263 = vmatprep.subr.bf16.mxu0 0
    %1264 = vmatpush1.bf16.msra.mxu0 0
    %1265 = vmatprep.subr.bf16.mxu0 0
    %1266 = vmatpush1.bf16.msra.mxu0 0
    %1267 = vmatprep.subr.bf16.mxu0 0
    %1268 = vmatpush1.bf16.msra.mxu0 0
    %1269 = vmatprep.subr.bf16.mxu0 0
    %1270 = vmatpush1.bf16.msra.mxu0 0
    %1271 = vmatprep.subr.bf16.mxu0 0
    %1272 = vmatpush1.bf16.msra.mxu0 0
    %1273 = vmatprep.subr.bf16.mxu0 0
    %1274 = vmatpush1.bf16.msra.mxu0 0
    %1275 = vmatprep.subr.bf16.mxu0 0
    %1276 = vmatpush1.bf16.msra.mxu0 0
    %1277 = vmatprep.mubr.bf16.mxu0 0
    %1278 = vmatmul.mubr.bf16.gmra.mrb[0].mxu0 %v436
    %v1279 = vpop.f32.mrb[0].mxu0
    %v1280 = vadd.f32 %v216, %v1279
    %v1281 = vpop.f32.mrb[0].mxu0
    %v1282 = vpop.f32.mrb[0].mxu0
    %v1283 = vadd.f32 %v216, %v1282
    %v1284 = vpop.f32.mrb[0].mxu0
    %1285 = vmatprep.mubr.bf16.mxu0 0
    %1286 = vmatmul.mubr.bf16.gmra.mrb[0].mxu0 %v437
    %v1287 = vpop.f32.mrb[0].mxu0
    %v1288 = vadd.f32 %v216, %v1287
    %v1289 = vpop.f32.mrb[0].mxu0
    %v1290 = vpop.f32.mrb[0].mxu0
    %v1291 = vadd.f32 %v216, %v1290
    %v1292 = vpop.f32.mrb[0].mxu0
    %1293 = vmatprep.mubr.bf16.mxu0 0
    %1294 = vmatmul.mubr.bf16.gmra.mrb[0].mxu0 %v438
    %v1295 = vpop.f32.mrb[0].mxu0
    %v1296 = vadd.f32 %v216, %v1295
    %v1297 = vpop.f32.mrb[0].mxu0
    %v1298 = vpop.f32.mrb[0].mxu0
    %v1299 = vadd.f32 %v216, %v1298
    %v1300 = vpop.f32.mrb[0].mxu0
    %1301 = vmatprep.mubr.bf16.mxu0 0
    %1302 = vmatmul.mubr.bf16.gmra.mrb[0].mxu0 %v439
    %v1303 = vpop.f32.mrb[0].mxu0
    %v1304 = vadd.f32 %v216, %v1303
    %v1305 = vpop.f32.mrb[0].mxu0
    %v1306 = vpop.f32.mrb[0].mxu0
    %v1307 = vadd.f32 %v216, %v1306
    %v1308 = vpop.f32.mrb[0].mxu0
    %1309 = vmatprep.mubr.bf16.mxu0 0
    %1310 = vmatmul.mubr.bf16.gmra.mrb[0].mxu0 %v440
    %v1311 = vpop.f32.mrb[0].mxu0
    %v1312 = vadd.f32 %v216, %v1311
    %v1313 = vpop.f32.mrb[0].mxu0
    %v1314 = vpop.f32.mrb[0].mxu0
    %v1315 = vadd.f32 %v216, %v1314
    %v1316 = vpop.f32.mrb[0].mxu0
    %1317 = vmatprep.mubr.bf16.mxu0 0
    %1318 = vmatmul.mubr.bf16.gmra.mrb[0].mxu0 %v441
    %v1319 = vpop.f32.mrb[0].mxu0
    %v1320 = vadd.f32 %v216, %v1319
    %v1321 = vpop.f32.mrb[0].mxu0
    %v1322 = vpop.f32.mrb[0].mxu0
    %v1323 = vadd.f32 %v216, %v1322
    %v1324 = vpop.f32.mrb[0].mxu0
    %1325 = vmatprep.mubr.bf16.mxu0 0
    %1326 = vmatmul.mubr.bf16.gmra.mrb[0].mxu0 %v442
    %v1327 = vpop.f32.mrb[0].mxu0
    %v1328 = vadd.f32 %v216, %v1327
    %v1329 = vpop.f32.mrb[0].mxu0
    %v1330 = vpop.f32.mrb[0].mxu0
    %v1331 = vadd.f32 %v216, %v1330
    %v1332 = vpop.f32.mrb[0].mxu0
    %1333 = vmatprep.mubr.bf16.mxu0 0
    %1334 = vmatmul.mubr.bf16.gmra.mrb[0].mxu0 %v443
    %v1335 = vpop.f32.mrb[0].mxu0
    %v1336 = vadd.f32 %v216, %v1335
    %v1337 = vpop.f32.mrb[0].mxu0
    %v1338 = vpop.f32.mrb[0].mxu0
    %v1339 = vadd.f32 %v216, %v1338
    %v1340 = vpop.f32.mrb[0].mxu0
    %1341 = vmatprep.mubr.bf16.mxu0 0
    %1342 = vmatmul.mubr.bf16.gmra.mrb[0].mxu0 %v444
    %v1343 = vpop.f32.mrb[0].mxu0
    %v1344 = vadd.f32 %v216, %v1343
    %v1345 = vpop.f32.mrb[0].mxu0
    %v1346 = vpop.f32.mrb[0].mxu0
    %v1347 = vadd.f32 %v216, %v1346
    %v1348 = vpop.f32.mrb[0].mxu0
    %1349 = vmatprep.mubr.bf16.mxu0 0
    %1350 = vmatmul.mubr.bf16.gmra.mrb[0].mxu0 %v445
    %v1351 = vpop.f32.mrb[0].mxu0
    %v1352 = vadd.f32 %v216, %v1351
    %v1353 = vpop.f32.mrb[0].mxu0
    %v1354 = vpop.f32.mrb[0].mxu0
    %v1355 = vadd.f32 %v216, %v1354
    %v1356 = vpop.f32.mrb[0].mxu0
    %1357 = vmatprep.mubr.bf16.mxu0 0
    %1358 = vmatmul.mubr.bf16.gmra.mrb[0].mxu0 %v446
    %v1359 = vpop.f32.mrb[0].mxu0
    %v1360 = vadd.f32 %v216, %v1359
    %v1361 = vpop.f32.mrb[0].mxu0
    %v1362 = vpop.f32.mrb[0].mxu0
    %v1363 = vadd.f32 %v216, %v1362
    %v1364 = vpop.f32.mrb[0].mxu0
    %1365 = vmatprep.mubr.bf16.mxu0 0
    %1366 = vmatmul.mubr.bf16.gmra.mrb[0].mxu0 %v447
    %v1367 = vpop.f32.mrb[0].mxu0
    %v1368 = vadd.f32 %v216, %v1367
    %v1369 = vpop.f32.mrb[0].mxu0
    %v1370 = vpop.f32.mrb[0].mxu0
    %v1371 = vadd.f32 %v216, %v1370
    %v1372 = vpop.f32.mrb[0].mxu0
    %1373 = vmatprep.mubr.bf16.mxu0 0
    %1374 = vmatmul.mubr.bf16.gmra.mrb[0].mxu0 %v448
    %v1375 = vpop.f32.mrb[0].mxu0
    %v1376 = vadd.f32 %v216, %v1375
    %v1377 = vpop.f32.mrb[0].mxu0
    %v1378 = vpop.f32.mrb[0].mxu0
    %v1379 = vadd.f32 %v216, %v1378
    %v1380 = vpop.f32.mrb[0].mxu0
    %1381 = vmatprep.mubr.bf16.mxu0 0
    %1382 = vmatmul.mubr.bf16.gmra.mrb[0].mxu0 %v449
    %v1383 = vpop.f32.mrb[0].mxu0
    %v1384 = vadd.f32 %v216, %v1383
    %v1385 = vpop.f32.mrb[0].mxu0
    %v1386 = vpop.f32.mrb[0].mxu0
    %v1387 = vadd.f32 %v216, %v1386
    %v1388 = vpop.f32.mrb[0].mxu0
    %1389 = vmatprep.mubr.bf16.mxu0 0
    %1390 = vmatmul.mubr.bf16.gmra.mrb[0].mxu0 %v450
    %v1391 = vpop.f32.mrb[0].mxu0
    %v1392 = vadd.f32 %v216, %v1391
    %v1393 = vpop.f32.mrb[0].mxu0
    %v1394 = vpop.f32.mrb[0].mxu0
    %v1395 = vadd.f32 %v216, %v1394
    %v1396 = vpop.f32.mrb[0].mxu0
    %1397 = vmatprep.mubr.bf16.mxu0 0
    %1398 = vmatmul.mubr.bf16.gmra.mrb[0].mxu0 %v451
    %v1399 = vpop.f32.mrb[0].mxu0
    %v1400 = vadd.f32 %v216, %v1399
    %v1401 = vpop.f32.mrb[0].mxu0
    %v1402 = vpop.f32.mrb[0].mxu0
    %v1403 = vadd.f32 %v216, %v1402
    %v1404 = vpop.f32.mrb[0].mxu0
    %1405 = vmatprep.mubr.bf16.mxu0 0
    %1406 = vmatmul.mubr.bf16.gmra.mrb[0].mxu0 %v452
    %v1407 = vpop.f32.mrb[0].mxu0
    %v1408 = vadd.f32 %v216, %v1407
    %v1409 = vpop.f32.mrb[0].mxu0
    %v1410 = vpop.f32.mrb[0].mxu0
    %v1411 = vadd.f32 %v216, %v1410
    %v1412 = vpop.f32.mrb[0].mxu0
    %1413 = vmatprep.mubr.bf16.mxu0 0
    %1414 = vmatmul.mubr.bf16.gmra.mrb[0].mxu0 %v453
    %v1415 = vpop.f32.mrb[0].mxu0
    %v1416 = vadd.f32 %v216, %v1415
    %v1417 = vpop.f32.mrb[0].mxu0
    %v1418 = vpop.f32.mrb[0].mxu0
    %v1419 = vadd.f32 %v216, %v1418
    %v1420 = vpop.f32.mrb[0].mxu0
    %1421 = vmatprep.mubr.bf16.mxu0 0
    %1422 = vmatmul.mubr.bf16.gmra.mrb[0].mxu0 %v454
    %v1423 = vpop.f32.mrb[0].mxu0
    %v1424 = vadd.f32 %v216, %v1423
    %v1425 = vpop.f32.mrb[0].mxu0
    %v1426 = vpop.f32.mrb[0].mxu0
    %v1427 = vadd.f32 %v216, %v1426
    %v1428 = vpop.f32.mrb[0].mxu0
    %1429 = vmatprep.mubr.bf16.mxu0 0
    %1430 = vmatmul.mubr.bf16.gmra.mrb[0].mxu0 %v455
    %v1431 = vpop.f32.mrb[0].mxu0
    %v1432 = vadd.f32 %v216, %v1431
    %v1433 = vpop.f32.mrb[0].mxu0
    %v1434 = vpop.f32.mrb[0].mxu0
    %v1435 = vadd.f32 %v216, %v1434
    %v1436 = vpop.f32.mrb[0].mxu0
    %1437 = vmatprep.mubr.bf16.mxu0 0
    %1438 = vmatmul.mubr.bf16.gmra.mrb[0].mxu0 %v456
    %v1439 = vpop.f32.mrb[0].mxu0
    %v1440 = vadd.f32 %v216, %v1439
    %v1441 = vpop.f32.mrb[0].mxu0
    %v1442 = vpop.f32.mrb[0].mxu0
    %v1443 = vadd.f32 %v216, %v1442
    %v1444 = vpop.f32.mrb[0].mxu0
    %1445 = vmatprep.mubr.bf16.mxu0 0
    %1446 = vmatmul.mubr.bf16.gmra.mrb[0].mxu0 %v457
    %v1447 = vpop.f32.mrb[0].mxu0
    %v1448 = vadd.f32 %v216, %v1447
    %v1449 = vpop.f32.mrb[0].mxu0
    %v1450 = vpop.f32.mrb[0].mxu0
    %v1451 = vadd.f32 %v216, %v1450
    %v1452 = vpop.f32.mrb[0].mxu0
    %1453 = vmatprep.mubr.bf16.mxu0 0
    %1454 = vmatmul.mubr.bf16.gmra.mrb[0].mxu0 %v458
    %v1455 = vpop.f32.mrb[0].mxu0
    %v1456 = vadd.f32 %v216, %v1455
    %v1457 = vpop.f32.mrb[0].mxu0
    %v1458 = vpop.f32.mrb[0].mxu0
    %v1459 = vadd.f32 %v216, %v1458
    %v1460 = vpop.f32.mrb[0].mxu0
    %1461 = vmatprep.mubr.bf16.mxu0 0
    %1462 = vmatmul.mubr.bf16.gmra.mrb[0].mxu0 %v459
    %v1463 = vpop.f32.mrb[0].mxu0
    %v1464 = vadd.f32 %v216, %v1463
    %v1465 = vpop.f32.mrb[0].mxu0
    %v1466 = vpop.f32.mrb[0].mxu0
    %v1467 = vadd.f32 %v216, %v1466
    %v1468 = vpop.f32.mrb[0].mxu0
    %1469 = vmatprep.mubr.bf16.mxu0 0
    %1470 = vmatmul.mubr.bf16.gmra.mrb[0].mxu0 %v460
    %v1471 = vpop.f32.mrb[0].mxu0
    %v1472 = vadd.f32 %v216, %v1471
    %v1473 = vpop.f32.mrb[0].mxu0
    %v1474 = vpop.f32.mrb[0].mxu0
    %v1475 = vadd.f32 %v216, %v1474
    %v1476 = vpop.f32.mrb[0].mxu0
    %1477 = vmatprep.mubr.bf16.mxu0 0
    %1478 = vmatmul.mubr.bf16.gmra.mrb[0].mxu0 %v461
    %v1479 = vpop.f32.mrb[0].mxu0
    %v1480 = vadd.f32 %v216, %v1479
    %v1481 = vpop.f32.mrb[0].mxu0
    %v1482 = vpop.f32.mrb[0].mxu0
    %v1483 = vadd.f32 %v216, %v1482
    %v1484 = vpop.f32.mrb[0].mxu0
    %1485 = vmatprep.mubr.bf16.mxu0 0
    %1486 = vmatmul.mubr.bf16.gmra.mrb[0].mxu0 %v462
    %v1487 = vpop.f32.mrb[0].mxu0
    %v1488 = vadd.f32 %v216, %v1487
    %v1489 = vpop.f32.mrb[0].mxu0
    %v1490 = vpop.f32.mrb[0].mxu0
    %v1491 = vadd.f32 %v216, %v1490
    %v1492 = vpop.f32.mrb[0].mxu0
    %1493 = vmatprep.mubr.bf16.mxu0 0
    %1494 = vmatmul.mubr.bf16.gmra.mrb[0].mxu0 %v463
    %v1495 = vpop.f32.mrb[0].mxu0
    %v1496 = vadd.f32 %v216, %v1495
    %v1497 = vpop.f32.mrb[0].mxu0
    %v1498 = vpop.f32.mrb[0].mxu0
    %v1499 = vadd.f32 %v216, %v1498
    %v1500 = vpop.f32.mrb[0].mxu0
    %1501 = vmatprep.mubr.bf16.mxu0 0
    %1502 = vmatmul.mubr.bf16.gmra.mrb[0].mxu0 %v464
    %v1503 = vpop.f32.mrb[0].mxu0
    %v1504 = vadd.f32 %v216, %v1503
    %v1505 = vpop.f32.mrb[0].mxu0
    %v1506 = vpop.f32.mrb[0].mxu0
    %v1507 = vadd.f32 %v216, %v1506
    %v1508 = vpop.f32.mrb[0].mxu0
    %1509 = vmatprep.mubr.bf16.mxu0 0
    %1510 = vmatmul.mubr.bf16.gmra.mrb[0].mxu0 %v465
    %v1511 = vpop.f32.mrb[0].mxu0
    %v1512 = vadd.f32 %v216, %v1511
    %v1513 = vpop.f32.mrb[0].mxu0
    %v1514 = vpop.f32.mrb[0].mxu0
    %v1515 = vadd.f32 %v216, %v1514
    %v1516 = vpop.f32.mrb[0].mxu0
    %1517 = vmatprep.mubr.bf16.mxu0 0
    %1518 = vmatmul.mubr.bf16.gmra.mrb[0].mxu0 %v466
    %v1519 = vpop.f32.mrb[0].mxu0
    %v1520 = vadd.f32 %v216, %v1519
    %v1521 = vpop.f32.mrb[0].mxu0
    %v1522 = vpop.f32.mrb[0].mxu0
    %v1523 = vadd.f32 %v216, %v1522
    %v1524 = vpop.f32.mrb[0].mxu0
    %1525 = vmatprep.mubr.bf16.mxu0 0
    %1526 = vmatmul.mubr.bf16.gmra.mrb[0].mxu0 %v467
    %v1527 = vpop.f32.mrb[0].mxu0
    %v1528 = vadd.f32 %v216, %v1527
    %v1529 = vpop.f32.mrb[0].mxu0
    %v1530 = vpop.f32.mrb[0].mxu0
    %v1531 = vadd.f32 %v216, %v1530
    %v1532 = vpop.f32.mrb[0].mxu0
    %1533 = vmatprep.mubr.bf16.mxu0 0
    %1534 = vmatmul.mubr.bf16.gmra.mrb[0].mxu0 %v468
    %v1535 = vpop.f32.mrb[0].mxu0
    %v1536 = vadd.f32 %v216, %v1535
    %v1537 = vpop.f32.mrb[0].mxu0
    %v1538 = vpop.f32.mrb[0].mxu0
    %v1539 = vadd.f32 %v216, %v1538
    %v1540 = vpop.f32.mrb[0].mxu0
    %1541 = vmatprep.mubr.bf16.mxu0 0
    %1542 = vmatmul.mubr.bf16.gmra.mrb[0].mxu0 %v469
    %v1543 = vpop.f32.mrb[0].mxu0
    %v1544 = vadd.f32 %v216, %v1543
    %v1545 = vpop.f32.mrb[0].mxu0
    %v1546 = vpop.f32.mrb[0].mxu0
    %v1547 = vadd.f32 %v216, %v1546
    %v1548 = vpop.f32.mrb[0].mxu0
    %1549 = vmatprep.mubr.bf16.mxu0 0
    %1550 = vmatmul.mubr.bf16.gmra.mrb[0].mxu0 %v470
    %v1551 = vpop.f32.mrb[0].mxu0
    %v1552 = vadd.f32 %v216, %v1551
    %v1553 = vpop.f32.mrb[0].mxu0
    %v1554 = vpop.f32.mrb[0].mxu0
    %v1555 = vadd.f32 %v216, %v1554
    %v1556 = vpop.f32.mrb[0].mxu0
    %1557 = vmatprep.mubr.bf16.mxu0 0
    %1558 = vmatmul.mubr.bf16.gmra.mrb[0].mxu0 %v471
    %v1559 = vpop.f32.mrb[0].mxu0
    %v1560 = vadd.f32 %v216, %v1559
    %v1561 = vpop.f32.mrb[0].mxu0
    %v1562 = vpop.f32.mrb[0].mxu0
    %v1563 = vadd.f32 %v216, %v1562
    %v1564 = vpop.f32.mrb[0].mxu0
    %1565 = vmatprep.mubr.bf16.mxu0 0
    %1566 = vmatmul.mubr.bf16.gmra.mrb[0].mxu0 %v472
    %v1567 = vpop.f32.mrb[0].mxu0
    %v1568 = vadd.f32 %v216, %v1567
    %v1569 = vpop.f32.mrb[0].mxu0
    %v1570 = vpop.f32.mrb[0].mxu0
    %v1571 = vadd.f32 %v216, %v1570
    %v1572 = vpop.f32.mrb[0].mxu0
    %1573 = vmatprep.mubr.bf16.mxu0 0
    %1574 = vmatmul.mubr.bf16.gmra.mrb[0].mxu0 %v473
    %v1575 = vpop.f32.mrb[0].mxu0
    %v1576 = vadd.f32 %v216, %v1575
    %v1577 = vpop.f32.mrb[0].mxu0
    %v1578 = vpop.f32.mrb[0].mxu0
    %v1579 = vadd.f32 %v216, %v1578
    %v1580 = vpop.f32.mrb[0].mxu0
    %1581 = vmatprep.mubr.bf16.mxu0 0
    %1582 = vmatmul.mubr.bf16.gmra.mrb[0].mxu0 %v474
    %v1583 = vpop.f32.mrb[0].mxu0
    %v1584 = vadd.f32 %v216, %v1583
    %v1585 = vpop.f32.mrb[0].mxu0
    %v1586 = vpop.f32.mrb[0].mxu0
    %v1587 = vadd.f32 %v216, %v1586
    %v1588 = vpop.f32.mrb[0].mxu0
    %1589 = vmatprep.mubr.bf16.mxu0 0
    %1590 = vmatmul.mubr.bf16.gmra.mrb[0].mxu0 %v475
    %v1591 = vpop.f32.mrb[0].mxu0
    %v1592 = vadd.f32 %v216, %v1591
    %v1593 = vpop.f32.mrb[0].mxu0
    %v1594 = vpop.f32.mrb[0].mxu0
    %v1595 = vadd.f32 %v216, %v1594
    %v1596 = vpop.f32.mrb[0].mxu0
    %1597 = vmatprep.mubr.bf16.mxu0 0
    %1598 = vmatmul.mubr.bf16.gmra.mrb[0].mxu0 %v476
    %v1599 = vpop.f32.mrb[0].mxu0
    %v1600 = vadd.f32 %v216, %v1599
    %v1601 = vpop.f32.mrb[0].mxu0
    %v1602 = vpop.f32.mrb[0].mxu0
    %v1603 = vadd.f32 %v216, %v1602
    %v1604 = vpop.f32.mrb[0].mxu0
    %1605 = vmatprep.mubr.bf16.mxu0 0
    %1606 = vmatmul.mubr.bf16.gmra.mrb[0].mxu0 %v477
    %v1607 = vpop.f32.mrb[0].mxu0
    %v1608 = vadd.f32 %v216, %v1607
    %v1609 = vpop.f32.mrb[0].mxu0
    %v1610 = vpop.f32.mrb[0].mxu0
    %v1611 = vadd.f32 %v216, %v1610
    %v1612 = vpop.f32.mrb[0].mxu0
    %1613 = vmatprep.mubr.bf16.mxu0 0
    %1614 = vmatmul.mubr.bf16.gmra.mrb[0].mxu0 %v478
    %v1615 = vpop.f32.mrb[0].mxu0
    %v1616 = vadd.f32 %v216, %v1615
    %v1617 = vpop.f32.mrb[0].mxu0
    %v1618 = vpop.f32.mrb[0].mxu0
    %v1619 = vadd.f32 %v216, %v1618
    %v1620 = vpop.f32.mrb[0].mxu0
    %1621 = vmatprep.mubr.bf16.mxu0 0
    %1622 = vmatmul.mubr.bf16.gmra.mrb[0].mxu0 %v479
    %v1623 = vpop.f32.mrb[0].mxu0
    %v1624 = vadd.f32 %v216, %v1623
    %v1625 = vpop.f32.mrb[0].mxu0
    %v1626 = vpop.f32.mrb[0].mxu0
    %v1627 = vadd.f32 %v216, %v1626
    %v1628 = vpop.f32.mrb[0].mxu0
    %1629 = vmatprep.mubr.bf16.mxu0 0
    %1630 = vmatmul.mubr.bf16.gmra.mrb[0].mxu0 %v480
    %v1631 = vpop.f32.mrb[0].mxu0
    %v1632 = vadd.f32 %v216, %v1631
    %v1633 = vpop.f32.mrb[0].mxu0
    %v1634 = vpop.f32.mrb[0].mxu0
    %v1635 = vadd.f32 %v216, %v1634
    %v1636 = vpop.f32.mrb[0].mxu0
    %1637 = vmatprep.mubr.bf16.mxu0 0
    %1638 = vmatmul.mubr.bf16.gmra.mrb[0].mxu0 %v481
    %v1639 = vpop.f32.mrb[0].mxu0
    %v1640 = vadd.f32 %v216, %v1639
    %v1641 = vpop.f32.mrb[0].mxu0
    %v1642 = vpop.f32.mrb[0].mxu0
    %v1643 = vadd.f32 %v216, %v1642
    %v1644 = vpop.f32.mrb[0].mxu0
    %1645 = vmatprep.mubr.bf16.mxu0 0
    %1646 = vmatmul.mubr.bf16.gmra.mrb[0].mxu0 %v482
    %v1647 = vpop.f32.mrb[0].mxu0
    %v1648 = vadd.f32 %v216, %v1647
    %v1649 = vpop.f32.mrb[0].mxu0
    %v1650 = vpop.f32.mrb[0].mxu0
    %v1651 = vadd.f32 %v216, %v1650
    %v1652 = vpop.f32.mrb[0].mxu0
    %1653 = vmatprep.mubr.bf16.mxu0 0
    %1654 = vmatmul.mubr.bf16.gmra.mrb[0].mxu0 %v483
    %v1655 = vpop.f32.mrb[0].mxu0
    %v1656 = vadd.f32 %v216, %v1655
    %v1657 = vpop.f32.mrb[0].mxu0
    %v1658 = vpop.f32.mrb[0].mxu0
    %v1659 = vadd.f32 %v216, %v1658
    %v1660 = vpop.f32.mrb[0].mxu0
    %1661 = vmatprep.mubr.bf16.mxu0 0
    %1662 = vmatmul.mubr.bf16.gmra.mrb[0].mxu0 %v484
    %v1663 = vpop.f32.mrb[0].mxu0
    %v1664 = vadd.f32 %v216, %v1663
    %v1665 = vpop.f32.mrb[0].mxu0
    %v1666 = vpop.f32.mrb[0].mxu0
    %v1667 = vadd.f32 %v216, %v1666
    %v1668 = vpop.f32.mrb[0].mxu0
    %1669 = vmatprep.mubr.bf16.mxu0 0
    %1670 = vmatmul.mubr.bf16.gmra.mrb[0].mxu0 %v485
    %v1671 = vpop.f32.mrb[0].mxu0
    %v1672 = vadd.f32 %v216, %v1671
    %v1673 = vpop.f32.mrb[0].mxu0
    %v1674 = vpop.f32.mrb[0].mxu0
    %v1675 = vadd.f32 %v216, %v1674
    %v1676 = vpop.f32.mrb[0].mxu0
    %1677 = vmatprep.mubr.bf16.mxu0 0
    %1678 = vmatmul.mubr.bf16.gmra.mrb[0].mxu0 %v486
    %v1679 = vpop.f32.mrb[0].mxu0
    %v1680 = vadd.f32 %v216, %v1679
    %v1681 = vpop.f32.mrb[0].mxu0
    %v1682 = vpop.f32.mrb[0].mxu0
    %v1683 = vadd.f32 %v216, %v1682
    %v1684 = vpop.f32.mrb[0].mxu0
    %1685 = vmatprep.mubr.bf16.mxu0 0
    %1686 = vmatmul.mubr.bf16.gmra.mrb[0].mxu0 %v487
    %v1687 = vpop.f32.mrb[0].mxu0
    %v1688 = vadd.f32 %v216, %v1687
    %v1689 = vpop.f32.mrb[0].mxu0
    %v1690 = vpop.f32.mrb[0].mxu0
    %v1691 = vadd.f32 %v216, %v1690
    %v1692 = vpop.f32.mrb[0].mxu0
    %1693 = vmatprep.mubr.bf16.mxu0 0
    %1694 = vmatmul.mubr.bf16.gmra.mrb[0].mxu0 %v488
    %v1695 = vpop.f32.mrb[0].mxu0
    %v1696 = vadd.f32 %v216, %v1695
    %v1697 = vpop.f32.mrb[0].mxu0
    %v1698 = vpop.f32.mrb[0].mxu0
    %v1699 = vadd.f32 %v216, %v1698
    %v1700 = vpop.f32.mrb[0].mxu0
    %1701 = vmatprep.mubr.bf16.mxu0 0
    %1702 = vmatmul.mubr.bf16.gmra.mrb[0].mxu0 %v489
    %v1703 = vpop.f32.mrb[0].mxu0
    %v1704 = vadd.f32 %v216, %v1703
    %v1705 = vpop.f32.mrb[0].mxu0
    %v1706 = vpop.f32.mrb[0].mxu0
    %v1707 = vadd.f32 %v216, %v1706
    %v1708 = vpop.f32.mrb[0].mxu0
    %1709 = vdwg.mxu0
    %1710 = vst [vmem:[#allocation2] sm:$0xff] %v707
    %1711 = vst [vmem:[#allocation2 + $0x8] sm:$0xff] %v709
    %1712 = vst [vmem:[#allocation2 + $0x10] sm:$0xff] %v1280
    %1713 = vst [vmem:[#allocation2 + $0x18] sm:$0xff] %v711
    %1714 = vst [vmem:[#allocation2 + $0x20] sm:$0xff] %v713
    %1715 = vst [vmem:[#allocation2 + $0x28] sm:$0xff] %v1283
    %1716 = vst [vmem:[#allocation2 + $0x30] sm:$0xff] %v717
    %1717 = vst [vmem:[#allocation2 + $0x38] sm:$0xff] %v719
    %1718 = vst [vmem:[#allocation2 + $0x40] sm:$0xff] %v1288
    %1719 = vst [vmem:[#allocation2 + $0x48] sm:$0xff] %v721
    %1720 = vst [vmem:[#allocation2 + $0x50] sm:$0xff] %v723
    %1721 = vst [vmem:[#allocation2 + $0x58] sm:$0xff] %v1291
    %1722 = vst [vmem:[#allocation2 + $0x60] sm:$0xff] %v727
    %1723 = vst [vmem:[#allocation2 + $0x68] sm:$0xff] %v729
    %1724 = vst [vmem:[#allocation2 + $0x70] sm:$0xff] %v1296
    %1725 = vst [vmem:[#allocation2 + $0x78] sm:$0xff] %v731
    %1726 = vst [vmem:[#allocation2 + $0x80] sm:$0xff] %v733
    %1727 = vst [vmem:[#allocation2 + $0x88] sm:$0xff] %v1299
    %1728 = vst [vmem:[#allocation2 + $0x90] sm:$0xff] %v737
    %1729 = vst [vmem:[#allocation2 + $0x98] sm:$0xff] %v739
    %1730 = vst [vmem:[#allocation2 + $0xa0] sm:$0xff] %v1304
    %1731 = vst [vmem:[#allocation2 + $0xa8] sm:$0xff] %v741
    %1732 = vst [vmem:[#allocation2 + $0xb0] sm:$0xff] %v743
    %1733 = vst [vmem:[#allocation2 + $0xb8] sm:$0xff] %v1307
    %1734 = vst [vmem:[#allocation2 + $0xc0] sm:$0xff] %v747
    %1735 = vst [vmem:[#allocation2 + $0xc8] sm:$0xff] %v749
    %1736 = vst [vmem:[#allocation2 + $0xd0] sm:$0xff] %v1312
    %1737 = vst [vmem:[#allocation2 + $0xd8] sm:$0xff] %v751
    %1738 = vst [vmem:[#allocation2 + $0xe0] sm:$0xff] %v753
    %1739 = vst [vmem:[#allocation2 + $0xe8] sm:$0xff] %v1315
    %1740 = vst [vmem:[#allocation2 + $0xf0] sm:$0xff] %v757
    %1741 = vst [vmem:[#allocation2 + $0xf8] sm:$0xff] %v759
    %1742 = vst [vmem:[#allocation2 + $0x100] sm:$0xff] %v1320
    %1743 = vst [vmem:[#allocation2 + $0x108] sm:$0xff] %v761
    %1744 = vst [vmem:[#allocation2 + $0x110] sm:$0xff] %v763
    %1745 = vst [vmem:[#allocation2 + $0x118] sm:$0xff] %v1323
    %1746 = vst [vmem:[#allocation2 + $0x120] sm:$0xff] %v767
    %1747 = vst [vmem:[#allocation2 + $0x128] sm:$0xff] %v769
    %1748 = vst [vmem:[#allocation2 + $0x130] sm:$0xff] %v1328
    %1749 = vst [vmem:[#allocation2 + $0x138] sm:$0xff] %v771
    %1750 = vst [vmem:[#allocation2 + $0x140] sm:$0xff] %v773
    %1751 = vst [vmem:[#allocation2 + $0x148] sm:$0xff] %v1331
    %1752 = vst [vmem:[#allocation2 + $0x150] sm:$0xff] %v777
    %1753 = vst [vmem:[#allocation2 + $0x158] sm:$0xff] %v779
    %1754 = vst [vmem:[#allocation2 + $0x160] sm:$0xff] %v1336
    %1755 = vst [vmem:[#allocation2 + $0x168] sm:$0xff] %v781
    %1756 = vst [vmem:[#allocation2 + $0x170] sm:$0xff] %v783
    %1757 = vst [vmem:[#allocation2 + $0x178] sm:$0xff] %v1339
    %1758 = vst [vmem:[#allocation2 + $0x180] sm:$0xff] %v787
    %1759 = vst [vmem:[#allocation2 + $0x188] sm:$0xff] %v789
    %1760 = vst [vmem:[#allocation2 + $0x190] sm:$0xff] %v1344
    %1761 = vst [vmem:[#allocation2 + $0x198] sm:$0xff] %v791
    %1762 = vst [vmem:[#allocation2 + $0x1a0] sm:$0xff] %v793
    %1763 = vst [vmem:[#allocation2 + $0x1a8] sm:$0xff] %v1347
    %1764 = vst [vmem:[#allocation2 + $0x1b0] sm:$0xff] %v797
    %1765 = vst [vmem:[#allocation2 + $0x1b8] sm:$0xff] %v799
    %1766 = vst [vmem:[#allocation2 + $0x1c0] sm:$0xff] %v1352
    %1767 = vst [vmem:[#allocation2 + $0x1c8] sm:$0xff] %v801
    %1768 = vst [vmem:[#allocation2 + $0x1d0] sm:$0xff] %v803
    %1769 = vst [vmem:[#allocation2 + $0x1d8] sm:$0xff] %v1355
    %1770 = vst [vmem:[#allocation2 + $0x1e0] sm:$0xff] %v807
    %1771 = vst [vmem:[#allocation2 + $0x1e8] sm:$0xff] %v809
    %1772 = vst [vmem:[#allocation2 + $0x1f0] sm:$0xff] %v1360
    %1773 = vst [vmem:[#allocation2 + $0x1f8] sm:$0xff] %v811
    %1774 = vst [vmem:[#allocation2 + $0x200] sm:$0xff] %v813
    %1775 = vst [vmem:[#allocation2 + $0x208] sm:$0xff] %v1363
    %1776 = vst [vmem:[#allocation2 + $0x210] sm:$0xff] %v817
    %1777 = vst [vmem:[#allocation2 + $0x218] sm:$0xff] %v819
    %1778 = vst [vmem:[#allocation2 + $0x220] sm:$0xff] %v1368
    %1779 = vst [vmem:[#allocation2 + $0x228] sm:$0xff] %v821
    %1780 = vst [vmem:[#allocation2 + $0x230] sm:$0xff] %v823
    %1781 = vst [vmem:[#allocation2 + $0x238] sm:$0xff] %v1371
    %1782 = vst [vmem:[#allocation2 + $0x240] sm:$0xff] %v827
    %1783 = vst [vmem:[#allocation2 + $0x248] sm:$0xff] %v829
    %1784 = vst [vmem:[#allocation2 + $0x250] sm:$0xff] %v1376
    %1785 = vst [vmem:[#allocation2 + $0x258] sm:$0xff] %v831
    %1786 = vst [vmem:[#allocation2 + $0x260] sm:$0xff] %v833
    %1787 = vst [vmem:[#allocation2 + $0x268] sm:$0xff] %v1379
    %1788 = vst [vmem:[#allocation2 + $0x270] sm:$0xff] %v837
    %1789 = vst [vmem:[#allocation2 + $0x278] sm:$0xff] %v839
    %1790 = vst [vmem:[#allocation2 + $0x280] sm:$0xff] %v1384
    %1791 = vst [vmem:[#allocation2 + $0x288] sm:$0xff] %v841
    %1792 = vst [vmem:[#allocation2 + $0x290] sm:$0xff] %v843
    %1793 = vst [vmem:[#allocation2 + $0x298] sm:$0xff] %v1387
    %1794 = vst [vmem:[#allocation2 + $0x2a0] sm:$0xff] %v847
    %1795 = vst [vmem:[#allocation2 + $0x2a8] sm:$0xff] %v849
    %1796 = vst [vmem:[#allocation2 + $0x2b0] sm:$0xff] %v1392
    %1797 = vst [vmem:[#allocation2 + $0x2b8] sm:$0xff] %v851
    %1798 = vst [vmem:[#allocation2 + $0x2c0] sm:$0xff] %v853
    %1799 = vst [vmem:[#allocation2 + $0x2c8] sm:$0xff] %v1395
    %1800 = vst [vmem:[#allocation2 + $0x2d0] sm:$0xff] %v857
    %1801 = vst [vmem:[#allocation2 + $0x2d8] sm:$0xff] %v859
    %1802 = vst [vmem:[#allocation2 + $0x2e0] sm:$0xff] %v1400
    %1803 = vst [vmem:[#allocation2 + $0x2e8] sm:$0xff] %v861
    %1804 = vst [vmem:[#allocation2 + $0x2f0] sm:$0xff] %v863
    %1805 = vst [vmem:[#allocation2 + $0x2f8] sm:$0xff] %v1403
    %1806 = vst [vmem:[#allocation2 + $0x300] sm:$0xff] %v867
    %1807 = vst [vmem:[#allocation2 + $0x308] sm:$0xff] %v869
    %1808 = vst [vmem:[#allocation2 + $0x310] sm:$0xff] %v1408
    %1809 = vst [vmem:[#allocation2 + $0x318] sm:$0xff] %v871
    %1810 = vst [vmem:[#allocation2 + $0x320] sm:$0xff] %v873
    %1811 = vst [vmem:[#allocation2 + $0x328] sm:$0xff] %v1411
    %1812 = vst [vmem:[#allocation2 + $0x330] sm:$0xff] %v877
    %1813 = vst [vmem:[#allocation2 + $0x338] sm:$0xff] %v879
    %1814 = vst [vmem:[#allocation2 + $0x340] sm:$0xff] %v1416
    %1815 = vst [vmem:[#allocation2 + $0x348] sm:$0xff] %v881
    %1816 = vst [vmem:[#allocation2 + $0x350] sm:$0xff] %v883
    %1817 = vst [vmem:[#allocation2 + $0x358] sm:$0xff] %v1419
    %1818 = vst [vmem:[#allocation2 + $0x360] sm:$0xff] %v887
    %1819 = vst [vmem:[#allocation2 + $0x368] sm:$0xff] %v889
    %1820 = vst [vmem:[#allocation2 + $0x370] sm:$0xff] %v1424
    %1821 = vst [vmem:[#allocation2 + $0x378] sm:$0xff] %v891
    %1822 = vst [vmem:[#allocation2 + $0x380] sm:$0xff] %v893
    %1823 = vst [vmem:[#allocation2 + $0x388] sm:$0xff] %v1427
    %1824 = vst [vmem:[#allocation2 + $0x390] sm:$0xff] %v897
    %1825 = vst [vmem:[#allocation2 + $0x398] sm:$0xff] %v899
    %1826 = vst [vmem:[#allocation2 + $0x3a0] sm:$0xff] %v1432
    %1827 = vst [vmem:[#allocation2 + $0x3a8] sm:$0xff] %v901
    %1828 = vst [vmem:[#allocation2 + $0x3b0] sm:$0xff] %v903
    %1829 = vst [vmem:[#allocation2 + $0x3b8] sm:$0xff] %v1435
    %1830 = vst [vmem:[#allocation2 + $0x3c0] sm:$0xff] %v907
    %1831 = vst [vmem:[#allocation2 + $0x3c8] sm:$0xff] %v909
    %1832 = vst [vmem:[#allocation2 + $0x3d0] sm:$0xff] %v1440
    %1833 = vst [vmem:[#allocation2 + $0x3d8] sm:$0xff] %v911
    %1834 = vst [vmem:[#allocation2 + $0x3e0] sm:$0xff] %v913
    %1835 = vst [vmem:[#allocation2 + $0x3e8] sm:$0xff] %v1443
    %1836 = vst [vmem:[#allocation2 + $0x3f0] sm:$0xff] %v917
    %1837 = vst [vmem:[#allocation2 + $0x3f8] sm:$0xff] %v919
    %1838 = vst [vmem:[#allocation2 + $0x400] sm:$0xff] %v1448
    %1839 = vst [vmem:[#allocation2 + $0x408] sm:$0xff] %v921
    %1840 = vst [vmem:[#allocation2 + $0x410] sm:$0xff] %v923
    %1841 = vst [vmem:[#allocation2 + $0x418] sm:$0xff] %v1451
    %1842 = vst [vmem:[#allocation2 + $0x420] sm:$0xff] %v927
    %1843 = vst [vmem:[#allocation2 + $0x428] sm:$0xff] %v929
    %1844 = vst [vmem:[#allocation2 + $0x430] sm:$0xff] %v1456
    %1845 = vst [vmem:[#allocation2 + $0x438] sm:$0xff] %v931
    %1846 = vst [vmem:[#allocation2 + $0x440] sm:$0xff] %v933
    %1847 = vst [vmem:[#allocation2 + $0x448] sm:$0xff] %v1459
    %1848 = vst [vmem:[#allocation2 + $0x450] sm:$0xff] %v937
    %1849 = vst [vmem:[#allocation2 + $0x458] sm:$0xff] %v939
    %1850 = vst [vmem:[#allocation2 + $0x460] sm:$0xff] %v1464
    %1851 = vst [vmem:[#allocation2 + $0x468] sm:$0xff] %v941
    %1852 = vst [vmem:[#allocation2 + $0x470] sm:$0xff] %v943
    %1853 = vst [vmem:[#allocation2 + $0x478] sm:$0xff] %v1467
    %1854 = vst [vmem:[#allocation2 + $0x480] sm:$0xff] %v947
    %1855 = vst [vmem:[#allocation2 + $0x488] sm:$0xff] %v949
    %1856 = vst [vmem:[#allocation2 + $0x490] sm:$0xff] %v1472
    %1857 = vst [vmem:[#allocation2 + $0x498] sm:$0xff] %v951
    %1858 = vst [vmem:[#allocation2 + $0x4a0] sm:$0xff] %v953
    %1859 = vst [vmem:[#allocation2 + $0x4a8] sm:$0xff] %v1475
    %1860 = vst [vmem:[#allocation2 + $0x4b0] sm:$0xff] %v957
    %1861 = vst [vmem:[#allocation2 + $0x4b8] sm:$0xff] %v959
    %1862 = vst [vmem:[#allocation2 + $0x4c0] sm:$0xff] %v1480
    %1863 = vst [vmem:[#allocation2 + $0x4c8] sm:$0xff] %v961
    %1864 = vst [vmem:[#allocation2 + $0x4d0] sm:$0xff] %v963
    %1865 = vst [vmem:[#allocation2 + $0x4d8] sm:$0xff] %v1483
    %1866 = vst [vmem:[#allocation2 + $0x4e0] sm:$0xff] %v967
    %1867 = vst [vmem:[#allocation2 + $0x4e8] sm:$0xff] %v969
    %1868 = vst [vmem:[#allocation2 + $0x4f0] sm:$0xff] %v1488
    %1869 = vst [vmem:[#allocation2 + $0x4f8] sm:$0xff] %v971
    %1870 = vst [vmem:[#allocation2 + $0x500] sm:$0xff] %v973
    %1871 = vst [vmem:[#allocation2 + $0x508] sm:$0xff] %v1491
    %1872 = vst [vmem:[#allocation2 + $0x510] sm:$0xff] %v977
    %1873 = vst [vmem:[#allocation2 + $0x518] sm:$0xff] %v979
    %1874 = vst [vmem:[#allocation2 + $0x520] sm:$0xff] %v1496
    %1875 = vst [vmem:[#allocation2 + $0x528] sm:$0xff] %v981
    %1876 = vst [vmem:[#allocation2 + $0x530] sm:$0xff] %v983
    %1877 = vst [vmem:[#allocation2 + $0x538] sm:$0xff] %v1499
    %1878 = vst [vmem:[#allocation2 + $0x540] sm:$0xff] %v987
    %1879 = vst [vmem:[#allocation2 + $0x548] sm:$0xff] %v989
    %1880 = vst [vmem:[#allocation2 + $0x550] sm:$0xff] %v1504
    %1881 = vst [vmem:[#allocation2 + $0x558] sm:$0xff] %v991
    %1882 = vst [vmem:[#allocation2 + $0x560] sm:$0xff] %v993
    %1883 = vst [vmem:[#allocation2 + $0x568] sm:$0xff] %v1507
    %1884 = vst [vmem:[#allocation2 + $0x570] sm:$0xff] %v997
    %1885 = vst [vmem:[#allocation2 + $0x578] sm:$0xff] %v999
    %1886 = vst [vmem:[#allocation2 + $0x580] sm:$0xff] %v1512
    %1887 = vst [vmem:[#allocation2 + $0x588] sm:$0xff] %v1001
    %1888 = vst [vmem:[#allocation2 + $0x590] sm:$0xff] %v1003
    %1889 = vst [vmem:[#allocation2 + $0x598] sm:$0xff] %v1515
    %1890 = vst [vmem:[#allocation2 + $0x5a0] sm:$0xff] %v1007
    %1891 = vst [vmem:[#allocation2 + $0x5a8] sm:$0xff] %v1009
    %1892 = vst [vmem:[#allocation2 + $0x5b0] sm:$0xff] %v1520
    %1893 = vst [vmem:[#allocation2 + $0x5b8] sm:$0xff] %v1011
    %1894 = vst [vmem:[#allocation2 + $0x5c0] sm:$0xff] %v1013
    %1895 = vst [vmem:[#allocation2 + $0x5c8] sm:$0xff] %v1523
    %1896 = vst [vmem:[#allocation2 + $0x5d0] sm:$0xff] %v1017
    %1897 = vst [vmem:[#allocation2 + $0x5d8] sm:$0xff] %v1019
    %1898 = vst [vmem:[#allocation2 + $0x5e0] sm:$0xff] %v1528
    %1899 = vst [vmem:[#allocation2 + $0x5e8] sm:$0xff] %v1021
    %1900 = vst [vmem:[#allocation2 + $0x5f0] sm:$0xff] %v1023
    %1901 = vst [vmem:[#allocation2 + $0x5f8] sm:$0xff] %v1531
    %1902 = vst [vmem:[#allocation2 + $0x600] sm:$0xff] %v1027
    %1903 = vst [vmem:[#allocation2 + $0x608] sm:$0xff] %v1029
    %1904 = vst [vmem:[#allocation2 + $0x610] sm:$0xff] %v1536
    %1905 = vst [vmem:[#allocation2 + $0x618] sm:$0xff] %v1031
    %1906 = vst [vmem:[#allocation2 + $0x620] sm:$0xff] %v1033
    %1907 = vst [vmem:[#allocation2 + $0x628] sm:$0xff] %v1539
    %1908 = vst [vmem:[#allocation2 + $0x630] sm:$0xff] %v1037
    %1909 = vst [vmem:[#allocation2 + $0x638] sm:$0xff] %v1039
    %1910 = vst [vmem:[#allocation2 + $0x640] sm:$0xff] %v1544
    %1911 = vst [vmem:[#allocation2 + $0x648] sm:$0xff] %v1041
    %1912 = vst [vmem:[#allocation2 + $0x650] sm:$0xff] %v1043
    %1913 = vst [vmem:[#allocation2 + $0x658] sm:$0xff] %v1547
    %1914 = vst [vmem:[#allocation2 + $0x660] sm:$0xff] %v1047
    %1915 = vst [vmem:[#allocation2 + $0x668] sm:$0xff] %v1049
    %1916 = vst [vmem:[#allocation2 + $0x670] sm:$0xff] %v1552
    %1917 = vst [vmem:[#allocation2 + $0x678] sm:$0xff] %v1051
    %1918 = vst [vmem:[#allocation2 + $0x680] sm:$0xff] %v1053
    %1919 = vst [vmem:[#allocation2 + $0x688] sm:$0xff] %v1555
    %1920 = vst [vmem:[#allocation2 + $0x690] sm:$0xff] %v1057
    %1921 = vst [vmem:[#allocation2 + $0x698] sm:$0xff] %v1059
    %1922 = vst [vmem:[#allocation2 + $0x6a0] sm:$0xff] %v1560
    %1923 = vst [vmem:[#allocation2 + $0x6a8] sm:$0xff] %v1061
    %1924 = vst [vmem:[#allocation2 + $0x6b0] sm:$0xff] %v1063
    %1925 = vst [vmem:[#allocation2 + $0x6b8] sm:$0xff] %v1563
    %1926 = vst [vmem:[#allocation2 + $0x6c0] sm:$0xff] %v1067
    %1927 = vst [vmem:[#allocation2 + $0x6c8] sm:$0xff] %v1069
    %1928 = vst [vmem:[#allocation2 + $0x6d0] sm:$0xff] %v1568
    %1929 = vst [vmem:[#allocation2 + $0x6d8] sm:$0xff] %v1071
    %1930 = vst [vmem:[#allocation2 + $0x6e0] sm:$0xff] %v1073
    %1931 = vst [vmem:[#allocation2 + $0x6e8] sm:$0xff] %v1571
    %1932 = vst [vmem:[#allocation2 + $0x6f0] sm:$0xff] %v1077
    %1933 = vst [vmem:[#allocation2 + $0x6f8] sm:$0xff] %v1079
    %1934 = vst [vmem:[#allocation2 + $0x700] sm:$0xff] %v1576
    %1935 = vst [vmem:[#allocation2 + $0x708] sm:$0xff] %v1081
    %1936 = vst [vmem:[#allocation2 + $0x710] sm:$0xff] %v1083
    %1937 = vst [vmem:[#allocation2 + $0x718] sm:$0xff] %v1579
    %1938 = vst [vmem:[#allocation2 + $0x720] sm:$0xff] %v1087
    %1939 = vst [vmem:[#allocation2 + $0x728] sm:$0xff] %v1089
    %1940 = vst [vmem:[#allocation2 + $0x730] sm:$0xff] %v1584
    %1941 = vst [vmem:[#allocation2 + $0x738] sm:$0xff] %v1091
    %1942 = vst [vmem:[#allocation2 + $0x740] sm:$0xff] %v1093
    %1943 = vst [vmem:[#allocation2 + $0x748] sm:$0xff] %v1587
    %1944 = vst [vmem:[#allocation2 + $0x750] sm:$0xff] %v1097
    %1945 = vst [vmem:[#allocation2 + $0x758] sm:$0xff] %v1099
    %1946 = vst [vmem:[#allocation2 + $0x760] sm:$0xff] %v1592
    %1947 = vst [vmem:[#allocation2 + $0x768] sm:$0xff] %v1101
    %1948 = vst [vmem:[#allocation2 + $0x770] sm:$0xff] %v1103
    %1949 = vst [vmem:[#allocation2 + $0x778] sm:$0xff] %v1595
    %1950 = vst [vmem:[#allocation2 + $0x780] sm:$0xff] %v1107
    %1951 = vst [vmem:[#allocation2 + $0x788] sm:$0xff] %v1109
    %1952 = vst [vmem:[#allocation2 + $0x790] sm:$0xff] %v1600
    %1953 = vst [vmem:[#allocation2 + $0x798] sm:$0xff] %v1111
    %1954 = vst [vmem:[#allocation2 + $0x7a0] sm:$0xff] %v1113
    %1955 = vst [vmem:[#allocation2 + $0x7a8] sm:$0xff] %v1603
    %1956 = vst [vmem:[#allocation2 + $0x7b0] sm:$0xff] %v1117
    %1957 = vst [vmem:[#allocation2 + $0x7b8] sm:$0xff] %v1119
    %1958 = vst [vmem:[#allocation2 + $0x7c0] sm:$0xff] %v1608
    %1959 = vst [vmem:[#allocation2 + $0x7c8] sm:$0xff] %v1121
    %1960 = vst [vmem:[#allocation2 + $0x7d0] sm:$0xff] %v1123
    %1961 = vst [vmem:[#allocation2 + $0x7d8] sm:$0xff] %v1611
    %1962 = vst [vmem:[#allocation2 + $0x7e0] sm:$0xff] %v1127
    %1963 = vst [vmem:[#allocation2 + $0x7e8] sm:$0xff] %v1129
    %1964 = vst [vmem:[#allocation2 + $0x7f0] sm:$0xff] %v1616
    %1965 = vst [vmem:[#allocation2 + $0x7f8] sm:$0xff] %v1131
    %1966 = vst [vmem:[#allocation2 + $0x800] sm:$0xff] %v1133
    %1967 = vst [vmem:[#allocation2 + $0x808] sm:$0xff] %v1619
    %1968 = vst [vmem:[#allocation2 + $0x810] sm:$0xff] %v1137
    %1969 = vst [vmem:[#allocation2 + $0x818] sm:$0xff] %v1139
    %1970 = vst [vmem:[#allocation2 + $0x820] sm:$0xff] %v1624
    %1971 = vst [vmem:[#allocation2 + $0x828] sm:$0xff] %v1141
    %1972 = vst [vmem:[#allocation2 + $0x830] sm:$0xff] %v1143
    %1973 = vst [vmem:[#allocation2 + $0x838] sm:$0xff] %v1627
    %1974 = vst [vmem:[#allocation2 + $0x840] sm:$0xff] %v1147
    %1975 = vst [vmem:[#allocation2 + $0x848] sm:$0xff] %v1149
    %1976 = vst [vmem:[#allocation2 + $0x850] sm:$0xff] %v1632
    %1977 = vst [vmem:[#allocation2 + $0x858] sm:$0xff] %v1151
    %1978 = vst [vmem:[#allocation2 + $0x860] sm:$0xff] %v1153
    %1979 = vst [vmem:[#allocation2 + $0x868] sm:$0xff] %v1635
    %1980 = vst [vmem:[#allocation2 + $0x870] sm:$0xff] %v1157
    %1981 = vst [vmem:[#allocation2 + $0x878] sm:$0xff] %v1159
    %1982 = vst [vmem:[#allocation2 + $0x880] sm:$0xff] %v1640
    %1983 = vst [vmem:[#allocation2 + $0x888] sm:$0xff] %v1161
    %1984 = vst [vmem:[#allocation2 + $0x890] sm:$0xff] %v1163
    %1985 = vst [vmem:[#allocation2 + $0x898] sm:$0xff] %v1643
    %1986 = vst [vmem:[#allocation2 + $0x8a0] sm:$0xff] %v1167
    %1987 = vst [vmem:[#allocation2 + $0x8a8] sm:$0xff] %v1169
    %1988 = vst [vmem:[#allocation2 + $0x8b0] sm:$0xff] %v1648
    %1989 = vst [vmem:[#allocation2 + $0x8b8] sm:$0xff] %v1171
    %1990 = vst [vmem:[#allocation2 + $0x8c0] sm:$0xff] %v1173
    %1991 = vst [vmem:[#allocation2 + $0x8c8] sm:$0xff] %v1651
    %1992 = vst [vmem:[#allocation2 + $0x8d0] sm:$0xff] %v1177
    %1993 = vst [vmem:[#allocation2 + $0x8d8] sm:$0xff] %v1179
    %1994 = vst [vmem:[#allocation2 + $0x8e0] sm:$0xff] %v1656
    %1995 = vst [vmem:[#allocation2 + $0x8e8] sm:$0xff] %v1181
    %1996 = vst [vmem:[#allocation2 + $0x8f0] sm:$0xff] %v1183
    %1997 = vst [vmem:[#allocation2 + $0x8f8] sm:$0xff] %v1659
    %1998 = vst [vmem:[#allocation2 + $0x900] sm:$0xff] %v1187
    %1999 = vst [vmem:[#allocation2 + $0x908] sm:$0xff] %v1189
    %2000 = vst [vmem:[#allocation2 + $0x910] sm:$0xff] %v1664
    %2001 = vst [vmem:[#allocation2 + $0x918] sm:$0xff] %v1191
    %2002 = vst [vmem:[#allocation2 + $0x920] sm:$0xff] %v1193
    %2003 = vst [vmem:[#allocation2 + $0x928] sm:$0xff] %v1667
    %2004 = vst [vmem:[#allocation2 + $0x930] sm:$0xff] %v1197
    %2005 = vst [vmem:[#allocation2 + $0x938] sm:$0xff] %v1199
    %2006 = vst [vmem:[#allocation2 + $0x940] sm:$0xff] %v1672
    %2007 = vst [vmem:[#allocation2 + $0x948] sm:$0xff] %v1201
    %2008 = vst [vmem:[#allocation2 + $0x950] sm:$0xff] %v1203
    %2009 = vst [vmem:[#allocation2 + $0x958] sm:$0xff] %v1675
    %2010 = vst [vmem:[#allocation2 + $0x960] sm:$0xff] %v1207
    %2011 = vst [vmem:[#allocation2 + $0x968] sm:$0xff] %v1209
    %2012 = vst [vmem:[#allocation2 + $0x970] sm:$0xff] %v1680
    %2013 = vst [vmem:[#allocation2 + $0x978] sm:$0xff] %v1211
    %2014 = vst [vmem:[#allocation2 + $0x980] sm:$0xff] %v1213
    %2015 = vst [vmem:[#allocation2 + $0x988] sm:$0xff] %v1683
    %2016 = vst [vmem:[#allocation2 + $0x990] sm:$0xff] %v1217
    %2017 = vst [vmem:[#allocation2 + $0x998] sm:$0xff] %v1219
    %2018 = vst [vmem:[#allocation2 + $0x9a0] sm:$0xff] %v1688
    %2019 = vst [vmem:[#allocation2 + $0x9a8] sm:$0xff] %v1221
    %2020 = vst [vmem:[#allocation2 + $0x9b0] sm:$0xff] %v1223
    %2021 = vst [vmem:[#allocation2 + $0x9b8] sm:$0xff] %v1691
    %2022 = vst [vmem:[#allocation2 + $0x9c0] sm:$0xff] %v1227
    %2023 = vst [vmem:[#allocation2 + $0x9c8] sm:$0xff] %v1229
    %2024 = vst [vmem:[#allocation2 + $0x9d0] sm:$0xff] %v1696
    %2025 = vst [vmem:[#allocation2 + $0x9d8] sm:$0xff] %v1231
    %2026 = vst [vmem:[#allocation2 + $0x9e0] sm:$0xff] %v1233
    %2027 = vst [vmem:[#allocation2 + $0x9e8] sm:$0xff] %v1699
    %2028 = vst [vmem:[#allocation2 + $0x9f0] sm:$0xff] %v1237
    %2029 = vst [vmem:[#allocation2 + $0x9f8] sm:$0xff] %v1239
    %2030 = vst [vmem:[#allocation2 + $0xa00] sm:$0xff] %v1704
    %2031 = vst [vmem:[#allocation2 + $0xa08] sm:$0xff] %v1241
    %2032 = vst [vmem:[#allocation2 + $0xa10] sm:$0xff] %v1243
    %2033 = vst [vmem:[#allocation2 + $0xa18] sm:$0xff] %v1707
    %v2034 = vld [vmem:[#allocation8] sm:$0xff]
    %v2035 = vld [vmem:[#allocation8 + $0x8] sm:$0xf]
    %v2036 = vld [vmem:[#allocation8 + $0xc] sm:$0xff]
    %v2037 = vld [vmem:[#allocation8 + $0x14] sm:$0xf]
    %v2038 = vld [vmem:[#allocation8 + $0x18] sm:$0xff]
    %v2039 = vld [vmem:[#allocation8 + $0x20] sm:$0xf]
    %v2040 = vld [vmem:[#allocation8 + $0x24] sm:$0xff]
    %v2041 = vld [vmem:[#allocation8 + $0x2c] sm:$0xf]
    %v2042 = vld [vmem:[#allocation8 + $0x30] sm:$0xff]
    %v2043 = vld [vmem:[#allocation8 + $0x38] sm:$0xf]
    %v2044 = vld [vmem:[#allocation8 + $0x3c] sm:$0xff]
    %v2045 = vld [vmem:[#allocation8 + $0x44] sm:$0xf]
    %v2046 = vld [vmem:[#allocation8 + $0x48] sm:$0xff]
    %v2047 = vld [vmem:[#allocation8 + $0x50] sm:$0xf]
    %v2048 = vld [vmem:[#allocation8 + $0x54] sm:$0xff]
    %v2049 = vld [vmem:[#allocation8 + $0x5c] sm:$0xf]
    %v2050 = vld [vmem:[#allocation8 + $0x60] sm:$0xff]
    %v2051 = vld [vmem:[#allocation8 + $0x68] sm:$0xf]
    %v2052 = vld [vmem:[#allocation8 + $0x6c] sm:$0xff]
    %v2053 = vld [vmem:[#allocation8 + $0x74] sm:$0xf]
    %v2054 = vld [vmem:[#allocation8 + $0x78] sm:$0xff]
    %v2055 = vld [vmem:[#allocation8 + $0x80] sm:$0xf]
    %v2056 = vld [vmem:[#allocation8 + $0x84] sm:$0xff]
    %v2057 = vld [vmem:[#allocation8 + $0x8c] sm:$0xf]
    %v2058 = vld [vmem:[#allocation8 + $0x90] sm:$0xff]
    %v2059 = vld [vmem:[#allocation8 + $0x98] sm:$0xf]
    %v2060 = vld [vmem:[#allocation8 + $0x9c] sm:$0xff]
    %v2061 = vld [vmem:[#allocation8 + $0xa4] sm:$0xf]
    %v2062 = vld [vmem:[#allocation8 + $0xa8] sm:$0xff]
    %v2063 = vld [vmem:[#allocation8 + $0xb0] sm:$0xf]
    %v2064 = vld [vmem:[#allocation8 + $0xb4] sm:$0xff]
    %v2065 = vld [vmem:[#allocation8 + $0xbc] sm:$0xf]
    %v2066 = vld [vmem:[%s4] sm:$0x1]
    %v2067 = vld [vmem:[#allocation2] sm:$0xff]
    %v2068 = vld [vmem:[#allocation2 + $0x8] sm:$0xff]
    %v2069 = vld [vmem:[#allocation2 + $0x10] sm:$0xff]
    %v2070 = vld [vmem:[#allocation2 + $0x18] sm:$0xff]
    %v2071 = vld [vmem:[#allocation2 + $0x20] sm:$0xff]
    %v2072 = vld [vmem:[#allocation2 + $0x28] sm:$0xff]
    %v2073 = vld [vmem:[#allocation2 + $0x30] sm:$0xff]
    %v2074 = vld [vmem:[#allocation2 + $0x38] sm:$0xff]
    %v2075 = vld [vmem:[#allocation2 + $0x40] sm:$0xff]
    %v2108 = vunpack.c.l.b16 %v2034
    %v2109 = vunpack.c.h.b16 %v2034
    %v2110 = vunpack.c.l.b16 %v2035
    %v2111 = vunpack.c.l.b16 %v2036
    %v2112 = vunpack.c.h.b16 %v2036
    %v2113 = vunpack.c.l.b16 %v2037
    %v2114 = vunpack.c.l.b16 %v2038
    %v2115 = vunpack.c.h.b16 %v2038
    %v2116 = vunpack.c.l.b16 %v2039
    %v2117 = vunpack.c.l.b16 %v2040
    %v2118 = vunpack.c.h.b16 %v2040
    %v2119 = vunpack.c.l.b16 %v2041
    %v2120 = vunpack.c.l.b16 %v2042
    %v2121 = vunpack.c.h.b16 %v2042
    %v2122 = vunpack.c.l.b16 %v2043
    %v2123 = vunpack.c.l.b16 %v2044
    %v2124 = vunpack.c.h.b16 %v2044
    %v2125 = vunpack.c.l.b16 %v2045
    %v2126 = vunpack.c.l.b16 %v2046
    %v2127 = vunpack.c.h.b16 %v2046
    %v2128 = vunpack.c.l.b16 %v2047
    %v2129 = vunpack.c.l.b16 %v2048
    %v2130 = vunpack.c.h.b16 %v2048
    %v2131 = vunpack.c.l.b16 %v2049
    %v2132 = vunpack.c.l.b16 %v2050
    %v2133 = vunpack.c.h.b16 %v2050
    %v2134 = vunpack.c.l.b16 %v2051
    %v2135 = vunpack.c.l.b16 %v2052
    %v2136 = vunpack.c.h.b16 %v2052
    %v2137 = vunpack.c.l.b16 %v2053
    %v2138 = vunpack.c.l.b16 %v2054
    %v2139 = vunpack.c.h.b16 %v2054
    %v2140 = vunpack.c.l.b16 %v2055
    %v2141 = vunpack.c.l.b16 %v2056
    %v2142 = vunpack.c.h.b16 %v2056
    %v2143 = vunpack.c.l.b16 %v2057
    %v2144 = vunpack.c.l.b16 %v2058
    %v2145 = vunpack.c.h.b16 %v2058
    %v2146 = vunpack.c.l.b16 %v2059
    %v2147 = vunpack.c.l.b16 %v2060
    %v2148 = vunpack.c.h.b16 %v2060
    %v2149 = vunpack.c.l.b16 %v2061
    %v2150 = vunpack.c.l.b16 %v2062
    %v2151 = vunpack.c.h.b16 %v2062
    %v2152 = vunpack.c.l.b16 %v2063
    %v2153 = vunpack.c.l.b16 %v2064
    %v2154 = vunpack.c.h.b16 %v2064
    %v2155 = vunpack.c.l.b16 %v2065
    %v2156 = vpack.c.b16 %v2111, %v2108
    %v2157 = vpack.c.b16 %v2112, %v2109
    %v2158 = vpack.c.b16 %v2113, %v2110
    %v2159 = vpack.c.b16 %v2117, %v2114
    %v2160 = vpack.c.b16 %v2118, %v2115
    %v2161 = vpack.c.b16 %v2119, %v2116
    %v2162 = vpack.c.b16 %v2123, %v2120
    %v2163 = vpack.c.b16 %v2124, %v2121
    %v2164 = vpack.c.b16 %v2125, %v2122
    %v2165 = vpack.c.b16 %v2129, %v2126
    %v2166 = vpack.c.b16 %v2130, %v2127
    %v2167 = vpack.c.b16 %v2131, %v2128
    %v2168 = vpack.c.b16 %v2135, %v2132
    %v2169 = vpack.c.b16 %v2136, %v2133
    %v2170 = vpack.c.b16 %v2137, %v2134
    %v2171 = vpack.c.b16 %v2141, %v2138
    %v2172 = vpack.c.b16 %v2142, %v2139
    %v2173 = vpack.c.b16 %v2143, %v2140
    %v2174 = vpack.c.b16 %v2147, %v2144
    %v2175 = vpack.c.b16 %v2148, %v2145
    %v2176 = vpack.c.b16 %v2149, %v2146
    %v2177 = vpack.c.b16 %v2153, %v2150
    %v2178 = vpack.c.b16 %v2154, %v2151
    %v2179 = vpack.c.b16 %v2155, %v2152
    %2204 = vmatprep.subr.bf16.mxu0 %v2157
    %2205 = vmatpush1.bf16.msra.mxu0 %v2156
    %2206 = vmatprep.subr.bf16.mxu0 %v2160
    %2207 = vmatpush1.bf16.msra.mxu0 %v2159
    %2208 = vmatprep.subr.bf16.mxu0 %v2163
    %2209 = vmatpush1.bf16.msra.mxu0 %v2162
    %2210 = vmatprep.subr.bf16.mxu0 %v2166
    %2211 = vmatpush1.bf16.msra.mxu0 %v2165
    %2212 = vmatprep.subr.bf16.mxu0 %v2169
    %2213 = vmatpush1.bf16.msra.mxu0 %v2168
    %2214 = vmatprep.subr.bf16.mxu0 %v2172
    %2215 = vmatpush1.bf16.msra.mxu0 %v2171
    %2216 = vmatprep.subr.bf16.mxu0 %v2175
    %2217 = vmatpush1.bf16.msra.mxu0 %v2174
    %2218 = vmatprep.subr.bf16.mxu0 %v2178
    %2219 = vmatpush1.bf16.msra.mxu0 %v2177
    %2220 = vmatprep.subr.bf16.mxu0 0
    %2221 = vmatpush1.bf16.msra.mxu0 0
    %2222 = vmatprep.subr.bf16.mxu0 0
    %2223 = vmatpush1.bf16.msra.mxu0 0
    %2224 = vmatprep.subr.bf16.mxu0 0
    %2225 = vmatpush1.bf16.msra.mxu0 0
    %2226 = vmatprep.subr.bf16.mxu0 0
    %2227 = vmatpush1.bf16.msra.mxu0 0
    %2228 = vmatprep.subr.bf16.mxu0 0
    %2229 = vmatpush1.bf16.msra.mxu0 0
    %2230 = vmatprep.subr.bf16.mxu0 0
    %2231 = vmatpush1.bf16.msra.mxu0 0
    %2232 = vmatprep.subr.bf16.mxu0 0
    %2233 = vmatpush1.bf16.msra.mxu0 0
    %2234 = vmatprep.subr.bf16.mxu0 0
    %2235 = vmatpush1.bf16.msra.mxu0 0
    %2236 = vmatprep.mubr.bf16.mxu0 0
    %2237 = vmatmul.mubr.bf16.gmra.mrb[0].mxu0 0
    %v2238 = vpop.f32.mrb[0].mxu0
    %v2239 = vadd.f32 0.0, %v2238
    %v2240 = vpop.f32.mrb[0].mxu0
    %v2241 = vadd.f32 0.0, %v2240
    %v2242 = vpop.f32.mrb[0].mxu0
    %v2243 = vadd.f32 0.0, %v2242
    %v2244 = vpop.f32.mrb[0].mxu0
    %v2245 = vadd.f32 0.0, %v2244
    %2246 = vmatprep.mubr.bf16.mxu0 0
    %2247 = vmatmul.mubr.bf16.gmra.mrb[0].mxu0 0
    %v2248 = vpop.f32.mrb[0].mxu0
    %v2249 = vadd.f32 0.0, %v2248
    %v2250 = vpop.f32.mrb[0].mxu0
    %v2251 = vadd.f32 0.0, %v2250
    %v2252 = vpop.f32.mrb[0].mxu0
    %v2253 = vpop.f32.mrb[0].mxu0
    %2254 = vdwg.mxu0
    %2255 = vmatprep.subr.bf16.mxu0 0
    %2256 = vmatpush1.bf16.msra.mxu0 %v2158
    %2257 = vmatprep.subr.bf16.mxu0 0
    %2258 = vmatpush1.bf16.msra.mxu0 %v2161
    %2259 = vmatprep.subr.bf16.mxu0 0
    %2260 = vmatpush1.bf16.msra.mxu0 %v2164
    %2261 = vmatprep.subr.bf16.mxu0 0
    %2262 = vmatpush1.bf16.msra.mxu0 %v2167
    %2263 = vmatprep.subr.bf16.mxu0 0
    %2264 = vmatpush1.bf16.msra.mxu0 %v2170
    %2265 = vmatprep.subr.bf16.mxu0 0
    %2266 = vmatpush1.bf16.msra.mxu0 %v2173
    %2267 = vmatprep.subr.bf16.mxu0 0
    %2268 = vmatpush1.bf16.msra.mxu0 %v2176
    %2269 = vmatprep.subr.bf16.mxu0 0
    %2270 = vmatpush1.bf16.msra.mxu0 %v2179
    %2271 = vmatprep.subr.bf16.mxu0 0
    %2272 = vmatpush1.bf16.msra.mxu0 0
    %2273 = vmatprep.subr.bf16.mxu0 0
    %2274 = vmatpush1.bf16.msra.mxu0 0
    %2275 = vmatprep.subr.bf16.mxu0 0
    %2276 = vmatpush1.bf16.msra.mxu0 0
    %2277 = vmatprep.subr.bf16.mxu0 0
    %2278 = vmatpush1.bf16.msra.mxu0 0
    %2279 = vmatprep.subr.bf16.mxu0 0
    %2280 = vmatpush1.bf16.msra.mxu0 0
    %2281 = vmatprep.subr.bf16.mxu0 0
    %2282 = vmatpush1.bf16.msra.mxu0 0
    %2283 = vmatprep.subr.bf16.mxu0 0
    %2284 = vmatpush1.bf16.msra.mxu0 0
    %2285 = vmatprep.subr.bf16.mxu0 0
    %2286 = vmatpush1.bf16.msra.mxu0 0
    %2287 = vmatprep.mubr.bf16.mxu0 0
    %2288 = vmatmul.mubr.bf16.gmra.mrb[0].mxu0 0
    %v2289 = vpop.f32.mrb[0].mxu0
    %v2290 = vadd.f32 0.0, %v2289
    %v2291 = vpop.f32.mrb[0].mxu0
    %v2292 = vpop.f32.mrb[0].mxu0
    %v2293 = vadd.f32 0.0, %v2292
    %v2294 = vpop.f32.mrb[0].mxu0
    %2295 = vmatprep.mubr.bf16.mxu0 0
    %2296 = vmatmul.mubr.bf16.gmra.mrb[0].mxu0 0
    %v2297 = vpop.f32.mrb[0].mxu0
    %v2298 = vadd.f32 0.0, %v2297
    %v2299 = vpop.f32.mrb[0].mxu0
    %v2300 = vpop.f32.mrb[0].mxu0
    %v2301 = vpop.f32.mrb[0].mxu0
    %2302 = vdwg.mxu0
    %v2303 = vadd.f32 %v2067, %v2239
    %v2304 = vadd.f32 %v2070, %v2243
    %v2305 = vadd.f32 %v2073, %v2249
    %v2306 = vxor.u32 %v2303, 2147483648
    %v2307 = vxor.u32 %v2304, 2147483648
    %v2308 = vxor.u32 %v2305, 2147483648
    %v2309 = vmul.f32 %v2306, 1.442695
    %v2310 = vpow.pop %v2309
    %v2311 = vmul.f32 %v2307, 1.442695
    %v2312 = vpow.pop %v2311
    %v2313 = vmul.f32 %v2308, 1.442695
    %v2314 = vpow.pop %v2313
    %v2315 = vadd.f32 %v2310, 1.0
    %v2316 = vadd.f32 %v2312, 1.0
    %v2317 = vadd.f32 %v2314, 1.0
    %v2318 = vrcp.pop %v2315
    %v2319 = vmul.f32 1.0, %v2318
    %v2320 = vrcp.pop %v2316
    %v2321 = vmul.f32 1.0, %v2320
    %v2322 = vrcp.pop %v2317
    %v2323 = vmul.f32 1.0, %v2322
    %v2324 = vadd.f32 %v2068, %v2241
    %v2325 = vadd.f32 %v2071, %v2245
    %v2326 = vadd.f32 %v2074, %v2251
    %v2327 = vxor.u32 %v2324, 2147483648
    %v2328 = vxor.u32 %v2325, 2147483648
    %v2329 = vxor.u32 %v2326, 2147483648
    %v2330 = vmul.f32 %v2327, 1.442695
    %v2331 = vpow.pop %v2330
    %v2332 = vmul.f32 %v2328, 1.442695
    %v2333 = vpow.pop %v2332
    %v2334 = vmul.f32 %v2329, 1.442695
    %v2335 = vpow.pop %v2334
    %v2336 = vadd.f32 %v2331, 1.0
    %v2337 = vadd.f32 %v2333, 1.0
    %v2338 = vadd.f32 %v2335, 1.0
    %v2339 = vrcp.pop %v2336
    %v2340 = vmul.f32 1.0, %v2339
    %v2341 = vrcp.pop %v2337
    %v2342 = vmul.f32 1.0, %v2341
    %v2343 = vrcp.pop %v2338
    %v2344 = vmul.f32 1.0, %v2343
    %v2346 = vlaneseq
    %v2347 = vshrl.u32 %v2346, 7
    %v2348 = vsub.s32 0, %v2347
    %v2349 = vrot.slane %v2066, %v2348
    %v2351 = vadd.f32 %v2290, %v2349
    %v2352 = vadd.f32 %v2293, %v2349
    %v2353 = vadd.f32 %v2298, %v2349
    %v2354 = vmul.f32 %v2319, %v2351
    %v2355 = vmul.f32 %v2321, %v2352
    %v2356 = vmul.f32 %v2323, %v2353
    %v2357 = vadd.f32 %v2069, %v2354
    %v2358 = vadd.f32 %v2072, %v2355
    %v2359 = vadd.f32 %v2075, %v2356
    %v2360 = vtanh.pop %v2357
    %v2361 = vtanh.pop %v2358
    %v2362 = vtanh.pop %v2359
    %v2363 = vsub.f32 1.0, %v2340
    %v2364 = vsub.f32 1.0, %v2342
    %v2365 = vsub.f32 1.0, %v2344
    %v2366 = vmul.f32 %v2363, %v2360
    %v2367 = vmul.f32 %v2364, %v2361
    %v2368 = vmul.f32 %v2365, %v2362
    %v2369 = vmul.f32 %v2340, 0.0
    %v2370 = vmul.f32 %v2342, 0.0
    %v2371 = vmul.f32 %v2344, 0.0
    %v2372 = vadd.f32 %v2366, %v2369
    %v2373 = vadd.f32 %v2367, %v2370
    %v2374 = vadd.f32 %v2368, %v2371
    %v2375 = vld [vmem:[#allocation2 + $0x48] sm:$0xff]
    %v2376 = vld [vmem:[#allocation2 + $0x50] sm:$0xff]
    %v2377 = vld [vmem:[#allocation2 + $0x58] sm:$0xff]
    %v2378 = vld [vmem:[#allocation2 + $0x60] sm:$0xff]
    %v2379 = vld [vmem:[#allocation2 + $0x68] sm:$0xff]
    %v2380 = vld [vmem:[#allocation2 + $0x70] sm:$0xff]
    %v2381 = vld [vmem:[#allocation2 + $0x78] sm:$0xff]
    %v2382 = vld [vmem:[#allocation2 + $0x80] sm:$0xff]
    %v2383 = vld [vmem:[#allocation2 + $0x88] sm:$0xff]
    %v2384 = vpack.c.bf16 %v2373, %v2372
    %v2385 = vpack.c.bf16 %v2374, %v2374
    %2386 = vmatprep.subr.bf16.mxu0 %v2157
    %2387 = vmatpush1.bf16.msra.mxu0 %v2156
    %2388 = vmatprep.subr.bf16.mxu0 %v2160
    %2389 = vmatpush1.bf16.msra.mxu0 %v2159
    %2390 = vmatprep.subr.bf16.mxu0 %v2163
    %2391 = vmatpush1.bf16.msra.mxu0 %v2162
    %2392 = vmatprep.subr.bf16.mxu0 %v2166
    %2393 = vmatpush1.bf16.msra.mxu0 %v2165
    %2394 = vmatprep.subr.bf16.mxu0 %v2169
    %2395 = vmatpush1.bf16.msra.mxu0 %v2168
    %2396 = vmatprep.subr.bf16.mxu0 %v2172
    %2397 = vmatpush1.bf16.msra.mxu0 %v2171
    %2398 = vmatprep.subr.bf16.mxu0 %v2175
    %2399 = vmatpush1.bf16.msra.mxu0 %v2174
    %2400 = vmatprep.subr.bf16.mxu0 %v2178
    %2401 = vmatpush1.bf16.msra.mxu0 %v2177
    %2402 = vmatprep.subr.bf16.mxu0 0
    %2403 = vmatpush1.bf16.msra.mxu0 0
    %2404 = vmatprep.subr.bf16.mxu0 0
    %2405 = vmatpush1.bf16.msra.mxu0 0
    %2406 = vmatprep.subr.bf16.mxu0 0
    %2407 = vmatpush1.bf16.msra.mxu0 0
    %2408 = vmatprep.subr.bf16.mxu0 0
    %2409 = vmatpush1.bf16.msra.mxu0 0
    %2410 = vmatprep.subr.bf16.mxu0 0
    %2411 = vmatpush1.bf16.msra.mxu0 0
    %2412 = vmatprep.subr.bf16.mxu0 0
    %2413 = vmatpush1.bf16.msra.mxu0 0
    %2414 = vmatprep.subr.bf16.mxu0 0
    %2415 = vmatpush1.bf16.msra.mxu0 0
    %2416 = vmatprep.subr.bf16.mxu0 0
    %2417 = vmatpush1.bf16.msra.mxu0 0
    %2418 = vmatprep.mubr.bf16.mxu0 0
    %2419 = vmatmul.mubr.bf16.gmra.mrb[0].mxu0 %v2384
    %v2420 = vpop.f32.mrb[0].mxu0
    %v2421 = vadd.f32 0.0, %v2420
    %v2422 = vpop.f32.mrb[0].mxu0
    %v2423 = vadd.f32 0.0, %v2422
    %v2424 = vpop.f32.mrb[0].mxu0
    %v2425 = vadd.f32 0.0, %v2424
    %v2426 = vpop.f32.mrb[0].mxu0
    %v2427 = vadd.f32 0.0, %v2426
    %2428 = vmatprep.mubr.bf16.mxu0 0
    %2429 = vmatmul.mubr.bf16.gmra.mrb[0].mxu0 %v2385
    %v2430 = vpop.f32.mrb[0].mxu0
    %v2431 = vadd.f32 0.0, %v2430
    %v2432 = vpop.f32.mrb[0].mxu0
    %v2433 = vadd.f32 0.0, %v2432
    %v2434 = vpop.f32.mrb[0].mxu0
    %v2435 = vpop.f32.mrb[0].mxu0
    %2436 = vdwg.mxu0
    %2437 = vmatprep.subr.bf16.mxu0 0
    %2438 = vmatpush1.bf16.msra.mxu0 %v2158
    %2439 = vmatprep.subr.bf16.mxu0 0
    %2440 = vmatpush1.bf16.msra.mxu0 %v2161
    %2441 = vmatprep.subr.bf16.mxu0 0
    %2442 = vmatpush1.bf16.msra.mxu0 %v2164
    %2443 = vmatprep.subr.bf16.mxu0 0
    %2444 = vmatpush1.bf16.msra.mxu0 %v2167
    %2445 = vmatprep.subr.bf16.mxu0 0
    %2446 = vmatpush1.bf16.msra.mxu0 %v2170
    %2447 = vmatprep.subr.bf16.mxu0 0
    %2448 = vmatpush1.bf16.msra.mxu0 %v2173
    %2449 = vmatprep.subr.bf16.mxu0 0
    %2450 = vmatpush1.bf16.msra.mxu0 %v2176
    %2451 = vmatprep.subr.bf16.mxu0 0
    %2452 = vmatpush1.bf16.msra.mxu0 %v2179
    %2453 = vmatprep.subr.bf16.mxu0 0
    %2454 = vmatpush1.bf16.msra.mxu0 0
    %2455 = vmatprep.subr.bf16.mxu0 0
    %2456 = vmatpush1.bf16.msra.mxu0 0
    %2457 = vmatprep.subr.bf16.mxu0 0
    %2458 = vmatpush1.bf16.msra.mxu0 0
    %2459 = vmatprep.subr.bf16.mxu0 0
    %2460 = vmatpush1.bf16.msra.mxu0 0
    %2461 = vmatprep.subr.bf16.mxu0 0
    %2462 = vmatpush1.bf16.msra.mxu0 0
    %2463 = vmatprep.subr.bf16.mxu0 0
    %2464 = vmatpush1.bf16.msra.mxu0 0
    %2465 = vmatprep.subr.bf16.mxu0 0
    %2466 = vmatpush1.bf16.msra.mxu0 0
    %2467 = vmatprep.subr.bf16.mxu0 0
    %2468 = vmatpush1.bf16.msra.mxu0 0
    %2469 = vmatprep.mubr.bf16.mxu0 0
    %2470 = vmatmul.mubr.bf16.gmra.mrb[0].mxu0 %v2384
    %v2471 = vpop.f32.mrb[0].mxu0
    %v2472 = vadd.f32 0.0, %v2471
    %v2473 = vpop.f32.mrb[0].mxu0
    %v2474 = vpop.f32.mrb[0].mxu0
    %v2475 = vadd.f32 0.0, %v2474
    %v2476 = vpop.f32.mrb[0].mxu0
    %2477 = vmatprep.mubr.bf16.mxu0 0
    %2478 = vmatmul.mubr.bf16.gmra.mrb[0].mxu0 %v2385
    %v2479 = vpop.f32.mrb[0].mxu0
    %v2480 = vadd.f32 0.0, %v2479
    %v2481 = vpop.f32.mrb[0].mxu0
    %v2482 = vpop.f32.mrb[0].mxu0
    %v2483 = vpop.f32.mrb[0].mxu0
    %2484 = vdwg.mxu0
    %v2485 = vadd.f32 %v2375, %v2421
    %v2486 = vadd.f32 %v2378, %v2425
    %v2487 = vadd.f32 %v2381, %v2431
    %v2488 = vxor.u32 %v2485, 2147483648
    %v2489 = vxor.u32 %v2486, 2147483648
    %v2490 = vxor.u32 %v2487, 2147483648
    %v2491 = vmul.f32 %v2488, 1.442695
    %v2492 = vpow.pop %v2491
    %v2493 = vmul.f32 %v2489, 1.442695
    %v2494 = vpow.pop %v2493
    %v2495 = vmul.f32 %v2490, 1.442695
    %v2496 = vpow.pop %v2495
    %v2497 = vadd.f32 %v2492, 1.0
    %v2498 = vadd.f32 %v2494, 1.0
    %v2499 = vadd.f32 %v2496, 1.0
    %v2500 = vrcp.pop %v2497
    %v2501 = vmul.f32 1.0, %v2500
    %v2502 = vrcp.pop %v2498
    %v2503 = vmul.f32 1.0, %v2502
    %v2504 = vrcp.pop %v2499
    %v2505 = vmul.f32 1.0, %v2504
    %v2506 = vadd.f32 %v2376, %v2423
    %v2507 = vadd.f32 %v2379, %v2427
    %v2508 = vadd.f32 %v2382, %v2433
    %v2509 = vxor.u32 %v2506, 2147483648
    %v2510 = vxor.u32 %v2507, 2147483648
    %v2511 = vxor.u32 %v2508, 2147483648
    %v2512 = vmul.f32 %v2509, 1.442695
    %v2513 = vpow.pop %v2512
    %v2514 = vmul.f32 %v2510, 1.442695
    %v2515 = vpow.pop %v2514
    %v2516 = vmul.f32 %v2511, 1.442695
    %v2517 = vpow.pop %v2516
    %v2518 = vadd.f32 %v2513, 1.0
    %v2519 = vadd.f32 %v2515, 1.0
    %v2520 = vadd.f32 %v2517, 1.0
    %v2521 = vrcp.pop %v2518
    %v2522 = vmul.f32 1.0, %v2521
    %v2523 = vrcp.pop %v2519
    %v2524 = vmul.f32 1.0, %v2523
    %v2525 = vrcp.pop %v2520
    %v2526 = vmul.f32 1.0, %v2525
    %v2527 = vadd.f32 %v2472, %v2349
    %v2528 = vadd.f32 %v2475, %v2349
    %v2529 = vadd.f32 %v2480, %v2349
    %v2530 = vmul.f32 %v2501, %v2527
    %v2531 = vmul.f32 %v2503, %v2528
    %v2532 = vmul.f32 %v2505, %v2529
    %v2533 = vadd.f32 %v2377, %v2530
    %v2534 = vadd.f32 %v2380, %v2531
    %v2535 = vadd.f32 %v2383, %v2532
    %v2536 = vtanh.pop %v2533
    %v2537 = vtanh.pop %v2534
    %v2538 = vtanh.pop %v2535
    %v2539 = vsub.f32 1.0, %v2522
    %v2540 = vsub.f32 1.0, %v2524
    %v2541 = vsub.f32 1.0, %v2526
    %v2542 = vmul.f32 %v2539, %v2536
    %v2543 = vmul.f32 %v2540, %v2537
    %v2544 = vmul.f32 %v2541, %v2538
    %v2545 = vmul.f32 %v2522, %v2372
    %v2546 = vmul.f32 %v2524, %v2373
    %v2547 = vmul.f32 %v2526, %v2374
    %v2548 = vadd.f32 %v2542, %v2545
    %v2549 = vadd.f32 %v2543, %v2546
    %v2550 = vadd.f32 %v2544, %v2547
    %v2551 = vld [vmem:[#allocation2 + $0x90] sm:$0xff]
    %v2552 = vld [vmem:[#allocation2 + $0x98] sm:$0xff]
    %v2553 = vld [vmem:[#allocation2 + $0xa0] sm:$0xff]
    %v2554 = vld [vmem:[#allocation2 + $0xa8] sm:$0xff]
    %v2555 = vld [vmem:[#allocation2 + $0xb0] sm:$0xff]
    %v2556 = vld [vmem:[#allocation2 + $0xb8] sm:$0xff]
    %v2557 = vld [vmem:[#allocation2 + $0xc0] sm:$0xff]
    %v2558 = vld [vmem:[#allocation2 + $0xc8] sm:$0xff]
    %v2559 = vld [vmem:[#allocation2 + $0xd0] sm:$0xff]
    %v2560 = vpack.c.bf16 %v2549, %v2548
    %v2561 = vpack.c.bf16 %v2550, %v2550
    %2562 = vmatprep.subr.bf16.mxu0 %v2157
    %2563 = vmatpush1.bf16.msra.mxu0 %v2156
    %2564 = vmatprep.subr.bf16.mxu0 %v2160
    %2565 = vmatpush1.bf16.msra.mxu0 %v2159
    %2566 = vmatprep.subr.bf16.mxu0 %v2163
    %2567 = vmatpush1.bf16.msra.mxu0 %v2162
    %2568 = vmatprep.subr.bf16.mxu0 %v2166
    %2569 = vmatpush1.bf16.msra.mxu0 %v2165
    %2570 = vmatprep.subr.bf16.mxu0 %v2169
    %2571 = vmatpush1.bf16.msra.mxu0 %v2168
    %2572 = vmatprep.subr.bf16.mxu0 %v2172
    %2573 = vmatpush1.bf16.msra.mxu0 %v2171
    %2574 = vmatprep.subr.bf16.mxu0 %v2175
    %2575 = vmatpush1.bf16.msra.mxu0 %v2174
    %2576 = vmatprep.subr.bf16.mxu0 %v2178
    %2577 = vmatpush1.bf16.msra.mxu0 %v2177
    %2578 = vmatprep.subr.bf16.mxu0 0
    %2579 = vmatpush1.bf16.msra.mxu0 0
    %2580 = vmatprep.subr.bf16.mxu0 0
    %2581 = vmatpush1.bf16.msra.mxu0 0
    %2582 = vmatprep.subr.bf16.mxu0 0
    %2583 = vmatpush1.bf16.msra.mxu0 0
    %2584 = vmatprep.subr.bf16.mxu0 0
    %2585 = vmatpush1.bf16.msra.mxu0 0
    %2586 = vmatprep.subr.bf16.mxu0 0
    %2587 = vmatpush1.bf16.msra.mxu0 0
    %2588 = vmatprep.subr.bf16.mxu0 0
    %2589 = vmatpush1.bf16.msra.mxu0 0
    %2590 = vmatprep.subr.bf16.mxu0 0
    %2591 = vmatpush1.bf16.msra.mxu0 0
    %2592 = vmatprep.subr.bf16.mxu0 0
    %2593 = vmatpush1.bf16.msra.mxu0 0
    %2594 = vmatprep.mubr.bf16.mxu0 0
    %2595 = vmatmul.mubr.bf16.gmra.mrb[0].mxu0 %v2560
    %v2596 = vpop.f32.mrb[0].mxu0
    %v2597 = vadd.f32 0.0, %v2596
    %v2598 = vpop.f32.mrb[0].mxu0
    %v2599 = vadd.f32 0.0, %v2598
    %v2600 = vpop.f32.mrb[0].mxu0
    %v2601 = vadd.f32 0.0, %v2600
    %v2602 = vpop.f32.mrb[0].mxu0
    %v2603 = vadd.f32 0.0, %v2602
    %2604 = vmatprep.mubr.bf16.mxu0 0
    %2605 = vmatmul.mubr.bf16.gmra.mrb[0].mxu0 %v2561
    %v2606 = vpop.f32.mrb[0].mxu0
    %v2607 = vadd.f32 0.0, %v2606
    %v2608 = vpop.f32.mrb[0].mxu0
    %v2609 = vadd.f32 0.0, %v2608
    %v2610 = vpop.f32.mrb[0].mxu0
    %v2611 = vpop.f32.mrb[0].mxu0
    %2612 = vdwg.mxu0
    %2613 = vmatprep.subr.bf16.mxu0 0
    %2614 = vmatpush1.bf16.msra.mxu0 %v2158
    %2615 = vmatprep.subr.bf16.mxu0 0
    %2616 = vmatpush1.bf16.msra.mxu0 %v2161
    %2617 = vmatprep.subr.bf16.mxu0 0
    %2618 = vmatpush1.bf16.msra.mxu0 %v2164
    %2619 = vmatprep.subr.bf16.mxu0 0
    %2620 = vmatpush1.bf16.msra.mxu0 %v2167
    %2621 = vmatprep.subr.bf16.mxu0 0
    %2622 = vmatpush1.bf16.msra.mxu0 %v2170
    %2623 = vmatprep.subr.bf16.mxu0 0
    %2624 = vmatpush1.bf16.msra.mxu0 %v2173
    %2625 = vmatprep.subr.bf16.mxu0 0
    %2626 = vmatpush1.bf16.msra.mxu0 %v2176
    %2627 = vmatprep.subr.bf16.mxu0 0
    %2628 = vmatpush1.bf16.msra.mxu0 %v2179
    %2629 = vmatprep.subr.bf16.mxu0 0
    %2630 = vmatpush1.bf16.msra.mxu0 0
    %2631 = vmatprep.subr.bf16.mxu0 0
    %2632 = vmatpush1.bf16.msra.mxu0 0
    %2633 = vmatprep.subr.bf16.mxu0 0
    %2634 = vmatpush1.bf16.msra.mxu0 0
    %2635 = vmatprep.subr.bf16.mxu0 0
    %2636 = vmatpush1.bf16.msra.mxu0 0
    %2637 = vmatprep.subr.bf16.mxu0 0
    %2638 = vmatpush1.bf16.msra.mxu0 0
    %2639 = vmatprep.subr.bf16.mxu0 0
    %2640 = vmatpush1.bf16.msra.mxu0 0
    %2641 = vmatprep.subr.bf16.mxu0 0
    %2642 = vmatpush1.bf16.msra.mxu0 0
    %2643 = vmatprep.subr.bf16.mxu0 0
    %2644 = vmatpush1.bf16.msra.mxu0 0
    %2645 = vmatprep.mubr.bf16.mxu0 0
    %2646 = vmatmul.mubr.bf16.gmra.mrb[0].mxu0 %v2560
    %v2647 = vpop.f32.mrb[0].mxu0
    %v2648 = vadd.f32 0.0, %v2647
    %v2649 = vpop.f32.mrb[0].mxu0
    %v2650 = vpop.f32.mrb[0].mxu0
    %v2651 = vadd.f32 0.0, %v2650
    %v2652 = vpop.f32.mrb[0].mxu0
    %2653 = vmatprep.mubr.bf16.mxu0 0
    %2654 = vmatmul.mubr.bf16.gmra.mrb[0].mxu0 %v2561
    %v2655 = vpop.f32.mrb[0].mxu0
    %v2656 = vadd.f32 0.0, %v2655
    %v2657 = vpop.f32.mrb[0].mxu0
    %v2658 = vpop.f32.mrb[0].mxu0
    %v2659 = vpop.f32.mrb[0].mxu0
    %2660 = vdwg.mxu0
    %v2661 = vadd.f32 %v2551, %v2597
    %v2662 = vadd.f32 %v2554, %v2601
    %v2663 = vadd.f32 %v2557, %v2607
    %v2664 = vxor.u32 %v2661, 2147483648
    %v2665 = vxor.u32 %v2662, 2147483648
    %v2666 = vxor.u32 %v2663, 2147483648
    %v2667 = vmul.f32 %v2664, 1.442695
    %v2668 = vpow.pop %v2667
    %v2669 = vmul.f32 %v2665, 1.442695
    %v2670 = vpow.pop %v2669
    %v2671 = vmul.f32 %v2666, 1.442695
    %v2672 = vpow.pop %v2671
    %v2673 = vadd.f32 %v2668, 1.0
    %v2674 = vadd.f32 %v2670, 1.0
    %v2675 = vadd.f32 %v2672, 1.0
    %v2676 = vrcp.pop %v2673
    %v2677 = vmul.f32 1.0, %v2676
    %v2678 = vrcp.pop %v2674
    %v2679 = vmul.f32 1.0, %v2678
    %v2680 = vrcp.pop %v2675
    %v2681 = vmul.f32 1.0, %v2680
    %v2682 = vadd.f32 %v2552, %v2599
    %v2683 = vadd.f32 %v2555, %v2603
    %v2684 = vadd.f32 %v2558, %v2609
    %v2685 = vxor.u32 %v2682, 2147483648
    %v2686 = vxor.u32 %v2683, 2147483648
    %v2687 = vxor.u32 %v2684, 2147483648
    %v2688 = vmul.f32 %v2685, 1.442695
    %v2689 = vpow.pop %v2688
    %v2690 = vmul.f32 %v2686, 1.442695
    %v2691 = vpow.pop %v2690
    %v2692 = vmul.f32 %v2687, 1.442695
    %v2693 = vpow.pop %v2692
    %v2694 = vadd.f32 %v2689, 1.0
    %v2695 = vadd.f32 %v2691, 1.0
    %v2696 = vadd.f32 %v2693, 1.0
    %v2697 = vrcp.pop %v2694
    %v2698 = vmul.f32 1.0, %v2697
    %v2699 = vrcp.pop %v2695
    %v2700 = vmul.f32 1.0, %v2699
    %v2701 = vrcp.pop %v2696
    %v2702 = vmul.f32 1.0, %v2701
    %v2703 = vadd.f32 %v2648, %v2349
    %v2704 = vadd.f32 %v2651, %v2349
    %v2705 = vadd.f32 %v2656, %v2349
    %v2706 = vmul.f32 %v2677, %v2703
    %v2707 = vmul.f32 %v2679, %v2704
    %v2708 = vmul.f32 %v2681, %v2705
    %v2709 = vadd.f32 %v2553, %v2706
    %v2710 = vadd.f32 %v2556, %v2707
    %v2711 = vadd.f32 %v2559, %v2708
    %v2712 = vtanh.pop %v2709
    %v2713 = vtanh.pop %v2710
    %v2714 = vtanh.pop %v2711
    %v2715 = vsub.f32 1.0, %v2698
    %v2716 = vsub.f32 1.0, %v2700
    %v2717 = vsub.f32 1.0, %v2702
    %v2718 = vmul.f32 %v2715, %v2712
    %v2719 = vmul.f32 %v2716, %v2713
    %v2720 = vmul.f32 %v2717, %v2714
    %v2721 = vmul.f32 %v2698, %v2548
    %v2722 = vmul.f32 %v2700, %v2549
    %v2723 = vmul.f32 %v2702, %v2550
    %v2724 = vadd.f32 %v2718, %v2721
    %v2725 = vadd.f32 %v2719, %v2722
    %v2726 = vadd.f32 %v2720, %v2723
    %v2727 = vld [vmem:[#allocation2 + $0xd8] sm:$0xff]
    %v2728 = vld [vmem:[#allocation2 + $0xe0] sm:$0xff]
    %v2729 = vld [vmem:[#allocation2 + $0xe8] sm:$0xff]
    %v2730 = vld [vmem:[#allocation2 + $0xf0] sm:$0xff]
    %v2731 = vld [vmem:[#allocation2 + $0xf8] sm:$0xff]
    %v2732 = vld [vmem:[#allocation2 + $0x100] sm:$0xff]
    %v2733 = vld [vmem:[#allocation2 + $0x108] sm:$0xff]
    %v2734 = vld [vmem:[#allocation2 + $0x110] sm:$0xff]
    %v2735 = vld [vmem:[#allocation2 + $0x118] sm:$0xff]
    %v2736 = vpack.c.bf16 %v2725, %v2724
    %v2737 = vpack.c.bf16 %v2726, %v2726
    %2738 = vmatprep.subr.bf16.mxu0 %v2157
    %2739 = vmatpush1.bf16.msra.mxu0 %v2156
    %2740 = vmatprep.subr.bf16.mxu0 %v2160
    %2741 = vmatpush1.bf16.msra.mxu0 %v2159
    %2742 = vmatprep.subr.bf16.mxu0 %v2163
    %2743 = vmatpush1.bf16.msra.mxu0 %v2162
    %2744 = vmatprep.subr.bf16.mxu0 %v2166
    %2745 = vmatpush1.bf16.msra.mxu0 %v2165
    %2746 = vmatprep.subr.bf16.mxu0 %v2169
    %2747 = vmatpush1.bf16.msra.mxu0 %v2168
    %2748 = vmatprep.subr.bf16.mxu0 %v2172
    %2749 = vmatpush1.bf16.msra.mxu0 %v2171
    %2750 = vmatprep.subr.bf16.mxu0 %v2175
    %2751 = vmatpush1.bf16.msra.mxu0 %v2174
    %2752 = vmatprep.subr.bf16.mxu0 %v2178
    %2753 = vmatpush1.bf16.msra.mxu0 %v2177
    %2754 = vmatprep.subr.bf16.mxu0 0
    %2755 = vmatpush1.bf16.msra.mxu0 0
    %2756 = vmatprep.subr.bf16.mxu0 0
    %2757 = vmatpush1.bf16.msra.mxu0 0
    %2758 = vmatprep.subr.bf16.mxu0 0
    %2759 = vmatpush1.bf16.msra.mxu0 0
    %2760 = vmatprep.subr.bf16.mxu0 0
    %2761 = vmatpush1.bf16.msra.mxu0 0
    %2762 = vmatprep.subr.bf16.mxu0 0
    %2763 = vmatpush1.bf16.msra.mxu0 0
    %2764 = vmatprep.subr.bf16.mxu0 0
    %2765 = vmatpush1.bf16.msra.mxu0 0
    %2766 = vmatprep.subr.bf16.mxu0 0
    %2767 = vmatpush1.bf16.msra.mxu0 0
    %2768 = vmatprep.subr.bf16.mxu0 0
    %2769 = vmatpush1.bf16.msra.mxu0 0
    %2770 = vmatprep.mubr.bf16.mxu0 0
    %2771 = vmatmul.mubr.bf16.gmra.mrb[0].mxu0 %v2736
    %v2772 = vpop.f32.mrb[0].mxu0
    %v2773 = vadd.f32 0.0, %v2772
    %v2774 = vpop.f32.mrb[0].mxu0
    %v2775 = vadd.f32 0.0, %v2774
    %v2776 = vpop.f32.mrb[0].mxu0
    %v2777 = vadd.f32 0.0, %v2776
    %v2778 = vpop.f32.mrb[0].mxu0
    %v2779 = vadd.f32 0.0, %v2778
    %2780 = vmatprep.mubr.bf16.mxu0 0
    %2781 = vmatmul.mubr.bf16.gmra.mrb[0].mxu0 %v2737
    %v2782 = vpop.f32.mrb[0].mxu0
    %v2783 = vadd.f32 0.0, %v2782
    %v2784 = vpop.f32.mrb[0].mxu0
    %v2785 = vadd.f32 0.0, %v2784
    %v2786 = vpop.f32.mrb[0].mxu0
    %v2787 = vpop.f32.mrb[0].mxu0
    %2788 = vdwg.mxu0
    %2789 = vmatprep.subr.bf16.mxu0 0
    %2790 = vmatpush1.bf16.msra.mxu0 %v2158
    %2791 = vmatprep.subr.bf16.mxu0 0
    %2792 = vmatpush1.bf16.msra.mxu0 %v2161
    %2793 = vmatprep.subr.bf16.mxu0 0
    %2794 = vmatpush1.bf16.msra.mxu0 %v2164
    %2795 = vmatprep.subr.bf16.mxu0 0
    %2796 = vmatpush1.bf16.msra.mxu0 %v2167
    %2797 = vmatprep.subr.bf16.mxu0 0
    %2798 = vmatpush1.bf16.msra.mxu0 %v2170
    %2799 = vmatprep.subr.bf16.mxu0 0
    %2800 = vmatpush1.bf16.msra.mxu0 %v2173
    %2801 = vmatprep.subr.bf16.mxu0 0
    %2802 = vmatpush1.bf16.msra.mxu0 %v2176
    %2803 = vmatprep.subr.bf16.mxu0 0
    %2804 = vmatpush1.bf16.msra.mxu0 %v2179
    %2805 = vmatprep.subr.bf16.mxu0 0
    %2806 = vmatpush1.bf16.msra.mxu0 0
    %2807 = vmatprep.subr.bf16.mxu0 0
    %2808 = vmatpush1.bf16.msra.mxu0 0
    %2809 = vmatprep.subr.bf16.mxu0 0
    %2810 = vmatpush1.bf16.msra.mxu0 0
    %2811 = vmatprep.subr.bf16.mxu0 0
    %2812 = vmatpush1.bf16.msra.mxu0 0
    %2813 = vmatprep.subr.bf16.mxu0 0
    %2814 = vmatpush1.bf16.msra.mxu0 0
    %2815 = vmatprep.subr.bf16.mxu0 0
    %2816 = vmatpush1.bf16.msra.mxu0 0
    %2817 = vmatprep.subr.bf16.mxu0 0
    %2818 = vmatpush1.bf16.msra.mxu0 0
    %2819 = vmatprep.subr.bf16.mxu0 0
    %2820 = vmatpush1.bf16.msra.mxu0 0
    %2821 = vmatprep.mubr.bf16.mxu0 0
    %2822 = vmatmul.mubr.bf16.gmra.mrb[0].mxu0 %v2736
    %v2823 = vpop.f32.mrb[0].mxu0
    %v2824 = vadd.f32 0.0, %v2823
    %v2825 = vpop.f32.mrb[0].mxu0
    %v2826 = vpop.f32.mrb[0].mxu0
    %v2827 = vadd.f32 0.0, %v2826
    %v2828 = vpop.f32.mrb[0].mxu0
    %2829 = vmatprep.mubr.bf16.mxu0 0
    %2830 = vmatmul.mubr.bf16.gmra.mrb[0].mxu0 %v2737
    %v2831 = vpop.f32.mrb[0].mxu0
    %v2832 = vadd.f32 0.0, %v2831
    %v2833 = vpop.f32.mrb[0].mxu0
    %v2834 = vpop.f32.mrb[0].mxu0
    %v2835 = vpop.f32.mrb[0].mxu0
    %2836 = vdwg.mxu0
    %v2837 = vadd.f32 %v2727, %v2773
    %v2838 = vadd.f32 %v2730, %v2777
    %v2839 = vadd.f32 %v2733, %v2783
    %v2840 = vxor.u32 %v2837, 2147483648
    %v2841 = vxor.u32 %v2838, 2147483648
    %v2842 = vxor.u32 %v2839, 2147483648
    %v2843 = vmul.f32 %v2840, 1.442695
    %v2844 = vpow.pop %v2843
    %v2845 = vmul.f32 %v2841, 1.442695
    %v2846 = vpow.pop %v2845
    %v2847 = vmul.f32 %v2842, 1.442695
    %v2848 = vpow.pop %v2847
    %v2849 = vadd.f32 %v2844, 1.0
    %v2850 = vadd.f32 %v2846, 1.0
    %v2851 = vadd.f32 %v2848, 1.0
    %v2852 = vrcp.pop %v2849
    %v2853 = vmul.f32 1.0, %v2852
    %v2854 = vrcp.pop %v2850
    %v2855 = vmul.f32 1.0, %v2854
    %v2856 = vrcp.pop %v2851
    %v2857 = vmul.f32 1.0, %v2856
    %v2858 = vadd.f32 %v2728, %v2775
    %v2859 = vadd.f32 %v2731, %v2779
    %v2860 = vadd.f32 %v2734, %v2785
    %v2861 = vxor.u32 %v2858, 2147483648
    %v2862 = vxor.u32 %v2859, 2147483648
    %v2863 = vxor.u32 %v2860, 2147483648
    %v2864 = vmul.f32 %v2861, 1.442695
    %v2865 = vpow.pop %v2864
    %v2866 = vmul.f32 %v2862, 1.442695
    %v2867 = vpow.pop %v2866
    %v2868 = vmul.f32 %v2863, 1.442695
    %v2869 = vpow.pop %v2868
    %v2870 = vadd.f32 %v2865, 1.0
    %v2871 = vadd.f32 %v2867, 1.0
    %v2872 = vadd.f32 %v2869, 1.0
    %v2873 = vrcp.pop %v2870
    %v2874 = vmul.f32 1.0, %v2873
    %v2875 = vrcp.pop %v2871
    %v2876 = vmul.f32 1.0, %v2875
    %v2877 = vrcp.pop %v2872
    %v2878 = vmul.f32 1.0, %v2877
    %v2879 = vadd.f32 %v2824, %v2349
    %v2880 = vadd.f32 %v2827, %v2349
    %v2881 = vadd.f32 %v2832, %v2349
    %v2882 = vmul.f32 %v2853, %v2879
    %v2883 = vmul.f32 %v2855, %v2880
    %v2884 = vmul.f32 %v2857, %v2881
    %v2885 = vadd.f32 %v2729, %v2882
    %v2886 = vadd.f32 %v2732, %v2883
    %v2887 = vadd.f32 %v2735, %v2884
    %v2888 = vtanh.pop %v2885
    %v2889 = vtanh.pop %v2886
    %v2890 = vtanh.pop %v2887
    %v2891 = vsub.f32 1.0, %v2874
    %v2892 = vsub.f32 1.0, %v2876
    %v2893 = vsub.f32 1.0, %v2878
    %v2894 = vmul.f32 %v2891, %v2888
    %v2895 = vmul.f32 %v2892, %v2889
    %v2896 = vmul.f32 %v2893, %v2890
    %v2897 = vmul.f32 %v2874, %v2724
    %v2898 = vmul.f32 %v2876, %v2725
    %v2899 = vmul.f32 %v2878, %v2726
    %v2900 = vadd.f32 %v2894, %v2897
    %v2901 = vadd.f32 %v2895, %v2898
    %v2902 = vadd.f32 %v2896, %v2899
    %v2903 = vld [vmem:[#allocation2 + $0x120] sm:$0xff]
    %v2904 = vld [vmem:[#allocation2 + $0x128] sm:$0xff]
    %v2905 = vld [vmem:[#allocation2 + $0x130] sm:$0xff]
    %v2906 = vld [vmem:[#allocation2 + $0x138] sm:$0xff]
    %v2907 = vld [vmem:[#allocation2 + $0x140] sm:$0xff]
    %v2908 = vld [vmem:[#allocation2 + $0x148] sm:$0xff]
    %v2909 = vld [vmem:[#allocation2 + $0x150] sm:$0xff]
    %v2910 = vld [vmem:[#allocation2 + $0x158] sm:$0xff]
    %v2911 = vld [vmem:[#allocation2 + $0x160] sm:$0xff]
    %v2912 = vpack.c.bf16 %v2901, %v2900
    %v2913 = vpack.c.bf16 %v2902, %v2902
    %2914 = vmatprep.subr.bf16.mxu0 %v2157
    %2915 = vmatpush1.bf16.msra.mxu0 %v2156
    %2916 = vmatprep.subr.bf16.mxu0 %v2160
    %2917 = vmatpush1.bf16.msra.mxu0 %v2159
    %2918 = vmatprep.subr.bf16.mxu0 %v2163
    %2919 = vmatpush1.bf16.msra.mxu0 %v2162
    %2920 = vmatprep.subr.bf16.mxu0 %v2166
    %2921 = vmatpush1.bf16.msra.mxu0 %v2165
    %2922 = vmatprep.subr.bf16.mxu0 %v2169
    %2923 = vmatpush1.bf16.msra.mxu0 %v2168
    %2924 = vmatprep.subr.bf16.mxu0 %v2172
    %2925 = vmatpush1.bf16.msra.mxu0 %v2171
    %2926 = vmatprep.subr.bf16.mxu0 %v2175
    %2927 = vmatpush1.bf16.msra.mxu0 %v2174
    %2928 = vmatprep.subr.bf16.mxu0 %v2178
    %2929 = vmatpush1.bf16.msra.mxu0 %v2177
    %2930 = vmatprep.subr.bf16.mxu0 0
    %2931 = vmatpush1.bf16.msra.mxu0 0
    %2932 = vmatprep.subr.bf16.mxu0 0
    %2933 = vmatpush1.bf16.msra.mxu0 0
    %2934 = vmatprep.subr.bf16.mxu0 0
    %2935 = vmatpush1.bf16.msra.mxu0 0
    %2936 = vmatprep.subr.bf16.mxu0 0
    %2937 = vmatpush1.bf16.msra.mxu0 0
    %2938 = vmatprep.subr.bf16.mxu0 0
    %2939 = vmatpush1.bf16.msra.mxu0 0
    %2940 = vmatprep.subr.bf16.mxu0 0
    %2941 = vmatpush1.bf16.msra.mxu0 0
    %2942 = vmatprep.subr.bf16.mxu0 0
    %2943 = vmatpush1.bf16.msra.mxu0 0
    %2944 = vmatprep.subr.bf16.mxu0 0
    %2945 = vmatpush1.bf16.msra.mxu0 0
    %2946 = vmatprep.mubr.bf16.mxu0 0
    %2947 = vmatmul.mubr.bf16.gmra.mrb[0].mxu0 %v2912
    %v2948 = vpop.f32.mrb[0].mxu0
    %v2949 = vadd.f32 0.0, %v2948
    %v2950 = vpop.f32.mrb[0].mxu0
    %v2951 = vadd.f32 0.0, %v2950
    %v2952 = vpop.f32.mrb[0].mxu0
    %v2953 = vadd.f32 0.0, %v2952
    %v2954 = vpop.f32.mrb[0].mxu0
    %v2955 = vadd.f32 0.0, %v2954
    %2956 = vmatprep.mubr.bf16.mxu0 0
    %2957 = vmatmul.mubr.bf16.gmra.mrb[0].mxu0 %v2913
    %v2958 = vpop.f32.mrb[0].mxu0
    %v2959 = vadd.f32 0.0, %v2958
    %v2960 = vpop.f32.mrb[0].mxu0
    %v2961 = vadd.f32 0.0, %v2960
    %v2962 = vpop.f32.mrb[0].mxu0
    %v2963 = vpop.f32.mrb[0].mxu0
    %2964 = vdwg.mxu0
    %2965 = vmatprep.subr.bf16.mxu0 0
    %2966 = vmatpush1.bf16.msra.mxu0 %v2158
    %2967 = vmatprep.subr.bf16.mxu0 0
    %2968 = vmatpush1.bf16.msra.mxu0 %v2161
    %2969 = vmatprep.subr.bf16.mxu0 0
    %2970 = vmatpush1.bf16.msra.mxu0 %v2164
    %2971 = vmatprep.subr.bf16.mxu0 0
    %2972 = vmatpush1.bf16.msra.mxu0 %v2167
    %2973 = vmatprep.subr.bf16.mxu0 0
    %2974 = vmatpush1.bf16.msra.mxu0 %v2170
    %2975 = vmatprep.subr.bf16.mxu0 0
    %2976 = vmatpush1.bf16.msra.mxu0 %v2173
    %2977 = vmatprep.subr.bf16.mxu0 0
    %2978 = vmatpush1.bf16.msra.mxu0 %v2176
    %2979 = vmatprep.subr.bf16.mxu0 0
    %2980 = vmatpush1.bf16.msra.mxu0 %v2179
    %2981 = vmatprep.subr.bf16.mxu0 0
    %2982 = vmatpush1.bf16.msra.mxu0 0
    %2983 = vmatprep.subr.bf16.mxu0 0
    %2984 = vmatpush1.bf16.msra.mxu0 0
    %2985 = vmatprep.subr.bf16.mxu0 0
    %2986 = vmatpush1.bf16.msra.mxu0 0
    %2987 = vmatprep.subr.bf16.mxu0 0
    %2988 = vmatpush1.bf16.msra.mxu0 0
    %2989 = vmatprep.subr.bf16.mxu0 0
    %2990 = vmatpush1.bf16.msra.mxu0 0
    %2991 = vmatprep.subr.bf16.mxu0 0
    %2992 = vmatpush1.bf16.msra.mxu0 0
    %2993 = vmatprep.subr.bf16.mxu0 0
    %2994 = vmatpush1.bf16.msra.mxu0 0
    %2995 = vmatprep.subr.bf16.mxu0 0
    %2996 = vmatpush1.bf16.msra.mxu0 0
    %2997 = vmatprep.mubr.bf16.mxu0 0
    %2998 = vmatmul.mubr.bf16.gmra.mrb[0].mxu0 %v2912
    %v2999 = vpop.f32.mrb[0].mxu0
    %v3000 = vadd.f32 0.0, %v2999
    %v3001 = vpop.f32.mrb[0].mxu0
    %v3002 = vpop.f32.mrb[0].mxu0
    %v3003 = vadd.f32 0.0, %v3002
    %v3004 = vpop.f32.mrb[0].mxu0
    %3005 = vmatprep.mubr.bf16.mxu0 0
    %3006 = vmatmul.mubr.bf16.gmra.mrb[0].mxu0 %v2913
    %v3007 = vpop.f32.mrb[0].mxu0
    %v3008 = vadd.f32 0.0, %v3007
    %v3009 = vpop.f32.mrb[0].mxu0
    %v3010 = vpop.f32.mrb[0].mxu0
    %v3011 = vpop.f32.mrb[0].mxu0
    %3012 = vdwg.mxu0
    %v3013 = vadd.f32 %v2903, %v2949
    %v3014 = vadd.f32 %v2906, %v2953
    %v3015 = vadd.f32 %v2909, %v2959
    %v3016 = vxor.u32 %v3013, 2147483648
    %v3017 = vxor.u32 %v3014, 2147483648
    %v3018 = vxor.u32 %v3015, 2147483648
    %v3019 = vmul.f32 %v3016, 1.442695
    %v3020 = vpow.pop %v3019
    %v3021 = vmul.f32 %v3017, 1.442695
    %v3022 = vpow.pop %v3021
    %v3023 = vmul.f32 %v3018, 1.442695
    %v3024 = vpow.pop %v3023
    %v3025 = vadd.f32 %v3020, 1.0
    %v3026 = vadd.f32 %v3022, 1.0
    %v3027 = vadd.f32 %v3024, 1.0
    %v3028 = vrcp.pop %v3025
    %v3029 = vmul.f32 1.0, %v3028
    %v3030 = vrcp.pop %v3026
    %v3031 = vmul.f32 1.0, %v3030
    %v3032 = vrcp.pop %v3027
    %v3033 = vmul.f32 1.0, %v3032
    %v3034 = vadd.f32 %v2904, %v2951
    %v3035 = vadd.f32 %v2907, %v2955
    %v3036 = vadd.f32 %v2910, %v2961
    %v3037 = vxor.u32 %v3034, 2147483648
    %v3038 = vxor.u32 %v3035, 2147483648
    %v3039 = vxor.u32 %v3036, 2147483648
    %v3040 = vmul.f32 %v3037, 1.442695
    %v3041 = vpow.pop %v3040
    %v3042 = vmul.f32 %v3038, 1.442695
    %v3043 = vpow.pop %v3042
    %v3044 = vmul.f32 %v3039, 1.442695
    %v3045 = vpow.pop %v3044
    %v3046 = vadd.f32 %v3041, 1.0
    %v3047 = vadd.f32 %v3043, 1.0
    %v3048 = vadd.f32 %v3045, 1.0
    %v3049 = vrcp.pop %v3046
    %v3050 = vmul.f32 1.0, %v3049
    %v3051 = vrcp.pop %v3047
    %v3052 = vmul.f32 1.0, %v3051
    %v3053 = vrcp.pop %v3048
    %v3054 = vmul.f32 1.0, %v3053
    %v3055 = vadd.f32 %v3000, %v2349
    %v3056 = vadd.f32 %v3003, %v2349
    %v3057 = vadd.f32 %v3008, %v2349
    %v3058 = vmul.f32 %v3029, %v3055
    %v3059 = vmul.f32 %v3031, %v3056
    %v3060 = vmul.f32 %v3033, %v3057
    %v3061 = vadd.f32 %v2905, %v3058
    %v3062 = vadd.f32 %v2908, %v3059
    %v3063 = vadd.f32 %v2911, %v3060
    %v3064 = vtanh.pop %v3061
    %v3065 = vtanh.pop %v3062
    %v3066 = vtanh.pop %v3063
    %v3067 = vsub.f32 1.0, %v3050
    %v3068 = vsub.f32 1.0, %v3052
    %v3069 = vsub.f32 1.0, %v3054
    %v3070 = vmul.f32 %v3067, %v3064
    %v3071 = vmul.f32 %v3068, %v3065
    %v3072 = vmul.f32 %v3069, %v3066
    %v3073 = vmul.f32 %v3050, %v2900
    %v3074 = vmul.f32 %v3052, %v2901
    %v3075 = vmul.f32 %v3054, %v2902
    %v3076 = vadd.f32 %v3070, %v3073
    %v3077 = vadd.f32 %v3071, %v3074
    %v3078 = vadd.f32 %v3072, %v3075
    %v3079 = vld [vmem:[#allocation2 + $0x168] sm:$0xff]
    %v3080 = vld [vmem:[#allocation2 + $0x170] sm:$0xff]
    %v3081 = vld [vmem:[#allocation2 + $0x178] sm:$0xff]
    %v3082 = vld [vmem:[#allocation2 + $0x180] sm:$0xff]
    %v3083 = vld [vmem:[#allocation2 + $0x188] sm:$0xff]
    %v3084 = vld [vmem:[#allocation2 + $0x190] sm:$0xff]
    %v3085 = vld [vmem:[#allocation2 + $0x198] sm:$0xff]
    %v3086 = vld [vmem:[#allocation2 + $0x1a0] sm:$0xff]
    %v3087 = vld [vmem:[#allocation2 + $0x1a8] sm:$0xff]
    %v3088 = vpack.c.bf16 %v3077, %v3076
    %v3089 = vpack.c.bf16 %v3078, %v3078
    %3090 = vmatprep.subr.bf16.mxu0 %v2157
    %3091 = vmatpush1.bf16.msra.mxu0 %v2156
    %3092 = vmatprep.subr.bf16.mxu0 %v2160
    %3093 = vmatpush1.bf16.msra.mxu0 %v2159
    %3094 = vmatprep.subr.bf16.mxu0 %v2163
    %3095 = vmatpush1.bf16.msra.mxu0 %v2162
    %3096 = vmatprep.subr.bf16.mxu0 %v2166
    %3097 = vmatpush1.bf16.msra.mxu0 %v2165
    %3098 = vmatprep.subr.bf16.mxu0 %v2169
    %3099 = vmatpush1.bf16.msra.mxu0 %v2168
    %3100 = vmatprep.subr.bf16.mxu0 %v2172
    %3101 = vmatpush1.bf16.msra.mxu0 %v2171
    %3102 = vmatprep.subr.bf16.mxu0 %v2175
    %3103 = vmatpush1.bf16.msra.mxu0 %v2174
    %3104 = vmatprep.subr.bf16.mxu0 %v2178
    %3105 = vmatpush1.bf16.msra.mxu0 %v2177
    %3106 = vmatprep.subr.bf16.mxu0 0
    %3107 = vmatpush1.bf16.msra.mxu0 0
    %3108 = vmatprep.subr.bf16.mxu0 0
    %3109 = vmatpush1.bf16.msra.mxu0 0
    %3110 = vmatprep.subr.bf16.mxu0 0
    %3111 = vmatpush1.bf16.msra.mxu0 0
    %3112 = vmatprep.subr.bf16.mxu0 0
    %3113 = vmatpush1.bf16.msra.mxu0 0
    %3114 = vmatprep.subr.bf16.mxu0 0
    %3115 = vmatpush1.bf16.msra.mxu0 0
    %3116 = vmatprep.subr.bf16.mxu0 0
    %3117 = vmatpush1.bf16.msra.mxu0 0
    %3118 = vmatprep.subr.bf16.mxu0 0
    %3119 = vmatpush1.bf16.msra.mxu0 0
    %3120 = vmatprep.subr.bf16.mxu0 0
    %3121 = vmatpush1.bf16.msra.mxu0 0
    %3122 = vmatprep.mubr.bf16.mxu0 0
    %3123 = vmatmul.mubr.bf16.gmra.mrb[0].mxu0 %v3088
    %v3124 = vpop.f32.mrb[0].mxu0
    %v3125 = vadd.f32 0.0, %v3124
    %v3126 = vpop.f32.mrb[0].mxu0
    %v3127 = vadd.f32 0.0, %v3126
    %v3128 = vpop.f32.mrb[0].mxu0
    %v3129 = vadd.f32 0.0, %v3128
    %v3130 = vpop.f32.mrb[0].mxu0
    %v3131 = vadd.f32 0.0, %v3130
    %3132 = vmatprep.mubr.bf16.mxu0 0
    %3133 = vmatmul.mubr.bf16.gmra.mrb[0].mxu0 %v3089
    %v3134 = vpop.f32.mrb[0].mxu0
    %v3135 = vadd.f32 0.0, %v3134
    %v3136 = vpop.f32.mrb[0].mxu0
    %v3137 = vadd.f32 0.0, %v3136
    %v3138 = vpop.f32.mrb[0].mxu0
    %v3139 = vpop.f32.mrb[0].mxu0
    %3140 = vdwg.mxu0
    %3141 = vmatprep.subr.bf16.mxu0 0
    %3142 = vmatpush1.bf16.msra.mxu0 %v2158
    %3143 = vmatprep.subr.bf16.mxu0 0
    %3144 = vmatpush1.bf16.msra.mxu0 %v2161
    %3145 = vmatprep.subr.bf16.mxu0 0
    %3146 = vmatpush1.bf16.msra.mxu0 %v2164
    %3147 = vmatprep.subr.bf16.mxu0 0
    %3148 = vmatpush1.bf16.msra.mxu0 %v2167
    %3149 = vmatprep.subr.bf16.mxu0 0
    %3150 = vmatpush1.bf16.msra.mxu0 %v2170
    %3151 = vmatprep.subr.bf16.mxu0 0
    %3152 = vmatpush1.bf16.msra.mxu0 %v2173
    %3153 = vmatprep.subr.bf16.mxu0 0
    %3154 = vmatpush1.bf16.msra.mxu0 %v2176
    %3155 = vmatprep.subr.bf16.mxu0 0
    %3156 = vmatpush1.bf16.msra.mxu0 %v2179
    %3157 = vmatprep.subr.bf16.mxu0 0
    %3158 = vmatpush1.bf16.msra.mxu0 0
    %3159 = vmatprep.subr.bf16.mxu0 0
    %3160 = vmatpush1.bf16.msra.mxu0 0
    %3161 = vmatprep.subr.bf16.mxu0 0
    %3162 = vmatpush1.bf16.msra.mxu0 0
    %3163 = vmatprep.subr.bf16.mxu0 0
    %3164 = vmatpush1.bf16.msra.mxu0 0
    %3165 = vmatprep.subr.bf16.mxu0 0
    %3166 = vmatpush1.bf16.msra.mxu0 0
    %3167 = vmatprep.subr.bf16.mxu0 0
    %3168 = vmatpush1.bf16.msra.mxu0 0
    %3169 = vmatprep.subr.bf16.mxu0 0
    %3170 = vmatpush1.bf16.msra.mxu0 0
    %3171 = vmatprep.subr.bf16.mxu0 0
    %3172 = vmatpush1.bf16.msra.mxu0 0
    %3173 = vmatprep.mubr.bf16.mxu0 0
    %3174 = vmatmul.mubr.bf16.gmra.mrb[0].mxu0 %v3088
    %v3175 = vpop.f32.mrb[0].mxu0
    %v3176 = vadd.f32 0.0, %v3175
    %v3177 = vpop.f32.mrb[0].mxu0
    %v3178 = vpop.f32.mrb[0].mxu0
    %v3179 = vadd.f32 0.0, %v3178
    %v3180 = vpop.f32.mrb[0].mxu0
    %3181 = vmatprep.mubr.bf16.mxu0 0
    %3182 = vmatmul.mubr.bf16.gmra.mrb[0].mxu0 %v3089
    %v3183 = vpop.f32.mrb[0].mxu0
    %v3184 = vadd.f32 0.0, %v3183
    %v3185 = vpop.f32.mrb[0].mxu0
    %v3186 = vpop.f32.mrb[0].mxu0
    %v3187 = vpop.f32.mrb[0].mxu0
    %3188 = vdwg.mxu0
    %v3189 = vadd.f32 %v3079, %v3125
    %v3190 = vadd.f32 %v3082, %v3129
    %v3191 = vadd.f32 %v3085, %v3135
    %v3192 = vxor.u32 %v3189, 2147483648
    %v3193 = vxor.u32 %v3190, 2147483648
    %v3194 = vxor.u32 %v3191, 2147483648
    %v3195 = vmul.f32 %v3192, 1.442695
    %v3196 = vpow.pop %v3195
    %v3197 = vmul.f32 %v3193, 1.442695
    %v3198 = vpow.pop %v3197
    %v3199 = vmul.f32 %v3194, 1.442695
    %v3200 = vpow.pop %v3199
    %v3201 = vadd.f32 %v3196, 1.0
    %v3202 = vadd.f32 %v3198, 1.0
    %v3203 = vadd.f32 %v3200, 1.0
    %v3204 = vrcp.pop %v3201
    %v3205 = vmul.f32 1.0, %v3204
    %v3206 = vrcp.pop %v3202
    %v3207 = vmul.f32 1.0, %v3206
    %v3208 = vrcp.pop %v3203
    %v3209 = vmul.f32 1.0, %v3208
    %v3210 = vadd.f32 %v3080, %v3127
    %v3211 = vadd.f32 %v3083, %v3131
    %v3212 = vadd.f32 %v3086, %v3137
    %v3213 = vxor.u32 %v3210, 2147483648
    %v3214 = vxor.u32 %v3211, 2147483648
    %v3215 = vxor.u32 %v3212, 2147483648
    %v3216 = vmul.f32 %v3213, 1.442695
    %v3217 = vpow.pop %v3216
    %v3218 = vmul.f32 %v3214, 1.442695
    %v3219 = vpow.pop %v3218
    %v3220 = vmul.f32 %v3215, 1.442695
    %v3221 = vpow.pop %v3220
    %v3222 = vadd.f32 %v3217, 1.0
    %v3223 = vadd.f32 %v3219, 1.0
    %v3224 = vadd.f32 %v3221, 1.0
    %v3225 = vrcp.pop %v3222
    %v3226 = vmul.f32 1.0, %v3225
    %v3227 = vrcp.pop %v3223
    %v3228 = vmul.f32 1.0, %v3227
    %v3229 = vrcp.pop %v3224
    %v3230 = vmul.f32 1.0, %v3229
    %v3231 = vadd.f32 %v3176, %v2349
    %v3232 = vadd.f32 %v3179, %v2349
    %v3233 = vadd.f32 %v3184, %v2349
    %v3234 = vmul.f32 %v3205, %v3231
    %v3235 = vmul.f32 %v3207, %v3232
    %v3236 = vmul.f32 %v3209, %v3233
    %v3237 = vadd.f32 %v3081, %v3234
    %v3238 = vadd.f32 %v3084, %v3235
    %v3239 = vadd.f32 %v3087, %v3236
    %v3240 = vtanh.pop %v3237
    %v3241 = vtanh.pop %v3238
    %v3242 = vtanh.pop %v3239
    %v3243 = vsub.f32 1.0, %v3226
    %v3244 = vsub.f32 1.0, %v3228
    %v3245 = vsub.f32 1.0, %v3230
    %v3246 = vmul.f32 %v3243, %v3240
    %v3247 = vmul.f32 %v3244, %v3241
    %v3248 = vmul.f32 %v3245, %v3242
    %v3249 = vmul.f32 %v3226, %v3076
    %v3250 = vmul.f32 %v3228, %v3077
    %v3251 = vmul.f32 %v3230, %v3078
    %v3252 = vadd.f32 %v3246, %v3249
    %v3253 = vadd.f32 %v3247, %v3250
    %v3254 = vadd.f32 %v3248, %v3251
    %v3255 = vld [vmem:[#allocation2 + $0x1b0] sm:$0xff]
    %v3256 = vld [vmem:[#allocation2 + $0x1b8] sm:$0xff]
    %v3257 = vld [vmem:[#allocation2 + $0x1c0] sm:$0xff]
    %v3258 = vld [vmem:[#allocation2 + $0x1c8] sm:$0xff]
    %v3259 = vld [vmem:[#allocation2 + $0x1d0] sm:$0xff]
    %v3260 = vld [vmem:[#allocation2 + $0x1d8] sm:$0xff]
    %v3261 = vld [vmem:[#allocation2 + $0x1e0] sm:$0xff]
    %v3262 = vld [vmem:[#allocation2 + $0x1e8] sm:$0xff]
    %v3263 = vld [vmem:[#allocation2 + $0x1f0] sm:$0xff]
    %v3264 = vpack.c.bf16 %v3253, %v3252
    %v3265 = vpack.c.bf16 %v3254, %v3254
    %3266 = vmatprep.subr.bf16.mxu0 %v2157
    %3267 = vmatpush1.bf16.msra.mxu0 %v2156
    %3268 = vmatprep.subr.bf16.mxu0 %v2160
    %3269 = vmatpush1.bf16.msra.mxu0 %v2159
    %3270 = vmatprep.subr.bf16.mxu0 %v2163
    %3271 = vmatpush1.bf16.msra.mxu0 %v2162
    %3272 = vmatprep.subr.bf16.mxu0 %v2166
    %3273 = vmatpush1.bf16.msra.mxu0 %v2165
    %3274 = vmatprep.subr.bf16.mxu0 %v2169
    %3275 = vmatpush1.bf16.msra.mxu0 %v2168
    %3276 = vmatprep.subr.bf16.mxu0 %v2172
    %3277 = vmatpush1.bf16.msra.mxu0 %v2171
    %3278 = vmatprep.subr.bf16.mxu0 %v2175
    %3279 = vmatpush1.bf16.msra.mxu0 %v2174
    %3280 = vmatprep.subr.bf16.mxu0 %v2178
    %3281 = vmatpush1.bf16.msra.mxu0 %v2177
    %3282 = vmatprep.subr.bf16.mxu0 0
    %3283 = vmatpush1.bf16.msra.mxu0 0
    %3284 = vmatprep.subr.bf16.mxu0 0
    %3285 = vmatpush1.bf16.msra.mxu0 0
    %3286 = vmatprep.subr.bf16.mxu0 0
    %3287 = vmatpush1.bf16.msra.mxu0 0
    %3288 = vmatprep.subr.bf16.mxu0 0
    %3289 = vmatpush1.bf16.msra.mxu0 0
    %3290 = vmatprep.subr.bf16.mxu0 0
    %3291 = vmatpush1.bf16.msra.mxu0 0
    %3292 = vmatprep.subr.bf16.mxu0 0
    %3293 = vmatpush1.bf16.msra.mxu0 0
    %3294 = vmatprep.subr.bf16.mxu0 0
    %3295 = vmatpush1.bf16.msra.mxu0 0
    %3296 = vmatprep.subr.bf16.mxu0 0
    %3297 = vmatpush1.bf16.msra.mxu0 0
    %3298 = vmatprep.mubr.bf16.mxu0 0
    %3299 = vmatmul.mubr.bf16.gmra.mrb[0].mxu0 %v3264
    %v3300 = vpop.f32.mrb[0].mxu0
    %v3301 = vadd.f32 0.0, %v3300
    %v3302 = vpop.f32.mrb[0].mxu0
    %v3303 = vadd.f32 0.0, %v3302
    %v3304 = vpop.f32.mrb[0].mxu0
    %v3305 = vadd.f32 0.0, %v3304
    %v3306 = vpop.f32.mrb[0].mxu0
    %v3307 = vadd.f32 0.0, %v3306
    %3308 = vmatprep.mubr.bf16.mxu0 0
    %3309 = vmatmul.mubr.bf16.gmra.mrb[0].mxu0 %v3265
    %v3310 = vpop.f32.mrb[0].mxu0
    %v3311 = vadd.f32 0.0, %v3310
    %v3312 = vpop.f32.mrb[0].mxu0
    %v3313 = vadd.f32 0.0, %v3312
    %v3314 = vpop.f32.mrb[0].mxu0
    %v3315 = vpop.f32.mrb[0].mxu0
    %3316 = vdwg.mxu0
    %3317 = vmatprep.subr.bf16.mxu0 0
    %3318 = vmatpush1.bf16.msra.mxu0 %v2158
    %3319 = vmatprep.subr.bf16.mxu0 0
    %3320 = vmatpush1.bf16.msra.mxu0 %v2161
    %3321 = vmatprep.subr.bf16.mxu0 0
    %3322 = vmatpush1.bf16.msra.mxu0 %v2164
    %3323 = vmatprep.subr.bf16.mxu0 0
    %3324 = vmatpush1.bf16.msra.mxu0 %v2167
    %3325 = vmatprep.subr.bf16.mxu0 0
    %3326 = vmatpush1.bf16.msra.mxu0 %v2170
    %3327 = vmatprep.subr.bf16.mxu0 0
    %3328 = vmatpush1.bf16.msra.mxu0 %v2173
    %3329 = vmatprep.subr.bf16.mxu0 0
    %3330 = vmatpush1.bf16.msra.mxu0 %v2176
    %3331 = vmatprep.subr.bf16.mxu0 0
    %3332 = vmatpush1.bf16.msra.mxu0 %v2179
    %3333 = vmatprep.subr.bf16.mxu0 0
    %3334 = vmatpush1.bf16.msra.mxu0 0
    %3335 = vmatprep.subr.bf16.mxu0 0
    %3336 = vmatpush1.bf16.msra.mxu0 0
    %3337 = vmatprep.subr.bf16.mxu0 0
    %3338 = vmatpush1.bf16.msra.mxu0 0
    %3339 = vmatprep.subr.bf16.mxu0 0
    %3340 = vmatpush1.bf16.msra.mxu0 0
    %3341 = vmatprep.subr.bf16.mxu0 0
    %3342 = vmatpush1.bf16.msra.mxu0 0
    %3343 = vmatprep.subr.bf16.mxu0 0
    %3344 = vmatpush1.bf16.msra.mxu0 0
    %3345 = vmatprep.subr.bf16.mxu0 0
    %3346 = vmatpush1.bf16.msra.mxu0 0
    %3347 = vmatprep.subr.bf16.mxu0 0
    %3348 = vmatpush1.bf16.msra.mxu0 0
    %3349 = vmatprep.mubr.bf16.mxu0 0
    %3350 = vmatmul.mubr.bf16.gmra.mrb[0].mxu0 %v3264
    %v3351 = vpop.f32.mrb[0].mxu0
    %v3352 = vadd.f32 0.0, %v3351
    %v3353 = vpop.f32.mrb[0].mxu0
    %v3354 = vpop.f32.mrb[0].mxu0
    %v3355 = vadd.f32 0.0, %v3354
    %v3356 = vpop.f32.mrb[0].mxu0
    %3357 = vmatprep.mubr.bf16.mxu0 0
    %3358 = vmatmul.mubr.bf16.gmra.mrb[0].mxu0 %v3265
    %v3359 = vpop.f32.mrb[0].mxu0
    %v3360 = vadd.f32 0.0, %v3359
    %v3361 = vpop.f32.mrb[0].mxu0
    %v3362 = vpop.f32.mrb[0].mxu0
    %v3363 = vpop.f32.mrb[0].mxu0
    %3364 = vdwg.mxu0
    %v3365 = vadd.f32 %v3255, %v3301
    %v3366 = vadd.f32 %v3258, %v3305
    %v3367 = vadd.f32 %v3261, %v3311
    %v3368 = vxor.u32 %v3365, 2147483648
    %v3369 = vxor.u32 %v3366, 2147483648
    %v3370 = vxor.u32 %v3367, 2147483648
    %v3371 = vmul.f32 %v3368, 1.442695
    %v3372 = vpow.pop %v3371
    %v3373 = vmul.f32 %v3369, 1.442695
    %v3374 = vpow.pop %v3373
    %v3375 = vmul.f32 %v3370, 1.442695
    %v3376 = vpow.pop %v3375
    %v3377 = vadd.f32 %v3372, 1.0
    %v3378 = vadd.f32 %v3374, 1.0
    %v3379 = vadd.f32 %v3376, 1.0
    %v3380 = vrcp.pop %v3377
    %v3381 = vmul.f32 1.0, %v3380
    %v3382 = vrcp.pop %v3378
    %v3383 = vmul.f32 1.0, %v3382
    %v3384 = vrcp.pop %v3379
    %v3385 = vmul.f32 1.0, %v3384
    %v3386 = vadd.f32 %v3256, %v3303
    %v3387 = vadd.f32 %v3259, %v3307
    %v3388 = vadd.f32 %v3262, %v3313
    %v3389 = vxor.u32 %v3386, 2147483648
    %v3390 = vxor.u32 %v3387, 2147483648
    %v3391 = vxor.u32 %v3388, 2147483648
    %v3392 = vmul.f32 %v3389, 1.442695
    %v3393 = vpow.pop %v3392
    %v3394 = vmul.f32 %v3390, 1.442695
    %v3395 = vpow.pop %v3394
    %v3396 = vmul.f32 %v3391, 1.442695
    %v3397 = vpow.pop %v3396
    %v3398 = vadd.f32 %v3393, 1.0
    %v3399 = vadd.f32 %v3395, 1.0
    %v3400 = vadd.f32 %v3397, 1.0
    %v3401 = vrcp.pop %v3398
    %v3402 = vmul.f32 1.0, %v3401
    %v3403 = vrcp.pop %v3399
    %v3404 = vmul.f32 1.0, %v3403
    %v3405 = vrcp.pop %v3400
    %v3406 = vmul.f32 1.0, %v3405
    %v3407 = vadd.f32 %v3352, %v2349
    %v3408 = vadd.f32 %v3355, %v2349
    %v3409 = vadd.f32 %v3360, %v2349
    %v3410 = vmul.f32 %v3381, %v3407
    %v3411 = vmul.f32 %v3383, %v3408
    %v3412 = vmul.f32 %v3385, %v3409
    %v3413 = vadd.f32 %v3257, %v3410
    %v3414 = vadd.f32 %v3260, %v3411
    %v3415 = vadd.f32 %v3263, %v3412
    %v3416 = vtanh.pop %v3413
    %v3417 = vtanh.pop %v3414
    %v3418 = vtanh.pop %v3415
    %v3419 = vsub.f32 1.0, %v3402
    %v3420 = vsub.f32 1.0, %v3404
    %v3421 = vsub.f32 1.0, %v3406
    %v3422 = vmul.f32 %v3419, %v3416
    %v3423 = vmul.f32 %v3420, %v3417
    %v3424 = vmul.f32 %v3421, %v3418
    %v3425 = vmul.f32 %v3402, %v3252
    %v3426 = vmul.f32 %v3404, %v3253
    %v3427 = vmul.f32 %v3406, %v3254
    %v3428 = vadd.f32 %v3422, %v3425
    %v3429 = vadd.f32 %v3423, %v3426
    %v3430 = vadd.f32 %v3424, %v3427
    %v3431 = vld [vmem:[#allocation2 + $0x1f8] sm:$0xff]
    %v3432 = vld [vmem:[#allocation2 + $0x200] sm:$0xff]
    %v3433 = vld [vmem:[#allocation2 + $0x208] sm:$0xff]
    %v3434 = vld [vmem:[#allocation2 + $0x210] sm:$0xff]
    %v3435 = vld [vmem:[#allocation2 + $0x218] sm:$0xff]
    %v3436 = vld [vmem:[#allocation2 + $0x220] sm:$0xff]
    %v3437 = vld [vmem:[#allocation2 + $0x228] sm:$0xff]
    %v3438 = vld [vmem:[#allocation2 + $0x230] sm:$0xff]
    %v3439 = vld [vmem:[#allocation2 + $0x238] sm:$0xff]
    %v3440 = vpack.c.bf16 %v3429, %v3428
    %v3441 = vpack.c.bf16 %v3430, %v3430
    %3442 = vmatprep.subr.bf16.mxu0 %v2157
    %3443 = vmatpush1.bf16.msra.mxu0 %v2156
    %3444 = vmatprep.subr.bf16.mxu0 %v2160
    %3445 = vmatpush1.bf16.msra.mxu0 %v2159
    %3446 = vmatprep.subr.bf16.mxu0 %v2163
    %3447 = vmatpush1.bf16.msra.mxu0 %v2162
    %3448 = vmatprep.subr.bf16.mxu0 %v2166
    %3449 = vmatpush1.bf16.msra.mxu0 %v2165
    %3450 = vmatprep.subr.bf16.mxu0 %v2169
    %3451 = vmatpush1.bf16.msra.mxu0 %v2168
    %3452 = vmatprep.subr.bf16.mxu0 %v2172
    %3453 = vmatpush1.bf16.msra.mxu0 %v2171
    %3454 = vmatprep.subr.bf16.mxu0 %v2175
    %3455 = vmatpush1.bf16.msra.mxu0 %v2174
    %3456 = vmatprep.subr.bf16.mxu0 %v2178
    %3457 = vmatpush1.bf16.msra.mxu0 %v2177
    %3458 = vmatprep.subr.bf16.mxu0 0
    %3459 = vmatpush1.bf16.msra.mxu0 0
    %3460 = vmatprep.subr.bf16.mxu0 0
    %3461 = vmatpush1.bf16.msra.mxu0 0
    %3462 = vmatprep.subr.bf16.mxu0 0
    %3463 = vmatpush1.bf16.msra.mxu0 0
    %3464 = vmatprep.subr.bf16.mxu0 0
    %3465 = vmatpush1.bf16.msra.mxu0 0
    %3466 = vmatprep.subr.bf16.mxu0 0
    %3467 = vmatpush1.bf16.msra.mxu0 0
    %3468 = vmatprep.subr.bf16.mxu0 0
    %3469 = vmatpush1.bf16.msra.mxu0 0
    %3470 = vmatprep.subr.bf16.mxu0 0
    %3471 = vmatpush1.bf16.msra.mxu0 0
    %3472 = vmatprep.subr.bf16.mxu0 0
    %3473 = vmatpush1.bf16.msra.mxu0 0
    %3474 = vmatprep.mubr.bf16.mxu0 0
    %3475 = vmatmul.mubr.bf16.gmra.mrb[0].mxu0 %v3440
    %v3476 = vpop.f32.mrb[0].mxu0
    %v3477 = vadd.f32 0.0, %v3476
    %v3478 = vpop.f32.mrb[0].mxu0
    %v3479 = vadd.f32 0.0, %v3478
    %v3480 = vpop.f32.mrb[0].mxu0
    %v3481 = vadd.f32 0.0, %v3480
    %v3482 = vpop.f32.mrb[0].mxu0
    %v3483 = vadd.f32 0.0, %v3482
    %3484 = vmatprep.mubr.bf16.mxu0 0
    %3485 = vmatmul.mubr.bf16.gmra.mrb[0].mxu0 %v3441
    %v3486 = vpop.f32.mrb[0].mxu0
    %v3487 = vadd.f32 0.0, %v3486
    %v3488 = vpop.f32.mrb[0].mxu0
    %v3489 = vadd.f32 0.0, %v3488
    %v3490 = vpop.f32.mrb[0].mxu0
    %v3491 = vpop.f32.mrb[0].mxu0
    %3492 = vdwg.mxu0
    %3493 = vmatprep.subr.bf16.mxu0 0
    %3494 = vmatpush1.bf16.msra.mxu0 %v2158
    %3495 = vmatprep.subr.bf16.mxu0 0
    %3496 = vmatpush1.bf16.msra.mxu0 %v2161
    %3497 = vmatprep.subr.bf16.mxu0 0
    %3498 = vmatpush1.bf16.msra.mxu0 %v2164
    %3499 = vmatprep.subr.bf16.mxu0 0
    %3500 = vmatpush1.bf16.msra.mxu0 %v2167
    %3501 = vmatprep.subr.bf16.mxu0 0
    %3502 = vmatpush1.bf16.msra.mxu0 %v2170
    %3503 = vmatprep.subr.bf16.mxu0 0
    %3504 = vmatpush1.bf16.msra.mxu0 %v2173
    %3505 = vmatprep.subr.bf16.mxu0 0
    %3506 = vmatpush1.bf16.msra.mxu0 %v2176
    %3507 = vmatprep.subr.bf16.mxu0 0
    %3508 = vmatpush1.bf16.msra.mxu0 %v2179
    %3509 = vmatprep.subr.bf16.mxu0 0
    %3510 = vmatpush1.bf16.msra.mxu0 0
    %3511 = vmatprep.subr.bf16.mxu0 0
    %3512 = vmatpush1.bf16.msra.mxu0 0
    %3513 = vmatprep.subr.bf16.mxu0 0
    %3514 = vmatpush1.bf16.msra.mxu0 0
    %3515 = vmatprep.subr.bf16.mxu0 0
    %3516 = vmatpush1.bf16.msra.mxu0 0
    %3517 = vmatprep.subr.bf16.mxu0 0
    %3518 = vmatpush1.bf16.msra.mxu0 0
    %3519 = vmatprep.subr.bf16.mxu0 0
    %3520 = vmatpush1.bf16.msra.mxu0 0
    %3521 = vmatprep.subr.bf16.mxu0 0
    %3522 = vmatpush1.bf16.msra.mxu0 0
    %3523 = vmatprep.subr.bf16.mxu0 0
    %3524 = vmatpush1.bf16.msra.mxu0 0
    %3525 = vmatprep.mubr.bf16.mxu0 0
    %3526 = vmatmul.mubr.bf16.gmra.mrb[0].mxu0 %v3440
    %v3527 = vpop.f32.mrb[0].mxu0
    %v3528 = vadd.f32 0.0, %v3527
    %v3529 = vpop.f32.mrb[0].mxu0
    %v3530 = vpop.f32.mrb[0].mxu0
    %v3531 = vadd.f32 0.0, %v3530
    %v3532 = vpop.f32.mrb[0].mxu0
    %3533 = vmatprep.mubr.bf16.mxu0 0
    %3534 = vmatmul.mubr.bf16.gmra.mrb[0].mxu0 %v3441
    %v3535 = vpop.f32.mrb[0].mxu0
    %v3536 = vadd.f32 0.0, %v3535
    %v3537 = vpop.f32.mrb[0].mxu0
    %v3538 = vpop.f32.mrb[0].mxu0
    %v3539 = vpop.f32.mrb[0].mxu0
    %3540 = vdwg.mxu0
    %v3541 = vadd.f32 %v3431, %v3477
    %v3542 = vadd.f32 %v3434, %v3481
    %v3543 = vadd.f32 %v3437, %v3487
    %v3544 = vxor.u32 %v3541, 2147483648
    %v3545 = vxor.u32 %v3542, 2147483648
    %v3546 = vxor.u32 %v3543, 2147483648
    %v3547 = vmul.f32 %v3544, 1.442695
    %v3548 = vpow.pop %v3547
    %v3549 = vmul.f32 %v3545, 1.442695
    %v3550 = vpow.pop %v3549
    %v3551 = vmul.f32 %v3546, 1.442695
    %v3552 = vpow.pop %v3551
    %v3553 = vadd.f32 %v3548, 1.0
    %v3554 = vadd.f32 %v3550, 1.0
    %v3555 = vadd.f32 %v3552, 1.0
    %v3556 = vrcp.pop %v3553
    %v3557 = vmul.f32 1.0, %v3556
    %v3558 = vrcp.pop %v3554
    %v3559 = vmul.f32 1.0, %v3558
    %v3560 = vrcp.pop %v3555
    %v3561 = vmul.f32 1.0, %v3560
    %v3562 = vadd.f32 %v3432, %v3479
    %v3563 = vadd.f32 %v3435, %v3483
    %v3564 = vadd.f32 %v3438, %v3489
    %v3565 = vxor.u32 %v3562, 2147483648
    %v3566 = vxor.u32 %v3563, 2147483648
    %v3567 = vxor.u32 %v3564, 2147483648
    %v3568 = vmul.f32 %v3565, 1.442695
    %v3569 = vpow.pop %v3568
    %v3570 = vmul.f32 %v3566, 1.442695
    %v3571 = vpow.pop %v3570
    %v3572 = vmul.f32 %v3567, 1.442695
    %v3573 = vpow.pop %v3572
    %v3574 = vadd.f32 %v3569, 1.0
    %v3575 = vadd.f32 %v3571, 1.0
    %v3576 = vadd.f32 %v3573, 1.0
    %v3577 = vrcp.pop %v3574
    %v3578 = vmul.f32 1.0, %v3577
    %v3579 = vrcp.pop %v3575
    %v3580 = vmul.f32 1.0, %v3579
    %v3581 = vrcp.pop %v3576
    %v3582 = vmul.f32 1.0, %v3581
    %v3583 = vadd.f32 %v3528, %v2349
    %v3584 = vadd.f32 %v3531, %v2349
    %v3585 = vadd.f32 %v3536, %v2349
    %v3586 = vmul.f32 %v3557, %v3583
    %v3587 = vmul.f32 %v3559, %v3584
    %v3588 = vmul.f32 %v3561, %v3585
    %v3589 = vadd.f32 %v3433, %v3586
    %v3590 = vadd.f32 %v3436, %v3587
    %v3591 = vadd.f32 %v3439, %v3588
    %v3592 = vtanh.pop %v3589
    %v3593 = vtanh.pop %v3590
    %v3594 = vtanh.pop %v3591
    %v3595 = vsub.f32 1.0, %v3578
    %v3596 = vsub.f32 1.0, %v3580
    %v3597 = vsub.f32 1.0, %v3582
    %v3598 = vmul.f32 %v3595, %v3592
    %v3599 = vmul.f32 %v3596, %v3593
    %v3600 = vmul.f32 %v3597, %v3594
    %v3601 = vmul.f32 %v3578, %v3428
    %v3602 = vmul.f32 %v3580, %v3429
    %v3603 = vmul.f32 %v3582, %v3430
    %v3604 = vadd.f32 %v3598, %v3601
    %v3605 = vadd.f32 %v3599, %v3602
    %v3606 = vadd.f32 %v3600, %v3603
    %v3607 = vld [vmem:[#allocation2 + $0x240] sm:$0xff]
    %v3608 = vld [vmem:[#allocation2 + $0x248] sm:$0xff]
    %v3609 = vld [vmem:[#allocation2 + $0x250] sm:$0xff]
    %v3610 = vld [vmem:[#allocation2 + $0x258] sm:$0xff]
    %v3611 = vld [vmem:[#allocation2 + $0x260] sm:$0xff]
    %v3612 = vld [vmem:[#allocation2 + $0x268] sm:$0xff]
    %v3613 = vld [vmem:[#allocation2 + $0x270] sm:$0xff]
    %v3614 = vld [vmem:[#allocation2 + $0x278] sm:$0xff]
    %v3615 = vld [vmem:[#allocation2 + $0x280] sm:$0xff]
    %v3616 = vpack.c.bf16 %v3605, %v3604
    %v3617 = vpack.c.bf16 %v3606, %v3606
    %3618 = vmatprep.subr.bf16.mxu0 %v2157
    %3619 = vmatpush1.bf16.msra.mxu0 %v2156
    %3620 = vmatprep.subr.bf16.mxu0 %v2160
    %3621 = vmatpush1.bf16.msra.mxu0 %v2159
    %3622 = vmatprep.subr.bf16.mxu0 %v2163
    %3623 = vmatpush1.bf16.msra.mxu0 %v2162
    %3624 = vmatprep.subr.bf16.mxu0 %v2166
    %3625 = vmatpush1.bf16.msra.mxu0 %v2165
    %3626 = vmatprep.subr.bf16.mxu0 %v2169
    %3627 = vmatpush1.bf16.msra.mxu0 %v2168
    %3628 = vmatprep.subr.bf16.mxu0 %v2172
    %3629 = vmatpush1.bf16.msra.mxu0 %v2171
    %3630 = vmatprep.subr.bf16.mxu0 %v2175
    %3631 = vmatpush1.bf16.msra.mxu0 %v2174
    %3632 = vmatprep.subr.bf16.mxu0 %v2178
    %3633 = vmatpush1.bf16.msra.mxu0 %v2177
    %3634 = vmatprep.subr.bf16.mxu0 0
    %3635 = vmatpush1.bf16.msra.mxu0 0
    %3636 = vmatprep.subr.bf16.mxu0 0
    %3637 = vmatpush1.bf16.msra.mxu0 0
    %3638 = vmatprep.subr.bf16.mxu0 0
    %3639 = vmatpush1.bf16.msra.mxu0 0
    %3640 = vmatprep.subr.bf16.mxu0 0
    %3641 = vmatpush1.bf16.msra.mxu0 0
    %3642 = vmatprep.subr.bf16.mxu0 0
    %3643 = vmatpush1.bf16.msra.mxu0 0
    %3644 = vmatprep.subr.bf16.mxu0 0
    %3645 = vmatpush1.bf16.msra.mxu0 0
    %3646 = vmatprep.subr.bf16.mxu0 0
    %3647 = vmatpush1.bf16.msra.mxu0 0
    %3648 = vmatprep.subr.bf16.mxu0 0
    %3649 = vmatpush1.bf16.msra.mxu0 0
    %3650 = vmatprep.mubr.bf16.mxu0 0
    %3651 = vmatmul.mubr.bf16.gmra.mrb[0].mxu0 %v3616
    %v3652 = vpop.f32.mrb[0].mxu0
    %v3653 = vadd.f32 0.0, %v3652
    %v3654 = vpop.f32.mrb[0].mxu0
    %v3655 = vadd.f32 0.0, %v3654
    %v3656 = vpop.f32.mrb[0].mxu0
    %v3657 = vadd.f32 0.0, %v3656
    %v3658 = vpop.f32.mrb[0].mxu0
    %v3659 = vadd.f32 0.0, %v3658
    %3660 = vmatprep.mubr.bf16.mxu0 0
    %3661 = vmatmul.mubr.bf16.gmra.mrb[0].mxu0 %v3617
    %v3662 = vpop.f32.mrb[0].mxu0
    %v3663 = vadd.f32 0.0, %v3662
    %v3664 = vpop.f32.mrb[0].mxu0
    %v3665 = vadd.f32 0.0, %v3664
    %v3666 = vpop.f32.mrb[0].mxu0
    %v3667 = vpop.f32.mrb[0].mxu0
    %3668 = vdwg.mxu0
    %3669 = vmatprep.subr.bf16.mxu0 0
    %3670 = vmatpush1.bf16.msra.mxu0 %v2158
    %3671 = vmatprep.subr.bf16.mxu0 0
    %3672 = vmatpush1.bf16.msra.mxu0 %v2161
    %3673 = vmatprep.subr.bf16.mxu0 0
    %3674 = vmatpush1.bf16.msra.mxu0 %v2164
    %3675 = vmatprep.subr.bf16.mxu0 0
    %3676 = vmatpush1.bf16.msra.mxu0 %v2167
    %3677 = vmatprep.subr.bf16.mxu0 0
    %3678 = vmatpush1.bf16.msra.mxu0 %v2170
    %3679 = vmatprep.subr.bf16.mxu0 0
    %3680 = vmatpush1.bf16.msra.mxu0 %v2173
    %3681 = vmatprep.subr.bf16.mxu0 0
    %3682 = vmatpush1.bf16.msra.mxu0 %v2176
    %3683 = vmatprep.subr.bf16.mxu0 0
    %3684 = vmatpush1.bf16.msra.mxu0 %v2179
    %3685 = vmatprep.subr.bf16.mxu0 0
    %3686 = vmatpush1.bf16.msra.mxu0 0
    %3687 = vmatprep.subr.bf16.mxu0 0
    %3688 = vmatpush1.bf16.msra.mxu0 0
    %3689 = vmatprep.subr.bf16.mxu0 0
    %3690 = vmatpush1.bf16.msra.mxu0 0
    %3691 = vmatprep.subr.bf16.mxu0 0
    %3692 = vmatpush1.bf16.msra.mxu0 0
    %3693 = vmatprep.subr.bf16.mxu0 0
    %3694 = vmatpush1.bf16.msra.mxu0 0
    %3695 = vmatprep.subr.bf16.mxu0 0
    %3696 = vmatpush1.bf16.msra.mxu0 0
    %3697 = vmatprep.subr.bf16.mxu0 0
    %3698 = vmatpush1.bf16.msra.mxu0 0
    %3699 = vmatprep.subr.bf16.mxu0 0
    %3700 = vmatpush1.bf16.msra.mxu0 0
    %3701 = vmatprep.mubr.bf16.mxu0 0
    %3702 = vmatmul.mubr.bf16.gmra.mrb[0].mxu0 %v3616
    %v3703 = vpop.f32.mrb[0].mxu0
    %v3704 = vadd.f32 0.0, %v3703
    %v3705 = vpop.f32.mrb[0].mxu0
    %v3706 = vpop.f32.mrb[0].mxu0
    %v3707 = vadd.f32 0.0, %v3706
    %v3708 = vpop.f32.mrb[0].mxu0
    %3709 = vmatprep.mubr.bf16.mxu0 0
    %3710 = vmatmul.mubr.bf16.gmra.mrb[0].mxu0 %v3617
    %v3711 = vpop.f32.mrb[0].mxu0
    %v3712 = vadd.f32 0.0, %v3711
    %v3713 = vpop.f32.mrb[0].mxu0
    %v3714 = vpop.f32.mrb[0].mxu0
    %v3715 = vpop.f32.mrb[0].mxu0
    %3716 = vdwg.mxu0
    %v3717 = vadd.f32 %v3607, %v3653
    %v3718 = vadd.f32 %v3610, %v3657
    %v3719 = vadd.f32 %v3613, %v3663
    %v3720 = vxor.u32 %v3717, 2147483648
    %v3721 = vxor.u32 %v3718, 2147483648
    %v3722 = vxor.u32 %v3719, 2147483648
    %v3723 = vmul.f32 %v3720, 1.442695
    %v3724 = vpow.pop %v3723
    %v3725 = vmul.f32 %v3721, 1.442695
    %v3726 = vpow.pop %v3725
    %v3727 = vmul.f32 %v3722, 1.442695
    %v3728 = vpow.pop %v3727
    %v3729 = vadd.f32 %v3724, 1.0
    %v3730 = vadd.f32 %v3726, 1.0
    %v3731 = vadd.f32 %v3728, 1.0
    %v3732 = vrcp.pop %v3729
    %v3733 = vmul.f32 1.0, %v3732
    %v3734 = vrcp.pop %v3730
    %v3735 = vmul.f32 1.0, %v3734
    %v3736 = vrcp.pop %v3731
    %v3737 = vmul.f32 1.0, %v3736
    %v3738 = vadd.f32 %v3608, %v3655
    %v3739 = vadd.f32 %v3611, %v3659
    %v3740 = vadd.f32 %v3614, %v3665
    %v3741 = vxor.u32 %v3738, 2147483648
    %v3742 = vxor.u32 %v3739, 2147483648
    %v3743 = vxor.u32 %v3740, 2147483648
    %v3744 = vmul.f32 %v3741, 1.442695
    %v3745 = vpow.pop %v3744
    %v3746 = vmul.f32 %v3742, 1.442695
    %v3747 = vpow.pop %v3746
    %v3748 = vmul.f32 %v3743, 1.442695
    %v3749 = vpow.pop %v3748
    %v3750 = vadd.f32 %v3745, 1.0
    %v3751 = vadd.f32 %v3747, 1.0
    %v3752 = vadd.f32 %v3749, 1.0
    %v3753 = vrcp.pop %v3750
    %v3754 = vmul.f32 1.0, %v3753
    %v3755 = vrcp.pop %v3751
    %v3756 = vmul.f32 1.0, %v3755
    %v3757 = vrcp.pop %v3752
    %v3758 = vmul.f32 1.0, %v3757
    %v3759 = vadd.f32 %v3704, %v2349
    %v3760 = vadd.f32 %v3707, %v2349
    %v3761 = vadd.f32 %v3712, %v2349
    %v3762 = vmul.f32 %v3733, %v3759
    %v3763 = vmul.f32 %v3735, %v3760
    %v3764 = vmul.f32 %v3737, %v3761
    %v3765 = vadd.f32 %v3609, %v3762
    %v3766 = vadd.f32 %v3612, %v3763
    %v3767 = vadd.f32 %v3615, %v3764
    %v3768 = vtanh.pop %v3765
    %v3769 = vtanh.pop %v3766
    %v3770 = vtanh.pop %v3767
    %v3771 = vsub.f32 1.0, %v3754
    %v3772 = vsub.f32 1.0, %v3756
    %v3773 = vsub.f32 1.0, %v3758
    %v3774 = vmul.f32 %v3771, %v3768
    %v3775 = vmul.f32 %v3772, %v3769
    %v3776 = vmul.f32 %v3773, %v3770
    %v3777 = vmul.f32 %v3754, %v3604
    %v3778 = vmul.f32 %v3756, %v3605
    %v3779 = vmul.f32 %v3758, %v3606
    %v3780 = vadd.f32 %v3774, %v3777
    %v3781 = vadd.f32 %v3775, %v3778
    %v3782 = vadd.f32 %v3776, %v3779
    %v3783 = vld [vmem:[#allocation2 + $0x288] sm:$0xff]
    %v3784 = vld [vmem:[#allocation2 + $0x290] sm:$0xff]
    %v3785 = vld [vmem:[#allocation2 + $0x298] sm:$0xff]
    %v3786 = vld [vmem:[#allocation2 + $0x2a0] sm:$0xff]
    %v3787 = vld [vmem:[#allocation2 + $0x2a8] sm:$0xff]
    %v3788 = vld [vmem:[#allocation2 + $0x2b0] sm:$0xff]
    %v3789 = vld [vmem:[#allocation2 + $0x2b8] sm:$0xff]
    %v3790 = vld [vmem:[#allocation2 + $0x2c0] sm:$0xff]
    %v3791 = vld [vmem:[#allocation2 + $0x2c8] sm:$0xff]
    %v3792 = vpack.c.bf16 %v3781, %v3780
    %v3793 = vpack.c.bf16 %v3782, %v3782
    %3794 = vmatprep.subr.bf16.mxu0 %v2157
    %3795 = vmatpush1.bf16.msra.mxu0 %v2156
    %3796 = vmatprep.subr.bf16.mxu0 %v2160
    %3797 = vmatpush1.bf16.msra.mxu0 %v2159
    %3798 = vmatprep.subr.bf16.mxu0 %v2163
    %3799 = vmatpush1.bf16.msra.mxu0 %v2162
    %3800 = vmatprep.subr.bf16.mxu0 %v2166
    %3801 = vmatpush1.bf16.msra.mxu0 %v2165
    %3802 = vmatprep.subr.bf16.mxu0 %v2169
    %3803 = vmatpush1.bf16.msra.mxu0 %v2168
    %3804 = vmatprep.subr.bf16.mxu0 %v2172
    %3805 = vmatpush1.bf16.msra.mxu0 %v2171
    %3806 = vmatprep.subr.bf16.mxu0 %v2175
    %3807 = vmatpush1.bf16.msra.mxu0 %v2174
    %3808 = vmatprep.subr.bf16.mxu0 %v2178
    %3809 = vmatpush1.bf16.msra.mxu0 %v2177
    %3810 = vmatprep.subr.bf16.mxu0 0
    %3811 = vmatpush1.bf16.msra.mxu0 0
    %3812 = vmatprep.subr.bf16.mxu0 0
    %3813 = vmatpush1.bf16.msra.mxu0 0
    %3814 = vmatprep.subr.bf16.mxu0 0
    %3815 = vmatpush1.bf16.msra.mxu0 0
    %3816 = vmatprep.subr.bf16.mxu0 0
    %3817 = vmatpush1.bf16.msra.mxu0 0
    %3818 = vmatprep.subr.bf16.mxu0 0
    %3819 = vmatpush1.bf16.msra.mxu0 0
    %3820 = vmatprep.subr.bf16.mxu0 0
    %3821 = vmatpush1.bf16.msra.mxu0 0
    %3822 = vmatprep.subr.bf16.mxu0 0
    %3823 = vmatpush1.bf16.msra.mxu0 0
    %3824 = vmatprep.subr.bf16.mxu0 0
    %3825 = vmatpush1.bf16.msra.mxu0 0
    %3826 = vmatprep.mubr.bf16.mxu0 0
    %3827 = vmatmul.mubr.bf16.gmra.mrb[0].mxu0 %v3792
    %v3828 = vpop.f32.mrb[0].mxu0
    %v3829 = vadd.f32 0.0, %v3828
    %v3830 = vpop.f32.mrb[0].mxu0
    %v3831 = vadd.f32 0.0, %v3830
    %v3832 = vpop.f32.mrb[0].mxu0
    %v3833 = vadd.f32 0.0, %v3832
    %v3834 = vpop.f32.mrb[0].mxu0
    %v3835 = vadd.f32 0.0, %v3834
    %3836 = vmatprep.mubr.bf16.mxu0 0
    %3837 = vmatmul.mubr.bf16.gmra.mrb[0].mxu0 %v3793
    %v3838 = vpop.f32.mrb[0].mxu0
    %v3839 = vadd.f32 0.0, %v3838
    %v3840 = vpop.f32.mrb[0].mxu0
    %v3841 = vadd.f32 0.0, %v3840
    %v3842 = vpop.f32.mrb[0].mxu0
    %v3843 = vpop.f32.mrb[0].mxu0
    %3844 = vdwg.mxu0
    %3845 = vmatprep.subr.bf16.mxu0 0
    %3846 = vmatpush1.bf16.msra.mxu0 %v2158
    %3847 = vmatprep.subr.bf16.mxu0 0
    %3848 = vmatpush1.bf16.msra.mxu0 %v2161
    %3849 = vmatprep.subr.bf16.mxu0 0
    %3850 = vmatpush1.bf16.msra.mxu0 %v2164
    %3851 = vmatprep.subr.bf16.mxu0 0
    %3852 = vmatpush1.bf16.msra.mxu0 %v2167
    %3853 = vmatprep.subr.bf16.mxu0 0
    %3854 = vmatpush1.bf16.msra.mxu0 %v2170
    %3855 = vmatprep.subr.bf16.mxu0 0
    %3856 = vmatpush1.bf16.msra.mxu0 %v2173
    %3857 = vmatprep.subr.bf16.mxu0 0
    %3858 = vmatpush1.bf16.msra.mxu0 %v2176
    %3859 = vmatprep.subr.bf16.mxu0 0
    %3860 = vmatpush1.bf16.msra.mxu0 %v2179
    %3861 = vmatprep.subr.bf16.mxu0 0
    %3862 = vmatpush1.bf16.msra.mxu0 0
    %3863 = vmatprep.subr.bf16.mxu0 0
    %3864 = vmatpush1.bf16.msra.mxu0 0
    %3865 = vmatprep.subr.bf16.mxu0 0
    %3866 = vmatpush1.bf16.msra.mxu0 0
    %3867 = vmatprep.subr.bf16.mxu0 0
    %3868 = vmatpush1.bf16.msra.mxu0 0
    %3869 = vmatprep.subr.bf16.mxu0 0
    %3870 = vmatpush1.bf16.msra.mxu0 0
    %3871 = vmatprep.subr.bf16.mxu0 0
    %3872 = vmatpush1.bf16.msra.mxu0 0
    %3873 = vmatprep.subr.bf16.mxu0 0
    %3874 = vmatpush1.bf16.msra.mxu0 0
    %3875 = vmatprep.subr.bf16.mxu0 0
    %3876 = vmatpush1.bf16.msra.mxu0 0
    %3877 = vmatprep.mubr.bf16.mxu0 0
    %3878 = vmatmul.mubr.bf16.gmra.mrb[0].mxu0 %v3792
    %v3879 = vpop.f32.mrb[0].mxu0
    %v3880 = vadd.f32 0.0, %v3879
    %v3881 = vpop.f32.mrb[0].mxu0
    %v3882 = vpop.f32.mrb[0].mxu0
    %v3883 = vadd.f32 0.0, %v3882
    %v3884 = vpop.f32.mrb[0].mxu0
    %3885 = vmatprep.mubr.bf16.mxu0 0
    %3886 = vmatmul.mubr.bf16.gmra.mrb[0].mxu0 %v3793
    %v3887 = vpop.f32.mrb[0].mxu0
    %v3888 = vadd.f32 0.0, %v3887
    %v3889 = vpop.f32.mrb[0].mxu0
    %v3890 = vpop.f32.mrb[0].mxu0
    %v3891 = vpop.f32.mrb[0].mxu0
    %3892 = vdwg.mxu0
    %v3893 = vadd.f32 %v3783, %v3829
    %v3894 = vadd.f32 %v3786, %v3833
    %v3895 = vadd.f32 %v3789, %v3839
    %v3896 = vxor.u32 %v3893, 2147483648
    %v3897 = vxor.u32 %v3894, 2147483648
    %v3898 = vxor.u32 %v3895, 2147483648
    %v3899 = vmul.f32 %v3896, 1.442695
    %v3900 = vpow.pop %v3899
    %v3901 = vmul.f32 %v3897, 1.442695
    %v3902 = vpow.pop %v3901
    %v3903 = vmul.f32 %v3898, 1.442695
    %v3904 = vpow.pop %v3903
    %v3905 = vadd.f32 %v3900, 1.0
    %v3906 = vadd.f32 %v3902, 1.0
    %v3907 = vadd.f32 %v3904, 1.0
    %v3908 = vrcp.pop %v3905
    %v3909 = vmul.f32 1.0, %v3908
    %v3910 = vrcp.pop %v3906
    %v3911 = vmul.f32 1.0, %v3910
    %v3912 = vrcp.pop %v3907
    %v3913 = vmul.f32 1.0, %v3912
    %v3914 = vadd.f32 %v3784, %v3831
    %v3915 = vadd.f32 %v3787, %v3835
    %v3916 = vadd.f32 %v3790, %v3841
    %v3917 = vxor.u32 %v3914, 2147483648
    %v3918 = vxor.u32 %v3915, 2147483648
    %v3919 = vxor.u32 %v3916, 2147483648
    %v3920 = vmul.f32 %v3917, 1.442695
    %v3921 = vpow.pop %v3920
    %v3922 = vmul.f32 %v3918, 1.442695
    %v3923 = vpow.pop %v3922
    %v3924 = vmul.f32 %v3919, 1.442695
    %v3925 = vpow.pop %v3924
    %v3926 = vadd.f32 %v3921, 1.0
    %v3927 = vadd.f32 %v3923, 1.0
    %v3928 = vadd.f32 %v3925, 1.0
    %v3929 = vrcp.pop %v3926
    %v3930 = vmul.f32 1.0, %v3929
    %v3931 = vrcp.pop %v3927
    %v3932 = vmul.f32 1.0, %v3931
    %v3933 = vrcp.pop %v3928
    %v3934 = vmul.f32 1.0, %v3933
    %v3935 = vadd.f32 %v3880, %v2349
    %v3936 = vadd.f32 %v3883, %v2349
    %v3937 = vadd.f32 %v3888, %v2349
    %v3938 = vmul.f32 %v3909, %v3935
    %v3939 = vmul.f32 %v3911, %v3936
    %v3940 = vmul.f32 %v3913, %v3937
    %v3941 = vadd.f32 %v3785, %v3938
    %v3942 = vadd.f32 %v3788, %v3939
    %v3943 = vadd.f32 %v3791, %v3940
    %v3944 = vtanh.pop %v3941
    %v3945 = vtanh.pop %v3942
    %v3946 = vtanh.pop %v3943
    %v3947 = vsub.f32 1.0, %v3930
    %v3948 = vsub.f32 1.0, %v3932
    %v3949 = vsub.f32 1.0, %v3934
    %v3950 = vmul.f32 %v3947, %v3944
    %v3951 = vmul.f32 %v3948, %v3945
    %v3952 = vmul.f32 %v3949, %v3946
    %v3953 = vmul.f32 %v3930, %v3780
    %v3954 = vmul.f32 %v3932, %v3781
    %v3955 = vmul.f32 %v3934, %v3782
    %v3956 = vadd.f32 %v3950, %v3953
    %v3957 = vadd.f32 %v3951, %v3954
    %v3958 = vadd.f32 %v3952, %v3955
    %v3959 = vld [vmem:[#allocation2 + $0x2d0] sm:$0xff]
    %v3960 = vld [vmem:[#allocation2 + $0x2d8] sm:$0xff]
    %v3961 = vld [vmem:[#allocation2 + $0x2e0] sm:$0xff]
    %v3962 = vld [vmem:[#allocation2 + $0x2e8] sm:$0xff]
    %v3963 = vld [vmem:[#allocation2 + $0x2f0] sm:$0xff]
    %v3964 = vld [vmem:[#allocation2 + $0x2f8] sm:$0xff]
    %v3965 = vld [vmem:[#allocation2 + $0x300] sm:$0xff]
    %v3966 = vld [vmem:[#allocation2 + $0x308] sm:$0xff]
    %v3967 = vld [vmem:[#allocation2 + $0x310] sm:$0xff]
    %v3968 = vpack.c.bf16 %v3957, %v3956
    %v3969 = vpack.c.bf16 %v3958, %v3958
    %3970 = vmatprep.subr.bf16.mxu0 %v2157
    %3971 = vmatpush1.bf16.msra.mxu0 %v2156
    %3972 = vmatprep.subr.bf16.mxu0 %v2160
    %3973 = vmatpush1.bf16.msra.mxu0 %v2159
    %3974 = vmatprep.subr.bf16.mxu0 %v2163
    %3975 = vmatpush1.bf16.msra.mxu0 %v2162
    %3976 = vmatprep.subr.bf16.mxu0 %v2166
    %3977 = vmatpush1.bf16.msra.mxu0 %v2165
    %3978 = vmatprep.subr.bf16.mxu0 %v2169
    %3979 = vmatpush1.bf16.msra.mxu0 %v2168
    %3980 = vmatprep.subr.bf16.mxu0 %v2172
    %3981 = vmatpush1.bf16.msra.mxu0 %v2171
    %3982 = vmatprep.subr.bf16.mxu0 %v2175
    %3983 = vmatpush1.bf16.msra.mxu0 %v2174
    %3984 = vmatprep.subr.bf16.mxu0 %v2178
    %3985 = vmatpush1.bf16.msra.mxu0 %v2177
    %3986 = vmatprep.subr.bf16.mxu0 0
    %3987 = vmatpush1.bf16.msra.mxu0 0
    %3988 = vmatprep.subr.bf16.mxu0 0
    %3989 = vmatpush1.bf16.msra.mxu0 0
    %3990 = vmatprep.subr.bf16.mxu0 0
    %3991 = vmatpush1.bf16.msra.mxu0 0
    %3992 = vmatprep.subr.bf16.mxu0 0
    %3993 = vmatpush1.bf16.msra.mxu0 0
    %3994 = vmatprep.subr.bf16.mxu0 0
    %3995 = vmatpush1.bf16.msra.mxu0 0
    %3996 = vmatprep.subr.bf16.mxu0 0
    %3997 = vmatpush1.bf16.msra.mxu0 0
    %3998 = vmatprep.subr.bf16.mxu0 0
    %3999 = vmatpush1.bf16.msra.mxu0 0
    %4000 = vmatprep.subr.bf16.mxu0 0
    %4001 = vmatpush1.bf16.msra.mxu0 0
    %4002 = vmatprep.mubr.bf16.mxu0 0
    %4003 = vmatmul.mubr.bf16.gmra.mrb[0].mxu0 %v3968
    %v4004 = vpop.f32.mrb[0].mxu0
    %v4005 = vadd.f32 0.0, %v4004
    %v4006 = vpop.f32.mrb[0].mxu0
    %v4007 = vadd.f32 0.0, %v4006
    %v4008 = vpop.f32.mrb[0].mxu0
    %v4009 = vadd.f32 0.0, %v4008
    %v4010 = vpop.f32.mrb[0].mxu0
    %v4011 = vadd.f32 0.0, %v4010
    %4012 = vmatprep.mubr.bf16.mxu0 0
    %4013 = vmatmul.mubr.bf16.gmra.mrb[0].mxu0 %v3969
    %v4014 = vpop.f32.mrb[0].mxu0
    %v4015 = vadd.f32 0.0, %v4014
    %v4016 = vpop.f32.mrb[0].mxu0
    %v4017 = vadd.f32 0.0, %v4016
    %v4018 = vpop.f32.mrb[0].mxu0
    %v4019 = vpop.f32.mrb[0].mxu0
    %4020 = vdwg.mxu0
    %4021 = vmatprep.subr.bf16.mxu0 0
    %4022 = vmatpush1.bf16.msra.mxu0 %v2158
    %4023 = vmatprep.subr.bf16.mxu0 0
    %4024 = vmatpush1.bf16.msra.mxu0 %v2161
    %4025 = vmatprep.subr.bf16.mxu0 0
    %4026 = vmatpush1.bf16.msra.mxu0 %v2164
    %4027 = vmatprep.subr.bf16.mxu0 0
    %4028 = vmatpush1.bf16.msra.mxu0 %v2167
    %4029 = vmatprep.subr.bf16.mxu0 0
    %4030 = vmatpush1.bf16.msra.mxu0 %v2170
    %4031 = vmatprep.subr.bf16.mxu0 0
    %4032 = vmatpush1.bf16.msra.mxu0 %v2173
    %4033 = vmatprep.subr.bf16.mxu0 0
    %4034 = vmatpush1.bf16.msra.mxu0 %v2176
    %4035 = vmatprep.subr.bf16.mxu0 0
    %4036 = vmatpush1.bf16.msra.mxu0 %v2179
    %4037 = vmatprep.subr.bf16.mxu0 0
    %4038 = vmatpush1.bf16.msra.mxu0 0
    %4039 = vmatprep.subr.bf16.mxu0 0
    %4040 = vmatpush1.bf16.msra.mxu0 0
    %4041 = vmatprep.subr.bf16.mxu0 0
    %4042 = vmatpush1.bf16.msra.mxu0 0
    %4043 = vmatprep.subr.bf16.mxu0 0
    %4044 = vmatpush1.bf16.msra.mxu0 0
    %4045 = vmatprep.subr.bf16.mxu0 0
    %4046 = vmatpush1.bf16.msra.mxu0 0
    %4047 = vmatprep.subr.bf16.mxu0 0
    %4048 = vmatpush1.bf16.msra.mxu0 0
    %4049 = vmatprep.subr.bf16.mxu0 0
    %4050 = vmatpush1.bf16.msra.mxu0 0
    %4051 = vmatprep.subr.bf16.mxu0 0
    %4052 = vmatpush1.bf16.msra.mxu0 0
    %4053 = vmatprep.mubr.bf16.mxu0 0
    %4054 = vmatmul.mubr.bf16.gmra.mrb[0].mxu0 %v3968
    %v4055 = vpop.f32.mrb[0].mxu0
    %v4056 = vadd.f32 0.0, %v4055
    %v4057 = vpop.f32.mrb[0].mxu0
    %v4058 = vpop.f32.mrb[0].mxu0
    %v4059 = vadd.f32 0.0, %v4058
    %v4060 = vpop.f32.mrb[0].mxu0
    %4061 = vmatprep.mubr.bf16.mxu0 0
    %4062 = vmatmul.mubr.bf16.gmra.mrb[0].mxu0 %v3969
    %v4063 = vpop.f32.mrb[0].mxu0
    %v4064 = vadd.f32 0.0, %v4063
    %v4065 = vpop.f32.mrb[0].mxu0
    %v4066 = vpop.f32.mrb[0].mxu0
    %v4067 = vpop.f32.mrb[0].mxu0
    %4068 = vdwg.mxu0
    %v4069 = vadd.f32 %v3959, %v4005
    %v4070 = vadd.f32 %v3962, %v4009
    %v4071 = vadd.f32 %v3965, %v4015
    %v4072 = vxor.u32 %v4069, 2147483648
    %v4073 = vxor.u32 %v4070, 2147483648
    %v4074 = vxor.u32 %v4071, 2147483648
    %v4075 = vmul.f32 %v4072, 1.442695
    %v4076 = vpow.pop %v4075
    %v4077 = vmul.f32 %v4073, 1.442695
    %v4078 = vpow.pop %v4077
    %v4079 = vmul.f32 %v4074, 1.442695
    %v4080 = vpow.pop %v4079
    %v4081 = vadd.f32 %v4076, 1.0
    %v4082 = vadd.f32 %v4078, 1.0
    %v4083 = vadd.f32 %v4080, 1.0
    %v4084 = vrcp.pop %v4081
    %v4085 = vmul.f32 1.0, %v4084
    %v4086 = vrcp.pop %v4082
    %v4087 = vmul.f32 1.0, %v4086
    %v4088 = vrcp.pop %v4083
    %v4089 = vmul.f32 1.0, %v4088
    %v4090 = vadd.f32 %v3960, %v4007
    %v4091 = vadd.f32 %v3963, %v4011
    %v4092 = vadd.f32 %v3966, %v4017
    %v4093 = vxor.u32 %v4090, 2147483648
    %v4094 = vxor.u32 %v4091, 2147483648
    %v4095 = vxor.u32 %v4092, 2147483648
    %v4096 = vmul.f32 %v4093, 1.442695
    %v4097 = vpow.pop %v4096
    %v4098 = vmul.f32 %v4094, 1.442695
    %v4099 = vpow.pop %v4098
    %v4100 = vmul.f32 %v4095, 1.442695
    %v4101 = vpow.pop %v4100
    %v4102 = vadd.f32 %v4097, 1.0
    %v4103 = vadd.f32 %v4099, 1.0
    %v4104 = vadd.f32 %v4101, 1.0
    %v4105 = vrcp.pop %v4102
    %v4106 = vmul.f32 1.0, %v4105
    %v4107 = vrcp.pop %v4103
    %v4108 = vmul.f32 1.0, %v4107
    %v4109 = vrcp.pop %v4104
    %v4110 = vmul.f32 1.0, %v4109
    %v4111 = vadd.f32 %v4056, %v2349
    %v4112 = vadd.f32 %v4059, %v2349
    %v4113 = vadd.f32 %v4064, %v2349
    %v4114 = vmul.f32 %v4085, %v4111
    %v4115 = vmul.f32 %v4087, %v4112
    %v4116 = vmul.f32 %v4089, %v4113
    %v4117 = vadd.f32 %v3961, %v4114
    %v4118 = vadd.f32 %v3964, %v4115
    %v4119 = vadd.f32 %v3967, %v4116
    %v4120 = vtanh.pop %v4117
    %v4121 = vtanh.pop %v4118
    %v4122 = vtanh.pop %v4119
    %v4123 = vsub.f32 1.0, %v4106
    %v4124 = vsub.f32 1.0, %v4108
    %v4125 = vsub.f32 1.0, %v4110
    %v4126 = vmul.f32 %v4123, %v4120
    %v4127 = vmul.f32 %v4124, %v4121
    %v4128 = vmul.f32 %v4125, %v4122
    %v4129 = vmul.f32 %v4106, %v3956
    %v4130 = vmul.f32 %v4108, %v3957
    %v4131 = vmul.f32 %v4110, %v3958
    %v4132 = vadd.f32 %v4126, %v4129
    %v4133 = vadd.f32 %v4127, %v4130
    %v4134 = vadd.f32 %v4128, %v4131
    %v4135 = vld [vmem:[#allocation2 + $0x318] sm:$0xff]
    %v4136 = vld [vmem:[#allocation2 + $0x320] sm:$0xff]
    %v4137 = vld [vmem:[#allocation2 + $0x328] sm:$0xff]
    %v4138 = vld [vmem:[#allocation2 + $0x330] sm:$0xff]
    %v4139 = vld [vmem:[#allocation2 + $0x338] sm:$0xff]
    %v4140 = vld [vmem:[#allocation2 + $0x340] sm:$0xff]
    %v4141 = vld [vmem:[#allocation2 + $0x348] sm:$0xff]
    %v4142 = vld [vmem:[#allocation2 + $0x350] sm:$0xff]
    %v4143 = vld [vmem:[#allocation2 + $0x358] sm:$0xff]
    %v4144 = vpack.c.bf16 %v4133, %v4132
    %v4145 = vpack.c.bf16 %v4134, %v4134
    %4146 = vmatprep.subr.bf16.mxu0 %v2157
    %4147 = vmatpush1.bf16.msra.mxu0 %v2156
    %4148 = vmatprep.subr.bf16.mxu0 %v2160
    %4149 = vmatpush1.bf16.msra.mxu0 %v2159
    %4150 = vmatprep.subr.bf16.mxu0 %v2163
    %4151 = vmatpush1.bf16.msra.mxu0 %v2162
    %4152 = vmatprep.subr.bf16.mxu0 %v2166
    %4153 = vmatpush1.bf16.msra.mxu0 %v2165
    %4154 = vmatprep.subr.bf16.mxu0 %v2169
    %4155 = vmatpush1.bf16.msra.mxu0 %v2168
    %4156 = vmatprep.subr.bf16.mxu0 %v2172
    %4157 = vmatpush1.bf16.msra.mxu0 %v2171
    %4158 = vmatprep.subr.bf16.mxu0 %v2175
    %4159 = vmatpush1.bf16.msra.mxu0 %v2174
    %4160 = vmatprep.subr.bf16.mxu0 %v2178
    %4161 = vmatpush1.bf16.msra.mxu0 %v2177
    %4162 = vmatprep.subr.bf16.mxu0 0
    %4163 = vmatpush1.bf16.msra.mxu0 0
    %4164 = vmatprep.subr.bf16.mxu0 0
    %4165 = vmatpush1.bf16.msra.mxu0 0
    %4166 = vmatprep.subr.bf16.mxu0 0
    %4167 = vmatpush1.bf16.msra.mxu0 0
    %4168 = vmatprep.subr.bf16.mxu0 0
    %4169 = vmatpush1.bf16.msra.mxu0 0
    %4170 = vmatprep.subr.bf16.mxu0 0
    %4171 = vmatpush1.bf16.msra.mxu0 0
    %4172 = vmatprep.subr.bf16.mxu0 0
    %4173 = vmatpush1.bf16.msra.mxu0 0
    %4174 = vmatprep.subr.bf16.mxu0 0
    %4175 = vmatpush1.bf16.msra.mxu0 0
    %4176 = vmatprep.subr.bf16.mxu0 0
    %4177 = vmatpush1.bf16.msra.mxu0 0
    %4178 = vmatprep.mubr.bf16.mxu0 0
    %4179 = vmatmul.mubr.bf16.gmra.mrb[0].mxu0 %v4144
    %v4180 = vpop.f32.mrb[0].mxu0
    %v4181 = vadd.f32 0.0, %v4180
    %v4182 = vpop.f32.mrb[0].mxu0
    %v4183 = vadd.f32 0.0, %v4182
    %v4184 = vpop.f32.mrb[0].mxu0
    %v4185 = vadd.f32 0.0, %v4184
    %v4186 = vpop.f32.mrb[0].mxu0
    %v4187 = vadd.f32 0.0, %v4186
    %4188 = vmatprep.mubr.bf16.mxu0 0
    %4189 = vmatmul.mubr.bf16.gmra.mrb[0].mxu0 %v4145
    %v4190 = vpop.f32.mrb[0].mxu0
    %v4191 = vadd.f32 0.0, %v4190
    %v4192 = vpop.f32.mrb[0].mxu0
    %v4193 = vadd.f32 0.0, %v4192
    %v4194 = vpop.f32.mrb[0].mxu0
    %v4195 = vpop.f32.mrb[0].mxu0
    %4196 = vdwg.mxu0
    %4197 = vmatprep.subr.bf16.mxu0 0
    %4198 = vmatpush1.bf16.msra.mxu0 %v2158
    %4199 = vmatprep.subr.bf16.mxu0 0
    %4200 = vmatpush1.bf16.msra.mxu0 %v2161
    %4201 = vmatprep.subr.bf16.mxu0 0
    %4202 = vmatpush1.bf16.msra.mxu0 %v2164
    %4203 = vmatprep.subr.bf16.mxu0 0
    %4204 = vmatpush1.bf16.msra.mxu0 %v2167
    %4205 = vmatprep.subr.bf16.mxu0 0
    %4206 = vmatpush1.bf16.msra.mxu0 %v2170
    %4207 = vmatprep.subr.bf16.mxu0 0
    %4208 = vmatpush1.bf16.msra.mxu0 %v2173
    %4209 = vmatprep.subr.bf16.mxu0 0
    %4210 = vmatpush1.bf16.msra.mxu0 %v2176
    %4211 = vmatprep.subr.bf16.mxu0 0
    %4212 = vmatpush1.bf16.msra.mxu0 %v2179
    %4213 = vmatprep.subr.bf16.mxu0 0
    %4214 = vmatpush1.bf16.msra.mxu0 0
    %4215 = vmatprep.subr.bf16.mxu0 0
    %4216 = vmatpush1.bf16.msra.mxu0 0
    %4217 = vmatprep.subr.bf16.mxu0 0
    %4218 = vmatpush1.bf16.msra.mxu0 0
    %4219 = vmatprep.subr.bf16.mxu0 0
    %4220 = vmatpush1.bf16.msra.mxu0 0
    %4221 = vmatprep.subr.bf16.mxu0 0
    %4222 = vmatpush1.bf16.msra.mxu0 0
    %4223 = vmatprep.subr.bf16.mxu0 0
    %4224 = vmatpush1.bf16.msra.mxu0 0
    %4225 = vmatprep.subr.bf16.mxu0 0
    %4226 = vmatpush1.bf16.msra.mxu0 0
    %4227 = vmatprep.subr.bf16.mxu0 0
    %4228 = vmatpush1.bf16.msra.mxu0 0
    %4229 = vmatprep.mubr.bf16.mxu0 0
    %4230 = vmatmul.mubr.bf16.gmra.mrb[0].mxu0 %v4144
    %v4231 = vpop.f32.mrb[0].mxu0
    %v4232 = vadd.f32 0.0, %v4231
    %v4233 = vpop.f32.mrb[0].mxu0
    %v4234 = vpop.f32.mrb[0].mxu0
    %v4235 = vadd.f32 0.0, %v4234
    %v4236 = vpop.f32.mrb[0].mxu0
    %4237 = vmatprep.mubr.bf16.mxu0 0
    %4238 = vmatmul.mubr.bf16.gmra.mrb[0].mxu0 %v4145
    %v4239 = vpop.f32.mrb[0].mxu0
    %v4240 = vadd.f32 0.0, %v4239
    %v4241 = vpop.f32.mrb[0].mxu0
    %v4242 = vpop.f32.mrb[0].mxu0
    %v4243 = vpop.f32.mrb[0].mxu0
    %4244 = vdwg.mxu0
    %v4245 = vadd.f32 %v4135, %v4181
    %v4246 = vadd.f32 %v4138, %v4185
    %v4247 = vadd.f32 %v4141, %v4191
    %v4248 = vxor.u32 %v4245, 2147483648
    %v4249 = vxor.u32 %v4246, 2147483648
    %v4250 = vxor.u32 %v4247, 2147483648
    %v4251 = vmul.f32 %v4248, 1.442695
    %v4252 = vpow.pop %v4251
    %v4253 = vmul.f32 %v4249, 1.442695
    %v4254 = vpow.pop %v4253
    %v4255 = vmul.f32 %v4250, 1.442695
    %v4256 = vpow.pop %v4255
    %v4257 = vadd.f32 %v4252, 1.0
    %v4258 = vadd.f32 %v4254, 1.0
    %v4259 = vadd.f32 %v4256, 1.0
    %v4260 = vrcp.pop %v4257
    %v4261 = vmul.f32 1.0, %v4260
    %v4262 = vrcp.pop %v4258
    %v4263 = vmul.f32 1.0, %v4262
    %v4264 = vrcp.pop %v4259
    %v4265 = vmul.f32 1.0, %v4264
    %v4266 = vadd.f32 %v4136, %v4183
    %v4267 = vadd.f32 %v4139, %v4187
    %v4268 = vadd.f32 %v4142, %v4193
    %v4269 = vxor.u32 %v4266, 2147483648
    %v4270 = vxor.u32 %v4267, 2147483648
    %v4271 = vxor.u32 %v4268, 2147483648
    %v4272 = vmul.f32 %v4269, 1.442695
    %v4273 = vpow.pop %v4272
    %v4274 = vmul.f32 %v4270, 1.442695
    %v4275 = vpow.pop %v4274
    %v4276 = vmul.f32 %v4271, 1.442695
    %v4277 = vpow.pop %v4276
    %v4278 = vadd.f32 %v4273, 1.0
    %v4279 = vadd.f32 %v4275, 1.0
    %v4280 = vadd.f32 %v4277, 1.0
    %v4281 = vrcp.pop %v4278
    %v4282 = vmul.f32 1.0, %v4281
    %v4283 = vrcp.pop %v4279
    %v4284 = vmul.f32 1.0, %v4283
    %v4285 = vrcp.pop %v4280
    %v4286 = vmul.f32 1.0, %v4285
    %v4287 = vadd.f32 %v4232, %v2349
    %v4288 = vadd.f32 %v4235, %v2349
    %v4289 = vadd.f32 %v4240, %v2349
    %v4290 = vmul.f32 %v4261, %v4287
    %v4291 = vmul.f32 %v4263, %v4288
    %v4292 = vmul.f32 %v4265, %v4289
    %v4293 = vadd.f32 %v4137, %v4290
    %v4294 = vadd.f32 %v4140, %v4291
    %v4295 = vadd.f32 %v4143, %v4292
    %v4296 = vtanh.pop %v4293
    %v4297 = vtanh.pop %v4294
    %v4298 = vtanh.pop %v4295
    %v4299 = vsub.f32 1.0, %v4282
    %v4300 = vsub.f32 1.0, %v4284
    %v4301 = vsub.f32 1.0, %v4286
    %v4302 = vmul.f32 %v4299, %v4296
    %v4303 = vmul.f32 %v4300, %v4297
    %v4304 = vmul.f32 %v4301, %v4298
    %v4305 = vmul.f32 %v4282, %v4132
    %v4306 = vmul.f32 %v4284, %v4133
    %v4307 = vmul.f32 %v4286, %v4134
    %v4308 = vadd.f32 %v4302, %v4305
    %v4309 = vadd.f32 %v4303, %v4306
    %v4310 = vadd.f32 %v4304, %v4307
    %v4311 = vld [vmem:[#allocation2 + $0x360] sm:$0xff]
    %v4312 = vld [vmem:[#allocation2 + $0x368] sm:$0xff]
    %v4313 = vld [vmem:[#allocation2 + $0x370] sm:$0xff]
    %v4314 = vld [vmem:[#allocation2 + $0x378] sm:$0xff]
    %v4315 = vld [vmem:[#allocation2 + $0x380] sm:$0xff]
    %v4316 = vld [vmem:[#allocation2 + $0x388] sm:$0xff]
    %v4317 = vld [vmem:[#allocation2 + $0x390] sm:$0xff]
    %v4318 = vld [vmem:[#allocation2 + $0x398] sm:$0xff]
    %v4319 = vld [vmem:[#allocation2 + $0x3a0] sm:$0xff]
    %v4320 = vpack.c.bf16 %v4309, %v4308
    %v4321 = vpack.c.bf16 %v4310, %v4310
    %4322 = vmatprep.subr.bf16.mxu0 %v2157
    %4323 = vmatpush1.bf16.msra.mxu0 %v2156
    %4324 = vmatprep.subr.bf16.mxu0 %v2160
    %4325 = vmatpush1.bf16.msra.mxu0 %v2159
    %4326 = vmatprep.subr.bf16.mxu0 %v2163
    %4327 = vmatpush1.bf16.msra.mxu0 %v2162
    %4328 = vmatprep.subr.bf16.mxu0 %v2166
    %4329 = vmatpush1.bf16.msra.mxu0 %v2165
    %4330 = vmatprep.subr.bf16.mxu0 %v2169
    %4331 = vmatpush1.bf16.msra.mxu0 %v2168
    %4332 = vmatprep.subr.bf16.mxu0 %v2172
    %4333 = vmatpush1.bf16.msra.mxu0 %v2171
    %4334 = vmatprep.subr.bf16.mxu0 %v2175
    %4335 = vmatpush1.bf16.msra.mxu0 %v2174
    %4336 = vmatprep.subr.bf16.mxu0 %v2178
    %4337 = vmatpush1.bf16.msra.mxu0 %v2177
    %4338 = vmatprep.subr.bf16.mxu0 0
    %4339 = vmatpush1.bf16.msra.mxu0 0
    %4340 = vmatprep.subr.bf16.mxu0 0
    %4341 = vmatpush1.bf16.msra.mxu0 0
    %4342 = vmatprep.subr.bf16.mxu0 0
    %4343 = vmatpush1.bf16.msra.mxu0 0
    %4344 = vmatprep.subr.bf16.mxu0 0
    %4345 = vmatpush1.bf16.msra.mxu0 0
    %4346 = vmatprep.subr.bf16.mxu0 0
    %4347 = vmatpush1.bf16.msra.mxu0 0
    %4348 = vmatprep.subr.bf16.mxu0 0
    %4349 = vmatpush1.bf16.msra.mxu0 0
    %4350 = vmatprep.subr.bf16.mxu0 0
    %4351 = vmatpush1.bf16.msra.mxu0 0
    %4352 = vmatprep.subr.bf16.mxu0 0
    %4353 = vmatpush1.bf16.msra.mxu0 0
    %4354 = vmatprep.mubr.bf16.mxu0 0
    %4355 = vmatmul.mubr.bf16.gmra.mrb[0].mxu0 %v4320
    %v4356 = vpop.f32.mrb[0].mxu0
    %v4357 = vadd.f32 0.0, %v4356
    %v4358 = vpop.f32.mrb[0].mxu0
    %v4359 = vadd.f32 0.0, %v4358
    %v4360 = vpop.f32.mrb[0].mxu0
    %v4361 = vadd.f32 0.0, %v4360
    %v4362 = vpop.f32.mrb[0].mxu0
    %v4363 = vadd.f32 0.0, %v4362
    %4364 = vmatprep.mubr.bf16.mxu0 0
    %4365 = vmatmul.mubr.bf16.gmra.mrb[0].mxu0 %v4321
    %v4366 = vpop.f32.mrb[0].mxu0
    %v4367 = vadd.f32 0.0, %v4366
    %v4368 = vpop.f32.mrb[0].mxu0
    %v4369 = vadd.f32 0.0, %v4368
    %v4370 = vpop.f32.mrb[0].mxu0
    %v4371 = vpop.f32.mrb[0].mxu0
    %4372 = vdwg.mxu0
    %4373 = vmatprep.subr.bf16.mxu0 0
    %4374 = vmatpush1.bf16.msra.mxu0 %v2158
    %4375 = vmatprep.subr.bf16.mxu0 0
    %4376 = vmatpush1.bf16.msra.mxu0 %v2161
    %4377 = vmatprep.subr.bf16.mxu0 0
    %4378 = vmatpush1.bf16.msra.mxu0 %v2164
    %4379 = vmatprep.subr.bf16.mxu0 0
    %4380 = vmatpush1.bf16.msra.mxu0 %v2167
    %4381 = vmatprep.subr.bf16.mxu0 0
    %4382 = vmatpush1.bf16.msra.mxu0 %v2170
    %4383 = vmatprep.subr.bf16.mxu0 0
    %4384 = vmatpush1.bf16.msra.mxu0 %v2173
    %4385 = vmatprep.subr.bf16.mxu0 0
    %4386 = vmatpush1.bf16.msra.mxu0 %v2176
    %4387 = vmatprep.subr.bf16.mxu0 0
    %4388 = vmatpush1.bf16.msra.mxu0 %v2179
    %4389 = vmatprep.subr.bf16.mxu0 0
    %4390 = vmatpush1.bf16.msra.mxu0 0
    %4391 = vmatprep.subr.bf16.mxu0 0
    %4392 = vmatpush1.bf16.msra.mxu0 0
    %4393 = vmatprep.subr.bf16.mxu0 0
    %4394 = vmatpush1.bf16.msra.mxu0 0
    %4395 = vmatprep.subr.bf16.mxu0 0
    %4396 = vmatpush1.bf16.msra.mxu0 0
    %4397 = vmatprep.subr.bf16.mxu0 0
    %4398 = vmatpush1.bf16.msra.mxu0 0
    %4399 = vmatprep.subr.bf16.mxu0 0
    %4400 = vmatpush1.bf16.msra.mxu0 0
    %4401 = vmatprep.subr.bf16.mxu0 0
    %4402 = vmatpush1.bf16.msra.mxu0 0
    %4403 = vmatprep.subr.bf16.mxu0 0
    %4404 = vmatpush1.bf16.msra.mxu0 0
    %4405 = vmatprep.mubr.bf16.mxu0 0
    %4406 = vmatmul.mubr.bf16.gmra.mrb[0].mxu0 %v4320
    %v4407 = vpop.f32.mrb[0].mxu0
    %v4408 = vadd.f32 0.0, %v4407
    %v4409 = vpop.f32.mrb[0].mxu0
    %v4410 = vpop.f32.mrb[0].mxu0
    %v4411 = vadd.f32 0.0, %v4410
    %v4412 = vpop.f32.mrb[0].mxu0
    %4413 = vmatprep.mubr.bf16.mxu0 0
    %4414 = vmatmul.mubr.bf16.gmra.mrb[0].mxu0 %v4321
    %v4415 = vpop.f32.mrb[0].mxu0
    %v4416 = vadd.f32 0.0, %v4415
    %v4417 = vpop.f32.mrb[0].mxu0
    %v4418 = vpop.f32.mrb[0].mxu0
    %v4419 = vpop.f32.mrb[0].mxu0
    %4420 = vdwg.mxu0
    %v4421 = vadd.f32 %v4311, %v4357
    %v4422 = vadd.f32 %v4314, %v4361
    %v4423 = vadd.f32 %v4317, %v4367
    %v4424 = vxor.u32 %v4421, 2147483648
    %v4425 = vxor.u32 %v4422, 2147483648
    %v4426 = vxor.u32 %v4423, 2147483648
    %v4427 = vmul.f32 %v4424, 1.442695
    %v4428 = vpow.pop %v4427
    %v4429 = vmul.f32 %v4425, 1.442695
    %v4430 = vpow.pop %v4429
    %v4431 = vmul.f32 %v4426, 1.442695
    %v4432 = vpow.pop %v4431
    %v4433 = vadd.f32 %v4428, 1.0
    %v4434 = vadd.f32 %v4430, 1.0
    %v4435 = vadd.f32 %v4432, 1.0
    %v4436 = vrcp.pop %v4433
    %v4437 = vmul.f32 1.0, %v4436
    %v4438 = vrcp.pop %v4434
    %v4439 = vmul.f32 1.0, %v4438
    %v4440 = vrcp.pop %v4435
    %v4441 = vmul.f32 1.0, %v4440
    %v4442 = vadd.f32 %v4312, %v4359
    %v4443 = vadd.f32 %v4315, %v4363
    %v4444 = vadd.f32 %v4318, %v4369
    %v4445 = vxor.u32 %v4442, 2147483648
    %v4446 = vxor.u32 %v4443, 2147483648
    %v4447 = vxor.u32 %v4444, 2147483648
    %v4448 = vmul.f32 %v4445, 1.442695
    %v4449 = vpow.pop %v4448
    %v4450 = vmul.f32 %v4446, 1.442695
    %v4451 = vpow.pop %v4450
    %v4452 = vmul.f32 %v4447, 1.442695
    %v4453 = vpow.pop %v4452
    %v4454 = vadd.f32 %v4449, 1.0
    %v4455 = vadd.f32 %v4451, 1.0
    %v4456 = vadd.f32 %v4453, 1.0
    %v4457 = vrcp.pop %v4454
    %v4458 = vmul.f32 1.0, %v4457
    %v4459 = vrcp.pop %v4455
    %v4460 = vmul.f32 1.0, %v4459
    %v4461 = vrcp.pop %v4456
    %v4462 = vmul.f32 1.0, %v4461
    %v4463 = vadd.f32 %v4408, %v2349
    %v4464 = vadd.f32 %v4411, %v2349
    %v4465 = vadd.f32 %v4416, %v2349
    %v4466 = vmul.f32 %v4437, %v4463
    %v4467 = vmul.f32 %v4439, %v4464
    %v4468 = vmul.f32 %v4441, %v4465
    %v4469 = vadd.f32 %v4313, %v4466
    %v4470 = vadd.f32 %v4316, %v4467
    %v4471 = vadd.f32 %v4319, %v4468
    %v4472 = vtanh.pop %v4469
    %v4473 = vtanh.pop %v4470
    %v4474 = vtanh.pop %v4471
    %v4475 = vsub.f32 1.0, %v4458
    %v4476 = vsub.f32 1.0, %v4460
    %v4477 = vsub.f32 1.0, %v4462
    %v4478 = vmul.f32 %v4475, %v4472
    %v4479 = vmul.f32 %v4476, %v4473
    %v4480 = vmul.f32 %v4477, %v4474
    %v4481 = vmul.f32 %v4458, %v4308
    %v4482 = vmul.f32 %v4460, %v4309
    %v4483 = vmul.f32 %v4462, %v4310
    %v4484 = vadd.f32 %v4478, %v4481
    %v4485 = vadd.f32 %v4479, %v4482
    %v4486 = vadd.f32 %v4480, %v4483
    %v4487 = vld [vmem:[#allocation2 + $0x3a8] sm:$0xff]
    %v4488 = vld [vmem:[#allocation2 + $0x3b0] sm:$0xff]
    %v4489 = vld [vmem:[#allocation2 + $0x3b8] sm:$0xff]
    %v4490 = vld [vmem:[#allocation2 + $0x3c0] sm:$0xff]
    %v4491 = vld [vmem:[#allocation2 + $0x3c8] sm:$0xff]
    %v4492 = vld [vmem:[#allocation2 + $0x3d0] sm:$0xff]
    %v4493 = vld [vmem:[#allocation2 + $0x3d8] sm:$0xff]
    %v4494 = vld [vmem:[#allocation2 + $0x3e0] sm:$0xff]
    %v4495 = vld [vmem:[#allocation2 + $0x3e8] sm:$0xff]
    %v4496 = vpack.c.bf16 %v4485, %v4484
    %v4497 = vpack.c.bf16 %v4486, %v4486
    %4498 = vmatprep.subr.bf16.mxu0 %v2157
    %4499 = vmatpush1.bf16.msra.mxu0 %v2156
    %4500 = vmatprep.subr.bf16.mxu0 %v2160
    %4501 = vmatpush1.bf16.msra.mxu0 %v2159
    %4502 = vmatprep.subr.bf16.mxu0 %v2163
    %4503 = vmatpush1.bf16.msra.mxu0 %v2162
    %4504 = vmatprep.subr.bf16.mxu0 %v2166
    %4505 = vmatpush1.bf16.msra.mxu0 %v2165
    %4506 = vmatprep.subr.bf16.mxu0 %v2169
    %4507 = vmatpush1.bf16.msra.mxu0 %v2168
    %4508 = vmatprep.subr.bf16.mxu0 %v2172
    %4509 = vmatpush1.bf16.msra.mxu0 %v2171
    %4510 = vmatprep.subr.bf16.mxu0 %v2175
    %4511 = vmatpush1.bf16.msra.mxu0 %v2174
    %4512 = vmatprep.subr.bf16.mxu0 %v2178
    %4513 = vmatpush1.bf16.msra.mxu0 %v2177
    %4514 = vmatprep.subr.bf16.mxu0 0
    %4515 = vmatpush1.bf16.msra.mxu0 0
    %4516 = vmatprep.subr.bf16.mxu0 0
    %4517 = vmatpush1.bf16.msra.mxu0 0
    %4518 = vmatprep.subr.bf16.mxu0 0
    %4519 = vmatpush1.bf16.msra.mxu0 0
    %4520 = vmatprep.subr.bf16.mxu0 0
    %4521 = vmatpush1.bf16.msra.mxu0 0
    %4522 = vmatprep.subr.bf16.mxu0 0
    %4523 = vmatpush1.bf16.msra.mxu0 0
    %4524 = vmatprep.subr.bf16.mxu0 0
    %4525 = vmatpush1.bf16.msra.mxu0 0
    %4526 = vmatprep.subr.bf16.mxu0 0
    %4527 = vmatpush1.bf16.msra.mxu0 0
    %4528 = vmatprep.subr.bf16.mxu0 0
    %4529 = vmatpush1.bf16.msra.mxu0 0
    %4530 = vmatprep.mubr.bf16.mxu0 0
    %4531 = vmatmul.mubr.bf16.gmra.mrb[0].mxu0 %v4496
    %v4532 = vpop.f32.mrb[0].mxu0
    %v4533 = vadd.f32 0.0, %v4532
    %v4534 = vpop.f32.mrb[0].mxu0
    %v4535 = vadd.f32 0.0, %v4534
    %v4536 = vpop.f32.mrb[0].mxu0
    %v4537 = vadd.f32 0.0, %v4536
    %v4538 = vpop.f32.mrb[0].mxu0
    %v4539 = vadd.f32 0.0, %v4538
    %4540 = vmatprep.mubr.bf16.mxu0 0
    %4541 = vmatmul.mubr.bf16.gmra.mrb[0].mxu0 %v4497
    %v4542 = vpop.f32.mrb[0].mxu0
    %v4543 = vadd.f32 0.0, %v4542
    %v4544 = vpop.f32.mrb[0].mxu0
    %v4545 = vadd.f32 0.0, %v4544
    %v4546 = vpop.f32.mrb[0].mxu0
    %v4547 = vpop.f32.mrb[0].mxu0
    %4548 = vdwg.mxu0
    %4549 = vmatprep.subr.bf16.mxu0 0
    %4550 = vmatpush1.bf16.msra.mxu0 %v2158
    %4551 = vmatprep.subr.bf16.mxu0 0
    %4552 = vmatpush1.bf16.msra.mxu0 %v2161
    %4553 = vmatprep.subr.bf16.mxu0 0
    %4554 = vmatpush1.bf16.msra.mxu0 %v2164
    %4555 = vmatprep.subr.bf16.mxu0 0
    %4556 = vmatpush1.bf16.msra.mxu0 %v2167
    %4557 = vmatprep.subr.bf16.mxu0 0
    %4558 = vmatpush1.bf16.msra.mxu0 %v2170
    %4559 = vmatprep.subr.bf16.mxu0 0
    %4560 = vmatpush1.bf16.msra.mxu0 %v2173
    %4561 = vmatprep.subr.bf16.mxu0 0
    %4562 = vmatpush1.bf16.msra.mxu0 %v2176
    %4563 = vmatprep.subr.bf16.mxu0 0
    %4564 = vmatpush1.bf16.msra.mxu0 %v2179
    %4565 = vmatprep.subr.bf16.mxu0 0
    %4566 = vmatpush1.bf16.msra.mxu0 0
    %4567 = vmatprep.subr.bf16.mxu0 0
    %4568 = vmatpush1.bf16.msra.mxu0 0
    %4569 = vmatprep.subr.bf16.mxu0 0
    %4570 = vmatpush1.bf16.msra.mxu0 0
    %4571 = vmatprep.subr.bf16.mxu0 0
    %4572 = vmatpush1.bf16.msra.mxu0 0
    %4573 = vmatprep.subr.bf16.mxu0 0
    %4574 = vmatpush1.bf16.msra.mxu0 0
    %4575 = vmatprep.subr.bf16.mxu0 0
    %4576 = vmatpush1.bf16.msra.mxu0 0
    %4577 = vmatprep.subr.bf16.mxu0 0
    %4578 = vmatpush1.bf16.msra.mxu0 0
    %4579 = vmatprep.subr.bf16.mxu0 0
    %4580 = vmatpush1.bf16.msra.mxu0 0
    %4581 = vmatprep.mubr.bf16.mxu0 0
    %4582 = vmatmul.mubr.bf16.gmra.mrb[0].mxu0 %v4496
    %v4583 = vpop.f32.mrb[0].mxu0
    %v4584 = vadd.f32 0.0, %v4583
    %v4585 = vpop.f32.mrb[0].mxu0
    %v4586 = vpop.f32.mrb[0].mxu0
    %v4587 = vadd.f32 0.0, %v4586
    %v4588 = vpop.f32.mrb[0].mxu0
    %4589 = vmatprep.mubr.bf16.mxu0 0
    %4590 = vmatmul.mubr.bf16.gmra.mrb[0].mxu0 %v4497
    %v4591 = vpop.f32.mrb[0].mxu0
    %v4592 = vadd.f32 0.0, %v4591
    %v4593 = vpop.f32.mrb[0].mxu0
    %v4594 = vpop.f32.mrb[0].mxu0
    %v4595 = vpop.f32.mrb[0].mxu0
    %4596 = vdwg.mxu0
    %v4597 = vadd.f32 %v4487, %v4533
    %v4598 = vadd.f32 %v4490, %v4537
    %v4599 = vadd.f32 %v4493, %v4543
    %v4600 = vxor.u32 %v4597, 2147483648
    %v4601 = vxor.u32 %v4598, 2147483648
    %v4602 = vxor.u32 %v4599, 2147483648
    %v4603 = vmul.f32 %v4600, 1.442695
    %v4604 = vpow.pop %v4603
    %v4605 = vmul.f32 %v4601, 1.442695
    %v4606 = vpow.pop %v4605
    %v4607 = vmul.f32 %v4602, 1.442695
    %v4608 = vpow.pop %v4607
    %v4609 = vadd.f32 %v4604, 1.0
    %v4610 = vadd.f32 %v4606, 1.0
    %v4611 = vadd.f32 %v4608, 1.0
    %v4612 = vrcp.pop %v4609
    %v4613 = vmul.f32 1.0, %v4612
    %v4614 = vrcp.pop %v4610
    %v4615 = vmul.f32 1.0, %v4614
    %v4616 = vrcp.pop %v4611
    %v4617 = vmul.f32 1.0, %v4616
    %v4618 = vadd.f32 %v4488, %v4535
    %v4619 = vadd.f32 %v4491, %v4539
    %v4620 = vadd.f32 %v4494, %v4545
    %v4621 = vxor.u32 %v4618, 2147483648
    %v4622 = vxor.u32 %v4619, 2147483648
    %v4623 = vxor.u32 %v4620, 2147483648
    %v4624 = vmul.f32 %v4621, 1.442695
    %v4625 = vpow.pop %v4624
    %v4626 = vmul.f32 %v4622, 1.442695
    %v4627 = vpow.pop %v4626
    %v4628 = vmul.f32 %v4623, 1.442695
    %v4629 = vpow.pop %v4628
    %v4630 = vadd.f32 %v4625, 1.0
    %v4631 = vadd.f32 %v4627, 1.0
    %v4632 = vadd.f32 %v4629, 1.0
    %v4633 = vrcp.pop %v4630
    %v4634 = vmul.f32 1.0, %v4633
    %v4635 = vrcp.pop %v4631
    %v4636 = vmul.f32 1.0, %v4635
    %v4637 = vrcp.pop %v4632
    %v4638 = vmul.f32 1.0, %v4637
    %v4639 = vadd.f32 %v4584, %v2349
    %v4640 = vadd.f32 %v4587, %v2349
    %v4641 = vadd.f32 %v4592, %v2349
    %v4642 = vmul.f32 %v4613, %v4639
    %v4643 = vmul.f32 %v4615, %v4640
    %v4644 = vmul.f32 %v4617, %v4641
    %v4645 = vadd.f32 %v4489, %v4642
    %v4646 = vadd.f32 %v4492, %v4643
    %v4647 = vadd.f32 %v4495, %v4644
    %v4648 = vtanh.pop %v4645
    %v4649 = vtanh.pop %v4646
    %v4650 = vtanh.pop %v4647
    %v4651 = vsub.f32 1.0, %v4634
    %v4652 = vsub.f32 1.0, %v4636
    %v4653 = vsub.f32 1.0, %v4638
    %v4654 = vmul.f32 %v4651, %v4648
    %v4655 = vmul.f32 %v4652, %v4649
    %v4656 = vmul.f32 %v4653, %v4650
    %v4657 = vmul.f32 %v4634, %v4484
    %v4658 = vmul.f32 %v4636, %v4485
    %v4659 = vmul.f32 %v4638, %v4486
    %v4660 = vadd.f32 %v4654, %v4657
    %v4661 = vadd.f32 %v4655, %v4658
    %v4662 = vadd.f32 %v4656, %v4659
    %v4663 = vld [vmem:[#allocation2 + $0x3f0] sm:$0xff]
    %v4664 = vld [vmem:[#allocation2 + $0x3f8] sm:$0xff]
    %v4665 = vld [vmem:[#allocation2 + $0x400] sm:$0xff]
    %v4666 = vld [vmem:[#allocation2 + $0x408] sm:$0xff]
    %v4667 = vld [vmem:[#allocation2 + $0x410] sm:$0xff]
    %v4668 = vld [vmem:[#allocation2 + $0x418] sm:$0xff]
    %v4669 = vld [vmem:[#allocation2 + $0x420] sm:$0xff]
    %v4670 = vld [vmem:[#allocation2 + $0x428] sm:$0xff]
    %v4671 = vld [vmem:[#allocation2 + $0x430] sm:$0xff]
    %v4672 = vpack.c.bf16 %v4661, %v4660
    %v4673 = vpack.c.bf16 %v4662, %v4662
    %4674 = vmatprep.subr.bf16.mxu0 %v2157
    %4675 = vmatpush1.bf16.msra.mxu0 %v2156
    %4676 = vmatprep.subr.bf16.mxu0 %v2160
    %4677 = vmatpush1.bf16.msra.mxu0 %v2159
    %4678 = vmatprep.subr.bf16.mxu0 %v2163
    %4679 = vmatpush1.bf16.msra.mxu0 %v2162
    %4680 = vmatprep.subr.bf16.mxu0 %v2166
    %4681 = vmatpush1.bf16.msra.mxu0 %v2165
    %4682 = vmatprep.subr.bf16.mxu0 %v2169
    %4683 = vmatpush1.bf16.msra.mxu0 %v2168
    %4684 = vmatprep.subr.bf16.mxu0 %v2172
    %4685 = vmatpush1.bf16.msra.mxu0 %v2171
    %4686 = vmatprep.subr.bf16.mxu0 %v2175
    %4687 = vmatpush1.bf16.msra.mxu0 %v2174
    %4688 = vmatprep.subr.bf16.mxu0 %v2178
    %4689 = vmatpush1.bf16.msra.mxu0 %v2177
    %4690 = vmatprep.subr.bf16.mxu0 0
    %4691 = vmatpush1.bf16.msra.mxu0 0
    %4692 = vmatprep.subr.bf16.mxu0 0
    %4693 = vmatpush1.bf16.msra.mxu0 0
    %4694 = vmatprep.subr.bf16.mxu0 0
    %4695 = vmatpush1.bf16.msra.mxu0 0
    %4696 = vmatprep.subr.bf16.mxu0 0
    %4697 = vmatpush1.bf16.msra.mxu0 0
    %4698 = vmatprep.subr.bf16.mxu0 0
    %4699 = vmatpush1.bf16.msra.mxu0 0
    %4700 = vmatprep.subr.bf16.mxu0 0
    %4701 = vmatpush1.bf16.msra.mxu0 0
    %4702 = vmatprep.subr.bf16.mxu0 0
    %4703 = vmatpush1.bf16.msra.mxu0 0
    %4704 = vmatprep.subr.bf16.mxu0 0
    %4705 = vmatpush1.bf16.msra.mxu0 0
    %4706 = vmatprep.mubr.bf16.mxu0 0
    %4707 = vmatmul.mubr.bf16.gmra.mrb[0].mxu0 %v4672
    %v4708 = vpop.f32.mrb[0].mxu0
    %v4709 = vadd.f32 0.0, %v4708
    %v4710 = vpop.f32.mrb[0].mxu0
    %v4711 = vadd.f32 0.0, %v4710
    %v4712 = vpop.f32.mrb[0].mxu0
    %v4713 = vadd.f32 0.0, %v4712
    %v4714 = vpop.f32.mrb[0].mxu0
    %v4715 = vadd.f32 0.0, %v4714
    %4716 = vmatprep.mubr.bf16.mxu0 0
    %4717 = vmatmul.mubr.bf16.gmra.mrb[0].mxu0 %v4673
    %v4718 = vpop.f32.mrb[0].mxu0
    %v4719 = vadd.f32 0.0, %v4718
    %v4720 = vpop.f32.mrb[0].mxu0
    %v4721 = vadd.f32 0.0, %v4720
    %v4722 = vpop.f32.mrb[0].mxu0
    %v4723 = vpop.f32.mrb[0].mxu0
    %4724 = vdwg.mxu0
    %4725 = vmatprep.subr.bf16.mxu0 0
    %4726 = vmatpush1.bf16.msra.mxu0 %v2158
    %4727 = vmatprep.subr.bf16.mxu0 0
    %4728 = vmatpush1.bf16.msra.mxu0 %v2161
    %4729 = vmatprep.subr.bf16.mxu0 0
    %4730 = vmatpush1.bf16.msra.mxu0 %v2164
    %4731 = vmatprep.subr.bf16.mxu0 0
    %4732 = vmatpush1.bf16.msra.mxu0 %v2167
    %4733 = vmatprep.subr.bf16.mxu0 0
    %4734 = vmatpush1.bf16.msra.mxu0 %v2170
    %4735 = vmatprep.subr.bf16.mxu0 0
    %4736 = vmatpush1.bf16.msra.mxu0 %v2173
    %4737 = vmatprep.subr.bf16.mxu0 0
    %4738 = vmatpush1.bf16.msra.mxu0 %v2176
    %4739 = vmatprep.subr.bf16.mxu0 0
    %4740 = vmatpush1.bf16.msra.mxu0 %v2179
    %4741 = vmatprep.subr.bf16.mxu0 0
    %4742 = vmatpush1.bf16.msra.mxu0 0
    %4743 = vmatprep.subr.bf16.mxu0 0
    %4744 = vmatpush1.bf16.msra.mxu0 0
    %4745 = vmatprep.subr.bf16.mxu0 0
    %4746 = vmatpush1.bf16.msra.mxu0 0
    %4747 = vmatprep.subr.bf16.mxu0 0
    %4748 = vmatpush1.bf16.msra.mxu0 0
    %4749 = vmatprep.subr.bf16.mxu0 0
    %4750 = vmatpush1.bf16.msra.mxu0 0
    %4751 = vmatprep.subr.bf16.mxu0 0
    %4752 = vmatpush1.bf16.msra.mxu0 0
    %4753 = vmatprep.subr.bf16.mxu0 0
    %4754 = vmatpush1.bf16.msra.mxu0 0
    %4755 = vmatprep.subr.bf16.mxu0 0
    %4756 = vmatpush1.bf16.msra.mxu0 0
    %4757 = vmatprep.mubr.bf16.mxu0 0
    %4758 = vmatmul.mubr.bf16.gmra.mrb[0].mxu0 %v4672
    %v4759 = vpop.f32.mrb[0].mxu0
    %v4760 = vadd.f32 0.0, %v4759
    %v4761 = vpop.f32.mrb[0].mxu0
    %v4762 = vpop.f32.mrb[0].mxu0
    %v4763 = vadd.f32 0.0, %v4762
    %v4764 = vpop.f32.mrb[0].mxu0
    %4765 = vmatprep.mubr.bf16.mxu0 0
    %4766 = vmatmul.mubr.bf16.gmra.mrb[0].mxu0 %v4673
    %v4767 = vpop.f32.mrb[0].mxu0
    %v4768 = vadd.f32 0.0, %v4767
    %v4769 = vpop.f32.mrb[0].mxu0
    %v4770 = vpop.f32.mrb[0].mxu0
    %v4771 = vpop.f32.mrb[0].mxu0
    %4772 = vdwg.mxu0
    %v4773 = vadd.f32 %v4663, %v4709
    %v4774 = vadd.f32 %v4666, %v4713
    %v4775 = vadd.f32 %v4669, %v4719
    %v4776 = vxor.u32 %v4773, 2147483648
    %v4777 = vxor.u32 %v4774, 2147483648
    %v4778 = vxor.u32 %v4775, 2147483648
    %v4779 = vmul.f32 %v4776, 1.442695
    %v4780 = vpow.pop %v4779
    %v4781 = vmul.f32 %v4777, 1.442695
    %v4782 = vpow.pop %v4781
    %v4783 = vmul.f32 %v4778, 1.442695
    %v4784 = vpow.pop %v4783
    %v4785 = vadd.f32 %v4780, 1.0
    %v4786 = vadd.f32 %v4782, 1.0
    %v4787 = vadd.f32 %v4784, 1.0
    %v4788 = vrcp.pop %v4785
    %v4789 = vmul.f32 1.0, %v4788
    %v4790 = vrcp.pop %v4786
    %v4791 = vmul.f32 1.0, %v4790
    %v4792 = vrcp.pop %v4787
    %v4793 = vmul.f32 1.0, %v4792
    %v4794 = vadd.f32 %v4664, %v4711
    %v4795 = vadd.f32 %v4667, %v4715
    %v4796 = vadd.f32 %v4670, %v4721
    %v4797 = vxor.u32 %v4794, 2147483648
    %v4798 = vxor.u32 %v4795, 2147483648
    %v4799 = vxor.u32 %v4796, 2147483648
    %v4800 = vmul.f32 %v4797, 1.442695
    %v4801 = vpow.pop %v4800
    %v4802 = vmul.f32 %v4798, 1.442695
    %v4803 = vpow.pop %v4802
    %v4804 = vmul.f32 %v4799, 1.442695
    %v4805 = vpow.pop %v4804
    %v4806 = vadd.f32 %v4801, 1.0
    %v4807 = vadd.f32 %v4803, 1.0
    %v4808 = vadd.f32 %v4805, 1.0
    %v4809 = vrcp.pop %v4806
    %v4810 = vmul.f32 1.0, %v4809
    %v4811 = vrcp.pop %v4807
    %v4812 = vmul.f32 1.0, %v4811
    %v4813 = vrcp.pop %v4808
    %v4814 = vmul.f32 1.0, %v4813
    %v4815 = vadd.f32 %v4760, %v2349
    %v4816 = vadd.f32 %v4763, %v2349
    %v4817 = vadd.f32 %v4768, %v2349
    %v4818 = vmul.f32 %v4789, %v4815
    %v4819 = vmul.f32 %v4791, %v4816
    %v4820 = vmul.f32 %v4793, %v4817
    %v4821 = vadd.f32 %v4665, %v4818
    %v4822 = vadd.f32 %v4668, %v4819
    %v4823 = vadd.f32 %v4671, %v4820
    %v4824 = vtanh.pop %v4821
    %v4825 = vtanh.pop %v4822
    %v4826 = vtanh.pop %v4823
    %v4827 = vsub.f32 1.0, %v4810
    %v4828 = vsub.f32 1.0, %v4812
    %v4829 = vsub.f32 1.0, %v4814
    %v4830 = vmul.f32 %v4827, %v4824
    %v4831 = vmul.f32 %v4828, %v4825
    %v4832 = vmul.f32 %v4829, %v4826
    %v4833 = vmul.f32 %v4810, %v4660
    %v4834 = vmul.f32 %v4812, %v4661
    %v4835 = vmul.f32 %v4814, %v4662
    %v4836 = vadd.f32 %v4830, %v4833
    %v4837 = vadd.f32 %v4831, %v4834
    %v4838 = vadd.f32 %v4832, %v4835
    %v4839 = vld [vmem:[#allocation2 + $0x438] sm:$0xff]
    %v4840 = vld [vmem:[#allocation2 + $0x440] sm:$0xff]
    %v4841 = vld [vmem:[#allocation2 + $0x448] sm:$0xff]
    %v4842 = vld [vmem:[#allocation2 + $0x450] sm:$0xff]
    %v4843 = vld [vmem:[#allocation2 + $0x458] sm:$0xff]
    %v4844 = vld [vmem:[#allocation2 + $0x460] sm:$0xff]
    %v4845 = vld [vmem:[#allocation2 + $0x468] sm:$0xff]
    %v4846 = vld [vmem:[#allocation2 + $0x470] sm:$0xff]
    %v4847 = vld [vmem:[#allocation2 + $0x478] sm:$0xff]
    %v4848 = vpack.c.bf16 %v4837, %v4836
    %v4849 = vpack.c.bf16 %v4838, %v4838
    %4850 = vmatprep.subr.bf16.mxu0 %v2157
    %4851 = vmatpush1.bf16.msra.mxu0 %v2156
    %4852 = vmatprep.subr.bf16.mxu0 %v2160
    %4853 = vmatpush1.bf16.msra.mxu0 %v2159
    %4854 = vmatprep.subr.bf16.mxu0 %v2163
    %4855 = vmatpush1.bf16.msra.mxu0 %v2162
    %4856 = vmatprep.subr.bf16.mxu0 %v2166
    %4857 = vmatpush1.bf16.msra.mxu0 %v2165
    %4858 = vmatprep.subr.bf16.mxu0 %v2169
    %4859 = vmatpush1.bf16.msra.mxu0 %v2168
    %4860 = vmatprep.subr.bf16.mxu0 %v2172
    %4861 = vmatpush1.bf16.msra.mxu0 %v2171
    %4862 = vmatprep.subr.bf16.mxu0 %v2175
    %4863 = vmatpush1.bf16.msra.mxu0 %v2174
    %4864 = vmatprep.subr.bf16.mxu0 %v2178
    %4865 = vmatpush1.bf16.msra.mxu0 %v2177
    %4866 = vmatprep.subr.bf16.mxu0 0
    %4867 = vmatpush1.bf16.msra.mxu0 0
    %4868 = vmatprep.subr.bf16.mxu0 0
    %4869 = vmatpush1.bf16.msra.mxu0 0
    %4870 = vmatprep.subr.bf16.mxu0 0
    %4871 = vmatpush1.bf16.msra.mxu0 0
    %4872 = vmatprep.subr.bf16.mxu0 0
    %4873 = vmatpush1.bf16.msra.mxu0 0
    %4874 = vmatprep.subr.bf16.mxu0 0
    %4875 = vmatpush1.bf16.msra.mxu0 0
    %4876 = vmatprep.subr.bf16.mxu0 0
    %4877 = vmatpush1.bf16.msra.mxu0 0
    %4878 = vmatprep.subr.bf16.mxu0 0
    %4879 = vmatpush1.bf16.msra.mxu0 0
    %4880 = vmatprep.subr.bf16.mxu0 0
    %4881 = vmatpush1.bf16.msra.mxu0 0
    %4882 = vmatprep.mubr.bf16.mxu0 0
    %4883 = vmatmul.mubr.bf16.gmra.mrb[0].mxu0 %v4848
    %v4884 = vpop.f32.mrb[0].mxu0
    %v4885 = vadd.f32 0.0, %v4884
    %v4886 = vpop.f32.mrb[0].mxu0
    %v4887 = vadd.f32 0.0, %v4886
    %v4888 = vpop.f32.mrb[0].mxu0
    %v4889 = vadd.f32 0.0, %v4888
    %v4890 = vpop.f32.mrb[0].mxu0
    %v4891 = vadd.f32 0.0, %v4890
    %4892 = vmatprep.mubr.bf16.mxu0 0
    %4893 = vmatmul.mubr.bf16.gmra.mrb[0].mxu0 %v4849
    %v4894 = vpop.f32.mrb[0].mxu0
    %v4895 = vadd.f32 0.0, %v4894
    %v4896 = vpop.f32.mrb[0].mxu0
    %v4897 = vadd.f32 0.0, %v4896
    %v4898 = vpop.f32.mrb[0].mxu0
    %v4899 = vpop.f32.mrb[0].mxu0
    %4900 = vdwg.mxu0
    %4901 = vmatprep.subr.bf16.mxu0 0
    %4902 = vmatpush1.bf16.msra.mxu0 %v2158
    %4903 = vmatprep.subr.bf16.mxu0 0
    %4904 = vmatpush1.bf16.msra.mxu0 %v2161
    %4905 = vmatprep.subr.bf16.mxu0 0
    %4906 = vmatpush1.bf16.msra.mxu0 %v2164
    %4907 = vmatprep.subr.bf16.mxu0 0
    %4908 = vmatpush1.bf16.msra.mxu0 %v2167
    %4909 = vmatprep.subr.bf16.mxu0 0
    %4910 = vmatpush1.bf16.msra.mxu0 %v2170
    %4911 = vmatprep.subr.bf16.mxu0 0
    %4912 = vmatpush1.bf16.msra.mxu0 %v2173
    %4913 = vmatprep.subr.bf16.mxu0 0
    %4914 = vmatpush1.bf16.msra.mxu0 %v2176
    %4915 = vmatprep.subr.bf16.mxu0 0
    %4916 = vmatpush1.bf16.msra.mxu0 %v2179
    %4917 = vmatprep.subr.bf16.mxu0 0
    %4918 = vmatpush1.bf16.msra.mxu0 0
    %4919 = vmatprep.subr.bf16.mxu0 0
    %4920 = vmatpush1.bf16.msra.mxu0 0
    %4921 = vmatprep.subr.bf16.mxu0 0
    %4922 = vmatpush1.bf16.msra.mxu0 0
    %4923 = vmatprep.subr.bf16.mxu0 0
    %4924 = vmatpush1.bf16.msra.mxu0 0
    %4925 = vmatprep.subr.bf16.mxu0 0
    %4926 = vmatpush1.bf16.msra.mxu0 0
    %4927 = vmatprep.subr.bf16.mxu0 0
    %4928 = vmatpush1.bf16.msra.mxu0 0
    %4929 = vmatprep.subr.bf16.mxu0 0
    %4930 = vmatpush1.bf16.msra.mxu0 0
    %4931 = vmatprep.subr.bf16.mxu0 0
    %4932 = vmatpush1.bf16.msra.mxu0 0
    %4933 = vmatprep.mubr.bf16.mxu0 0
    %4934 = vmatmul.mubr.bf16.gmra.mrb[0].mxu0 %v4848
    %v4935 = vpop.f32.mrb[0].mxu0
    %v4936 = vadd.f32 0.0, %v4935
    %v4937 = vpop.f32.mrb[0].mxu0
    %v4938 = vpop.f32.mrb[0].mxu0
    %v4939 = vadd.f32 0.0, %v4938
    %v4940 = vpop.f32.mrb[0].mxu0
    %4941 = vmatprep.mubr.bf16.mxu0 0
    %4942 = vmatmul.mubr.bf16.gmra.mrb[0].mxu0 %v4849
    %v4943 = vpop.f32.mrb[0].mxu0
    %v4944 = vadd.f32 0.0, %v4943
    %v4945 = vpop.f32.mrb[0].mxu0
    %v4946 = vpop.f32.mrb[0].mxu0
    %v4947 = vpop.f32.mrb[0].mxu0
    %4948 = vdwg.mxu0
    %v4949 = vadd.f32 %v4839, %v4885
    %v4950 = vadd.f32 %v4842, %v4889
    %v4951 = vadd.f32 %v4845, %v4895
    %v4952 = vxor.u32 %v4949, 2147483648
    %v4953 = vxor.u32 %v4950, 2147483648
    %v4954 = vxor.u32 %v4951, 2147483648
    %v4955 = vmul.f32 %v4952, 1.442695
    %v4956 = vpow.pop %v4955
    %v4957 = vmul.f32 %v4953, 1.442695
    %v4958 = vpow.pop %v4957
    %v4959 = vmul.f32 %v4954, 1.442695
    %v4960 = vpow.pop %v4959
    %v4961 = vadd.f32 %v4956, 1.0
    %v4962 = vadd.f32 %v4958, 1.0
    %v4963 = vadd.f32 %v4960, 1.0
    %v4964 = vrcp.pop %v4961
    %v4965 = vmul.f32 1.0, %v4964
    %v4966 = vrcp.pop %v4962
    %v4967 = vmul.f32 1.0, %v4966
    %v4968 = vrcp.pop %v4963
    %v4969 = vmul.f32 1.0, %v4968
    %v4970 = vadd.f32 %v4840, %v4887
    %v4971 = vadd.f32 %v4843, %v4891
    %v4972 = vadd.f32 %v4846, %v4897
    %v4973 = vxor.u32 %v4970, 2147483648
    %v4974 = vxor.u32 %v4971, 2147483648
    %v4975 = vxor.u32 %v4972, 2147483648
    %v4976 = vmul.f32 %v4973, 1.442695
    %v4977 = vpow.pop %v4976
    %v4978 = vmul.f32 %v4974, 1.442695
    %v4979 = vpow.pop %v4978
    %v4980 = vmul.f32 %v4975, 1.442695
    %v4981 = vpow.pop %v4980
    %v4982 = vadd.f32 %v4977, 1.0
    %v4983 = vadd.f32 %v4979, 1.0
    %v4984 = vadd.f32 %v4981, 1.0
    %v4985 = vrcp.pop %v4982
    %v4986 = vmul.f32 1.0, %v4985
    %v4987 = vrcp.pop %v4983
    %v4988 = vmul.f32 1.0, %v4987
    %v4989 = vrcp.pop %v4984
    %v4990 = vmul.f32 1.0, %v4989
    %v4991 = vadd.f32 %v4936, %v2349
    %v4992 = vadd.f32 %v4939, %v2349
    %v4993 = vadd.f32 %v4944, %v2349
    %v4994 = vmul.f32 %v4965, %v4991
    %v4995 = vmul.f32 %v4967, %v4992
    %v4996 = vmul.f32 %v4969, %v4993
    %v4997 = vadd.f32 %v4841, %v4994
    %v4998 = vadd.f32 %v4844, %v4995
    %v4999 = vadd.f32 %v4847, %v4996
    %v5000 = vtanh.pop %v4997
    %v5001 = vtanh.pop %v4998
    %v5002 = vtanh.pop %v4999
    %v5003 = vsub.f32 1.0, %v4986
    %v5004 = vsub.f32 1.0, %v4988
    %v5005 = vsub.f32 1.0, %v4990
    %v5006 = vmul.f32 %v5003, %v5000
    %v5007 = vmul.f32 %v5004, %v5001
    %v5008 = vmul.f32 %v5005, %v5002
    %v5009 = vmul.f32 %v4986, %v4836
    %v5010 = vmul.f32 %v4988, %v4837
    %v5011 = vmul.f32 %v4990, %v4838
    %v5012 = vadd.f32 %v5006, %v5009
    %v5013 = vadd.f32 %v5007, %v5010
    %v5014 = vadd.f32 %v5008, %v5011
    %v5015 = vld [vmem:[#allocation2 + $0x480] sm:$0xff]
    %v5016 = vld [vmem:[#allocation2 + $0x488] sm:$0xff]
    %v5017 = vld [vmem:[#allocation2 + $0x490] sm:$0xff]
    %v5018 = vld [vmem:[#allocation2 + $0x498] sm:$0xff]
    %v5019 = vld [vmem:[#allocation2 + $0x4a0] sm:$0xff]
    %v5020 = vld [vmem:[#allocation2 + $0x4a8] sm:$0xff]
    %v5021 = vld [vmem:[#allocation2 + $0x4b0] sm:$0xff]
    %v5022 = vld [vmem:[#allocation2 + $0x4b8] sm:$0xff]
    %v5023 = vld [vmem:[#allocation2 + $0x4c0] sm:$0xff]
    %v5024 = vpack.c.bf16 %v5013, %v5012
    %v5025 = vpack.c.bf16 %v5014, %v5014
    %5026 = vmatprep.subr.bf16.mxu0 %v2157
    %5027 = vmatpush1.bf16.msra.mxu0 %v2156
    %5028 = vmatprep.subr.bf16.mxu0 %v2160
    %5029 = vmatpush1.bf16.msra.mxu0 %v2159
    %5030 = vmatprep.subr.bf16.mxu0 %v2163
    %5031 = vmatpush1.bf16.msra.mxu0 %v2162
    %5032 = vmatprep.subr.bf16.mxu0 %v2166
    %5033 = vmatpush1.bf16.msra.mxu0 %v2165
    %5034 = vmatprep.subr.bf16.mxu0 %v2169
    %5035 = vmatpush1.bf16.msra.mxu0 %v2168
    %5036 = vmatprep.subr.bf16.mxu0 %v2172
    %5037 = vmatpush1.bf16.msra.mxu0 %v2171
    %5038 = vmatprep.subr.bf16.mxu0 %v2175
    %5039 = vmatpush1.bf16.msra.mxu0 %v2174
    %5040 = vmatprep.subr.bf16.mxu0 %v2178
    %5041 = vmatpush1.bf16.msra.mxu0 %v2177
    %5042 = vmatprep.subr.bf16.mxu0 0
    %5043 = vmatpush1.bf16.msra.mxu0 0
    %5044 = vmatprep.subr.bf16.mxu0 0
    %5045 = vmatpush1.bf16.msra.mxu0 0
    %5046 = vmatprep.subr.bf16.mxu0 0
    %5047 = vmatpush1.bf16.msra.mxu0 0
    %5048 = vmatprep.subr.bf16.mxu0 0
    %5049 = vmatpush1.bf16.msra.mxu0 0
    %5050 = vmatprep.subr.bf16.mxu0 0
    %5051 = vmatpush1.bf16.msra.mxu0 0
    %5052 = vmatprep.subr.bf16.mxu0 0
    %5053 = vmatpush1.bf16.msra.mxu0 0
    %5054 = vmatprep.subr.bf16.mxu0 0
    %5055 = vmatpush1.bf16.msra.mxu0 0
    %5056 = vmatprep.subr.bf16.mxu0 0
    %5057 = vmatpush1.bf16.msra.mxu0 0
    %5058 = vmatprep.mubr.bf16.mxu0 0
    %5059 = vmatmul.mubr.bf16.gmra.mrb[0].mxu0 %v5024
    %v5060 = vpop.f32.mrb[0].mxu0
    %v5061 = vadd.f32 0.0, %v5060
    %v5062 = vpop.f32.mrb[0].mxu0
    %v5063 = vadd.f32 0.0, %v5062
    %v5064 = vpop.f32.mrb[0].mxu0
    %v5065 = vadd.f32 0.0, %v5064
    %v5066 = vpop.f32.mrb[0].mxu0
    %v5067 = vadd.f32 0.0, %v5066
    %5068 = vmatprep.mubr.bf16.mxu0 0
    %5069 = vmatmul.mubr.bf16.gmra.mrb[0].mxu0 %v5025
    %v5070 = vpop.f32.mrb[0].mxu0
    %v5071 = vadd.f32 0.0, %v5070
    %v5072 = vpop.f32.mrb[0].mxu0
    %v5073 = vadd.f32 0.0, %v5072
    %v5074 = vpop.f32.mrb[0].mxu0
    %v5075 = vpop.f32.mrb[0].mxu0
    %5076 = vdwg.mxu0
    %5077 = vmatprep.subr.bf16.mxu0 0
    %5078 = vmatpush1.bf16.msra.mxu0 %v2158
    %5079 = vmatprep.subr.bf16.mxu0 0
    %5080 = vmatpush1.bf16.msra.mxu0 %v2161
    %5081 = vmatprep.subr.bf16.mxu0 0
    %5082 = vmatpush1.bf16.msra.mxu0 %v2164
    %5083 = vmatprep.subr.bf16.mxu0 0
    %5084 = vmatpush1.bf16.msra.mxu0 %v2167
    %5085 = vmatprep.subr.bf16.mxu0 0
    %5086 = vmatpush1.bf16.msra.mxu0 %v2170
    %5087 = vmatprep.subr.bf16.mxu0 0
    %5088 = vmatpush1.bf16.msra.mxu0 %v2173
    %5089 = vmatprep.subr.bf16.mxu0 0
    %5090 = vmatpush1.bf16.msra.mxu0 %v2176
    %5091 = vmatprep.subr.bf16.mxu0 0
    %5092 = vmatpush1.bf16.msra.mxu0 %v2179
    %5093 = vmatprep.subr.bf16.mxu0 0
    %5094 = vmatpush1.bf16.msra.mxu0 0
    %5095 = vmatprep.subr.bf16.mxu0 0
    %5096 = vmatpush1.bf16.msra.mxu0 0
    %5097 = vmatprep.subr.bf16.mxu0 0
    %5098 = vmatpush1.bf16.msra.mxu0 0
    %5099 = vmatprep.subr.bf16.mxu0 0
    %5100 = vmatpush1.bf16.msra.mxu0 0
    %5101 = vmatprep.subr.bf16.mxu0 0
    %5102 = vmatpush1.bf16.msra.mxu0 0
    %5103 = vmatprep.subr.bf16.mxu0 0
    %5104 = vmatpush1.bf16.msra.mxu0 0
    %5105 = vmatprep.subr.bf16.mxu0 0
    %5106 = vmatpush1.bf16.msra.mxu0 0
    %5107 = vmatprep.subr.bf16.mxu0 0
    %5108 = vmatpush1.bf16.msra.mxu0 0
    %5109 = vmatprep.mubr.bf16.mxu0 0
    %5110 = vmatmul.mubr.bf16.gmra.mrb[0].mxu0 %v5024
    %v5111 = vpop.f32.mrb[0].mxu0
    %v5112 = vadd.f32 0.0, %v5111
    %v5113 = vpop.f32.mrb[0].mxu0
    %v5114 = vpop.f32.mrb[0].mxu0
    %v5115 = vadd.f32 0.0, %v5114
    %v5116 = vpop.f32.mrb[0].mxu0
    %5117 = vmatprep.mubr.bf16.mxu0 0
    %5118 = vmatmul.mubr.bf16.gmra.mrb[0].mxu0 %v5025
    %v5119 = vpop.f32.mrb[0].mxu0
    %v5120 = vadd.f32 0.0, %v5119
    %v5121 = vpop.f32.mrb[0].mxu0
    %v5122 = vpop.f32.mrb[0].mxu0
    %v5123 = vpop.f32.mrb[0].mxu0
    %5124 = vdwg.mxu0
    %v5125 = vadd.f32 %v5015, %v5061
    %v5126 = vadd.f32 %v5018, %v5065
    %v5127 = vadd.f32 %v5021, %v5071
    %v5128 = vxor.u32 %v5125, 2147483648
    %v5129 = vxor.u32 %v5126, 2147483648
    %v5130 = vxor.u32 %v5127, 2147483648
    %v5131 = vmul.f32 %v5128, 1.442695
    %v5132 = vpow.pop %v5131
    %v5133 = vmul.f32 %v5129, 1.442695
    %v5134 = vpow.pop %v5133
    %v5135 = vmul.f32 %v5130, 1.442695
    %v5136 = vpow.pop %v5135
    %v5137 = vadd.f32 %v5132, 1.0
    %v5138 = vadd.f32 %v5134, 1.0
    %v5139 = vadd.f32 %v5136, 1.0
    %v5140 = vrcp.pop %v5137
    %v5141 = vmul.f32 1.0, %v5140
    %v5142 = vrcp.pop %v5138
    %v5143 = vmul.f32 1.0, %v5142
    %v5144 = vrcp.pop %v5139
    %v5145 = vmul.f32 1.0, %v5144
    %v5146 = vadd.f32 %v5016, %v5063
    %v5147 = vadd.f32 %v5019, %v5067
    %v5148 = vadd.f32 %v5022, %v5073
    %v5149 = vxor.u32 %v5146, 2147483648
    %v5150 = vxor.u32 %v5147, 2147483648
    %v5151 = vxor.u32 %v5148, 2147483648
    %v5152 = vmul.f32 %v5149, 1.442695
    %v5153 = vpow.pop %v5152
    %v5154 = vmul.f32 %v5150, 1.442695
    %v5155 = vpow.pop %v5154
    %v5156 = vmul.f32 %v5151, 1.442695
    %v5157 = vpow.pop %v5156
    %v5158 = vadd.f32 %v5153, 1.0
    %v5159 = vadd.f32 %v5155, 1.0
    %v5160 = vadd.f32 %v5157, 1.0
    %v5161 = vrcp.pop %v5158
    %v5162 = vmul.f32 1.0, %v5161
    %v5163 = vrcp.pop %v5159
    %v5164 = vmul.f32 1.0, %v5163
    %v5165 = vrcp.pop %v5160
    %v5166 = vmul.f32 1.0, %v5165
    %v5167 = vadd.f32 %v5112, %v2349
    %v5168 = vadd.f32 %v5115, %v2349
    %v5169 = vadd.f32 %v5120, %v2349
    %v5170 = vmul.f32 %v5141, %v5167
    %v5171 = vmul.f32 %v5143, %v5168
    %v5172 = vmul.f32 %v5145, %v5169
    %v5173 = vadd.f32 %v5017, %v5170
    %v5174 = vadd.f32 %v5020, %v5171
    %v5175 = vadd.f32 %v5023, %v5172
    %v5176 = vtanh.pop %v5173
    %v5177 = vtanh.pop %v5174
    %v5178 = vtanh.pop %v5175
    %v5179 = vsub.f32 1.0, %v5162
    %v5180 = vsub.f32 1.0, %v5164
    %v5181 = vsub.f32 1.0, %v5166
    %v5182 = vmul.f32 %v5179, %v5176
    %v5183 = vmul.f32 %v5180, %v5177
    %v5184 = vmul.f32 %v5181, %v5178
    %v5185 = vmul.f32 %v5162, %v5012
    %v5186 = vmul.f32 %v5164, %v5013
    %v5187 = vmul.f32 %v5166, %v5014
    %v5188 = vadd.f32 %v5182, %v5185
    %v5189 = vadd.f32 %v5183, %v5186
    %v5190 = vadd.f32 %v5184, %v5187
    %v5191 = vld [vmem:[#allocation2 + $0x4c8] sm:$0xff]
    %v5192 = vld [vmem:[#allocation2 + $0x4d0] sm:$0xff]
    %v5193 = vld [vmem:[#allocation2 + $0x4d8] sm:$0xff]
    %v5194 = vld [vmem:[#allocation2 + $0x4e0] sm:$0xff]
    %v5195 = vld [vmem:[#allocation2 + $0x4e8] sm:$0xff]
    %v5196 = vld [vmem:[#allocation2 + $0x4f0] sm:$0xff]
    %v5197 = vld [vmem:[#allocation2 + $0x4f8] sm:$0xff]
    %v5198 = vld [vmem:[#allocation2 + $0x500] sm:$0xff]
    %v5199 = vld [vmem:[#allocation2 + $0x508] sm:$0xff]
    %v5200 = vpack.c.bf16 %v5189, %v5188
    %v5201 = vpack.c.bf16 %v5190, %v5190
    %5202 = vmatprep.subr.bf16.mxu0 %v2157
    %5203 = vmatpush1.bf16.msra.mxu0 %v2156
    %5204 = vmatprep.subr.bf16.mxu0 %v2160
    %5205 = vmatpush1.bf16.msra.mxu0 %v2159
    %5206 = vmatprep.subr.bf16.mxu0 %v2163
    %5207 = vmatpush1.bf16.msra.mxu0 %v2162
    %5208 = vmatprep.subr.bf16.mxu0 %v2166
    %5209 = vmatpush1.bf16.msra.mxu0 %v2165
    %5210 = vmatprep.subr.bf16.mxu0 %v2169
    %5211 = vmatpush1.bf16.msra.mxu0 %v2168
    %5212 = vmatprep.subr.bf16.mxu0 %v2172
    %5213 = vmatpush1.bf16.msra.mxu0 %v2171
    %5214 = vmatprep.subr.bf16.mxu0 %v2175
    %5215 = vmatpush1.bf16.msra.mxu0 %v2174
    %5216 = vmatprep.subr.bf16.mxu0 %v2178
    %5217 = vmatpush1.bf16.msra.mxu0 %v2177
    %5218 = vmatprep.subr.bf16.mxu0 0
    %5219 = vmatpush1.bf16.msra.mxu0 0
    %5220 = vmatprep.subr.bf16.mxu0 0
    %5221 = vmatpush1.bf16.msra.mxu0 0
    %5222 = vmatprep.subr.bf16.mxu0 0
    %5223 = vmatpush1.bf16.msra.mxu0 0
    %5224 = vmatprep.subr.bf16.mxu0 0
    %5225 = vmatpush1.bf16.msra.mxu0 0
    %5226 = vmatprep.subr.bf16.mxu0 0
    %5227 = vmatpush1.bf16.msra.mxu0 0
    %5228 = vmatprep.subr.bf16.mxu0 0
    %5229 = vmatpush1.bf16.msra.mxu0 0
    %5230 = vmatprep.subr.bf16.mxu0 0
    %5231 = vmatpush1.bf16.msra.mxu0 0
    %5232 = vmatprep.subr.bf16.mxu0 0
    %5233 = vmatpush1.bf16.msra.mxu0 0
    %5234 = vmatprep.mubr.bf16.mxu0 0
    %5235 = vmatmul.mubr.bf16.gmra.mrb[0].mxu0 %v5200
    %v5236 = vpop.f32.mrb[0].mxu0
    %v5237 = vadd.f32 0.0, %v5236
    %v5238 = vpop.f32.mrb[0].mxu0
    %v5239 = vadd.f32 0.0, %v5238
    %v5240 = vpop.f32.mrb[0].mxu0
    %v5241 = vadd.f32 0.0, %v5240
    %v5242 = vpop.f32.mrb[0].mxu0
    %v5243 = vadd.f32 0.0, %v5242
    %5244 = vmatprep.mubr.bf16.mxu0 0
    %5245 = vmatmul.mubr.bf16.gmra.mrb[0].mxu0 %v5201
    %v5246 = vpop.f32.mrb[0].mxu0
    %v5247 = vadd.f32 0.0, %v5246
    %v5248 = vpop.f32.mrb[0].mxu0
    %v5249 = vadd.f32 0.0, %v5248
    %v5250 = vpop.f32.mrb[0].mxu0
    %v5251 = vpop.f32.mrb[0].mxu0
    %5252 = vdwg.mxu0
    %5253 = vmatprep.subr.bf16.mxu0 0
    %5254 = vmatpush1.bf16.msra.mxu0 %v2158
    %5255 = vmatprep.subr.bf16.mxu0 0
    %5256 = vmatpush1.bf16.msra.mxu0 %v2161
    %5257 = vmatprep.subr.bf16.mxu0 0
    %5258 = vmatpush1.bf16.msra.mxu0 %v2164
    %5259 = vmatprep.subr.bf16.mxu0 0
    %5260 = vmatpush1.bf16.msra.mxu0 %v2167
    %5261 = vmatprep.subr.bf16.mxu0 0
    %5262 = vmatpush1.bf16.msra.mxu0 %v2170
    %5263 = vmatprep.subr.bf16.mxu0 0
    %5264 = vmatpush1.bf16.msra.mxu0 %v2173
    %5265 = vmatprep.subr.bf16.mxu0 0
    %5266 = vmatpush1.bf16.msra.mxu0 %v2176
    %5267 = vmatprep.subr.bf16.mxu0 0
    %5268 = vmatpush1.bf16.msra.mxu0 %v2179
    %5269 = vmatprep.subr.bf16.mxu0 0
    %5270 = vmatpush1.bf16.msra.mxu0 0
    %5271 = vmatprep.subr.bf16.mxu0 0
    %5272 = vmatpush1.bf16.msra.mxu0 0
    %5273 = vmatprep.subr.bf16.mxu0 0
    %5274 = vmatpush1.bf16.msra.mxu0 0
    %5275 = vmatprep.subr.bf16.mxu0 0
    %5276 = vmatpush1.bf16.msra.mxu0 0
    %5277 = vmatprep.subr.bf16.mxu0 0
    %5278 = vmatpush1.bf16.msra.mxu0 0
    %5279 = vmatprep.subr.bf16.mxu0 0
    %5280 = vmatpush1.bf16.msra.mxu0 0
    %5281 = vmatprep.subr.bf16.mxu0 0
    %5282 = vmatpush1.bf16.msra.mxu0 0
    %5283 = vmatprep.subr.bf16.mxu0 0
    %5284 = vmatpush1.bf16.msra.mxu0 0
    %5285 = vmatprep.mubr.bf16.mxu0 0
    %5286 = vmatmul.mubr.bf16.gmra.mrb[0].mxu0 %v5200
    %v5287 = vpop.f32.mrb[0].mxu0
    %v5288 = vadd.f32 0.0, %v5287
    %v5289 = vpop.f32.mrb[0].mxu0
    %v5290 = vpop.f32.mrb[0].mxu0
    %v5291 = vadd.f32 0.0, %v5290
    %v5292 = vpop.f32.mrb[0].mxu0
    %5293 = vmatprep.mubr.bf16.mxu0 0
    %5294 = vmatmul.mubr.bf16.gmra.mrb[0].mxu0 %v5201
    %v5295 = vpop.f32.mrb[0].mxu0
    %v5296 = vadd.f32 0.0, %v5295
    %v5297 = vpop.f32.mrb[0].mxu0
    %v5298 = vpop.f32.mrb[0].mxu0
    %v5299 = vpop.f32.mrb[0].mxu0
    %5300 = vdwg.mxu0
    %v5301 = vadd.f32 %v5191, %v5237
    %v5302 = vadd.f32 %v5194, %v5241
    %v5303 = vadd.f32 %v5197, %v5247
    %v5304 = vxor.u32 %v5301, 2147483648
    %v5305 = vxor.u32 %v5302, 2147483648
    %v5306 = vxor.u32 %v5303, 2147483648
    %v5307 = vmul.f32 %v5304, 1.442695
    %v5308 = vpow.pop %v5307
    %v5309 = vmul.f32 %v5305, 1.442695
    %v5310 = vpow.pop %v5309
    %v5311 = vmul.f32 %v5306, 1.442695
    %v5312 = vpow.pop %v5311
    %v5313 = vadd.f32 %v5308, 1.0
    %v5314 = vadd.f32 %v5310, 1.0
    %v5315 = vadd.f32 %v5312, 1.0
    %v5316 = vrcp.pop %v5313
    %v5317 = vmul.f32 1.0, %v5316
    %v5318 = vrcp.pop %v5314
    %v5319 = vmul.f32 1.0, %v5318
    %v5320 = vrcp.pop %v5315
    %v5321 = vmul.f32 1.0, %v5320
    %v5322 = vadd.f32 %v5192, %v5239
    %v5323 = vadd.f32 %v5195, %v5243
    %v5324 = vadd.f32 %v5198, %v5249
    %v5325 = vxor.u32 %v5322, 2147483648
    %v5326 = vxor.u32 %v5323, 2147483648
    %v5327 = vxor.u32 %v5324, 2147483648
    %v5328 = vmul.f32 %v5325, 1.442695
    %v5329 = vpow.pop %v5328
    %v5330 = vmul.f32 %v5326, 1.442695
    %v5331 = vpow.pop %v5330
    %v5332 = vmul.f32 %v5327, 1.442695
    %v5333 = vpow.pop %v5332
    %v5334 = vadd.f32 %v5329, 1.0
    %v5335 = vadd.f32 %v5331, 1.0
    %v5336 = vadd.f32 %v5333, 1.0
    %v5337 = vrcp.pop %v5334
    %v5338 = vmul.f32 1.0, %v5337
    %v5339 = vrcp.pop %v5335
    %v5340 = vmul.f32 1.0, %v5339
    %v5341 = vrcp.pop %v5336
    %v5342 = vmul.f32 1.0, %v5341
    %v5343 = vadd.f32 %v5288, %v2349
    %v5344 = vadd.f32 %v5291, %v2349
    %v5345 = vadd.f32 %v5296, %v2349
    %v5346 = vmul.f32 %v5317, %v5343
    %v5347 = vmul.f32 %v5319, %v5344
    %v5348 = vmul.f32 %v5321, %v5345
    %v5349 = vadd.f32 %v5193, %v5346
    %v5350 = vadd.f32 %v5196, %v5347
    %v5351 = vadd.f32 %v5199, %v5348
    %v5352 = vtanh.pop %v5349
    %v5353 = vtanh.pop %v5350
    %v5354 = vtanh.pop %v5351
    %v5355 = vsub.f32 1.0, %v5338
    %v5356 = vsub.f32 1.0, %v5340
    %v5357 = vsub.f32 1.0, %v5342
    %v5358 = vmul.f32 %v5355, %v5352
    %v5359 = vmul.f32 %v5356, %v5353
    %v5360 = vmul.f32 %v5357, %v5354
    %v5361 = vmul.f32 %v5338, %v5188
    %v5362 = vmul.f32 %v5340, %v5189
    %v5363 = vmul.f32 %v5342, %v5190
    %v5364 = vadd.f32 %v5358, %v5361
    %v5365 = vadd.f32 %v5359, %v5362
    %v5366 = vadd.f32 %v5360, %v5363
    %v5367 = vld [vmem:[#allocation2 + $0x510] sm:$0xff]
    %v5368 = vld [vmem:[#allocation2 + $0x518] sm:$0xff]
    %v5369 = vld [vmem:[#allocation2 + $0x520] sm:$0xff]
    %v5370 = vld [vmem:[#allocation2 + $0x528] sm:$0xff]
    %v5371 = vld [vmem:[#allocation2 + $0x530] sm:$0xff]
    %v5372 = vld [vmem:[#allocation2 + $0x538] sm:$0xff]
    %v5373 = vld [vmem:[#allocation2 + $0x540] sm:$0xff]
    %v5374 = vld [vmem:[#allocation2 + $0x548] sm:$0xff]
    %v5375 = vld [vmem:[#allocation2 + $0x550] sm:$0xff]
    %v5376 = vpack.c.bf16 %v5365, %v5364
    %v5377 = vpack.c.bf16 %v5366, %v5366
    %5378 = vmatprep.subr.bf16.mxu0 %v2157
    %5379 = vmatpush1.bf16.msra.mxu0 %v2156
    %5380 = vmatprep.subr.bf16.mxu0 %v2160
    %5381 = vmatpush1.bf16.msra.mxu0 %v2159
    %5382 = vmatprep.subr.bf16.mxu0 %v2163
    %5383 = vmatpush1.bf16.msra.mxu0 %v2162
    %5384 = vmatprep.subr.bf16.mxu0 %v2166
    %5385 = vmatpush1.bf16.msra.mxu0 %v2165
    %5386 = vmatprep.subr.bf16.mxu0 %v2169
    %5387 = vmatpush1.bf16.msra.mxu0 %v2168
    %5388 = vmatprep.subr.bf16.mxu0 %v2172
    %5389 = vmatpush1.bf16.msra.mxu0 %v2171
    %5390 = vmatprep.subr.bf16.mxu0 %v2175
    %5391 = vmatpush1.bf16.msra.mxu0 %v2174
    %5392 = vmatprep.subr.bf16.mxu0 %v2178
    %5393 = vmatpush1.bf16.msra.mxu0 %v2177
    %5394 = vmatprep.subr.bf16.mxu0 0
    %5395 = vmatpush1.bf16.msra.mxu0 0
    %5396 = vmatprep.subr.bf16.mxu0 0
    %5397 = vmatpush1.bf16.msra.mxu0 0
    %5398 = vmatprep.subr.bf16.mxu0 0
    %5399 = vmatpush1.bf16.msra.mxu0 0
    %5400 = vmatprep.subr.bf16.mxu0 0
    %5401 = vmatpush1.bf16.msra.mxu0 0
    %5402 = vmatprep.subr.bf16.mxu0 0
    %5403 = vmatpush1.bf16.msra.mxu0 0
    %5404 = vmatprep.subr.bf16.mxu0 0
    %5405 = vmatpush1.bf16.msra.mxu0 0
    %5406 = vmatprep.subr.bf16.mxu0 0
    %5407 = vmatpush1.bf16.msra.mxu0 0
    %5408 = vmatprep.subr.bf16.mxu0 0
    %5409 = vmatpush1.bf16.msra.mxu0 0
    %5410 = vmatprep.mubr.bf16.mxu0 0
    %5411 = vmatmul.mubr.bf16.gmra.mrb[0].mxu0 %v5376
    %v5412 = vpop.f32.mrb[0].mxu0
    %v5413 = vadd.f32 0.0, %v5412
    %v5414 = vpop.f32.mrb[0].mxu0
    %v5415 = vadd.f32 0.0, %v5414
    %v5416 = vpop.f32.mrb[0].mxu0
    %v5417 = vadd.f32 0.0, %v5416
    %v5418 = vpop.f32.mrb[0].mxu0
    %v5419 = vadd.f32 0.0, %v5418
    %5420 = vmatprep.mubr.bf16.mxu0 0
    %5421 = vmatmul.mubr.bf16.gmra.mrb[0].mxu0 %v5377
    %v5422 = vpop.f32.mrb[0].mxu0
    %v5423 = vadd.f32 0.0, %v5422
    %v5424 = vpop.f32.mrb[0].mxu0
    %v5425 = vadd.f32 0.0, %v5424
    %v5426 = vpop.f32.mrb[0].mxu0
    %v5427 = vpop.f32.mrb[0].mxu0
    %5428 = vdwg.mxu0
    %5429 = vmatprep.subr.bf16.mxu0 0
    %5430 = vmatpush1.bf16.msra.mxu0 %v2158
    %5431 = vmatprep.subr.bf16.mxu0 0
    %5432 = vmatpush1.bf16.msra.mxu0 %v2161
    %5433 = vmatprep.subr.bf16.mxu0 0
    %5434 = vmatpush1.bf16.msra.mxu0 %v2164
    %5435 = vmatprep.subr.bf16.mxu0 0
    %5436 = vmatpush1.bf16.msra.mxu0 %v2167
    %5437 = vmatprep.subr.bf16.mxu0 0
    %5438 = vmatpush1.bf16.msra.mxu0 %v2170
    %5439 = vmatprep.subr.bf16.mxu0 0
    %5440 = vmatpush1.bf16.msra.mxu0 %v2173
    %5441 = vmatprep.subr.bf16.mxu0 0
    %5442 = vmatpush1.bf16.msra.mxu0 %v2176
    %5443 = vmatprep.subr.bf16.mxu0 0
    %5444 = vmatpush1.bf16.msra.mxu0 %v2179
    %5445 = vmatprep.subr.bf16.mxu0 0
    %5446 = vmatpush1.bf16.msra.mxu0 0
    %5447 = vmatprep.subr.bf16.mxu0 0
    %5448 = vmatpush1.bf16.msra.mxu0 0
    %5449 = vmatprep.subr.bf16.mxu0 0
    %5450 = vmatpush1.bf16.msra.mxu0 0
    %5451 = vmatprep.subr.bf16.mxu0 0
    %5452 = vmatpush1.bf16.msra.mxu0 0
    %5453 = vmatprep.subr.bf16.mxu0 0
    %5454 = vmatpush1.bf16.msra.mxu0 0
    %5455 = vmatprep.subr.bf16.mxu0 0
    %5456 = vmatpush1.bf16.msra.mxu0 0
    %5457 = vmatprep.subr.bf16.mxu0 0
    %5458 = vmatpush1.bf16.msra.mxu0 0
    %5459 = vmatprep.subr.bf16.mxu0 0
    %5460 = vmatpush1.bf16.msra.mxu0 0
    %5461 = vmatprep.mubr.bf16.mxu0 0
    %5462 = vmatmul.mubr.bf16.gmra.mrb[0].mxu0 %v5376
    %v5463 = vpop.f32.mrb[0].mxu0
    %v5464 = vadd.f32 0.0, %v5463
    %v5465 = vpop.f32.mrb[0].mxu0
    %v5466 = vpop.f32.mrb[0].mxu0
    %v5467 = vadd.f32 0.0, %v5466
    %v5468 = vpop.f32.mrb[0].mxu0
    %5469 = vmatprep.mubr.bf16.mxu0 0
    %5470 = vmatmul.mubr.bf16.gmra.mrb[0].mxu0 %v5377
    %v5471 = vpop.f32.mrb[0].mxu0
    %v5472 = vadd.f32 0.0, %v5471
    %v5473 = vpop.f32.mrb[0].mxu0
    %v5474 = vpop.f32.mrb[0].mxu0
    %v5475 = vpop.f32.mrb[0].mxu0
    %5476 = vdwg.mxu0
    %v5477 = vadd.f32 %v5367, %v5413
    %v5478 = vadd.f32 %v5370, %v5417
    %v5479 = vadd.f32 %v5373, %v5423
    %v5480 = vxor.u32 %v5477, 2147483648
    %v5481 = vxor.u32 %v5478, 2147483648
    %v5482 = vxor.u32 %v5479, 2147483648
    %v5483 = vmul.f32 %v5480, 1.442695
    %v5484 = vpow.pop %v5483
    %v5485 = vmul.f32 %v5481, 1.442695
    %v5486 = vpow.pop %v5485
    %v5487 = vmul.f32 %v5482, 1.442695
    %v5488 = vpow.pop %v5487
    %v5489 = vadd.f32 %v5484, 1.0
    %v5490 = vadd.f32 %v5486, 1.0
    %v5491 = vadd.f32 %v5488, 1.0
    %v5492 = vrcp.pop %v5489
    %v5493 = vmul.f32 1.0, %v5492
    %v5494 = vrcp.pop %v5490
    %v5495 = vmul.f32 1.0, %v5494
    %v5496 = vrcp.pop %v5491
    %v5497 = vmul.f32 1.0, %v5496
    %v5498 = vadd.f32 %v5368, %v5415
    %v5499 = vadd.f32 %v5371, %v5419
    %v5500 = vadd.f32 %v5374, %v5425
    %v5501 = vxor.u32 %v5498, 2147483648
    %v5502 = vxor.u32 %v5499, 2147483648
    %v5503 = vxor.u32 %v5500, 2147483648
    %v5504 = vmul.f32 %v5501, 1.442695
    %v5505 = vpow.pop %v5504
    %v5506 = vmul.f32 %v5502, 1.442695
    %v5507 = vpow.pop %v5506
    %v5508 = vmul.f32 %v5503, 1.442695
    %v5509 = vpow.pop %v5508
    %v5510 = vadd.f32 %v5505, 1.0
    %v5511 = vadd.f32 %v5507, 1.0
    %v5512 = vadd.f32 %v5509, 1.0
    %v5513 = vrcp.pop %v5510
    %v5514 = vmul.f32 1.0, %v5513
    %v5515 = vrcp.pop %v5511
    %v5516 = vmul.f32 1.0, %v5515
    %v5517 = vrcp.pop %v5512
    %v5518 = vmul.f32 1.0, %v5517
    %v5519 = vadd.f32 %v5464, %v2349
    %v5520 = vadd.f32 %v5467, %v2349
    %v5521 = vadd.f32 %v5472, %v2349
    %v5522 = vmul.f32 %v5493, %v5519
    %v5523 = vmul.f32 %v5495, %v5520
    %v5524 = vmul.f32 %v5497, %v5521
    %v5525 = vadd.f32 %v5369, %v5522
    %v5526 = vadd.f32 %v5372, %v5523
    %v5527 = vadd.f32 %v5375, %v5524
    %v5528 = vtanh.pop %v5525
    %v5529 = vtanh.pop %v5526
    %v5530 = vtanh.pop %v5527
    %v5531 = vsub.f32 1.0, %v5514
    %v5532 = vsub.f32 1.0, %v5516
    %v5533 = vsub.f32 1.0, %v5518
    %v5534 = vmul.f32 %v5531, %v5528
    %v5535 = vmul.f32 %v5532, %v5529
    %v5536 = vmul.f32 %v5533, %v5530
    %v5537 = vmul.f32 %v5514, %v5364
    %v5538 = vmul.f32 %v5516, %v5365
    %v5539 = vmul.f32 %v5518, %v5366
    %v5540 = vadd.f32 %v5534, %v5537
    %v5541 = vadd.f32 %v5535, %v5538
    %v5542 = vadd.f32 %v5536, %v5539
    %v5543 = vld [vmem:[#allocation2 + $0x558] sm:$0xff]
    %v5544 = vld [vmem:[#allocation2 + $0x560] sm:$0xff]
    %v5545 = vld [vmem:[#allocation2 + $0x568] sm:$0xff]
    %v5546 = vld [vmem:[#allocation2 + $0x570] sm:$0xff]
    %v5547 = vld [vmem:[#allocation2 + $0x578] sm:$0xff]
    %v5548 = vld [vmem:[#allocation2 + $0x580] sm:$0xff]
    %v5549 = vld [vmem:[#allocation2 + $0x588] sm:$0xff]
    %v5550 = vld [vmem:[#allocation2 + $0x590] sm:$0xff]
    %v5551 = vld [vmem:[#allocation2 + $0x598] sm:$0xff]
    %v5552 = vpack.c.bf16 %v5541, %v5540
    %v5553 = vpack.c.bf16 %v5542, %v5542
    %5554 = vmatprep.subr.bf16.mxu0 %v2157
    %5555 = vmatpush1.bf16.msra.mxu0 %v2156
    %5556 = vmatprep.subr.bf16.mxu0 %v2160
    %5557 = vmatpush1.bf16.msra.mxu0 %v2159
    %5558 = vmatprep.subr.bf16.mxu0 %v2163
    %5559 = vmatpush1.bf16.msra.mxu0 %v2162
    %5560 = vmatprep.subr.bf16.mxu0 %v2166
    %5561 = vmatpush1.bf16.msra.mxu0 %v2165
    %5562 = vmatprep.subr.bf16.mxu0 %v2169
    %5563 = vmatpush1.bf16.msra.mxu0 %v2168
    %5564 = vmatprep.subr.bf16.mxu0 %v2172
    %5565 = vmatpush1.bf16.msra.mxu0 %v2171
    %5566 = vmatprep.subr.bf16.mxu0 %v2175
    %5567 = vmatpush1.bf16.msra.mxu0 %v2174
    %5568 = vmatprep.subr.bf16.mxu0 %v2178
    %5569 = vmatpush1.bf16.msra.mxu0 %v2177
    %5570 = vmatprep.subr.bf16.mxu0 0
    %5571 = vmatpush1.bf16.msra.mxu0 0
    %5572 = vmatprep.subr.bf16.mxu0 0
    %5573 = vmatpush1.bf16.msra.mxu0 0
    %5574 = vmatprep.subr.bf16.mxu0 0
    %5575 = vmatpush1.bf16.msra.mxu0 0
    %5576 = vmatprep.subr.bf16.mxu0 0
    %5577 = vmatpush1.bf16.msra.mxu0 0
    %5578 = vmatprep.subr.bf16.mxu0 0
    %5579 = vmatpush1.bf16.msra.mxu0 0
    %5580 = vmatprep.subr.bf16.mxu0 0
    %5581 = vmatpush1.bf16.msra.mxu0 0
    %5582 = vmatprep.subr.bf16.mxu0 0
    %5583 = vmatpush1.bf16.msra.mxu0 0
    %5584 = vmatprep.subr.bf16.mxu0 0
    %5585 = vmatpush1.bf16.msra.mxu0 0
    %5586 = vmatprep.mubr.bf16.mxu0 0
    %5587 = vmatmul.mubr.bf16.gmra.mrb[0].mxu0 %v5552
    %v5588 = vpop.f32.mrb[0].mxu0
    %v5589 = vadd.f32 0.0, %v5588
    %v5590 = vpop.f32.mrb[0].mxu0
    %v5591 = vadd.f32 0.0, %v5590
    %v5592 = vpop.f32.mrb[0].mxu0
    %v5593 = vadd.f32 0.0, %v5592
    %v5594 = vpop.f32.mrb[0].mxu0
    %v5595 = vadd.f32 0.0, %v5594
    %5596 = vmatprep.mubr.bf16.mxu0 0
    %5597 = vmatmul.mubr.bf16.gmra.mrb[0].mxu0 %v5553
    %v5598 = vpop.f32.mrb[0].mxu0
    %v5599 = vadd.f32 0.0, %v5598
    %v5600 = vpop.f32.mrb[0].mxu0
    %v5601 = vadd.f32 0.0, %v5600
    %v5602 = vpop.f32.mrb[0].mxu0
    %v5603 = vpop.f32.mrb[0].mxu0
    %5604 = vdwg.mxu0
    %5605 = vmatprep.subr.bf16.mxu0 0
    %5606 = vmatpush1.bf16.msra.mxu0 %v2158
    %5607 = vmatprep.subr.bf16.mxu0 0
    %5608 = vmatpush1.bf16.msra.mxu0 %v2161
    %5609 = vmatprep.subr.bf16.mxu0 0
    %5610 = vmatpush1.bf16.msra.mxu0 %v2164
    %5611 = vmatprep.subr.bf16.mxu0 0
    %5612 = vmatpush1.bf16.msra.mxu0 %v2167
    %5613 = vmatprep.subr.bf16.mxu0 0
    %5614 = vmatpush1.bf16.msra.mxu0 %v2170
    %5615 = vmatprep.subr.bf16.mxu0 0
    %5616 = vmatpush1.bf16.msra.mxu0 %v2173
    %5617 = vmatprep.subr.bf16.mxu0 0
    %5618 = vmatpush1.bf16.msra.mxu0 %v2176
    %5619 = vmatprep.subr.bf16.mxu0 0
    %5620 = vmatpush1.bf16.msra.mxu0 %v2179
    %5621 = vmatprep.subr.bf16.mxu0 0
    %5622 = vmatpush1.bf16.msra.mxu0 0
    %5623 = vmatprep.subr.bf16.mxu0 0
    %5624 = vmatpush1.bf16.msra.mxu0 0
    %5625 = vmatprep.subr.bf16.mxu0 0
    %5626 = vmatpush1.bf16.msra.mxu0 0
    %5627 = vmatprep.subr.bf16.mxu0 0
    %5628 = vmatpush1.bf16.msra.mxu0 0
    %5629 = vmatprep.subr.bf16.mxu0 0
    %5630 = vmatpush1.bf16.msra.mxu0 0
    %5631 = vmatprep.subr.bf16.mxu0 0
    %5632 = vmatpush1.bf16.msra.mxu0 0
    %5633 = vmatprep.subr.bf16.mxu0 0
    %5634 = vmatpush1.bf16.msra.mxu0 0
    %5635 = vmatprep.subr.bf16.mxu0 0
    %5636 = vmatpush1.bf16.msra.mxu0 0
    %5637 = vmatprep.mubr.bf16.mxu0 0
    %5638 = vmatmul.mubr.bf16.gmra.mrb[0].mxu0 %v5552
    %v5639 = vpop.f32.mrb[0].mxu0
    %v5640 = vadd.f32 0.0, %v5639
    %v5641 = vpop.f32.mrb[0].mxu0
    %v5642 = vpop.f32.mrb[0].mxu0
    %v5643 = vadd.f32 0.0, %v5642
    %v5644 = vpop.f32.mrb[0].mxu0
    %5645 = vmatprep.mubr.bf16.mxu0 0
    %5646 = vmatmul.mubr.bf16.gmra.mrb[0].mxu0 %v5553
    %v5647 = vpop.f32.mrb[0].mxu0
    %v5648 = vadd.f32 0.0, %v5647
    %v5649 = vpop.f32.mrb[0].mxu0
    %v5650 = vpop.f32.mrb[0].mxu0
    %v5651 = vpop.f32.mrb[0].mxu0
    %5652 = vdwg.mxu0
    %v5653 = vadd.f32 %v5543, %v5589
    %v5654 = vadd.f32 %v5546, %v5593
    %v5655 = vadd.f32 %v5549, %v5599
    %v5656 = vxor.u32 %v5653, 2147483648
    %v5657 = vxor.u32 %v5654, 2147483648
    %v5658 = vxor.u32 %v5655, 2147483648
    %v5659 = vmul.f32 %v5656, 1.442695
    %v5660 = vpow.pop %v5659
    %v5661 = vmul.f32 %v5657, 1.442695
    %v5662 = vpow.pop %v5661
    %v5663 = vmul.f32 %v5658, 1.442695
    %v5664 = vpow.pop %v5663
    %v5665 = vadd.f32 %v5660, 1.0
    %v5666 = vadd.f32 %v5662, 1.0
    %v5667 = vadd.f32 %v5664, 1.0
    %v5668 = vrcp.pop %v5665
    %v5669 = vmul.f32 1.0, %v5668
    %v5670 = vrcp.pop %v5666
    %v5671 = vmul.f32 1.0, %v5670
    %v5672 = vrcp.pop %v5667
    %v5673 = vmul.f32 1.0, %v5672
    %v5674 = vadd.f32 %v5544, %v5591
    %v5675 = vadd.f32 %v5547, %v5595
    %v5676 = vadd.f32 %v5550, %v5601
    %v5677 = vxor.u32 %v5674, 2147483648
    %v5678 = vxor.u32 %v5675, 2147483648
    %v5679 = vxor.u32 %v5676, 2147483648
    %v5680 = vmul.f32 %v5677, 1.442695
    %v5681 = vpow.pop %v5680
    %v5682 = vmul.f32 %v5678, 1.442695
    %v5683 = vpow.pop %v5682
    %v5684 = vmul.f32 %v5679, 1.442695
    %v5685 = vpow.pop %v5684
    %v5686 = vadd.f32 %v5681, 1.0
    %v5687 = vadd.f32 %v5683, 1.0
    %v5688 = vadd.f32 %v5685, 1.0
    %v5689 = vrcp.pop %v5686
    %v5690 = vmul.f32 1.0, %v5689
    %v5691 = vrcp.pop %v5687
    %v5692 = vmul.f32 1.0, %v5691
    %v5693 = vrcp.pop %v5688
    %v5694 = vmul.f32 1.0, %v5693
    %v5695 = vadd.f32 %v5640, %v2349
    %v5696 = vadd.f32 %v5643, %v2349
    %v5697 = vadd.f32 %v5648, %v2349
    %v5698 = vmul.f32 %v5669, %v5695
    %v5699 = vmul.f32 %v5671, %v5696
    %v5700 = vmul.f32 %v5673, %v5697
    %v5701 = vadd.f32 %v5545, %v5698
    %v5702 = vadd.f32 %v5548, %v5699
    %v5703 = vadd.f32 %v5551, %v5700
    %v5704 = vtanh.pop %v5701
    %v5705 = vtanh.pop %v5702
    %v5706 = vtanh.pop %v5703
    %v5707 = vsub.f32 1.0, %v5690
    %v5708 = vsub.f32 1.0, %v5692
    %v5709 = vsub.f32 1.0, %v5694
    %v5710 = vmul.f32 %v5707, %v5704
    %v5711 = vmul.f32 %v5708, %v5705
    %v5712 = vmul.f32 %v5709, %v5706
    %v5713 = vmul.f32 %v5690, %v5540
    %v5714 = vmul.f32 %v5692, %v5541
    %v5715 = vmul.f32 %v5694, %v5542
    %v5716 = vadd.f32 %v5710, %v5713
    %v5717 = vadd.f32 %v5711, %v5714
    %v5718 = vadd.f32 %v5712, %v5715
    %v5719 = vld [vmem:[#allocation2 + $0x5a0] sm:$0xff]
    %v5720 = vld [vmem:[#allocation2 + $0x5a8] sm:$0xff]
    %v5721 = vld [vmem:[#allocation2 + $0x5b0] sm:$0xff]
    %v5722 = vld [vmem:[#allocation2 + $0x5b8] sm:$0xff]
    %v5723 = vld [vmem:[#allocation2 + $0x5c0] sm:$0xff]
    %v5724 = vld [vmem:[#allocation2 + $0x5c8] sm:$0xff]
    %v5725 = vld [vmem:[#allocation2 + $0x5d0] sm:$0xff]
    %v5726 = vld [vmem:[#allocation2 + $0x5d8] sm:$0xff]
    %v5727 = vld [vmem:[#allocation2 + $0x5e0] sm:$0xff]
    %v5728 = vpack.c.bf16 %v5717, %v5716
    %v5729 = vpack.c.bf16 %v5718, %v5718
    %5730 = vmatprep.subr.bf16.mxu0 %v2157
    %5731 = vmatpush1.bf16.msra.mxu0 %v2156
    %5732 = vmatprep.subr.bf16.mxu0 %v2160
    %5733 = vmatpush1.bf16.msra.mxu0 %v2159
    %5734 = vmatprep.subr.bf16.mxu0 %v2163
    %5735 = vmatpush1.bf16.msra.mxu0 %v2162
    %5736 = vmatprep.subr.bf16.mxu0 %v2166
    %5737 = vmatpush1.bf16.msra.mxu0 %v2165
    %5738 = vmatprep.subr.bf16.mxu0 %v2169
    %5739 = vmatpush1.bf16.msra.mxu0 %v2168
    %5740 = vmatprep.subr.bf16.mxu0 %v2172
    %5741 = vmatpush1.bf16.msra.mxu0 %v2171
    %5742 = vmatprep.subr.bf16.mxu0 %v2175
    %5743 = vmatpush1.bf16.msra.mxu0 %v2174
    %5744 = vmatprep.subr.bf16.mxu0 %v2178
    %5745 = vmatpush1.bf16.msra.mxu0 %v2177
    %5746 = vmatprep.subr.bf16.mxu0 0
    %5747 = vmatpush1.bf16.msra.mxu0 0
    %5748 = vmatprep.subr.bf16.mxu0 0
    %5749 = vmatpush1.bf16.msra.mxu0 0
    %5750 = vmatprep.subr.bf16.mxu0 0
    %5751 = vmatpush1.bf16.msra.mxu0 0
    %5752 = vmatprep.subr.bf16.mxu0 0
    %5753 = vmatpush1.bf16.msra.mxu0 0
    %5754 = vmatprep.subr.bf16.mxu0 0
    %5755 = vmatpush1.bf16.msra.mxu0 0
    %5756 = vmatprep.subr.bf16.mxu0 0
    %5757 = vmatpush1.bf16.msra.mxu0 0
    %5758 = vmatprep.subr.bf16.mxu0 0
    %5759 = vmatpush1.bf16.msra.mxu0 0
    %5760 = vmatprep.subr.bf16.mxu0 0
    %5761 = vmatpush1.bf16.msra.mxu0 0
    %5762 = vmatprep.mubr.bf16.mxu0 0
    %5763 = vmatmul.mubr.bf16.gmra.mrb[0].mxu0 %v5728
    %v5764 = vpop.f32.mrb[0].mxu0
    %v5765 = vadd.f32 0.0, %v5764
    %v5766 = vpop.f32.mrb[0].mxu0
    %v5767 = vadd.f32 0.0, %v5766
    %v5768 = vpop.f32.mrb[0].mxu0
    %v5769 = vadd.f32 0.0, %v5768
    %v5770 = vpop.f32.mrb[0].mxu0
    %v5771 = vadd.f32 0.0, %v5770
    %5772 = vmatprep.mubr.bf16.mxu0 0
    %5773 = vmatmul.mubr.bf16.gmra.mrb[0].mxu0 %v5729
    %v5774 = vpop.f32.mrb[0].mxu0
    %v5775 = vadd.f32 0.0, %v5774
    %v5776 = vpop.f32.mrb[0].mxu0
    %v5777 = vadd.f32 0.0, %v5776
    %v5778 = vpop.f32.mrb[0].mxu0
    %v5779 = vpop.f32.mrb[0].mxu0
    %5780 = vdwg.mxu0
    %5781 = vmatprep.subr.bf16.mxu0 0
    %5782 = vmatpush1.bf16.msra.mxu0 %v2158
    %5783 = vmatprep.subr.bf16.mxu0 0
    %5784 = vmatpush1.bf16.msra.mxu0 %v2161
    %5785 = vmatprep.subr.bf16.mxu0 0
    %5786 = vmatpush1.bf16.msra.mxu0 %v2164
    %5787 = vmatprep.subr.bf16.mxu0 0
    %5788 = vmatpush1.bf16.msra.mxu0 %v2167
    %5789 = vmatprep.subr.bf16.mxu0 0
    %5790 = vmatpush1.bf16.msra.mxu0 %v2170
    %5791 = vmatprep.subr.bf16.mxu0 0
    %5792 = vmatpush1.bf16.msra.mxu0 %v2173
    %5793 = vmatprep.subr.bf16.mxu0 0
    %5794 = vmatpush1.bf16.msra.mxu0 %v2176
    %5795 = vmatprep.subr.bf16.mxu0 0
    %5796 = vmatpush1.bf16.msra.mxu0 %v2179
    %5797 = vmatprep.subr.bf16.mxu0 0
    %5798 = vmatpush1.bf16.msra.mxu0 0
    %5799 = vmatprep.subr.bf16.mxu0 0
    %5800 = vmatpush1.bf16.msra.mxu0 0
    %5801 = vmatprep.subr.bf16.mxu0 0
    %5802 = vmatpush1.bf16.msra.mxu0 0
    %5803 = vmatprep.subr.bf16.mxu0 0
    %5804 = vmatpush1.bf16.msra.mxu0 0
    %5805 = vmatprep.subr.bf16.mxu0 0
    %5806 = vmatpush1.bf16.msra.mxu0 0
    %5807 = vmatprep.subr.bf16.mxu0 0
    %5808 = vmatpush1.bf16.msra.mxu0 0
    %5809 = vmatprep.subr.bf16.mxu0 0
    %5810 = vmatpush1.bf16.msra.mxu0 0
    %5811 = vmatprep.subr.bf16.mxu0 0
    %5812 = vmatpush1.bf16.msra.mxu0 0
    %5813 = vmatprep.mubr.bf16.mxu0 0
    %5814 = vmatmul.mubr.bf16.gmra.mrb[0].mxu0 %v5728
    %v5815 = vpop.f32.mrb[0].mxu0
    %v5816 = vadd.f32 0.0, %v5815
    %v5817 = vpop.f32.mrb[0].mxu0
    %v5818 = vpop.f32.mrb[0].mxu0
    %v5819 = vadd.f32 0.0, %v5818
    %v5820 = vpop.f32.mrb[0].mxu0
    %5821 = vmatprep.mubr.bf16.mxu0 0
    %5822 = vmatmul.mubr.bf16.gmra.mrb[0].mxu0 %v5729
    %v5823 = vpop.f32.mrb[0].mxu0
    %v5824 = vadd.f32 0.0, %v5823
    %v5825 = vpop.f32.mrb[0].mxu0
    %v5826 = vpop.f32.mrb[0].mxu0
    %v5827 = vpop.f32.mrb[0].mxu0
    %5828 = vdwg.mxu0
    %v5829 = vadd.f32 %v5719, %v5765
    %v5830 = vadd.f32 %v5722, %v5769
    %v5831 = vadd.f32 %v5725, %v5775
    %v5832 = vxor.u32 %v5829, 2147483648
    %v5833 = vxor.u32 %v5830, 2147483648
    %v5834 = vxor.u32 %v5831, 2147483648
    %v5835 = vmul.f32 %v5832, 1.442695
    %v5836 = vpow.pop %v5835
    %v5837 = vmul.f32 %v5833, 1.442695
    %v5838 = vpow.pop %v5837
    %v5839 = vmul.f32 %v5834, 1.442695
    %v5840 = vpow.pop %v5839
    %v5841 = vadd.f32 %v5836, 1.0
    %v5842 = vadd.f32 %v5838, 1.0
    %v5843 = vadd.f32 %v5840, 1.0
    %v5844 = vrcp.pop %v5841
    %v5845 = vmul.f32 1.0, %v5844
    %v5846 = vrcp.pop %v5842
    %v5847 = vmul.f32 1.0, %v5846
    %v5848 = vrcp.pop %v5843
    %v5849 = vmul.f32 1.0, %v5848
    %v5850 = vadd.f32 %v5720, %v5767
    %v5851 = vadd.f32 %v5723, %v5771
    %v5852 = vadd.f32 %v5726, %v5777
    %v5853 = vxor.u32 %v5850, 2147483648
    %v5854 = vxor.u32 %v5851, 2147483648
    %v5855 = vxor.u32 %v5852, 2147483648
    %v5856 = vmul.f32 %v5853, 1.442695
    %v5857 = vpow.pop %v5856
    %v5858 = vmul.f32 %v5854, 1.442695
    %v5859 = vpow.pop %v5858
    %v5860 = vmul.f32 %v5855, 1.442695
    %v5861 = vpow.pop %v5860
    %v5862 = vadd.f32 %v5857, 1.0
    %v5863 = vadd.f32 %v5859, 1.0
    %v5864 = vadd.f32 %v5861, 1.0
    %v5865 = vrcp.pop %v5862
    %v5866 = vmul.f32 1.0, %v5865
    %v5867 = vrcp.pop %v5863
    %v5868 = vmul.f32 1.0, %v5867
    %v5869 = vrcp.pop %v5864
    %v5870 = vmul.f32 1.0, %v5869
    %v5871 = vadd.f32 %v5816, %v2349
    %v5872 = vadd.f32 %v5819, %v2349
    %v5873 = vadd.f32 %v5824, %v2349
    %v5874 = vmul.f32 %v5845, %v5871
    %v5875 = vmul.f32 %v5847, %v5872
    %v5876 = vmul.f32 %v5849, %v5873
    %v5877 = vadd.f32 %v5721, %v5874
    %v5878 = vadd.f32 %v5724, %v5875
    %v5879 = vadd.f32 %v5727, %v5876
    %v5880 = vtanh.pop %v5877
    %v5881 = vtanh.pop %v5878
    %v5882 = vtanh.pop %v5879
    %v5883 = vsub.f32 1.0, %v5866
    %v5884 = vsub.f32 1.0, %v5868
    %v5885 = vsub.f32 1.0, %v5870
    %v5886 = vmul.f32 %v5883, %v5880
    %v5887 = vmul.f32 %v5884, %v5881
    %v5888 = vmul.f32 %v5885, %v5882
    %v5889 = vmul.f32 %v5866, %v5716
    %v5890 = vmul.f32 %v5868, %v5717
    %v5891 = vmul.f32 %v5870, %v5718
    %v5892 = vadd.f32 %v5886, %v5889
    %v5893 = vadd.f32 %v5887, %v5890
    %v5894 = vadd.f32 %v5888, %v5891
    %v5895 = vld [vmem:[#allocation2 + $0x5e8] sm:$0xff]
    %v5896 = vld [vmem:[#allocation2 + $0x5f0] sm:$0xff]
    %v5897 = vld [vmem:[#allocation2 + $0x5f8] sm:$0xff]
    %v5898 = vld [vmem:[#allocation2 + $0x600] sm:$0xff]
    %v5899 = vld [vmem:[#allocation2 + $0x608] sm:$0xff]
    %v5900 = vld [vmem:[#allocation2 + $0x610] sm:$0xff]
    %v5901 = vld [vmem:[#allocation2 + $0x618] sm:$0xff]
    %v5902 = vld [vmem:[#allocation2 + $0x620] sm:$0xff]
    %v5903 = vld [vmem:[#allocation2 + $0x628] sm:$0xff]
    %v5904 = vpack.c.bf16 %v5893, %v5892
    %v5905 = vpack.c.bf16 %v5894, %v5894
    %5906 = vmatprep.subr.bf16.mxu0 %v2157
    %5907 = vmatpush1.bf16.msra.mxu0 %v2156
    %5908 = vmatprep.subr.bf16.mxu0 %v2160
    %5909 = vmatpush1.bf16.msra.mxu0 %v2159
    %5910 = vmatprep.subr.bf16.mxu0 %v2163
    %5911 = vmatpush1.bf16.msra.mxu0 %v2162
    %5912 = vmatprep.subr.bf16.mxu0 %v2166
    %5913 = vmatpush1.bf16.msra.mxu0 %v2165
    %5914 = vmatprep.subr.bf16.mxu0 %v2169
    %5915 = vmatpush1.bf16.msra.mxu0 %v2168
    %5916 = vmatprep.subr.bf16.mxu0 %v2172
    %5917 = vmatpush1.bf16.msra.mxu0 %v2171
    %5918 = vmatprep.subr.bf16.mxu0 %v2175
    %5919 = vmatpush1.bf16.msra.mxu0 %v2174
    %5920 = vmatprep.subr.bf16.mxu0 %v2178
    %5921 = vmatpush1.bf16.msra.mxu0 %v2177
    %5922 = vmatprep.subr.bf16.mxu0 0
    %5923 = vmatpush1.bf16.msra.mxu0 0
    %5924 = vmatprep.subr.bf16.mxu0 0
    %5925 = vmatpush1.bf16.msra.mxu0 0
    %5926 = vmatprep.subr.bf16.mxu0 0
    %5927 = vmatpush1.bf16.msra.mxu0 0
    %5928 = vmatprep.subr.bf16.mxu0 0
    %5929 = vmatpush1.bf16.msra.mxu0 0
    %5930 = vmatprep.subr.bf16.mxu0 0
    %5931 = vmatpush1.bf16.msra.mxu0 0
    %5932 = vmatprep.subr.bf16.mxu0 0
    %5933 = vmatpush1.bf16.msra.mxu0 0
    %5934 = vmatprep.subr.bf16.mxu0 0
    %5935 = vmatpush1.bf16.msra.mxu0 0
    %5936 = vmatprep.subr.bf16.mxu0 0
    %5937 = vmatpush1.bf16.msra.mxu0 0
    %5938 = vmatprep.mubr.bf16.mxu0 0
    %5939 = vmatmul.mubr.bf16.gmra.mrb[0].mxu0 %v5904
    %v5940 = vpop.f32.mrb[0].mxu0
    %v5941 = vadd.f32 0.0, %v5940
    %v5942 = vpop.f32.mrb[0].mxu0
    %v5943 = vadd.f32 0.0, %v5942
    %v5944 = vpop.f32.mrb[0].mxu0
    %v5945 = vadd.f32 0.0, %v5944
    %v5946 = vpop.f32.mrb[0].mxu0
    %v5947 = vadd.f32 0.0, %v5946
    %5948 = vmatprep.mubr.bf16.mxu0 0
    %5949 = vmatmul.mubr.bf16.gmra.mrb[0].mxu0 %v5905
    %v5950 = vpop.f32.mrb[0].mxu0
    %v5951 = vadd.f32 0.0, %v5950
    %v5952 = vpop.f32.mrb[0].mxu0
    %v5953 = vadd.f32 0.0, %v5952
    %v5954 = vpop.f32.mrb[0].mxu0
    %v5955 = vpop.f32.mrb[0].mxu0
    %5956 = vdwg.mxu0
    %5957 = vmatprep.subr.bf16.mxu0 0
    %5958 = vmatpush1.bf16.msra.mxu0 %v2158
    %5959 = vmatprep.subr.bf16.mxu0 0
    %5960 = vmatpush1.bf16.msra.mxu0 %v2161
    %5961 = vmatprep.subr.bf16.mxu0 0
    %5962 = vmatpush1.bf16.msra.mxu0 %v2164
    %5963 = vmatprep.subr.bf16.mxu0 0
    %5964 = vmatpush1.bf16.msra.mxu0 %v2167
    %5965 = vmatprep.subr.bf16.mxu0 0
    %5966 = vmatpush1.bf16.msra.mxu0 %v2170
    %5967 = vmatprep.subr.bf16.mxu0 0
    %5968 = vmatpush1.bf16.msra.mxu0 %v2173
    %5969 = vmatprep.subr.bf16.mxu0 0
    %5970 = vmatpush1.bf16.msra.mxu0 %v2176
    %5971 = vmatprep.subr.bf16.mxu0 0
    %5972 = vmatpush1.bf16.msra.mxu0 %v2179
    %5973 = vmatprep.subr.bf16.mxu0 0
    %5974 = vmatpush1.bf16.msra.mxu0 0
    %5975 = vmatprep.subr.bf16.mxu0 0
    %5976 = vmatpush1.bf16.msra.mxu0 0
    %5977 = vmatprep.subr.bf16.mxu0 0
    %5978 = vmatpush1.bf16.msra.mxu0 0
    %5979 = vmatprep.subr.bf16.mxu0 0
    %5980 = vmatpush1.bf16.msra.mxu0 0
    %5981 = vmatprep.subr.bf16.mxu0 0
    %5982 = vmatpush1.bf16.msra.mxu0 0
    %5983 = vmatprep.subr.bf16.mxu0 0
    %5984 = vmatpush1.bf16.msra.mxu0 0
    %5985 = vmatprep.subr.bf16.mxu0 0
    %5986 = vmatpush1.bf16.msra.mxu0 0
    %5987 = vmatprep.subr.bf16.mxu0 0
    %5988 = vmatpush1.bf16.msra.mxu0 0
    %5989 = vmatprep.mubr.bf16.mxu0 0
    %5990 = vmatmul.mubr.bf16.gmra.mrb[0].mxu0 %v5904
    %v5991 = vpop.f32.mrb[0].mxu0
    %v5992 = vadd.f32 0.0, %v5991
    %v5993 = vpop.f32.mrb[0].mxu0
    %v5994 = vpop.f32.mrb[0].mxu0
    %v5995 = vadd.f32 0.0, %v5994
    %v5996 = vpop.f32.mrb[0].mxu0
    %5997 = vmatprep.mubr.bf16.mxu0 0
    %5998 = vmatmul.mubr.bf16.gmra.mrb[0].mxu0 %v5905
    %v5999 = vpop.f32.mrb[0].mxu0
    %v6000 = vadd.f32 0.0, %v5999
    %v6001 = vpop.f32.mrb[0].mxu0
    %v6002 = vpop.f32.mrb[0].mxu0
    %v6003 = vpop.f32.mrb[0].mxu0
    %6004 = vdwg.mxu0
    %v6005 = vadd.f32 %v5895, %v5941
    %v6006 = vadd.f32 %v5898, %v5945
    %v6007 = vadd.f32 %v5901, %v5951
    %v6008 = vxor.u32 %v6005, 2147483648
    %v6009 = vxor.u32 %v6006, 2147483648
    %v6010 = vxor.u32 %v6007, 2147483648
    %v6011 = vmul.f32 %v6008, 1.442695
    %v6012 = vpow.pop %v6011
    %v6013 = vmul.f32 %v6009, 1.442695
    %v6014 = vpow.pop %v6013
    %v6015 = vmul.f32 %v6010, 1.442695
    %v6016 = vpow.pop %v6015
    %v6017 = vadd.f32 %v6012, 1.0
    %v6018 = vadd.f32 %v6014, 1.0
    %v6019 = vadd.f32 %v6016, 1.0
    %v6020 = vrcp.pop %v6017
    %v6021 = vmul.f32 1.0, %v6020
    %v6022 = vrcp.pop %v6018
    %v6023 = vmul.f32 1.0, %v6022
    %v6024 = vrcp.pop %v6019
    %v6025 = vmul.f32 1.0, %v6024
    %v6026 = vadd.f32 %v5896, %v5943
    %v6027 = vadd.f32 %v5899, %v5947
    %v6028 = vadd.f32 %v5902, %v5953
    %v6029 = vxor.u32 %v6026, 2147483648
    %v6030 = vxor.u32 %v6027, 2147483648
    %v6031 = vxor.u32 %v6028, 2147483648
    %v6032 = vmul.f32 %v6029, 1.442695
    %v6033 = vpow.pop %v6032
    %v6034 = vmul.f32 %v6030, 1.442695
    %v6035 = vpow.pop %v6034
    %v6036 = vmul.f32 %v6031, 1.442695
    %v6037 = vpow.pop %v6036
    %v6038 = vadd.f32 %v6033, 1.0
    %v6039 = vadd.f32 %v6035, 1.0
    %v6040 = vadd.f32 %v6037, 1.0
    %v6041 = vrcp.pop %v6038
    %v6042 = vmul.f32 1.0, %v6041
    %v6043 = vrcp.pop %v6039
    %v6044 = vmul.f32 1.0, %v6043
    %v6045 = vrcp.pop %v6040
    %v6046 = vmul.f32 1.0, %v6045
    %v6047 = vadd.f32 %v5992, %v2349
    %v6048 = vadd.f32 %v5995, %v2349
    %v6049 = vadd.f32 %v6000, %v2349
    %v6050 = vmul.f32 %v6021, %v6047
    %v6051 = vmul.f32 %v6023, %v6048
    %v6052 = vmul.f32 %v6025, %v6049
    %v6053 = vadd.f32 %v5897, %v6050
    %v6054 = vadd.f32 %v5900, %v6051
    %v6055 = vadd.f32 %v5903, %v6052
    %v6056 = vtanh.pop %v6053
    %v6057 = vtanh.pop %v6054
    %v6058 = vtanh.pop %v6055
    %v6059 = vsub.f32 1.0, %v6042
    %v6060 = vsub.f32 1.0, %v6044
    %v6061 = vsub.f32 1.0, %v6046
    %v6062 = vmul.f32 %v6059, %v6056
    %v6063 = vmul.f32 %v6060, %v6057
    %v6064 = vmul.f32 %v6061, %v6058
    %v6065 = vmul.f32 %v6042, %v5892
    %v6066 = vmul.f32 %v6044, %v5893
    %v6067 = vmul.f32 %v6046, %v5894
    %v6068 = vadd.f32 %v6062, %v6065
    %v6069 = vadd.f32 %v6063, %v6066
    %v6070 = vadd.f32 %v6064, %v6067
    %v6071 = vld [vmem:[#allocation2 + $0x630] sm:$0xff]
    %v6072 = vld [vmem:[#allocation2 + $0x638] sm:$0xff]
    %v6073 = vld [vmem:[#allocation2 + $0x640] sm:$0xff]
    %v6074 = vld [vmem:[#allocation2 + $0x648] sm:$0xff]
    %v6075 = vld [vmem:[#allocation2 + $0x650] sm:$0xff]
    %v6076 = vld [vmem:[#allocation2 + $0x658] sm:$0xff]
    %v6077 = vld [vmem:[#allocation2 + $0x660] sm:$0xff]
    %v6078 = vld [vmem:[#allocation2 + $0x668] sm:$0xff]
    %v6079 = vld [vmem:[#allocation2 + $0x670] sm:$0xff]
    %v6080 = vpack.c.bf16 %v6069, %v6068
    %v6081 = vpack.c.bf16 %v6070, %v6070
    %6082 = vmatprep.subr.bf16.mxu0 %v2157
    %6083 = vmatpush1.bf16.msra.mxu0 %v2156
    %6084 = vmatprep.subr.bf16.mxu0 %v2160
    %6085 = vmatpush1.bf16.msra.mxu0 %v2159
    %6086 = vmatprep.subr.bf16.mxu0 %v2163
    %6087 = vmatpush1.bf16.msra.mxu0 %v2162
    %6088 = vmatprep.subr.bf16.mxu0 %v2166
    %6089 = vmatpush1.bf16.msra.mxu0 %v2165
    %6090 = vmatprep.subr.bf16.mxu0 %v2169
    %6091 = vmatpush1.bf16.msra.mxu0 %v2168
    %6092 = vmatprep.subr.bf16.mxu0 %v2172
    %6093 = vmatpush1.bf16.msra.mxu0 %v2171
    %6094 = vmatprep.subr.bf16.mxu0 %v2175
    %6095 = vmatpush1.bf16.msra.mxu0 %v2174
    %6096 = vmatprep.subr.bf16.mxu0 %v2178
    %6097 = vmatpush1.bf16.msra.mxu0 %v2177
    %6098 = vmatprep.subr.bf16.mxu0 0
    %6099 = vmatpush1.bf16.msra.mxu0 0
    %6100 = vmatprep.subr.bf16.mxu0 0
    %6101 = vmatpush1.bf16.msra.mxu0 0
    %6102 = vmatprep.subr.bf16.mxu0 0
    %6103 = vmatpush1.bf16.msra.mxu0 0
    %6104 = vmatprep.subr.bf16.mxu0 0
    %6105 = vmatpush1.bf16.msra.mxu0 0
    %6106 = vmatprep.subr.bf16.mxu0 0
    %6107 = vmatpush1.bf16.msra.mxu0 0
    %6108 = vmatprep.subr.bf16.mxu0 0
    %6109 = vmatpush1.bf16.msra.mxu0 0
    %6110 = vmatprep.subr.bf16.mxu0 0
    %6111 = vmatpush1.bf16.msra.mxu0 0
    %6112 = vmatprep.subr.bf16.mxu0 0
    %6113 = vmatpush1.bf16.msra.mxu0 0
    %6114 = vmatprep.mubr.bf16.mxu0 0
    %6115 = vmatmul.mubr.bf16.gmra.mrb[0].mxu0 %v6080
    %v6116 = vpop.f32.mrb[0].mxu0
    %v6117 = vadd.f32 0.0, %v6116
    %v6118 = vpop.f32.mrb[0].mxu0
    %v6119 = vadd.f32 0.0, %v6118
    %v6120 = vpop.f32.mrb[0].mxu0
    %v6121 = vadd.f32 0.0, %v6120
    %v6122 = vpop.f32.mrb[0].mxu0
    %v6123 = vadd.f32 0.0, %v6122
    %6124 = vmatprep.mubr.bf16.mxu0 0
    %6125 = vmatmul.mubr.bf16.gmra.mrb[0].mxu0 %v6081
    %v6126 = vpop.f32.mrb[0].mxu0
    %v6127 = vadd.f32 0.0, %v6126
    %v6128 = vpop.f32.mrb[0].mxu0
    %v6129 = vadd.f32 0.0, %v6128
    %v6130 = vpop.f32.mrb[0].mxu0
    %v6131 = vpop.f32.mrb[0].mxu0
    %6132 = vdwg.mxu0
    %6133 = vmatprep.subr.bf16.mxu0 0
    %6134 = vmatpush1.bf16.msra.mxu0 %v2158
    %6135 = vmatprep.subr.bf16.mxu0 0
    %6136 = vmatpush1.bf16.msra.mxu0 %v2161
    %6137 = vmatprep.subr.bf16.mxu0 0
    %6138 = vmatpush1.bf16.msra.mxu0 %v2164
    %6139 = vmatprep.subr.bf16.mxu0 0
    %6140 = vmatpush1.bf16.msra.mxu0 %v2167
    %6141 = vmatprep.subr.bf16.mxu0 0
    %6142 = vmatpush1.bf16.msra.mxu0 %v2170
    %6143 = vmatprep.subr.bf16.mxu0 0
    %6144 = vmatpush1.bf16.msra.mxu0 %v2173
    %6145 = vmatprep.subr.bf16.mxu0 0
    %6146 = vmatpush1.bf16.msra.mxu0 %v2176
    %6147 = vmatprep.subr.bf16.mxu0 0
    %6148 = vmatpush1.bf16.msra.mxu0 %v2179
    %6149 = vmatprep.subr.bf16.mxu0 0
    %6150 = vmatpush1.bf16.msra.mxu0 0
    %6151 = vmatprep.subr.bf16.mxu0 0
    %6152 = vmatpush1.bf16.msra.mxu0 0
    %6153 = vmatprep.subr.bf16.mxu0 0
    %6154 = vmatpush1.bf16.msra.mxu0 0
    %6155 = vmatprep.subr.bf16.mxu0 0
    %6156 = vmatpush1.bf16.msra.mxu0 0
    %6157 = vmatprep.subr.bf16.mxu0 0
    %6158 = vmatpush1.bf16.msra.mxu0 0
    %6159 = vmatprep.subr.bf16.mxu0 0
    %6160 = vmatpush1.bf16.msra.mxu0 0
    %6161 = vmatprep.subr.bf16.mxu0 0
    %6162 = vmatpush1.bf16.msra.mxu0 0
    %6163 = vmatprep.subr.bf16.mxu0 0
    %6164 = vmatpush1.bf16.msra.mxu0 0
    %6165 = vmatprep.mubr.bf16.mxu0 0
    %6166 = vmatmul.mubr.bf16.gmra.mrb[0].mxu0 %v6080
    %v6167 = vpop.f32.mrb[0].mxu0
    %v6168 = vadd.f32 0.0, %v6167
    %v6169 = vpop.f32.mrb[0].mxu0
    %v6170 = vpop.f32.mrb[0].mxu0
    %v6171 = vadd.f32 0.0, %v6170
    %v6172 = vpop.f32.mrb[0].mxu0
    %6173 = vmatprep.mubr.bf16.mxu0 0
    %6174 = vmatmul.mubr.bf16.gmra.mrb[0].mxu0 %v6081
    %v6175 = vpop.f32.mrb[0].mxu0
    %v6176 = vadd.f32 0.0, %v6175
    %v6177 = vpop.f32.mrb[0].mxu0
    %v6178 = vpop.f32.mrb[0].mxu0
    %v6179 = vpop.f32.mrb[0].mxu0
    %6180 = vdwg.mxu0
    %v6181 = vadd.f32 %v6071, %v6117
    %v6182 = vadd.f32 %v6074, %v6121
    %v6183 = vadd.f32 %v6077, %v6127
    %v6184 = vxor.u32 %v6181, 2147483648
    %v6185 = vxor.u32 %v6182, 2147483648
    %v6186 = vxor.u32 %v6183, 2147483648
    %v6187 = vmul.f32 %v6184, 1.442695
    %v6188 = vpow.pop %v6187
    %v6189 = vmul.f32 %v6185, 1.442695
    %v6190 = vpow.pop %v6189
    %v6191 = vmul.f32 %v6186, 1.442695
    %v6192 = vpow.pop %v6191
    %v6193 = vadd.f32 %v6188, 1.0
    %v6194 = vadd.f32 %v6190, 1.0
    %v6195 = vadd.f32 %v6192, 1.0
    %v6196 = vrcp.pop %v6193
    %v6197 = vmul.f32 1.0, %v6196
    %v6198 = vrcp.pop %v6194
    %v6199 = vmul.f32 1.0, %v6198
    %v6200 = vrcp.pop %v6195
    %v6201 = vmul.f32 1.0, %v6200
    %v6202 = vadd.f32 %v6072, %v6119
    %v6203 = vadd.f32 %v6075, %v6123
    %v6204 = vadd.f32 %v6078, %v6129
    %v6205 = vxor.u32 %v6202, 2147483648
    %v6206 = vxor.u32 %v6203, 2147483648
    %v6207 = vxor.u32 %v6204, 2147483648
    %v6208 = vmul.f32 %v6205, 1.442695
    %v6209 = vpow.pop %v6208
    %v6210 = vmul.f32 %v6206, 1.442695
    %v6211 = vpow.pop %v6210
    %v6212 = vmul.f32 %v6207, 1.442695
    %v6213 = vpow.pop %v6212
    %v6214 = vadd.f32 %v6209, 1.0
    %v6215 = vadd.f32 %v6211, 1.0
    %v6216 = vadd.f32 %v6213, 1.0
    %v6217 = vrcp.pop %v6214
    %v6218 = vmul.f32 1.0, %v6217
    %v6219 = vrcp.pop %v6215
    %v6220 = vmul.f32 1.0, %v6219
    %v6221 = vrcp.pop %v6216
    %v6222 = vmul.f32 1.0, %v6221
    %v6223 = vadd.f32 %v6168, %v2349
    %v6224 = vadd.f32 %v6171, %v2349
    %v6225 = vadd.f32 %v6176, %v2349
    %v6226 = vmul.f32 %v6197, %v6223
    %v6227 = vmul.f32 %v6199, %v6224
    %v6228 = vmul.f32 %v6201, %v6225
    %v6229 = vadd.f32 %v6073, %v6226
    %v6230 = vadd.f32 %v6076, %v6227
    %v6231 = vadd.f32 %v6079, %v6228
    %v6232 = vtanh.pop %v6229
    %v6233 = vtanh.pop %v6230
    %v6234 = vtanh.pop %v6231
    %v6235 = vsub.f32 1.0, %v6218
    %v6236 = vsub.f32 1.0, %v6220
    %v6237 = vsub.f32 1.0, %v6222
    %v6238 = vmul.f32 %v6235, %v6232
    %v6239 = vmul.f32 %v6236, %v6233
    %v6240 = vmul.f32 %v6237, %v6234
    %v6241 = vmul.f32 %v6218, %v6068
    %v6242 = vmul.f32 %v6220, %v6069
    %v6243 = vmul.f32 %v6222, %v6070
    %v6244 = vadd.f32 %v6238, %v6241
    %v6245 = vadd.f32 %v6239, %v6242
    %v6246 = vadd.f32 %v6240, %v6243
    %v6247 = vld [vmem:[#allocation2 + $0x678] sm:$0xff]
    %v6248 = vld [vmem:[#allocation2 + $0x680] sm:$0xff]
    %v6249 = vld [vmem:[#allocation2 + $0x688] sm:$0xff]
    %v6250 = vld [vmem:[#allocation2 + $0x690] sm:$0xff]
    %v6251 = vld [vmem:[#allocation2 + $0x698] sm:$0xff]
    %v6252 = vld [vmem:[#allocation2 + $0x6a0] sm:$0xff]
    %v6253 = vld [vmem:[#allocation2 + $0x6a8] sm:$0xff]
    %v6254 = vld [vmem:[#allocation2 + $0x6b0] sm:$0xff]
    %v6255 = vld [vmem:[#allocation2 + $0x6b8] sm:$0xff]
    %v6256 = vpack.c.bf16 %v6245, %v6244
    %v6257 = vpack.c.bf16 %v6246, %v6246
    %6258 = vmatprep.subr.bf16.mxu0 %v2157
    %6259 = vmatpush1.bf16.msra.mxu0 %v2156
    %6260 = vmatprep.subr.bf16.mxu0 %v2160
    %6261 = vmatpush1.bf16.msra.mxu0 %v2159
    %6262 = vmatprep.subr.bf16.mxu0 %v2163
    %6263 = vmatpush1.bf16.msra.mxu0 %v2162
    %6264 = vmatprep.subr.bf16.mxu0 %v2166
    %6265 = vmatpush1.bf16.msra.mxu0 %v2165
    %6266 = vmatprep.subr.bf16.mxu0 %v2169
    %6267 = vmatpush1.bf16.msra.mxu0 %v2168
    %6268 = vmatprep.subr.bf16.mxu0 %v2172
    %6269 = vmatpush1.bf16.msra.mxu0 %v2171
    %6270 = vmatprep.subr.bf16.mxu0 %v2175
    %6271 = vmatpush1.bf16.msra.mxu0 %v2174
    %6272 = vmatprep.subr.bf16.mxu0 %v2178
    %6273 = vmatpush1.bf16.msra.mxu0 %v2177
    %6274 = vmatprep.subr.bf16.mxu0 0
    %6275 = vmatpush1.bf16.msra.mxu0 0
    %6276 = vmatprep.subr.bf16.mxu0 0
    %6277 = vmatpush1.bf16.msra.mxu0 0
    %6278 = vmatprep.subr.bf16.mxu0 0
    %6279 = vmatpush1.bf16.msra.mxu0 0
    %6280 = vmatprep.subr.bf16.mxu0 0
    %6281 = vmatpush1.bf16.msra.mxu0 0
    %6282 = vmatprep.subr.bf16.mxu0 0
    %6283 = vmatpush1.bf16.msra.mxu0 0
    %6284 = vmatprep.subr.bf16.mxu0 0
    %6285 = vmatpush1.bf16.msra.mxu0 0
    %6286 = vmatprep.subr.bf16.mxu0 0
    %6287 = vmatpush1.bf16.msra.mxu0 0
    %6288 = vmatprep.subr.bf16.mxu0 0
    %6289 = vmatpush1.bf16.msra.mxu0 0
    %6290 = vmatprep.mubr.bf16.mxu0 0
    %6291 = vmatmul.mubr.bf16.gmra.mrb[0].mxu0 %v6256
    %v6292 = vpop.f32.mrb[0].mxu0
    %v6293 = vadd.f32 0.0, %v6292
    %v6294 = vpop.f32.mrb[0].mxu0
    %v6295 = vadd.f32 0.0, %v6294
    %v6296 = vpop.f32.mrb[0].mxu0
    %v6297 = vadd.f32 0.0, %v6296
    %v6298 = vpop.f32.mrb[0].mxu0
    %v6299 = vadd.f32 0.0, %v6298
    %6300 = vmatprep.mubr.bf16.mxu0 0
    %6301 = vmatmul.mubr.bf16.gmra.mrb[0].mxu0 %v6257
    %v6302 = vpop.f32.mrb[0].mxu0
    %v6303 = vadd.f32 0.0, %v6302
    %v6304 = vpop.f32.mrb[0].mxu0
    %v6305 = vadd.f32 0.0, %v6304
    %v6306 = vpop.f32.mrb[0].mxu0
    %v6307 = vpop.f32.mrb[0].mxu0
    %6308 = vdwg.mxu0
    %6309 = vmatprep.subr.bf16.mxu0 0
    %6310 = vmatpush1.bf16.msra.mxu0 %v2158
    %6311 = vmatprep.subr.bf16.mxu0 0
    %6312 = vmatpush1.bf16.msra.mxu0 %v2161
    %6313 = vmatprep.subr.bf16.mxu0 0
    %6314 = vmatpush1.bf16.msra.mxu0 %v2164
    %6315 = vmatprep.subr.bf16.mxu0 0
    %6316 = vmatpush1.bf16.msra.mxu0 %v2167
    %6317 = vmatprep.subr.bf16.mxu0 0
    %6318 = vmatpush1.bf16.msra.mxu0 %v2170
    %6319 = vmatprep.subr.bf16.mxu0 0
    %6320 = vmatpush1.bf16.msra.mxu0 %v2173
    %6321 = vmatprep.subr.bf16.mxu0 0
    %6322 = vmatpush1.bf16.msra.mxu0 %v2176
    %6323 = vmatprep.subr.bf16.mxu0 0
    %6324 = vmatpush1.bf16.msra.mxu0 %v2179
    %6325 = vmatprep.subr.bf16.mxu0 0
    %6326 = vmatpush1.bf16.msra.mxu0 0
    %6327 = vmatprep.subr.bf16.mxu0 0
    %6328 = vmatpush1.bf16.msra.mxu0 0
    %6329 = vmatprep.subr.bf16.mxu0 0
    %6330 = vmatpush1.bf16.msra.mxu0 0
    %6331 = vmatprep.subr.bf16.mxu0 0
    %6332 = vmatpush1.bf16.msra.mxu0 0
    %6333 = vmatprep.subr.bf16.mxu0 0
    %6334 = vmatpush1.bf16.msra.mxu0 0
    %6335 = vmatprep.subr.bf16.mxu0 0
    %6336 = vmatpush1.bf16.msra.mxu0 0
    %6337 = vmatprep.subr.bf16.mxu0 0
    %6338 = vmatpush1.bf16.msra.mxu0 0
    %6339 = vmatprep.subr.bf16.mxu0 0
    %6340 = vmatpush1.bf16.msra.mxu0 0
    %6341 = vmatprep.mubr.bf16.mxu0 0
    %6342 = vmatmul.mubr.bf16.gmra.mrb[0].mxu0 %v6256
    %v6343 = vpop.f32.mrb[0].mxu0
    %v6344 = vadd.f32 0.0, %v6343
    %v6345 = vpop.f32.mrb[0].mxu0
    %v6346 = vpop.f32.mrb[0].mxu0
    %v6347 = vadd.f32 0.0, %v6346
    %v6348 = vpop.f32.mrb[0].mxu0
    %6349 = vmatprep.mubr.bf16.mxu0 0
    %6350 = vmatmul.mubr.bf16.gmra.mrb[0].mxu0 %v6257
    %v6351 = vpop.f32.mrb[0].mxu0
    %v6352 = vadd.f32 0.0, %v6351
    %v6353 = vpop.f32.mrb[0].mxu0
    %v6354 = vpop.f32.mrb[0].mxu0
    %v6355 = vpop.f32.mrb[0].mxu0
    %6356 = vdwg.mxu0
    %v6357 = vadd.f32 %v6247, %v6293
    %v6358 = vadd.f32 %v6250, %v6297
    %v6359 = vadd.f32 %v6253, %v6303
    %v6360 = vxor.u32 %v6357, 2147483648
    %v6361 = vxor.u32 %v6358, 2147483648
    %v6362 = vxor.u32 %v6359, 2147483648
    %v6363 = vmul.f32 %v6360, 1.442695
    %v6364 = vpow.pop %v6363
    %v6365 = vmul.f32 %v6361, 1.442695
    %v6366 = vpow.pop %v6365
    %v6367 = vmul.f32 %v6362, 1.442695
    %v6368 = vpow.pop %v6367
    %v6369 = vadd.f32 %v6364, 1.0
    %v6370 = vadd.f32 %v6366, 1.0
    %v6371 = vadd.f32 %v6368, 1.0
    %v6372 = vrcp.pop %v6369
    %v6373 = vmul.f32 1.0, %v6372
    %v6374 = vrcp.pop %v6370
    %v6375 = vmul.f32 1.0, %v6374
    %v6376 = vrcp.pop %v6371
    %v6377 = vmul.f32 1.0, %v6376
    %v6378 = vadd.f32 %v6248, %v6295
    %v6379 = vadd.f32 %v6251, %v6299
    %v6380 = vadd.f32 %v6254, %v6305
    %v6381 = vxor.u32 %v6378, 2147483648
    %v6382 = vxor.u32 %v6379, 2147483648
    %v6383 = vxor.u32 %v6380, 2147483648
    %v6384 = vmul.f32 %v6381, 1.442695
    %v6385 = vpow.pop %v6384
    %v6386 = vmul.f32 %v6382, 1.442695
    %v6387 = vpow.pop %v6386
    %v6388 = vmul.f32 %v6383, 1.442695
    %v6389 = vpow.pop %v6388
    %v6390 = vadd.f32 %v6385, 1.0
    %v6391 = vadd.f32 %v6387, 1.0
    %v6392 = vadd.f32 %v6389, 1.0
    %v6393 = vrcp.pop %v6390
    %v6394 = vmul.f32 1.0, %v6393
    %v6395 = vrcp.pop %v6391
    %v6396 = vmul.f32 1.0, %v6395
    %v6397 = vrcp.pop %v6392
    %v6398 = vmul.f32 1.0, %v6397
    %v6399 = vadd.f32 %v6344, %v2349
    %v6400 = vadd.f32 %v6347, %v2349
    %v6401 = vadd.f32 %v6352, %v2349
    %v6402 = vmul.f32 %v6373, %v6399
    %v6403 = vmul.f32 %v6375, %v6400
    %v6404 = vmul.f32 %v6377, %v6401
    %v6405 = vadd.f32 %v6249, %v6402
    %v6406 = vadd.f32 %v6252, %v6403
    %v6407 = vadd.f32 %v6255, %v6404
    %v6408 = vtanh.pop %v6405
    %v6409 = vtanh.pop %v6406
    %v6410 = vtanh.pop %v6407
    %v6411 = vsub.f32 1.0, %v6394
    %v6412 = vsub.f32 1.0, %v6396
    %v6413 = vsub.f32 1.0, %v6398
    %v6414 = vmul.f32 %v6411, %v6408
    %v6415 = vmul.f32 %v6412, %v6409
    %v6416 = vmul.f32 %v6413, %v6410
    %v6417 = vmul.f32 %v6394, %v6244
    %v6418 = vmul.f32 %v6396, %v6245
    %v6419 = vmul.f32 %v6398, %v6246
    %v6420 = vadd.f32 %v6414, %v6417
    %v6421 = vadd.f32 %v6415, %v6418
    %v6422 = vadd.f32 %v6416, %v6419
    %v6423 = vld [vmem:[#allocation2 + $0x6c0] sm:$0xff]
    %v6424 = vld [vmem:[#allocation2 + $0x6c8] sm:$0xff]
    %v6425 = vld [vmem:[#allocation2 + $0x6d0] sm:$0xff]
    %v6426 = vld [vmem:[#allocation2 + $0x6d8] sm:$0xff]
    %v6427 = vld [vmem:[#allocation2 + $0x6e0] sm:$0xff]
    %v6428 = vld [vmem:[#allocation2 + $0x6e8] sm:$0xff]
    %v6429 = vld [vmem:[#allocation2 + $0x6f0] sm:$0xff]
    %v6430 = vld [vmem:[#allocation2 + $0x6f8] sm:$0xff]
    %v6431 = vld [vmem:[#allocation2 + $0x700] sm:$0xff]
    %v6432 = vpack.c.bf16 %v6421, %v6420
    %v6433 = vpack.c.bf16 %v6422, %v6422
    %6434 = vmatprep.subr.bf16.mxu0 %v2157
    %6435 = vmatpush1.bf16.msra.mxu0 %v2156
    %6436 = vmatprep.subr.bf16.mxu0 %v2160
    %6437 = vmatpush1.bf16.msra.mxu0 %v2159
    %6438 = vmatprep.subr.bf16.mxu0 %v2163
    %6439 = vmatpush1.bf16.msra.mxu0 %v2162
    %6440 = vmatprep.subr.bf16.mxu0 %v2166
    %6441 = vmatpush1.bf16.msra.mxu0 %v2165
    %6442 = vmatprep.subr.bf16.mxu0 %v2169
    %6443 = vmatpush1.bf16.msra.mxu0 %v2168
    %6444 = vmatprep.subr.bf16.mxu0 %v2172
    %6445 = vmatpush1.bf16.msra.mxu0 %v2171
    %6446 = vmatprep.subr.bf16.mxu0 %v2175
    %6447 = vmatpush1.bf16.msra.mxu0 %v2174
    %6448 = vmatprep.subr.bf16.mxu0 %v2178
    %6449 = vmatpush1.bf16.msra.mxu0 %v2177
    %6450 = vmatprep.subr.bf16.mxu0 0
    %6451 = vmatpush1.bf16.msra.mxu0 0
    %6452 = vmatprep.subr.bf16.mxu0 0
    %6453 = vmatpush1.bf16.msra.mxu0 0
    %6454 = vmatprep.subr.bf16.mxu0 0
    %6455 = vmatpush1.bf16.msra.mxu0 0
    %6456 = vmatprep.subr.bf16.mxu0 0
    %6457 = vmatpush1.bf16.msra.mxu0 0
    %6458 = vmatprep.subr.bf16.mxu0 0
    %6459 = vmatpush1.bf16.msra.mxu0 0
    %6460 = vmatprep.subr.bf16.mxu0 0
    %6461 = vmatpush1.bf16.msra.mxu0 0
    %6462 = vmatprep.subr.bf16.mxu0 0
    %6463 = vmatpush1.bf16.msra.mxu0 0
    %6464 = vmatprep.subr.bf16.mxu0 0
    %6465 = vmatpush1.bf16.msra.mxu0 0
    %6466 = vmatprep.mubr.bf16.mxu0 0
    %6467 = vmatmul.mubr.bf16.gmra.mrb[0].mxu0 %v6432
    %v6468 = vpop.f32.mrb[0].mxu0
    %v6469 = vadd.f32 0.0, %v6468
    %v6470 = vpop.f32.mrb[0].mxu0
    %v6471 = vadd.f32 0.0, %v6470
    %v6472 = vpop.f32.mrb[0].mxu0
    %v6473 = vadd.f32 0.0, %v6472
    %v6474 = vpop.f32.mrb[0].mxu0
    %v6475 = vadd.f32 0.0, %v6474
    %6476 = vmatprep.mubr.bf16.mxu0 0
    %6477 = vmatmul.mubr.bf16.gmra.mrb[0].mxu0 %v6433
    %v6478 = vpop.f32.mrb[0].mxu0
    %v6479 = vadd.f32 0.0, %v6478
    %v6480 = vpop.f32.mrb[0].mxu0
    %v6481 = vadd.f32 0.0, %v6480
    %v6482 = vpop.f32.mrb[0].mxu0
    %v6483 = vpop.f32.mrb[0].mxu0
    %6484 = vdwg.mxu0
    %6485 = vmatprep.subr.bf16.mxu0 0
    %6486 = vmatpush1.bf16.msra.mxu0 %v2158
    %6487 = vmatprep.subr.bf16.mxu0 0
    %6488 = vmatpush1.bf16.msra.mxu0 %v2161
    %6489 = vmatprep.subr.bf16.mxu0 0
    %6490 = vmatpush1.bf16.msra.mxu0 %v2164
    %6491 = vmatprep.subr.bf16.mxu0 0
    %6492 = vmatpush1.bf16.msra.mxu0 %v2167
    %6493 = vmatprep.subr.bf16.mxu0 0
    %6494 = vmatpush1.bf16.msra.mxu0 %v2170
    %6495 = vmatprep.subr.bf16.mxu0 0
    %6496 = vmatpush1.bf16.msra.mxu0 %v2173
    %6497 = vmatprep.subr.bf16.mxu0 0
    %6498 = vmatpush1.bf16.msra.mxu0 %v2176
    %6499 = vmatprep.subr.bf16.mxu0 0
    %6500 = vmatpush1.bf16.msra.mxu0 %v2179
    %6501 = vmatprep.subr.bf16.mxu0 0
    %6502 = vmatpush1.bf16.msra.mxu0 0
    %6503 = vmatprep.subr.bf16.mxu0 0
    %6504 = vmatpush1.bf16.msra.mxu0 0
    %6505 = vmatprep.subr.bf16.mxu0 0
    %6506 = vmatpush1.bf16.msra.mxu0 0
    %6507 = vmatprep.subr.bf16.mxu0 0
    %6508 = vmatpush1.bf16.msra.mxu0 0
    %6509 = vmatprep.subr.bf16.mxu0 0
    %6510 = vmatpush1.bf16.msra.mxu0 0
    %6511 = vmatprep.subr.bf16.mxu0 0
    %6512 = vmatpush1.bf16.msra.mxu0 0
    %6513 = vmatprep.subr.bf16.mxu0 0
    %6514 = vmatpush1.bf16.msra.mxu0 0
    %6515 = vmatprep.subr.bf16.mxu0 0
    %6516 = vmatpush1.bf16.msra.mxu0 0
    %6517 = vmatprep.mubr.bf16.mxu0 0
    %6518 = vmatmul.mubr.bf16.gmra.mrb[0].mxu0 %v6432
    %v6519 = vpop.f32.mrb[0].mxu0
    %v6520 = vadd.f32 0.0, %v6519
    %v6521 = vpop.f32.mrb[0].mxu0
    %v6522 = vpop.f32.mrb[0].mxu0
    %v6523 = vadd.f32 0.0, %v6522
    %v6524 = vpop.f32.mrb[0].mxu0
    %6525 = vmatprep.mubr.bf16.mxu0 0
    %6526 = vmatmul.mubr.bf16.gmra.mrb[0].mxu0 %v6433
    %v6527 = vpop.f32.mrb[0].mxu0
    %v6528 = vadd.f32 0.0, %v6527
    %v6529 = vpop.f32.mrb[0].mxu0
    %v6530 = vpop.f32.mrb[0].mxu0
    %v6531 = vpop.f32.mrb[0].mxu0
    %6532 = vdwg.mxu0
    %v6533 = vadd.f32 %v6423, %v6469
    %v6534 = vadd.f32 %v6426, %v6473
    %v6535 = vadd.f32 %v6429, %v6479
    %v6536 = vxor.u32 %v6533, 2147483648
    %v6537 = vxor.u32 %v6534, 2147483648
    %v6538 = vxor.u32 %v6535, 2147483648
    %v6539 = vmul.f32 %v6536, 1.442695
    %v6540 = vpow.pop %v6539
    %v6541 = vmul.f32 %v6537, 1.442695
    %v6542 = vpow.pop %v6541
    %v6543 = vmul.f32 %v6538, 1.442695
    %v6544 = vpow.pop %v6543
    %v6545 = vadd.f32 %v6540, 1.0
    %v6546 = vadd.f32 %v6542, 1.0
    %v6547 = vadd.f32 %v6544, 1.0
    %v6548 = vrcp.pop %v6545
    %v6549 = vmul.f32 1.0, %v6548
    %v6550 = vrcp.pop %v6546
    %v6551 = vmul.f32 1.0, %v6550
    %v6552 = vrcp.pop %v6547
    %v6553 = vmul.f32 1.0, %v6552
    %v6554 = vadd.f32 %v6424, %v6471
    %v6555 = vadd.f32 %v6427, %v6475
    %v6556 = vadd.f32 %v6430, %v6481
    %v6557 = vxor.u32 %v6554, 2147483648
    %v6558 = vxor.u32 %v6555, 2147483648
    %v6559 = vxor.u32 %v6556, 2147483648
    %v6560 = vmul.f32 %v6557, 1.442695
    %v6561 = vpow.pop %v6560
    %v6562 = vmul.f32 %v6558, 1.442695
    %v6563 = vpow.pop %v6562
    %v6564 = vmul.f32 %v6559, 1.442695
    %v6565 = vpow.pop %v6564
    %v6566 = vadd.f32 %v6561, 1.0
    %v6567 = vadd.f32 %v6563, 1.0
    %v6568 = vadd.f32 %v6565, 1.0
    %v6569 = vrcp.pop %v6566
    %v6570 = vmul.f32 1.0, %v6569
    %v6571 = vrcp.pop %v6567
    %v6572 = vmul.f32 1.0, %v6571
    %v6573 = vrcp.pop %v6568
    %v6574 = vmul.f32 1.0, %v6573
    %v6575 = vadd.f32 %v6520, %v2349
    %v6576 = vadd.f32 %v6523, %v2349
    %v6577 = vadd.f32 %v6528, %v2349
    %v6578 = vmul.f32 %v6549, %v6575
    %v6579 = vmul.f32 %v6551, %v6576
    %v6580 = vmul.f32 %v6553, %v6577
    %v6581 = vadd.f32 %v6425, %v6578
    %v6582 = vadd.f32 %v6428, %v6579
    %v6583 = vadd.f32 %v6431, %v6580
    %v6584 = vtanh.pop %v6581
    %v6585 = vtanh.pop %v6582
    %v6586 = vtanh.pop %v6583
    %v6587 = vsub.f32 1.0, %v6570
    %v6588 = vsub.f32 1.0, %v6572
    %v6589 = vsub.f32 1.0, %v6574
    %v6590 = vmul.f32 %v6587, %v6584
    %v6591 = vmul.f32 %v6588, %v6585
    %v6592 = vmul.f32 %v6589, %v6586
    %v6593 = vmul.f32 %v6570, %v6420
    %v6594 = vmul.f32 %v6572, %v6421
    %v6595 = vmul.f32 %v6574, %v6422
    %v6596 = vadd.f32 %v6590, %v6593
    %v6597 = vadd.f32 %v6591, %v6594
    %v6598 = vadd.f32 %v6592, %v6595
    %v6599 = vld [vmem:[#allocation2 + $0x708] sm:$0xff]
    %v6600 = vld [vmem:[#allocation2 + $0x710] sm:$0xff]
    %v6601 = vld [vmem:[#allocation2 + $0x718] sm:$0xff]
    %v6602 = vld [vmem:[#allocation2 + $0x720] sm:$0xff]
    %v6603 = vld [vmem:[#allocation2 + $0x728] sm:$0xff]
    %v6604 = vld [vmem:[#allocation2 + $0x730] sm:$0xff]
    %v6605 = vld [vmem:[#allocation2 + $0x738] sm:$0xff]
    %v6606 = vld [vmem:[#allocation2 + $0x740] sm:$0xff]
    %v6607 = vld [vmem:[#allocation2 + $0x748] sm:$0xff]
    %v6608 = vpack.c.bf16 %v6597, %v6596
    %v6609 = vpack.c.bf16 %v6598, %v6598
    %6610 = vmatprep.subr.bf16.mxu0 %v2157
    %6611 = vmatpush1.bf16.msra.mxu0 %v2156
    %6612 = vmatprep.subr.bf16.mxu0 %v2160
    %6613 = vmatpush1.bf16.msra.mxu0 %v2159
    %6614 = vmatprep.subr.bf16.mxu0 %v2163
    %6615 = vmatpush1.bf16.msra.mxu0 %v2162
    %6616 = vmatprep.subr.bf16.mxu0 %v2166
    %6617 = vmatpush1.bf16.msra.mxu0 %v2165
    %6618 = vmatprep.subr.bf16.mxu0 %v2169
    %6619 = vmatpush1.bf16.msra.mxu0 %v2168
    %6620 = vmatprep.subr.bf16.mxu0 %v2172
    %6621 = vmatpush1.bf16.msra.mxu0 %v2171
    %6622 = vmatprep.subr.bf16.mxu0 %v2175
    %6623 = vmatpush1.bf16.msra.mxu0 %v2174
    %6624 = vmatprep.subr.bf16.mxu0 %v2178
    %6625 = vmatpush1.bf16.msra.mxu0 %v2177
    %6626 = vmatprep.subr.bf16.mxu0 0
    %6627 = vmatpush1.bf16.msra.mxu0 0
    %6628 = vmatprep.subr.bf16.mxu0 0
    %6629 = vmatpush1.bf16.msra.mxu0 0
    %6630 = vmatprep.subr.bf16.mxu0 0
    %6631 = vmatpush1.bf16.msra.mxu0 0
    %6632 = vmatprep.subr.bf16.mxu0 0
    %6633 = vmatpush1.bf16.msra.mxu0 0
    %6634 = vmatprep.subr.bf16.mxu0 0
    %6635 = vmatpush1.bf16.msra.mxu0 0
    %6636 = vmatprep.subr.bf16.mxu0 0
    %6637 = vmatpush1.bf16.msra.mxu0 0
    %6638 = vmatprep.subr.bf16.mxu0 0
    %6639 = vmatpush1.bf16.msra.mxu0 0
    %6640 = vmatprep.subr.bf16.mxu0 0
    %6641 = vmatpush1.bf16.msra.mxu0 0
    %6642 = vmatprep.mubr.bf16.mxu0 0
    %6643 = vmatmul.mubr.bf16.gmra.mrb[0].mxu0 %v6608
    %v6644 = vpop.f32.mrb[0].mxu0
    %v6645 = vadd.f32 0.0, %v6644
    %v6646 = vpop.f32.mrb[0].mxu0
    %v6647 = vadd.f32 0.0, %v6646
    %v6648 = vpop.f32.mrb[0].mxu0
    %v6649 = vadd.f32 0.0, %v6648
    %v6650 = vpop.f32.mrb[0].mxu0
    %v6651 = vadd.f32 0.0, %v6650
    %6652 = vmatprep.mubr.bf16.mxu0 0
    %6653 = vmatmul.mubr.bf16.gmra.mrb[0].mxu0 %v6609
    %v6654 = vpop.f32.mrb[0].mxu0
    %v6655 = vadd.f32 0.0, %v6654
    %v6656 = vpop.f32.mrb[0].mxu0
    %v6657 = vadd.f32 0.0, %v6656
    %v6658 = vpop.f32.mrb[0].mxu0
    %v6659 = vpop.f32.mrb[0].mxu0
    %6660 = vdwg.mxu0
    %6661 = vmatprep.subr.bf16.mxu0 0
    %6662 = vmatpush1.bf16.msra.mxu0 %v2158
    %6663 = vmatprep.subr.bf16.mxu0 0
    %6664 = vmatpush1.bf16.msra.mxu0 %v2161
    %6665 = vmatprep.subr.bf16.mxu0 0
    %6666 = vmatpush1.bf16.msra.mxu0 %v2164
    %6667 = vmatprep.subr.bf16.mxu0 0
    %6668 = vmatpush1.bf16.msra.mxu0 %v2167
    %6669 = vmatprep.subr.bf16.mxu0 0
    %6670 = vmatpush1.bf16.msra.mxu0 %v2170
    %6671 = vmatprep.subr.bf16.mxu0 0
    %6672 = vmatpush1.bf16.msra.mxu0 %v2173
    %6673 = vmatprep.subr.bf16.mxu0 0
    %6674 = vmatpush1.bf16.msra.mxu0 %v2176
    %6675 = vmatprep.subr.bf16.mxu0 0
    %6676 = vmatpush1.bf16.msra.mxu0 %v2179
    %6677 = vmatprep.subr.bf16.mxu0 0
    %6678 = vmatpush1.bf16.msra.mxu0 0
    %6679 = vmatprep.subr.bf16.mxu0 0
    %6680 = vmatpush1.bf16.msra.mxu0 0
    %6681 = vmatprep.subr.bf16.mxu0 0
    %6682 = vmatpush1.bf16.msra.mxu0 0
    %6683 = vmatprep.subr.bf16.mxu0 0
    %6684 = vmatpush1.bf16.msra.mxu0 0
    %6685 = vmatprep.subr.bf16.mxu0 0
    %6686 = vmatpush1.bf16.msra.mxu0 0
    %6687 = vmatprep.subr.bf16.mxu0 0
    %6688 = vmatpush1.bf16.msra.mxu0 0
    %6689 = vmatprep.subr.bf16.mxu0 0
    %6690 = vmatpush1.bf16.msra.mxu0 0
    %6691 = vmatprep.subr.bf16.mxu0 0
    %6692 = vmatpush1.bf16.msra.mxu0 0
    %6693 = vmatprep.mubr.bf16.mxu0 0
    %6694 = vmatmul.mubr.bf16.gmra.mrb[0].mxu0 %v6608
    %v6695 = vpop.f32.mrb[0].mxu0
    %v6696 = vadd.f32 0.0, %v6695
    %v6697 = vpop.f32.mrb[0].mxu0
    %v6698 = vpop.f32.mrb[0].mxu0
    %v6699 = vadd.f32 0.0, %v6698
    %v6700 = vpop.f32.mrb[0].mxu0
    %6701 = vmatprep.mubr.bf16.mxu0 0
    %6702 = vmatmul.mubr.bf16.gmra.mrb[0].mxu0 %v6609
    %v6703 = vpop.f32.mrb[0].mxu0
    %v6704 = vadd.f32 0.0, %v6703
    %v6705 = vpop.f32.mrb[0].mxu0
    %v6706 = vpop.f32.mrb[0].mxu0
    %v6707 = vpop.f32.mrb[0].mxu0
    %6708 = vdwg.mxu0
    %v6709 = vadd.f32 %v6599, %v6645
    %v6710 = vadd.f32 %v6602, %v6649
    %v6711 = vadd.f32 %v6605, %v6655
    %v6712 = vxor.u32 %v6709, 2147483648
    %v6713 = vxor.u32 %v6710, 2147483648
    %v6714 = vxor.u32 %v6711, 2147483648
    %v6715 = vmul.f32 %v6712, 1.442695
    %v6716 = vpow.pop %v6715
    %v6717 = vmul.f32 %v6713, 1.442695
    %v6718 = vpow.pop %v6717
    %v6719 = vmul.f32 %v6714, 1.442695
    %v6720 = vpow.pop %v6719
    %v6721 = vadd.f32 %v6716, 1.0
    %v6722 = vadd.f32 %v6718, 1.0
    %v6723 = vadd.f32 %v6720, 1.0
    %v6724 = vrcp.pop %v6721
    %v6725 = vmul.f32 1.0, %v6724
    %v6726 = vrcp.pop %v6722
    %v6727 = vmul.f32 1.0, %v6726
    %v6728 = vrcp.pop %v6723
    %v6729 = vmul.f32 1.0, %v6728
    %v6730 = vadd.f32 %v6600, %v6647
    %v6731 = vadd.f32 %v6603, %v6651
    %v6732 = vadd.f32 %v6606, %v6657
    %v6733 = vxor.u32 %v6730, 2147483648
    %v6734 = vxor.u32 %v6731, 2147483648
    %v6735 = vxor.u32 %v6732, 2147483648
    %v6736 = vmul.f32 %v6733, 1.442695
    %v6737 = vpow.pop %v6736
    %v6738 = vmul.f32 %v6734, 1.442695
    %v6739 = vpow.pop %v6738
    %v6740 = vmul.f32 %v6735, 1.442695
    %v6741 = vpow.pop %v6740
    %v6742 = vadd.f32 %v6737, 1.0
    %v6743 = vadd.f32 %v6739, 1.0
    %v6744 = vadd.f32 %v6741, 1.0
    %v6745 = vrcp.pop %v6742
    %v6746 = vmul.f32 1.0, %v6745
    %v6747 = vrcp.pop %v6743
    %v6748 = vmul.f32 1.0, %v6747
    %v6749 = vrcp.pop %v6744
    %v6750 = vmul.f32 1.0, %v6749
    %v6751 = vadd.f32 %v6696, %v2349
    %v6752 = vadd.f32 %v6699, %v2349
    %v6753 = vadd.f32 %v6704, %v2349
    %v6754 = vmul.f32 %v6725, %v6751
    %v6755 = vmul.f32 %v6727, %v6752
    %v6756 = vmul.f32 %v6729, %v6753
    %v6757 = vadd.f32 %v6601, %v6754
    %v6758 = vadd.f32 %v6604, %v6755
    %v6759 = vadd.f32 %v6607, %v6756
    %v6760 = vtanh.pop %v6757
    %v6761 = vtanh.pop %v6758
    %v6762 = vtanh.pop %v6759
    %v6763 = vsub.f32 1.0, %v6746
    %v6764 = vsub.f32 1.0, %v6748
    %v6765 = vsub.f32 1.0, %v6750
    %v6766 = vmul.f32 %v6763, %v6760
    %v6767 = vmul.f32 %v6764, %v6761
    %v6768 = vmul.f32 %v6765, %v6762
    %v6769 = vmul.f32 %v6746, %v6596
    %v6770 = vmul.f32 %v6748, %v6597
    %v6771 = vmul.f32 %v6750, %v6598
    %v6772 = vadd.f32 %v6766, %v6769
    %v6773 = vadd.f32 %v6767, %v6770
    %v6774 = vadd.f32 %v6768, %v6771
    %v6775 = vld [vmem:[#allocation2 + $0x750] sm:$0xff]
    %v6776 = vld [vmem:[#allocation2 + $0x758] sm:$0xff]
    %v6777 = vld [vmem:[#allocation2 + $0x760] sm:$0xff]
    %v6778 = vld [vmem:[#allocation2 + $0x768] sm:$0xff]
    %v6779 = vld [vmem:[#allocation2 + $0x770] sm:$0xff]
    %v6780 = vld [vmem:[#allocation2 + $0x778] sm:$0xff]
    %v6781 = vld [vmem:[#allocation2 + $0x780] sm:$0xff]
    %v6782 = vld [vmem:[#allocation2 + $0x788] sm:$0xff]
    %v6783 = vld [vmem:[#allocation2 + $0x790] sm:$0xff]
    %v6784 = vpack.c.bf16 %v6773, %v6772
    %v6785 = vpack.c.bf16 %v6774, %v6774
    %6786 = vmatprep.subr.bf16.mxu0 %v2157
    %6787 = vmatpush1.bf16.msra.mxu0 %v2156
    %6788 = vmatprep.subr.bf16.mxu0 %v2160
    %6789 = vmatpush1.bf16.msra.mxu0 %v2159
    %6790 = vmatprep.subr.bf16.mxu0 %v2163
    %6791 = vmatpush1.bf16.msra.mxu0 %v2162
    %6792 = vmatprep.subr.bf16.mxu0 %v2166
    %6793 = vmatpush1.bf16.msra.mxu0 %v2165
    %6794 = vmatprep.subr.bf16.mxu0 %v2169
    %6795 = vmatpush1.bf16.msra.mxu0 %v2168
    %6796 = vmatprep.subr.bf16.mxu0 %v2172
    %6797 = vmatpush1.bf16.msra.mxu0 %v2171
    %6798 = vmatprep.subr.bf16.mxu0 %v2175
    %6799 = vmatpush1.bf16.msra.mxu0 %v2174
    %6800 = vmatprep.subr.bf16.mxu0 %v2178
    %6801 = vmatpush1.bf16.msra.mxu0 %v2177
    %6802 = vmatprep.subr.bf16.mxu0 0
    %6803 = vmatpush1.bf16.msra.mxu0 0
    %6804 = vmatprep.subr.bf16.mxu0 0
    %6805 = vmatpush1.bf16.msra.mxu0 0
    %6806 = vmatprep.subr.bf16.mxu0 0
    %6807 = vmatpush1.bf16.msra.mxu0 0
    %6808 = vmatprep.subr.bf16.mxu0 0
    %6809 = vmatpush1.bf16.msra.mxu0 0
    %6810 = vmatprep.subr.bf16.mxu0 0
    %6811 = vmatpush1.bf16.msra.mxu0 0
    %6812 = vmatprep.subr.bf16.mxu0 0
    %6813 = vmatpush1.bf16.msra.mxu0 0
    %6814 = vmatprep.subr.bf16.mxu0 0
    %6815 = vmatpush1.bf16.msra.mxu0 0
    %6816 = vmatprep.subr.bf16.mxu0 0
    %6817 = vmatpush1.bf16.msra.mxu0 0
    %6818 = vmatprep.mubr.bf16.mxu0 0
    %6819 = vmatmul.mubr.bf16.gmra.mrb[0].mxu0 %v6784
    %v6820 = vpop.f32.mrb[0].mxu0
    %v6821 = vadd.f32 0.0, %v6820
    %v6822 = vpop.f32.mrb[0].mxu0
    %v6823 = vadd.f32 0.0, %v6822
    %v6824 = vpop.f32.mrb[0].mxu0
    %v6825 = vadd.f32 0.0, %v6824
    %v6826 = vpop.f32.mrb[0].mxu0
    %v6827 = vadd.f32 0.0, %v6826
    %6828 = vmatprep.mubr.bf16.mxu0 0
    %6829 = vmatmul.mubr.bf16.gmra.mrb[0].mxu0 %v6785
    %v6830 = vpop.f32.mrb[0].mxu0
    %v6831 = vadd.f32 0.0, %v6830
    %v6832 = vpop.f32.mrb[0].mxu0
    %v6833 = vadd.f32 0.0, %v6832
    %v6834 = vpop.f32.mrb[0].mxu0
    %v6835 = vpop.f32.mrb[0].mxu0
    %6836 = vdwg.mxu0
    %6837 = vmatprep.subr.bf16.mxu0 0
    %6838 = vmatpush1.bf16.msra.mxu0 %v2158
    %6839 = vmatprep.subr.bf16.mxu0 0
    %6840 = vmatpush1.bf16.msra.mxu0 %v2161
    %6841 = vmatprep.subr.bf16.mxu0 0
    %6842 = vmatpush1.bf16.msra.mxu0 %v2164
    %6843 = vmatprep.subr.bf16.mxu0 0
    %6844 = vmatpush1.bf16.msra.mxu0 %v2167
    %6845 = vmatprep.subr.bf16.mxu0 0
    %6846 = vmatpush1.bf16.msra.mxu0 %v2170
    %6847 = vmatprep.subr.bf16.mxu0 0
    %6848 = vmatpush1.bf16.msra.mxu0 %v2173
    %6849 = vmatprep.subr.bf16.mxu0 0
    %6850 = vmatpush1.bf16.msra.mxu0 %v2176
    %6851 = vmatprep.subr.bf16.mxu0 0
    %6852 = vmatpush1.bf16.msra.mxu0 %v2179
    %6853 = vmatprep.subr.bf16.mxu0 0
    %6854 = vmatpush1.bf16.msra.mxu0 0
    %6855 = vmatprep.subr.bf16.mxu0 0
    %6856 = vmatpush1.bf16.msra.mxu0 0
    %6857 = vmatprep.subr.bf16.mxu0 0
    %6858 = vmatpush1.bf16.msra.mxu0 0
    %6859 = vmatprep.subr.bf16.mxu0 0
    %6860 = vmatpush1.bf16.msra.mxu0 0
    %6861 = vmatprep.subr.bf16.mxu0 0
    %6862 = vmatpush1.bf16.msra.mxu0 0
    %6863 = vmatprep.subr.bf16.mxu0 0
    %6864 = vmatpush1.bf16.msra.mxu0 0
    %6865 = vmatprep.subr.bf16.mxu0 0
    %6866 = vmatpush1.bf16.msra.mxu0 0
    %6867 = vmatprep.subr.bf16.mxu0 0
    %6868 = vmatpush1.bf16.msra.mxu0 0
    %6869 = vmatprep.mubr.bf16.mxu0 0
    %6870 = vmatmul.mubr.bf16.gmra.mrb[0].mxu0 %v6784
    %v6871 = vpop.f32.mrb[0].mxu0
    %v6872 = vadd.f32 0.0, %v6871
    %v6873 = vpop.f32.mrb[0].mxu0
    %v6874 = vpop.f32.mrb[0].mxu0
    %v6875 = vadd.f32 0.0, %v6874
    %v6876 = vpop.f32.mrb[0].mxu0
    %6877 = vmatprep.mubr.bf16.mxu0 0
    %6878 = vmatmul.mubr.bf16.gmra.mrb[0].mxu0 %v6785
    %v6879 = vpop.f32.mrb[0].mxu0
    %v6880 = vadd.f32 0.0, %v6879
    %v6881 = vpop.f32.mrb[0].mxu0
    %v6882 = vpop.f32.mrb[0].mxu0
    %v6883 = vpop.f32.mrb[0].mxu0
    %6884 = vdwg.mxu0
    %v6885 = vadd.f32 %v6775, %v6821
    %v6886 = vadd.f32 %v6778, %v6825
    %v6887 = vadd.f32 %v6781, %v6831
    %v6888 = vxor.u32 %v6885, 2147483648
    %v6889 = vxor.u32 %v6886, 2147483648
    %v6890 = vxor.u32 %v6887, 2147483648
    %v6891 = vmul.f32 %v6888, 1.442695
    %v6892 = vpow.pop %v6891
    %v6893 = vmul.f32 %v6889, 1.442695
    %v6894 = vpow.pop %v6893
    %v6895 = vmul.f32 %v6890, 1.442695
    %v6896 = vpow.pop %v6895
    %v6897 = vadd.f32 %v6892, 1.0
    %v6898 = vadd.f32 %v6894, 1.0
    %v6899 = vadd.f32 %v6896, 1.0
    %v6900 = vrcp.pop %v6897
    %v6901 = vmul.f32 1.0, %v6900
    %v6902 = vrcp.pop %v6898
    %v6903 = vmul.f32 1.0, %v6902
    %v6904 = vrcp.pop %v6899
    %v6905 = vmul.f32 1.0, %v6904
    %v6906 = vadd.f32 %v6776, %v6823
    %v6907 = vadd.f32 %v6779, %v6827
    %v6908 = vadd.f32 %v6782, %v6833
    %v6909 = vxor.u32 %v6906, 2147483648
    %v6910 = vxor.u32 %v6907, 2147483648
    %v6911 = vxor.u32 %v6908, 2147483648
    %v6912 = vmul.f32 %v6909, 1.442695
    %v6913 = vpow.pop %v6912
    %v6914 = vmul.f32 %v6910, 1.442695
    %v6915 = vpow.pop %v6914
    %v6916 = vmul.f32 %v6911, 1.442695
    %v6917 = vpow.pop %v6916
    %v6918 = vadd.f32 %v6913, 1.0
    %v6919 = vadd.f32 %v6915, 1.0
    %v6920 = vadd.f32 %v6917, 1.0
    %v6921 = vrcp.pop %v6918
    %v6922 = vmul.f32 1.0, %v6921
    %v6923 = vrcp.pop %v6919
    %v6924 = vmul.f32 1.0, %v6923
    %v6925 = vrcp.pop %v6920
    %v6926 = vmul.f32 1.0, %v6925
    %v6927 = vadd.f32 %v6872, %v2349
    %v6928 = vadd.f32 %v6875, %v2349
    %v6929 = vadd.f32 %v6880, %v2349
    %v6930 = vmul.f32 %v6901, %v6927
    %v6931 = vmul.f32 %v6903, %v6928
    %v6932 = vmul.f32 %v6905, %v6929
    %v6933 = vadd.f32 %v6777, %v6930
    %v6934 = vadd.f32 %v6780, %v6931
    %v6935 = vadd.f32 %v6783, %v6932
    %v6936 = vtanh.pop %v6933
    %v6937 = vtanh.pop %v6934
    %v6938 = vtanh.pop %v6935
    %v6939 = vsub.f32 1.0, %v6922
    %v6940 = vsub.f32 1.0, %v6924
    %v6941 = vsub.f32 1.0, %v6926
    %v6942 = vmul.f32 %v6939, %v6936
    %v6943 = vmul.f32 %v6940, %v6937
    %v6944 = vmul.f32 %v6941, %v6938
    %v6945 = vmul.f32 %v6922, %v6772
    %v6946 = vmul.f32 %v6924, %v6773
    %v6947 = vmul.f32 %v6926, %v6774
    %v6948 = vadd.f32 %v6942, %v6945
    %v6949 = vadd.f32 %v6943, %v6946
    %v6950 = vadd.f32 %v6944, %v6947
    %v6951 = vld [vmem:[#allocation2 + $0x798] sm:$0xff]
    %v6952 = vld [vmem:[#allocation2 + $0x7a0] sm:$0xff]
    %v6953 = vld [vmem:[#allocation2 + $0x7a8] sm:$0xff]
    %v6954 = vld [vmem:[#allocation2 + $0x7b0] sm:$0xff]
    %v6955 = vld [vmem:[#allocation2 + $0x7b8] sm:$0xff]
    %v6956 = vld [vmem:[#allocation2 + $0x7c0] sm:$0xff]
    %v6957 = vld [vmem:[#allocation2 + $0x7c8] sm:$0xff]
    %v6958 = vld [vmem:[#allocation2 + $0x7d0] sm:$0xff]
    %v6959 = vld [vmem:[#allocation2 + $0x7d8] sm:$0xff]
    %v6960 = vpack.c.bf16 %v6949, %v6948
    %v6961 = vpack.c.bf16 %v6950, %v6950
    %6962 = vmatprep.subr.bf16.mxu0 %v2157
    %6963 = vmatpush1.bf16.msra.mxu0 %v2156
    %6964 = vmatprep.subr.bf16.mxu0 %v2160
    %6965 = vmatpush1.bf16.msra.mxu0 %v2159
    %6966 = vmatprep.subr.bf16.mxu0 %v2163
    %6967 = vmatpush1.bf16.msra.mxu0 %v2162
    %6968 = vmatprep.subr.bf16.mxu0 %v2166
    %6969 = vmatpush1.bf16.msra.mxu0 %v2165
    %6970 = vmatprep.subr.bf16.mxu0 %v2169
    %6971 = vmatpush1.bf16.msra.mxu0 %v2168
    %6972 = vmatprep.subr.bf16.mxu0 %v2172
    %6973 = vmatpush1.bf16.msra.mxu0 %v2171
    %6974 = vmatprep.subr.bf16.mxu0 %v2175
    %6975 = vmatpush1.bf16.msra.mxu0 %v2174
    %6976 = vmatprep.subr.bf16.mxu0 %v2178
    %6977 = vmatpush1.bf16.msra.mxu0 %v2177
    %6978 = vmatprep.subr.bf16.mxu0 0
    %6979 = vmatpush1.bf16.msra.mxu0 0
    %6980 = vmatprep.subr.bf16.mxu0 0
    %6981 = vmatpush1.bf16.msra.mxu0 0
    %6982 = vmatprep.subr.bf16.mxu0 0
    %6983 = vmatpush1.bf16.msra.mxu0 0
    %6984 = vmatprep.subr.bf16.mxu0 0
    %6985 = vmatpush1.bf16.msra.mxu0 0
    %6986 = vmatprep.subr.bf16.mxu0 0
    %6987 = vmatpush1.bf16.msra.mxu0 0
    %6988 = vmatprep.subr.bf16.mxu0 0
    %6989 = vmatpush1.bf16.msra.mxu0 0
    %6990 = vmatprep.subr.bf16.mxu0 0
    %6991 = vmatpush1.bf16.msra.mxu0 0
    %6992 = vmatprep.subr.bf16.mxu0 0
    %6993 = vmatpush1.bf16.msra.mxu0 0
    %6994 = vmatprep.mubr.bf16.mxu0 0
    %6995 = vmatmul.mubr.bf16.gmra.mrb[0].mxu0 %v6960
    %v6996 = vpop.f32.mrb[0].mxu0
    %v6997 = vadd.f32 0.0, %v6996
    %v6998 = vpop.f32.mrb[0].mxu0
    %v6999 = vadd.f32 0.0, %v6998
    %v7000 = vpop.f32.mrb[0].mxu0
    %v7001 = vadd.f32 0.0, %v7000
    %v7002 = vpop.f32.mrb[0].mxu0
    %v7003 = vadd.f32 0.0, %v7002
    %7004 = vmatprep.mubr.bf16.mxu0 0
    %7005 = vmatmul.mubr.bf16.gmra.mrb[0].mxu0 %v6961
    %v7006 = vpop.f32.mrb[0].mxu0
    %v7007 = vadd.f32 0.0, %v7006
    %v7008 = vpop.f32.mrb[0].mxu0
    %v7009 = vadd.f32 0.0, %v7008
    %v7010 = vpop.f32.mrb[0].mxu0
    %v7011 = vpop.f32.mrb[0].mxu0
    %7012 = vdwg.mxu0
    %7013 = vmatprep.subr.bf16.mxu0 0
    %7014 = vmatpush1.bf16.msra.mxu0 %v2158
    %7015 = vmatprep.subr.bf16.mxu0 0
    %7016 = vmatpush1.bf16.msra.mxu0 %v2161
    %7017 = vmatprep.subr.bf16.mxu0 0
    %7018 = vmatpush1.bf16.msra.mxu0 %v2164
    %7019 = vmatprep.subr.bf16.mxu0 0
    %7020 = vmatpush1.bf16.msra.mxu0 %v2167
    %7021 = vmatprep.subr.bf16.mxu0 0
    %7022 = vmatpush1.bf16.msra.mxu0 %v2170
    %7023 = vmatprep.subr.bf16.mxu0 0
    %7024 = vmatpush1.bf16.msra.mxu0 %v2173
    %7025 = vmatprep.subr.bf16.mxu0 0
    %7026 = vmatpush1.bf16.msra.mxu0 %v2176
    %7027 = vmatprep.subr.bf16.mxu0 0
    %7028 = vmatpush1.bf16.msra.mxu0 %v2179
    %7029 = vmatprep.subr.bf16.mxu0 0
    %7030 = vmatpush1.bf16.msra.mxu0 0
    %7031 = vmatprep.subr.bf16.mxu0 0
    %7032 = vmatpush1.bf16.msra.mxu0 0
    %7033 = vmatprep.subr.bf16.mxu0 0
    %7034 = vmatpush1.bf16.msra.mxu0 0
    %7035 = vmatprep.subr.bf16.mxu0 0
    %7036 = vmatpush1.bf16.msra.mxu0 0
    %7037 = vmatprep.subr.bf16.mxu0 0
    %7038 = vmatpush1.bf16.msra.mxu0 0
    %7039 = vmatprep.subr.bf16.mxu0 0
    %7040 = vmatpush1.bf16.msra.mxu0 0
    %7041 = vmatprep.subr.bf16.mxu0 0
    %7042 = vmatpush1.bf16.msra.mxu0 0
    %7043 = vmatprep.subr.bf16.mxu0 0
    %7044 = vmatpush1.bf16.msra.mxu0 0
    %7045 = vmatprep.mubr.bf16.mxu0 0
    %7046 = vmatmul.mubr.bf16.gmra.mrb[0].mxu0 %v6960
    %v7047 = vpop.f32.mrb[0].mxu0
    %v7048 = vadd.f32 0.0, %v7047
    %v7049 = vpop.f32.mrb[0].mxu0
    %v7050 = vpop.f32.mrb[0].mxu0
    %v7051 = vadd.f32 0.0, %v7050
    %v7052 = vpop.f32.mrb[0].mxu0
    %7053 = vmatprep.mubr.bf16.mxu0 0
    %7054 = vmatmul.mubr.bf16.gmra.mrb[0].mxu0 %v6961
    %v7055 = vpop.f32.mrb[0].mxu0
    %v7056 = vadd.f32 0.0, %v7055
    %v7057 = vpop.f32.mrb[0].mxu0
    %v7058 = vpop.f32.mrb[0].mxu0
    %v7059 = vpop.f32.mrb[0].mxu0
    %7060 = vdwg.mxu0
    %v7061 = vadd.f32 %v6951, %v6997
    %v7062 = vadd.f32 %v6954, %v7001
    %v7063 = vadd.f32 %v6957, %v7007
    %v7064 = vxor.u32 %v7061, 2147483648
    %v7065 = vxor.u32 %v7062, 2147483648
    %v7066 = vxor.u32 %v7063, 2147483648
    %v7067 = vmul.f32 %v7064, 1.442695
    %v7068 = vpow.pop %v7067
    %v7069 = vmul.f32 %v7065, 1.442695
    %v7070 = vpow.pop %v7069
    %v7071 = vmul.f32 %v7066, 1.442695
    %v7072 = vpow.pop %v7071
    %v7073 = vadd.f32 %v7068, 1.0
    %v7074 = vadd.f32 %v7070, 1.0
    %v7075 = vadd.f32 %v7072, 1.0
    %v7076 = vrcp.pop %v7073
    %v7077 = vmul.f32 1.0, %v7076
    %v7078 = vrcp.pop %v7074
    %v7079 = vmul.f32 1.0, %v7078
    %v7080 = vrcp.pop %v7075
    %v7081 = vmul.f32 1.0, %v7080
    %v7082 = vadd.f32 %v6952, %v6999
    %v7083 = vadd.f32 %v6955, %v7003
    %v7084 = vadd.f32 %v6958, %v7009
    %v7085 = vxor.u32 %v7082, 2147483648
    %v7086 = vxor.u32 %v7083, 2147483648
    %v7087 = vxor.u32 %v7084, 2147483648
    %v7088 = vmul.f32 %v7085, 1.442695
    %v7089 = vpow.pop %v7088
    %v7090 = vmul.f32 %v7086, 1.442695
    %v7091 = vpow.pop %v7090
    %v7092 = vmul.f32 %v7087, 1.442695
    %v7093 = vpow.pop %v7092
    %v7094 = vadd.f32 %v7089, 1.0
    %v7095 = vadd.f32 %v7091, 1.0
    %v7096 = vadd.f32 %v7093, 1.0
    %v7097 = vrcp.pop %v7094
    %v7098 = vmul.f32 1.0, %v7097
    %v7099 = vrcp.pop %v7095
    %v7100 = vmul.f32 1.0, %v7099
    %v7101 = vrcp.pop %v7096
    %v7102 = vmul.f32 1.0, %v7101
    %v7103 = vadd.f32 %v7048, %v2349
    %v7104 = vadd.f32 %v7051, %v2349
    %v7105 = vadd.f32 %v7056, %v2349
    %v7106 = vmul.f32 %v7077, %v7103
    %v7107 = vmul.f32 %v7079, %v7104
    %v7108 = vmul.f32 %v7081, %v7105
    %v7109 = vadd.f32 %v6953, %v7106
    %v7110 = vadd.f32 %v6956, %v7107
    %v7111 = vadd.f32 %v6959, %v7108
    %v7112 = vtanh.pop %v7109
    %v7113 = vtanh.pop %v7110
    %v7114 = vtanh.pop %v7111
    %v7115 = vsub.f32 1.0, %v7098
    %v7116 = vsub.f32 1.0, %v7100
    %v7117 = vsub.f32 1.0, %v7102
    %v7118 = vmul.f32 %v7115, %v7112
    %v7119 = vmul.f32 %v7116, %v7113
    %v7120 = vmul.f32 %v7117, %v7114
    %v7121 = vmul.f32 %v7098, %v6948
    %v7122 = vmul.f32 %v7100, %v6949
    %v7123 = vmul.f32 %v7102, %v6950
    %v7124 = vadd.f32 %v7118, %v7121
    %v7125 = vadd.f32 %v7119, %v7122
    %v7126 = vadd.f32 %v7120, %v7123
    %v7127 = vld [vmem:[#allocation2 + $0x7e0] sm:$0xff]
    %v7128 = vld [vmem:[#allocation2 + $0x7e8] sm:$0xff]
    %v7129 = vld [vmem:[#allocation2 + $0x7f0] sm:$0xff]
    %v7130 = vld [vmem:[#allocation2 + $0x7f8] sm:$0xff]
    %v7131 = vld [vmem:[#allocation2 + $0x800] sm:$0xff]
    %v7132 = vld [vmem:[#allocation2 + $0x808] sm:$0xff]
    %v7133 = vld [vmem:[#allocation2 + $0x810] sm:$0xff]
    %v7134 = vld [vmem:[#allocation2 + $0x818] sm:$0xff]
    %v7135 = vld [vmem:[#allocation2 + $0x820] sm:$0xff]
    %v7136 = vpack.c.bf16 %v7125, %v7124
    %v7137 = vpack.c.bf16 %v7126, %v7126
    %7138 = vmatprep.subr.bf16.mxu0 %v2157
    %7139 = vmatpush1.bf16.msra.mxu0 %v2156
    %7140 = vmatprep.subr.bf16.mxu0 %v2160
    %7141 = vmatpush1.bf16.msra.mxu0 %v2159
    %7142 = vmatprep.subr.bf16.mxu0 %v2163
    %7143 = vmatpush1.bf16.msra.mxu0 %v2162
    %7144 = vmatprep.subr.bf16.mxu0 %v2166
    %7145 = vmatpush1.bf16.msra.mxu0 %v2165
    %7146 = vmatprep.subr.bf16.mxu0 %v2169
    %7147 = vmatpush1.bf16.msra.mxu0 %v2168
    %7148 = vmatprep.subr.bf16.mxu0 %v2172
    %7149 = vmatpush1.bf16.msra.mxu0 %v2171
    %7150 = vmatprep.subr.bf16.mxu0 %v2175
    %7151 = vmatpush1.bf16.msra.mxu0 %v2174
    %7152 = vmatprep.subr.bf16.mxu0 %v2178
    %7153 = vmatpush1.bf16.msra.mxu0 %v2177
    %7154 = vmatprep.subr.bf16.mxu0 0
    %7155 = vmatpush1.bf16.msra.mxu0 0
    %7156 = vmatprep.subr.bf16.mxu0 0
    %7157 = vmatpush1.bf16.msra.mxu0 0
    %7158 = vmatprep.subr.bf16.mxu0 0
    %7159 = vmatpush1.bf16.msra.mxu0 0
    %7160 = vmatprep.subr.bf16.mxu0 0
    %7161 = vmatpush1.bf16.msra.mxu0 0
    %7162 = vmatprep.subr.bf16.mxu0 0
    %7163 = vmatpush1.bf16.msra.mxu0 0
    %7164 = vmatprep.subr.bf16.mxu0 0
    %7165 = vmatpush1.bf16.msra.mxu0 0
    %7166 = vmatprep.subr.bf16.mxu0 0
    %7167 = vmatpush1.bf16.msra.mxu0 0
    %7168 = vmatprep.subr.bf16.mxu0 0
    %7169 = vmatpush1.bf16.msra.mxu0 0
    %7170 = vmatprep.mubr.bf16.mxu0 0
    %7171 = vmatmul.mubr.bf16.gmra.mrb[0].mxu0 %v7136
    %v7172 = vpop.f32.mrb[0].mxu0
    %v7173 = vadd.f32 0.0, %v7172
    %v7174 = vpop.f32.mrb[0].mxu0
    %v7175 = vadd.f32 0.0, %v7174
    %v7176 = vpop.f32.mrb[0].mxu0
    %v7177 = vadd.f32 0.0, %v7176
    %v7178 = vpop.f32.mrb[0].mxu0
    %v7179 = vadd.f32 0.0, %v7178
    %7180 = vmatprep.mubr.bf16.mxu0 0
    %7181 = vmatmul.mubr.bf16.gmra.mrb[0].mxu0 %v7137
    %v7182 = vpop.f32.mrb[0].mxu0
    %v7183 = vadd.f32 0.0, %v7182
    %v7184 = vpop.f32.mrb[0].mxu0
    %v7185 = vadd.f32 0.0, %v7184
    %v7186 = vpop.f32.mrb[0].mxu0
    %v7187 = vpop.f32.mrb[0].mxu0
    %7188 = vdwg.mxu0
    %7189 = vmatprep.subr.bf16.mxu0 0
    %7190 = vmatpush1.bf16.msra.mxu0 %v2158
    %7191 = vmatprep.subr.bf16.mxu0 0
    %7192 = vmatpush1.bf16.msra.mxu0 %v2161
    %7193 = vmatprep.subr.bf16.mxu0 0
    %7194 = vmatpush1.bf16.msra.mxu0 %v2164
    %7195 = vmatprep.subr.bf16.mxu0 0
    %7196 = vmatpush1.bf16.msra.mxu0 %v2167
    %7197 = vmatprep.subr.bf16.mxu0 0
    %7198 = vmatpush1.bf16.msra.mxu0 %v2170
    %7199 = vmatprep.subr.bf16.mxu0 0
    %7200 = vmatpush1.bf16.msra.mxu0 %v2173
    %7201 = vmatprep.subr.bf16.mxu0 0
    %7202 = vmatpush1.bf16.msra.mxu0 %v2176
    %7203 = vmatprep.subr.bf16.mxu0 0
    %7204 = vmatpush1.bf16.msra.mxu0 %v2179
    %7205 = vmatprep.subr.bf16.mxu0 0
    %7206 = vmatpush1.bf16.msra.mxu0 0
    %7207 = vmatprep.subr.bf16.mxu0 0
    %7208 = vmatpush1.bf16.msra.mxu0 0
    %7209 = vmatprep.subr.bf16.mxu0 0
    %7210 = vmatpush1.bf16.msra.mxu0 0
    %7211 = vmatprep.subr.bf16.mxu0 0
    %7212 = vmatpush1.bf16.msra.mxu0 0
    %7213 = vmatprep.subr.bf16.mxu0 0
    %7214 = vmatpush1.bf16.msra.mxu0 0
    %7215 = vmatprep.subr.bf16.mxu0 0
    %7216 = vmatpush1.bf16.msra.mxu0 0
    %7217 = vmatprep.subr.bf16.mxu0 0
    %7218 = vmatpush1.bf16.msra.mxu0 0
    %7219 = vmatprep.subr.bf16.mxu0 0
    %7220 = vmatpush1.bf16.msra.mxu0 0
    %7221 = vmatprep.mubr.bf16.mxu0 0
    %7222 = vmatmul.mubr.bf16.gmra.mrb[0].mxu0 %v7136
    %v7223 = vpop.f32.mrb[0].mxu0
    %v7224 = vadd.f32 0.0, %v7223
    %v7225 = vpop.f32.mrb[0].mxu0
    %v7226 = vpop.f32.mrb[0].mxu0
    %v7227 = vadd.f32 0.0, %v7226
    %v7228 = vpop.f32.mrb[0].mxu0
    %7229 = vmatprep.mubr.bf16.mxu0 0
    %7230 = vmatmul.mubr.bf16.gmra.mrb[0].mxu0 %v7137
    %v7231 = vpop.f32.mrb[0].mxu0
    %v7232 = vadd.f32 0.0, %v7231
    %v7233 = vpop.f32.mrb[0].mxu0
    %v7234 = vpop.f32.mrb[0].mxu0
    %v7235 = vpop.f32.mrb[0].mxu0
    %7236 = vdwg.mxu0
    %v7237 = vadd.f32 %v7127, %v7173
    %v7238 = vadd.f32 %v7130, %v7177
    %v7239 = vadd.f32 %v7133, %v7183
    %v7240 = vxor.u32 %v7237, 2147483648
    %v7241 = vxor.u32 %v7238, 2147483648
    %v7242 = vxor.u32 %v7239, 2147483648
    %v7243 = vmul.f32 %v7240, 1.442695
    %v7244 = vpow.pop %v7243
    %v7245 = vmul.f32 %v7241, 1.442695
    %v7246 = vpow.pop %v7245
    %v7247 = vmul.f32 %v7242, 1.442695
    %v7248 = vpow.pop %v7247
    %v7249 = vadd.f32 %v7244, 1.0
    %v7250 = vadd.f32 %v7246, 1.0
    %v7251 = vadd.f32 %v7248, 1.0
    %v7252 = vrcp.pop %v7249
    %v7253 = vmul.f32 1.0, %v7252
    %v7254 = vrcp.pop %v7250
    %v7255 = vmul.f32 1.0, %v7254
    %v7256 = vrcp.pop %v7251
    %v7257 = vmul.f32 1.0, %v7256
    %v7258 = vadd.f32 %v7128, %v7175
    %v7259 = vadd.f32 %v7131, %v7179
    %v7260 = vadd.f32 %v7134, %v7185
    %v7261 = vxor.u32 %v7258, 2147483648
    %v7262 = vxor.u32 %v7259, 2147483648
    %v7263 = vxor.u32 %v7260, 2147483648
    %v7264 = vmul.f32 %v7261, 1.442695
    %v7265 = vpow.pop %v7264
    %v7266 = vmul.f32 %v7262, 1.442695
    %v7267 = vpow.pop %v7266
    %v7268 = vmul.f32 %v7263, 1.442695
    %v7269 = vpow.pop %v7268
    %v7270 = vadd.f32 %v7265, 1.0
    %v7271 = vadd.f32 %v7267, 1.0
    %v7272 = vadd.f32 %v7269, 1.0
    %v7273 = vrcp.pop %v7270
    %v7274 = vmul.f32 1.0, %v7273
    %v7275 = vrcp.pop %v7271
    %v7276 = vmul.f32 1.0, %v7275
    %v7277 = vrcp.pop %v7272
    %v7278 = vmul.f32 1.0, %v7277
    %v7279 = vadd.f32 %v7224, %v2349
    %v7280 = vadd.f32 %v7227, %v2349
    %v7281 = vadd.f32 %v7232, %v2349
    %v7282 = vmul.f32 %v7253, %v7279
    %v7283 = vmul.f32 %v7255, %v7280
    %v7284 = vmul.f32 %v7257, %v7281
    %v7285 = vadd.f32 %v7129, %v7282
    %v7286 = vadd.f32 %v7132, %v7283
    %v7287 = vadd.f32 %v7135, %v7284
    %v7288 = vtanh.pop %v7285
    %v7289 = vtanh.pop %v7286
    %v7290 = vtanh.pop %v7287
    %v7291 = vsub.f32 1.0, %v7274
    %v7292 = vsub.f32 1.0, %v7276
    %v7293 = vsub.f32 1.0, %v7278
    %v7294 = vmul.f32 %v7291, %v7288
    %v7295 = vmul.f32 %v7292, %v7289
    %v7296 = vmul.f32 %v7293, %v7290
    %v7297 = vmul.f32 %v7274, %v7124
    %v7298 = vmul.f32 %v7276, %v7125
    %v7299 = vmul.f32 %v7278, %v7126
    %v7300 = vadd.f32 %v7294, %v7297
    %v7301 = vadd.f32 %v7295, %v7298
    %v7302 = vadd.f32 %v7296, %v7299
    %v7303 = vld [vmem:[#allocation2 + $0x828] sm:$0xff]
    %v7304 = vld [vmem:[#allocation2 + $0x830] sm:$0xff]
    %v7305 = vld [vmem:[#allocation2 + $0x838] sm:$0xff]
    %v7306 = vld [vmem:[#allocation2 + $0x840] sm:$0xff]
    %v7307 = vld [vmem:[#allocation2 + $0x848] sm:$0xff]
    %v7308 = vld [vmem:[#allocation2 + $0x850] sm:$0xff]
    %v7309 = vld [vmem:[#allocation2 + $0x858] sm:$0xff]
    %v7310 = vld [vmem:[#allocation2 + $0x860] sm:$0xff]
    %v7311 = vld [vmem:[#allocation2 + $0x868] sm:$0xff]
    %v7312 = vpack.c.bf16 %v7301, %v7300
    %v7313 = vpack.c.bf16 %v7302, %v7302
    %7314 = vmatprep.subr.bf16.mxu0 %v2157
    %7315 = vmatpush1.bf16.msra.mxu0 %v2156
    %7316 = vmatprep.subr.bf16.mxu0 %v2160
    %7317 = vmatpush1.bf16.msra.mxu0 %v2159
    %7318 = vmatprep.subr.bf16.mxu0 %v2163
    %7319 = vmatpush1.bf16.msra.mxu0 %v2162
    %7320 = vmatprep.subr.bf16.mxu0 %v2166
    %7321 = vmatpush1.bf16.msra.mxu0 %v2165
    %7322 = vmatprep.subr.bf16.mxu0 %v2169
    %7323 = vmatpush1.bf16.msra.mxu0 %v2168
    %7324 = vmatprep.subr.bf16.mxu0 %v2172
    %7325 = vmatpush1.bf16.msra.mxu0 %v2171
    %7326 = vmatprep.subr.bf16.mxu0 %v2175
    %7327 = vmatpush1.bf16.msra.mxu0 %v2174
    %7328 = vmatprep.subr.bf16.mxu0 %v2178
    %7329 = vmatpush1.bf16.msra.mxu0 %v2177
    %7330 = vmatprep.subr.bf16.mxu0 0
    %7331 = vmatpush1.bf16.msra.mxu0 0
    %7332 = vmatprep.subr.bf16.mxu0 0
    %7333 = vmatpush1.bf16.msra.mxu0 0
    %7334 = vmatprep.subr.bf16.mxu0 0
    %7335 = vmatpush1.bf16.msra.mxu0 0
    %7336 = vmatprep.subr.bf16.mxu0 0
    %7337 = vmatpush1.bf16.msra.mxu0 0
    %7338 = vmatprep.subr.bf16.mxu0 0
    %7339 = vmatpush1.bf16.msra.mxu0 0
    %7340 = vmatprep.subr.bf16.mxu0 0
    %7341 = vmatpush1.bf16.msra.mxu0 0
    %7342 = vmatprep.subr.bf16.mxu0 0
    %7343 = vmatpush1.bf16.msra.mxu0 0
    %7344 = vmatprep.subr.bf16.mxu0 0
    %7345 = vmatpush1.bf16.msra.mxu0 0
    %7346 = vmatprep.mubr.bf16.mxu0 0
    %7347 = vmatmul.mubr.bf16.gmra.mrb[0].mxu0 %v7312
    %v7348 = vpop.f32.mrb[0].mxu0
    %v7349 = vadd.f32 0.0, %v7348
    %v7350 = vpop.f32.mrb[0].mxu0
    %v7351 = vadd.f32 0.0, %v7350
    %v7352 = vpop.f32.mrb[0].mxu0
    %v7353 = vadd.f32 0.0, %v7352
    %v7354 = vpop.f32.mrb[0].mxu0
    %v7355 = vadd.f32 0.0, %v7354
    %7356 = vmatprep.mubr.bf16.mxu0 0
    %7357 = vmatmul.mubr.bf16.gmra.mrb[0].mxu0 %v7313
    %v7358 = vpop.f32.mrb[0].mxu0
    %v7359 = vadd.f32 0.0, %v7358
    %v7360 = vpop.f32.mrb[0].mxu0
    %v7361 = vadd.f32 0.0, %v7360
    %v7362 = vpop.f32.mrb[0].mxu0
    %v7363 = vpop.f32.mrb[0].mxu0
    %7364 = vdwg.mxu0
    %7365 = vmatprep.subr.bf16.mxu0 0
    %7366 = vmatpush1.bf16.msra.mxu0 %v2158
    %7367 = vmatprep.subr.bf16.mxu0 0
    %7368 = vmatpush1.bf16.msra.mxu0 %v2161
    %7369 = vmatprep.subr.bf16.mxu0 0
    %7370 = vmatpush1.bf16.msra.mxu0 %v2164
    %7371 = vmatprep.subr.bf16.mxu0 0
    %7372 = vmatpush1.bf16.msra.mxu0 %v2167
    %7373 = vmatprep.subr.bf16.mxu0 0
    %7374 = vmatpush1.bf16.msra.mxu0 %v2170
    %7375 = vmatprep.subr.bf16.mxu0 0
    %7376 = vmatpush1.bf16.msra.mxu0 %v2173
    %7377 = vmatprep.subr.bf16.mxu0 0
    %7378 = vmatpush1.bf16.msra.mxu0 %v2176
    %7379 = vmatprep.subr.bf16.mxu0 0
    %7380 = vmatpush1.bf16.msra.mxu0 %v2179
    %7381 = vmatprep.subr.bf16.mxu0 0
    %7382 = vmatpush1.bf16.msra.mxu0 0
    %7383 = vmatprep.subr.bf16.mxu0 0
    %7384 = vmatpush1.bf16.msra.mxu0 0
    %7385 = vmatprep.subr.bf16.mxu0 0
    %7386 = vmatpush1.bf16.msra.mxu0 0
    %7387 = vmatprep.subr.bf16.mxu0 0
    %7388 = vmatpush1.bf16.msra.mxu0 0
    %7389 = vmatprep.subr.bf16.mxu0 0
    %7390 = vmatpush1.bf16.msra.mxu0 0
    %7391 = vmatprep.subr.bf16.mxu0 0
    %7392 = vmatpush1.bf16.msra.mxu0 0
    %7393 = vmatprep.subr.bf16.mxu0 0
    %7394 = vmatpush1.bf16.msra.mxu0 0
    %7395 = vmatprep.subr.bf16.mxu0 0
    %7396 = vmatpush1.bf16.msra.mxu0 0
    %7397 = vmatprep.mubr.bf16.mxu0 0
    %7398 = vmatmul.mubr.bf16.gmra.mrb[0].mxu0 %v7312
    %v7399 = vpop.f32.mrb[0].mxu0
    %v7400 = vadd.f32 0.0, %v7399
    %v7401 = vpop.f32.mrb[0].mxu0
    %v7402 = vpop.f32.mrb[0].mxu0
    %v7403 = vadd.f32 0.0, %v7402
    %v7404 = vpop.f32.mrb[0].mxu0
    %7405 = vmatprep.mubr.bf16.mxu0 0
    %7406 = vmatmul.mubr.bf16.gmra.mrb[0].mxu0 %v7313
    %v7407 = vpop.f32.mrb[0].mxu0
    %v7408 = vadd.f32 0.0, %v7407
    %v7409 = vpop.f32.mrb[0].mxu0
    %v7410 = vpop.f32.mrb[0].mxu0
    %v7411 = vpop.f32.mrb[0].mxu0
    %7412 = vdwg.mxu0
    %v7413 = vadd.f32 %v7303, %v7349
    %v7414 = vadd.f32 %v7306, %v7353
    %v7415 = vadd.f32 %v7309, %v7359
    %v7416 = vxor.u32 %v7413, 2147483648
    %v7417 = vxor.u32 %v7414, 2147483648
    %v7418 = vxor.u32 %v7415, 2147483648
    %v7419 = vmul.f32 %v7416, 1.442695
    %v7420 = vpow.pop %v7419
    %v7421 = vmul.f32 %v7417, 1.442695
    %v7422 = vpow.pop %v7421
    %v7423 = vmul.f32 %v7418, 1.442695
    %v7424 = vpow.pop %v7423
    %v7425 = vadd.f32 %v7420, 1.0
    %v7426 = vadd.f32 %v7422, 1.0
    %v7427 = vadd.f32 %v7424, 1.0
    %v7428 = vrcp.pop %v7425
    %v7429 = vmul.f32 1.0, %v7428
    %v7430 = vrcp.pop %v7426
    %v7431 = vmul.f32 1.0, %v7430
    %v7432 = vrcp.pop %v7427
    %v7433 = vmul.f32 1.0, %v7432
    %v7434 = vadd.f32 %v7304, %v7351
    %v7435 = vadd.f32 %v7307, %v7355
    %v7436 = vadd.f32 %v7310, %v7361
    %v7437 = vxor.u32 %v7434, 2147483648
    %v7438 = vxor.u32 %v7435, 2147483648
    %v7439 = vxor.u32 %v7436, 2147483648
    %v7440 = vmul.f32 %v7437, 1.442695
    %v7441 = vpow.pop %v7440
    %v7442 = vmul.f32 %v7438, 1.442695
    %v7443 = vpow.pop %v7442
    %v7444 = vmul.f32 %v7439, 1.442695
    %v7445 = vpow.pop %v7444
    %v7446 = vadd.f32 %v7441, 1.0
    %v7447 = vadd.f32 %v7443, 1.0
    %v7448 = vadd.f32 %v7445, 1.0
    %v7449 = vrcp.pop %v7446
    %v7450 = vmul.f32 1.0, %v7449
    %v7451 = vrcp.pop %v7447
    %v7452 = vmul.f32 1.0, %v7451
    %v7453 = vrcp.pop %v7448
    %v7454 = vmul.f32 1.0, %v7453
    %v7455 = vadd.f32 %v7400, %v2349
    %v7456 = vadd.f32 %v7403, %v2349
    %v7457 = vadd.f32 %v7408, %v2349
    %v7458 = vmul.f32 %v7429, %v7455
    %v7459 = vmul.f32 %v7431, %v7456
    %v7460 = vmul.f32 %v7433, %v7457
    %v7461 = vadd.f32 %v7305, %v7458
    %v7462 = vadd.f32 %v7308, %v7459
    %v7463 = vadd.f32 %v7311, %v7460
    %v7464 = vtanh.pop %v7461
    %v7465 = vtanh.pop %v7462
    %v7466 = vtanh.pop %v7463
    %v7467 = vsub.f32 1.0, %v7450
    %v7468 = vsub.f32 1.0, %v7452
    %v7469 = vsub.f32 1.0, %v7454
    %v7470 = vmul.f32 %v7467, %v7464
    %v7471 = vmul.f32 %v7468, %v7465
    %v7472 = vmul.f32 %v7469, %v7466
    %v7473 = vmul.f32 %v7450, %v7300
    %v7474 = vmul.f32 %v7452, %v7301
    %v7475 = vmul.f32 %v7454, %v7302
    %v7476 = vadd.f32 %v7470, %v7473
    %v7477 = vadd.f32 %v7471, %v7474
    %v7478 = vadd.f32 %v7472, %v7475
    %v7479 = vld [vmem:[#allocation2 + $0x870] sm:$0xff]
    %v7480 = vld [vmem:[#allocation2 + $0x878] sm:$0xff]
    %v7481 = vld [vmem:[#allocation2 + $0x880] sm:$0xff]
    %v7482 = vld [vmem:[#allocation2 + $0x888] sm:$0xff]
    %v7483 = vld [vmem:[#allocation2 + $0x890] sm:$0xff]
    %v7484 = vld [vmem:[#allocation2 + $0x898] sm:$0xff]
    %v7485 = vld [vmem:[#allocation2 + $0x8a0] sm:$0xff]
    %v7486 = vld [vmem:[#allocation2 + $0x8a8] sm:$0xff]
    %v7487 = vld [vmem:[#allocation2 + $0x8b0] sm:$0xff]
    %v7488 = vpack.c.bf16 %v7477, %v7476
    %v7489 = vpack.c.bf16 %v7478, %v7478
    %7490 = vmatprep.subr.bf16.mxu0 %v2157
    %7491 = vmatpush1.bf16.msra.mxu0 %v2156
    %7492 = vmatprep.subr.bf16.mxu0 %v2160
    %7493 = vmatpush1.bf16.msra.mxu0 %v2159
    %7494 = vmatprep.subr.bf16.mxu0 %v2163
    %7495 = vmatpush1.bf16.msra.mxu0 %v2162
    %7496 = vmatprep.subr.bf16.mxu0 %v2166
    %7497 = vmatpush1.bf16.msra.mxu0 %v2165
    %7498 = vmatprep.subr.bf16.mxu0 %v2169
    %7499 = vmatpush1.bf16.msra.mxu0 %v2168
    %7500 = vmatprep.subr.bf16.mxu0 %v2172
    %7501 = vmatpush1.bf16.msra.mxu0 %v2171
    %7502 = vmatprep.subr.bf16.mxu0 %v2175
    %7503 = vmatpush1.bf16.msra.mxu0 %v2174
    %7504 = vmatprep.subr.bf16.mxu0 %v2178
    %7505 = vmatpush1.bf16.msra.mxu0 %v2177
    %7506 = vmatprep.subr.bf16.mxu0 0
    %7507 = vmatpush1.bf16.msra.mxu0 0
    %7508 = vmatprep.subr.bf16.mxu0 0
    %7509 = vmatpush1.bf16.msra.mxu0 0
    %7510 = vmatprep.subr.bf16.mxu0 0
    %7511 = vmatpush1.bf16.msra.mxu0 0
    %7512 = vmatprep.subr.bf16.mxu0 0
    %7513 = vmatpush1.bf16.msra.mxu0 0
    %7514 = vmatprep.subr.bf16.mxu0 0
    %7515 = vmatpush1.bf16.msra.mxu0 0
    %7516 = vmatprep.subr.bf16.mxu0 0
    %7517 = vmatpush1.bf16.msra.mxu0 0
    %7518 = vmatprep.subr.bf16.mxu0 0
    %7519 = vmatpush1.bf16.msra.mxu0 0
    %7520 = vmatprep.subr.bf16.mxu0 0
    %7521 = vmatpush1.bf16.msra.mxu0 0
    %7522 = vmatprep.mubr.bf16.mxu0 0
    %7523 = vmatmul.mubr.bf16.gmra.mrb[0].mxu0 %v7488
    %v7524 = vpop.f32.mrb[0].mxu0
    %v7525 = vadd.f32 0.0, %v7524
    %v7526 = vpop.f32.mrb[0].mxu0
    %v7527 = vadd.f32 0.0, %v7526
    %v7528 = vpop.f32.mrb[0].mxu0
    %v7529 = vadd.f32 0.0, %v7528
    %v7530 = vpop.f32.mrb[0].mxu0
    %v7531 = vadd.f32 0.0, %v7530
    %7532 = vmatprep.mubr.bf16.mxu0 0
    %7533 = vmatmul.mubr.bf16.gmra.mrb[0].mxu0 %v7489
    %v7534 = vpop.f32.mrb[0].mxu0
    %v7535 = vadd.f32 0.0, %v7534
    %v7536 = vpop.f32.mrb[0].mxu0
    %v7537 = vadd.f32 0.0, %v7536
    %v7538 = vpop.f32.mrb[0].mxu0
    %v7539 = vpop.f32.mrb[0].mxu0
    %7540 = vdwg.mxu0
    %7541 = vmatprep.subr.bf16.mxu0 0
    %7542 = vmatpush1.bf16.msra.mxu0 %v2158
    %7543 = vmatprep.subr.bf16.mxu0 0
    %7544 = vmatpush1.bf16.msra.mxu0 %v2161
    %7545 = vmatprep.subr.bf16.mxu0 0
    %7546 = vmatpush1.bf16.msra.mxu0 %v2164
    %7547 = vmatprep.subr.bf16.mxu0 0
    %7548 = vmatpush1.bf16.msra.mxu0 %v2167
    %7549 = vmatprep.subr.bf16.mxu0 0
    %7550 = vmatpush1.bf16.msra.mxu0 %v2170
    %7551 = vmatprep.subr.bf16.mxu0 0
    %7552 = vmatpush1.bf16.msra.mxu0 %v2173
    %7553 = vmatprep.subr.bf16.mxu0 0
    %7554 = vmatpush1.bf16.msra.mxu0 %v2176
    %7555 = vmatprep.subr.bf16.mxu0 0
    %7556 = vmatpush1.bf16.msra.mxu0 %v2179
    %7557 = vmatprep.subr.bf16.mxu0 0
    %7558 = vmatpush1.bf16.msra.mxu0 0
    %7559 = vmatprep.subr.bf16.mxu0 0
    %7560 = vmatpush1.bf16.msra.mxu0 0
    %7561 = vmatprep.subr.bf16.mxu0 0
    %7562 = vmatpush1.bf16.msra.mxu0 0
    %7563 = vmatprep.subr.bf16.mxu0 0
    %7564 = vmatpush1.bf16.msra.mxu0 0
    %7565 = vmatprep.subr.bf16.mxu0 0
    %7566 = vmatpush1.bf16.msra.mxu0 0
    %7567 = vmatprep.subr.bf16.mxu0 0
    %7568 = vmatpush1.bf16.msra.mxu0 0
    %7569 = vmatprep.subr.bf16.mxu0 0
    %7570 = vmatpush1.bf16.msra.mxu0 0
    %7571 = vmatprep.subr.bf16.mxu0 0
    %7572 = vmatpush1.bf16.msra.mxu0 0
    %7573 = vmatprep.mubr.bf16.mxu0 0
    %7574 = vmatmul.mubr.bf16.gmra.mrb[0].mxu0 %v7488
    %v7575 = vpop.f32.mrb[0].mxu0
    %v7576 = vadd.f32 0.0, %v7575
    %v7577 = vpop.f32.mrb[0].mxu0
    %v7578 = vpop.f32.mrb[0].mxu0
    %v7579 = vadd.f32 0.0, %v7578
    %v7580 = vpop.f32.mrb[0].mxu0
    %7581 = vmatprep.mubr.bf16.mxu0 0
    %7582 = vmatmul.mubr.bf16.gmra.mrb[0].mxu0 %v7489
    %v7583 = vpop.f32.mrb[0].mxu0
    %v7584 = vadd.f32 0.0, %v7583
    %v7585 = vpop.f32.mrb[0].mxu0
    %v7586 = vpop.f32.mrb[0].mxu0
    %v7587 = vpop.f32.mrb[0].mxu0
    %7588 = vdwg.mxu0
    %v7589 = vadd.f32 %v7479, %v7525
    %v7590 = vadd.f32 %v7482, %v7529
    %v7591 = vadd.f32 %v7485, %v7535
    %v7592 = vxor.u32 %v7589, 2147483648
    %v7593 = vxor.u32 %v7590, 2147483648
    %v7594 = vxor.u32 %v7591, 2147483648
    %v7595 = vmul.f32 %v7592, 1.442695
    %v7596 = vpow.pop %v7595
    %v7597 = vmul.f32 %v7593, 1.442695
    %v7598 = vpow.pop %v7597
    %v7599 = vmul.f32 %v7594, 1.442695
    %v7600 = vpow.pop %v7599
    %v7601 = vadd.f32 %v7596, 1.0
    %v7602 = vadd.f32 %v7598, 1.0
    %v7603 = vadd.f32 %v7600, 1.0
    %v7604 = vrcp.pop %v7601
    %v7605 = vmul.f32 1.0, %v7604
    %v7606 = vrcp.pop %v7602
    %v7607 = vmul.f32 1.0, %v7606
    %v7608 = vrcp.pop %v7603
    %v7609 = vmul.f32 1.0, %v7608
    %v7610 = vadd.f32 %v7480, %v7527
    %v7611 = vadd.f32 %v7483, %v7531
    %v7612 = vadd.f32 %v7486, %v7537
    %v7613 = vxor.u32 %v7610, 2147483648
    %v7614 = vxor.u32 %v7611, 2147483648
    %v7615 = vxor.u32 %v7612, 2147483648
    %v7616 = vmul.f32 %v7613, 1.442695
    %v7617 = vpow.pop %v7616
    %v7618 = vmul.f32 %v7614, 1.442695
    %v7619 = vpow.pop %v7618
    %v7620 = vmul.f32 %v7615, 1.442695
    %v7621 = vpow.pop %v7620
    %v7622 = vadd.f32 %v7617, 1.0
    %v7623 = vadd.f32 %v7619, 1.0
    %v7624 = vadd.f32 %v7621, 1.0
    %v7625 = vrcp.pop %v7622
    %v7626 = vmul.f32 1.0, %v7625
    %v7627 = vrcp.pop %v7623
    %v7628 = vmul.f32 1.0, %v7627
    %v7629 = vrcp.pop %v7624
    %v7630 = vmul.f32 1.0, %v7629
    %v7631 = vadd.f32 %v7576, %v2349
    %v7632 = vadd.f32 %v7579, %v2349
    %v7633 = vadd.f32 %v7584, %v2349
    %v7634 = vmul.f32 %v7605, %v7631
    %v7635 = vmul.f32 %v7607, %v7632
    %v7636 = vmul.f32 %v7609, %v7633
    %v7637 = vadd.f32 %v7481, %v7634
    %v7638 = vadd.f32 %v7484, %v7635
    %v7639 = vadd.f32 %v7487, %v7636
    %v7640 = vtanh.pop %v7637
    %v7641 = vtanh.pop %v7638
    %v7642 = vtanh.pop %v7639
    %v7643 = vsub.f32 1.0, %v7626
    %v7644 = vsub.f32 1.0, %v7628
    %v7645 = vsub.f32 1.0, %v7630
    %v7646 = vmul.f32 %v7643, %v7640
    %v7647 = vmul.f32 %v7644, %v7641
    %v7648 = vmul.f32 %v7645, %v7642
    %v7649 = vmul.f32 %v7626, %v7476
    %v7650 = vmul.f32 %v7628, %v7477
    %v7651 = vmul.f32 %v7630, %v7478
    %v7652 = vadd.f32 %v7646, %v7649
    %v7653 = vadd.f32 %v7647, %v7650
    %v7654 = vadd.f32 %v7648, %v7651
    %v7655 = vld [vmem:[#allocation2 + $0x8b8] sm:$0xff]
    %v7656 = vld [vmem:[#allocation2 + $0x8c0] sm:$0xff]
    %v7657 = vld [vmem:[#allocation2 + $0x8c8] sm:$0xff]
    %v7658 = vld [vmem:[#allocation2 + $0x8d0] sm:$0xff]
    %v7659 = vld [vmem:[#allocation2 + $0x8d8] sm:$0xff]
    %v7660 = vld [vmem:[#allocation2 + $0x8e0] sm:$0xff]
    %v7661 = vld [vmem:[#allocation2 + $0x8e8] sm:$0xff]
    %v7662 = vld [vmem:[#allocation2 + $0x8f0] sm:$0xff]
    %v7663 = vld [vmem:[#allocation2 + $0x8f8] sm:$0xff]
    %v7664 = vpack.c.bf16 %v7653, %v7652
    %v7665 = vpack.c.bf16 %v7654, %v7654
    %7666 = vmatprep.subr.bf16.mxu0 %v2157
    %7667 = vmatpush1.bf16.msra.mxu0 %v2156
    %7668 = vmatprep.subr.bf16.mxu0 %v2160
    %7669 = vmatpush1.bf16.msra.mxu0 %v2159
    %7670 = vmatprep.subr.bf16.mxu0 %v2163
    %7671 = vmatpush1.bf16.msra.mxu0 %v2162
    %7672 = vmatprep.subr.bf16.mxu0 %v2166
    %7673 = vmatpush1.bf16.msra.mxu0 %v2165
    %7674 = vmatprep.subr.bf16.mxu0 %v2169
    %7675 = vmatpush1.bf16.msra.mxu0 %v2168
    %7676 = vmatprep.subr.bf16.mxu0 %v2172
    %7677 = vmatpush1.bf16.msra.mxu0 %v2171
    %7678 = vmatprep.subr.bf16.mxu0 %v2175
    %7679 = vmatpush1.bf16.msra.mxu0 %v2174
    %7680 = vmatprep.subr.bf16.mxu0 %v2178
    %7681 = vmatpush1.bf16.msra.mxu0 %v2177
    %7682 = vmatprep.subr.bf16.mxu0 0
    %7683 = vmatpush1.bf16.msra.mxu0 0
    %7684 = vmatprep.subr.bf16.mxu0 0
    %7685 = vmatpush1.bf16.msra.mxu0 0
    %7686 = vmatprep.subr.bf16.mxu0 0
    %7687 = vmatpush1.bf16.msra.mxu0 0
    %7688 = vmatprep.subr.bf16.mxu0 0
    %7689 = vmatpush1.bf16.msra.mxu0 0
    %7690 = vmatprep.subr.bf16.mxu0 0
    %7691 = vmatpush1.bf16.msra.mxu0 0
    %7692 = vmatprep.subr.bf16.mxu0 0
    %7693 = vmatpush1.bf16.msra.mxu0 0
    %7694 = vmatprep.subr.bf16.mxu0 0
    %7695 = vmatpush1.bf16.msra.mxu0 0
    %7696 = vmatprep.subr.bf16.mxu0 0
    %7697 = vmatpush1.bf16.msra.mxu0 0
    %7698 = vmatprep.mubr.bf16.mxu0 0
    %7699 = vmatmul.mubr.bf16.gmra.mrb[0].mxu0 %v7664
    %v7700 = vpop.f32.mrb[0].mxu0
    %v7701 = vadd.f32 0.0, %v7700
    %v7702 = vpop.f32.mrb[0].mxu0
    %v7703 = vadd.f32 0.0, %v7702
    %v7704 = vpop.f32.mrb[0].mxu0
    %v7705 = vadd.f32 0.0, %v7704
    %v7706 = vpop.f32.mrb[0].mxu0
    %v7707 = vadd.f32 0.0, %v7706
    %7708 = vmatprep.mubr.bf16.mxu0 0
    %7709 = vmatmul.mubr.bf16.gmra.mrb[0].mxu0 %v7665
    %v7710 = vpop.f32.mrb[0].mxu0
    %v7711 = vadd.f32 0.0, %v7710
    %v7712 = vpop.f32.mrb[0].mxu0
    %v7713 = vadd.f32 0.0, %v7712
    %v7714 = vpop.f32.mrb[0].mxu0
    %v7715 = vpop.f32.mrb[0].mxu0
    %7716 = vdwg.mxu0
    %7717 = vmatprep.subr.bf16.mxu0 0
    %7718 = vmatpush1.bf16.msra.mxu0 %v2158
    %7719 = vmatprep.subr.bf16.mxu0 0
    %7720 = vmatpush1.bf16.msra.mxu0 %v2161
    %7721 = vmatprep.subr.bf16.mxu0 0
    %7722 = vmatpush1.bf16.msra.mxu0 %v2164
    %7723 = vmatprep.subr.bf16.mxu0 0
    %7724 = vmatpush1.bf16.msra.mxu0 %v2167
    %7725 = vmatprep.subr.bf16.mxu0 0
    %7726 = vmatpush1.bf16.msra.mxu0 %v2170
    %7727 = vmatprep.subr.bf16.mxu0 0
    %7728 = vmatpush1.bf16.msra.mxu0 %v2173
    %7729 = vmatprep.subr.bf16.mxu0 0
    %7730 = vmatpush1.bf16.msra.mxu0 %v2176
    %7731 = vmatprep.subr.bf16.mxu0 0
    %7732 = vmatpush1.bf16.msra.mxu0 %v2179
    %7733 = vmatprep.subr.bf16.mxu0 0
    %7734 = vmatpush1.bf16.msra.mxu0 0
    %7735 = vmatprep.subr.bf16.mxu0 0
    %7736 = vmatpush1.bf16.msra.mxu0 0
    %7737 = vmatprep.subr.bf16.mxu0 0
    %7738 = vmatpush1.bf16.msra.mxu0 0
    %7739 = vmatprep.subr.bf16.mxu0 0
    %7740 = vmatpush1.bf16.msra.mxu0 0
    %7741 = vmatprep.subr.bf16.mxu0 0
    %7742 = vmatpush1.bf16.msra.mxu0 0
    %7743 = vmatprep.subr.bf16.mxu0 0
    %7744 = vmatpush1.bf16.msra.mxu0 0
    %7745 = vmatprep.subr.bf16.mxu0 0
    %7746 = vmatpush1.bf16.msra.mxu0 0
    %7747 = vmatprep.subr.bf16.mxu0 0
    %7748 = vmatpush1.bf16.msra.mxu0 0
    %7749 = vmatprep.mubr.bf16.mxu0 0
    %7750 = vmatmul.mubr.bf16.gmra.mrb[0].mxu0 %v7664
    %v7751 = vpop.f32.mrb[0].mxu0
    %v7752 = vadd.f32 0.0, %v7751
    %v7753 = vpop.f32.mrb[0].mxu0
    %v7754 = vpop.f32.mrb[0].mxu0
    %v7755 = vadd.f32 0.0, %v7754
    %v7756 = vpop.f32.mrb[0].mxu0
    %7757 = vmatprep.mubr.bf16.mxu0 0
    %7758 = vmatmul.mubr.bf16.gmra.mrb[0].mxu0 %v7665
    %v7759 = vpop.f32.mrb[0].mxu0
    %v7760 = vadd.f32 0.0, %v7759
    %v7761 = vpop.f32.mrb[0].mxu0
    %v7762 = vpop.f32.mrb[0].mxu0
    %v7763 = vpop.f32.mrb[0].mxu0
    %7764 = vdwg.mxu0
    %v7765 = vadd.f32 %v7655, %v7701
    %v7766 = vadd.f32 %v7658, %v7705
    %v7767 = vadd.f32 %v7661, %v7711
    %v7768 = vxor.u32 %v7765, 2147483648
    %v7769 = vxor.u32 %v7766, 2147483648
    %v7770 = vxor.u32 %v7767, 2147483648
    %v7771 = vmul.f32 %v7768, 1.442695
    %v7772 = vpow.pop %v7771
    %v7773 = vmul.f32 %v7769, 1.442695
    %v7774 = vpow.pop %v7773
    %v7775 = vmul.f32 %v7770, 1.442695
    %v7776 = vpow.pop %v7775
    %v7777 = vadd.f32 %v7772, 1.0
    %v7778 = vadd.f32 %v7774, 1.0
    %v7779 = vadd.f32 %v7776, 1.0
    %v7780 = vrcp.pop %v7777
    %v7781 = vmul.f32 1.0, %v7780
    %v7782 = vrcp.pop %v7778
    %v7783 = vmul.f32 1.0, %v7782
    %v7784 = vrcp.pop %v7779
    %v7785 = vmul.f32 1.0, %v7784
    %v7786 = vadd.f32 %v7656, %v7703
    %v7787 = vadd.f32 %v7659, %v7707
    %v7788 = vadd.f32 %v7662, %v7713
    %v7789 = vxor.u32 %v7786, 2147483648
    %v7790 = vxor.u32 %v7787, 2147483648
    %v7791 = vxor.u32 %v7788, 2147483648
    %v7792 = vmul.f32 %v7789, 1.442695
    %v7793 = vpow.pop %v7792
    %v7794 = vmul.f32 %v7790, 1.442695
    %v7795 = vpow.pop %v7794
    %v7796 = vmul.f32 %v7791, 1.442695
    %v7797 = vpow.pop %v7796
    %v7798 = vadd.f32 %v7793, 1.0
    %v7799 = vadd.f32 %v7795, 1.0
    %v7800 = vadd.f32 %v7797, 1.0
    %v7801 = vrcp.pop %v7798
    %v7802 = vmul.f32 1.0, %v7801
    %v7803 = vrcp.pop %v7799
    %v7804 = vmul.f32 1.0, %v7803
    %v7805 = vrcp.pop %v7800
    %v7806 = vmul.f32 1.0, %v7805
    %v7807 = vadd.f32 %v7752, %v2349
    %v7808 = vadd.f32 %v7755, %v2349
    %v7809 = vadd.f32 %v7760, %v2349
    %v7810 = vmul.f32 %v7781, %v7807
    %v7811 = vmul.f32 %v7783, %v7808
    %v7812 = vmul.f32 %v7785, %v7809
    %v7813 = vadd.f32 %v7657, %v7810
    %v7814 = vadd.f32 %v7660, %v7811
    %v7815 = vadd.f32 %v7663, %v7812
    %v7816 = vtanh.pop %v7813
    %v7817 = vtanh.pop %v7814
    %v7818 = vtanh.pop %v7815
    %v7819 = vsub.f32 1.0, %v7802
    %v7820 = vsub.f32 1.0, %v7804
    %v7821 = vsub.f32 1.0, %v7806
    %v7822 = vmul.f32 %v7819, %v7816
    %v7823 = vmul.f32 %v7820, %v7817
    %v7824 = vmul.f32 %v7821, %v7818
    %v7825 = vmul.f32 %v7802, %v7652
    %v7826 = vmul.f32 %v7804, %v7653
    %v7827 = vmul.f32 %v7806, %v7654
    %v7828 = vadd.f32 %v7822, %v7825
    %v7829 = vadd.f32 %v7823, %v7826
    %v7830 = vadd.f32 %v7824, %v7827
    %v7831 = vld [vmem:[#allocation2 + $0x900] sm:$0xff]
    %v7832 = vld [vmem:[#allocation2 + $0x908] sm:$0xff]
    %v7833 = vld [vmem:[#allocation2 + $0x910] sm:$0xff]
    %v7834 = vld [vmem:[#allocation2 + $0x918] sm:$0xff]
    %v7835 = vld [vmem:[#allocation2 + $0x920] sm:$0xff]
    %v7836 = vld [vmem:[#allocation2 + $0x928] sm:$0xff]
    %v7837 = vld [vmem:[#allocation2 + $0x930] sm:$0xff]
    %v7838 = vld [vmem:[#allocation2 + $0x938] sm:$0xff]
    %v7839 = vld [vmem:[#allocation2 + $0x940] sm:$0xff]
    %v7840 = vpack.c.bf16 %v7829, %v7828
    %v7841 = vpack.c.bf16 %v7830, %v7830
    %7842 = vmatprep.subr.bf16.mxu0 %v2157
    %7843 = vmatpush1.bf16.msra.mxu0 %v2156
    %7844 = vmatprep.subr.bf16.mxu0 %v2160
    %7845 = vmatpush1.bf16.msra.mxu0 %v2159
    %7846 = vmatprep.subr.bf16.mxu0 %v2163
    %7847 = vmatpush1.bf16.msra.mxu0 %v2162
    %7848 = vmatprep.subr.bf16.mxu0 %v2166
    %7849 = vmatpush1.bf16.msra.mxu0 %v2165
    %7850 = vmatprep.subr.bf16.mxu0 %v2169
    %7851 = vmatpush1.bf16.msra.mxu0 %v2168
    %7852 = vmatprep.subr.bf16.mxu0 %v2172
    %7853 = vmatpush1.bf16.msra.mxu0 %v2171
    %7854 = vmatprep.subr.bf16.mxu0 %v2175
    %7855 = vmatpush1.bf16.msra.mxu0 %v2174
    %7856 = vmatprep.subr.bf16.mxu0 %v2178
    %7857 = vmatpush1.bf16.msra.mxu0 %v2177
    %7858 = vmatprep.subr.bf16.mxu0 0
    %7859 = vmatpush1.bf16.msra.mxu0 0
    %7860 = vmatprep.subr.bf16.mxu0 0
    %7861 = vmatpush1.bf16.msra.mxu0 0
    %7862 = vmatprep.subr.bf16.mxu0 0
    %7863 = vmatpush1.bf16.msra.mxu0 0
    %7864 = vmatprep.subr.bf16.mxu0 0
    %7865 = vmatpush1.bf16.msra.mxu0 0
    %7866 = vmatprep.subr.bf16.mxu0 0
    %7867 = vmatpush1.bf16.msra.mxu0 0
    %7868 = vmatprep.subr.bf16.mxu0 0
    %7869 = vmatpush1.bf16.msra.mxu0 0
    %7870 = vmatprep.subr.bf16.mxu0 0
    %7871 = vmatpush1.bf16.msra.mxu0 0
    %7872 = vmatprep.subr.bf16.mxu0 0
    %7873 = vmatpush1.bf16.msra.mxu0 0
    %7874 = vmatprep.mubr.bf16.mxu0 0
    %7875 = vmatmul.mubr.bf16.gmra.mrb[0].mxu0 %v7840
    %v7876 = vpop.f32.mrb[0].mxu0
    %v7877 = vadd.f32 0.0, %v7876
    %v7878 = vpop.f32.mrb[0].mxu0
    %v7879 = vadd.f32 0.0, %v7878
    %v7880 = vpop.f32.mrb[0].mxu0
    %v7881 = vadd.f32 0.0, %v7880
    %v7882 = vpop.f32.mrb[0].mxu0
    %v7883 = vadd.f32 0.0, %v7882
    %7884 = vmatprep.mubr.bf16.mxu0 0
    %7885 = vmatmul.mubr.bf16.gmra.mrb[0].mxu0 %v7841
    %v7886 = vpop.f32.mrb[0].mxu0
    %v7887 = vadd.f32 0.0, %v7886
    %v7888 = vpop.f32.mrb[0].mxu0
    %v7889 = vadd.f32 0.0, %v7888
    %v7890 = vpop.f32.mrb[0].mxu0
    %v7891 = vpop.f32.mrb[0].mxu0
    %7892 = vdwg.mxu0
    %7893 = vmatprep.subr.bf16.mxu0 0
    %7894 = vmatpush1.bf16.msra.mxu0 %v2158
    %7895 = vmatprep.subr.bf16.mxu0 0
    %7896 = vmatpush1.bf16.msra.mxu0 %v2161
    %7897 = vmatprep.subr.bf16.mxu0 0
    %7898 = vmatpush1.bf16.msra.mxu0 %v2164
    %7899 = vmatprep.subr.bf16.mxu0 0
    %7900 = vmatpush1.bf16.msra.mxu0 %v2167
    %7901 = vmatprep.subr.bf16.mxu0 0
    %7902 = vmatpush1.bf16.msra.mxu0 %v2170
    %7903 = vmatprep.subr.bf16.mxu0 0
    %7904 = vmatpush1.bf16.msra.mxu0 %v2173
    %7905 = vmatprep.subr.bf16.mxu0 0
    %7906 = vmatpush1.bf16.msra.mxu0 %v2176
    %7907 = vmatprep.subr.bf16.mxu0 0
    %7908 = vmatpush1.bf16.msra.mxu0 %v2179
    %7909 = vmatprep.subr.bf16.mxu0 0
    %7910 = vmatpush1.bf16.msra.mxu0 0
    %7911 = vmatprep.subr.bf16.mxu0 0
    %7912 = vmatpush1.bf16.msra.mxu0 0
    %7913 = vmatprep.subr.bf16.mxu0 0
    %7914 = vmatpush1.bf16.msra.mxu0 0
    %7915 = vmatprep.subr.bf16.mxu0 0
    %7916 = vmatpush1.bf16.msra.mxu0 0
    %7917 = vmatprep.subr.bf16.mxu0 0
    %7918 = vmatpush1.bf16.msra.mxu0 0
    %7919 = vmatprep.subr.bf16.mxu0 0
    %7920 = vmatpush1.bf16.msra.mxu0 0
    %7921 = vmatprep.subr.bf16.mxu0 0
    %7922 = vmatpush1.bf16.msra.mxu0 0
    %7923 = vmatprep.subr.bf16.mxu0 0
    %7924 = vmatpush1.bf16.msra.mxu0 0
    %7925 = vmatprep.mubr.bf16.mxu0 0
    %7926 = vmatmul.mubr.bf16.gmra.mrb[0].mxu0 %v7840
    %v7927 = vpop.f32.mrb[0].mxu0
    %v7928 = vadd.f32 0.0, %v7927
    %v7929 = vpop.f32.mrb[0].mxu0
    %v7930 = vpop.f32.mrb[0].mxu0
    %v7931 = vadd.f32 0.0, %v7930
    %v7932 = vpop.f32.mrb[0].mxu0
    %7933 = vmatprep.mubr.bf16.mxu0 0
    %7934 = vmatmul.mubr.bf16.gmra.mrb[0].mxu0 %v7841
    %v7935 = vpop.f32.mrb[0].mxu0
    %v7936 = vadd.f32 0.0, %v7935
    %v7937 = vpop.f32.mrb[0].mxu0
    %v7938 = vpop.f32.mrb[0].mxu0
    %v7939 = vpop.f32.mrb[0].mxu0
    %7940 = vdwg.mxu0
    %v7941 = vadd.f32 %v7831, %v7877
    %v7942 = vadd.f32 %v7834, %v7881
    %v7943 = vadd.f32 %v7837, %v7887
    %v7944 = vxor.u32 %v7941, 2147483648
    %v7945 = vxor.u32 %v7942, 2147483648
    %v7946 = vxor.u32 %v7943, 2147483648
    %v7947 = vmul.f32 %v7944, 1.442695
    %v7948 = vpow.pop %v7947
    %v7949 = vmul.f32 %v7945, 1.442695
    %v7950 = vpow.pop %v7949
    %v7951 = vmul.f32 %v7946, 1.442695
    %v7952 = vpow.pop %v7951
    %v7953 = vadd.f32 %v7948, 1.0
    %v7954 = vadd.f32 %v7950, 1.0
    %v7955 = vadd.f32 %v7952, 1.0
    %v7956 = vrcp.pop %v7953
    %v7957 = vmul.f32 1.0, %v7956
    %v7958 = vrcp.pop %v7954
    %v7959 = vmul.f32 1.0, %v7958
    %v7960 = vrcp.pop %v7955
    %v7961 = vmul.f32 1.0, %v7960
    %v7962 = vadd.f32 %v7832, %v7879
    %v7963 = vadd.f32 %v7835, %v7883
    %v7964 = vadd.f32 %v7838, %v7889
    %v7965 = vxor.u32 %v7962, 2147483648
    %v7966 = vxor.u32 %v7963, 2147483648
    %v7967 = vxor.u32 %v7964, 2147483648
    %v7968 = vmul.f32 %v7965, 1.442695
    %v7969 = vpow.pop %v7968
    %v7970 = vmul.f32 %v7966, 1.442695
    %v7971 = vpow.pop %v7970
    %v7972 = vmul.f32 %v7967, 1.442695
    %v7973 = vpow.pop %v7972
    %v7974 = vadd.f32 %v7969, 1.0
    %v7975 = vadd.f32 %v7971, 1.0
    %v7976 = vadd.f32 %v7973, 1.0
    %v7977 = vrcp.pop %v7974
    %v7978 = vmul.f32 1.0, %v7977
    %v7979 = vrcp.pop %v7975
    %v7980 = vmul.f32 1.0, %v7979
    %v7981 = vrcp.pop %v7976
    %v7982 = vmul.f32 1.0, %v7981
    %v7983 = vadd.f32 %v7928, %v2349
    %v7984 = vadd.f32 %v7931, %v2349
    %v7985 = vadd.f32 %v7936, %v2349
    %v7986 = vmul.f32 %v7957, %v7983
    %v7987 = vmul.f32 %v7959, %v7984
    %v7988 = vmul.f32 %v7961, %v7985
    %v7989 = vadd.f32 %v7833, %v7986
    %v7990 = vadd.f32 %v7836, %v7987
    %v7991 = vadd.f32 %v7839, %v7988
    %v7992 = vtanh.pop %v7989
    %v7993 = vtanh.pop %v7990
    %v7994 = vtanh.pop %v7991
    %v7995 = vsub.f32 1.0, %v7978
    %v7996 = vsub.f32 1.0, %v7980
    %v7997 = vsub.f32 1.0, %v7982
    %v7998 = vmul.f32 %v7995, %v7992
    %v7999 = vmul.f32 %v7996, %v7993
    %v8000 = vmul.f32 %v7997, %v7994
    %v8001 = vmul.f32 %v7978, %v7828
    %v8002 = vmul.f32 %v7980, %v7829
    %v8003 = vmul.f32 %v7982, %v7830
    %v8004 = vadd.f32 %v7998, %v8001
    %v8005 = vadd.f32 %v7999, %v8002
    %v8006 = vadd.f32 %v8000, %v8003
    %v8007 = vld [vmem:[#allocation2 + $0x948] sm:$0xff]
    %v8008 = vld [vmem:[#allocation2 + $0x950] sm:$0xff]
    %v8009 = vld [vmem:[#allocation2 + $0x958] sm:$0xff]
    %v8010 = vld [vmem:[#allocation2 + $0x960] sm:$0xff]
    %v8011 = vld [vmem:[#allocation2 + $0x968] sm:$0xff]
    %v8012 = vld [vmem:[#allocation2 + $0x970] sm:$0xff]
    %v8013 = vld [vmem:[#allocation2 + $0x978] sm:$0xff]
    %v8014 = vld [vmem:[#allocation2 + $0x980] sm:$0xff]
    %v8015 = vld [vmem:[#allocation2 + $0x988] sm:$0xff]
    %v8016 = vpack.c.bf16 %v8005, %v8004
    %v8017 = vpack.c.bf16 %v8006, %v8006
    %8018 = vmatprep.subr.bf16.mxu0 %v2157
    %8019 = vmatpush1.bf16.msra.mxu0 %v2156
    %8020 = vmatprep.subr.bf16.mxu0 %v2160
    %8021 = vmatpush1.bf16.msra.mxu0 %v2159
    %8022 = vmatprep.subr.bf16.mxu0 %v2163
    %8023 = vmatpush1.bf16.msra.mxu0 %v2162
    %8024 = vmatprep.subr.bf16.mxu0 %v2166
    %8025 = vmatpush1.bf16.msra.mxu0 %v2165
    %8026 = vmatprep.subr.bf16.mxu0 %v2169
    %8027 = vmatpush1.bf16.msra.mxu0 %v2168
    %8028 = vmatprep.subr.bf16.mxu0 %v2172
    %8029 = vmatpush1.bf16.msra.mxu0 %v2171
    %8030 = vmatprep.subr.bf16.mxu0 %v2175
    %8031 = vmatpush1.bf16.msra.mxu0 %v2174
    %8032 = vmatprep.subr.bf16.mxu0 %v2178
    %8033 = vmatpush1.bf16.msra.mxu0 %v2177
    %8034 = vmatprep.subr.bf16.mxu0 0
    %8035 = vmatpush1.bf16.msra.mxu0 0
    %8036 = vmatprep.subr.bf16.mxu0 0
    %8037 = vmatpush1.bf16.msra.mxu0 0
    %8038 = vmatprep.subr.bf16.mxu0 0
    %8039 = vmatpush1.bf16.msra.mxu0 0
    %8040 = vmatprep.subr.bf16.mxu0 0
    %8041 = vmatpush1.bf16.msra.mxu0 0
    %8042 = vmatprep.subr.bf16.mxu0 0
    %8043 = vmatpush1.bf16.msra.mxu0 0
    %8044 = vmatprep.subr.bf16.mxu0 0
    %8045 = vmatpush1.bf16.msra.mxu0 0
    %8046 = vmatprep.subr.bf16.mxu0 0
    %8047 = vmatpush1.bf16.msra.mxu0 0
    %8048 = vmatprep.subr.bf16.mxu0 0
    %8049 = vmatpush1.bf16.msra.mxu0 0
    %8050 = vmatprep.mubr.bf16.mxu0 0
    %8051 = vmatmul.mubr.bf16.gmra.mrb[0].mxu0 %v8016
    %v8052 = vpop.f32.mrb[0].mxu0
    %v8053 = vadd.f32 0.0, %v8052
    %v8054 = vpop.f32.mrb[0].mxu0
    %v8055 = vadd.f32 0.0, %v8054
    %v8056 = vpop.f32.mrb[0].mxu0
    %v8057 = vadd.f32 0.0, %v8056
    %v8058 = vpop.f32.mrb[0].mxu0
    %v8059 = vadd.f32 0.0, %v8058
    %8060 = vmatprep.mubr.bf16.mxu0 0
    %8061 = vmatmul.mubr.bf16.gmra.mrb[0].mxu0 %v8017
    %v8062 = vpop.f32.mrb[0].mxu0
    %v8063 = vadd.f32 0.0, %v8062
    %v8064 = vpop.f32.mrb[0].mxu0
    %v8065 = vadd.f32 0.0, %v8064
    %v8066 = vpop.f32.mrb[0].mxu0
    %v8067 = vpop.f32.mrb[0].mxu0
    %8068 = vdwg.mxu0
    %8069 = vmatprep.subr.bf16.mxu0 0
    %8070 = vmatpush1.bf16.msra.mxu0 %v2158
    %8071 = vmatprep.subr.bf16.mxu0 0
    %8072 = vmatpush1.bf16.msra.mxu0 %v2161
    %8073 = vmatprep.subr.bf16.mxu0 0
    %8074 = vmatpush1.bf16.msra.mxu0 %v2164
    %8075 = vmatprep.subr.bf16.mxu0 0
    %8076 = vmatpush1.bf16.msra.mxu0 %v2167
    %8077 = vmatprep.subr.bf16.mxu0 0
    %8078 = vmatpush1.bf16.msra.mxu0 %v2170
    %8079 = vmatprep.subr.bf16.mxu0 0
    %8080 = vmatpush1.bf16.msra.mxu0 %v2173
    %8081 = vmatprep.subr.bf16.mxu0 0
    %8082 = vmatpush1.bf16.msra.mxu0 %v2176
    %8083 = vmatprep.subr.bf16.mxu0 0
    %8084 = vmatpush1.bf16.msra.mxu0 %v2179
    %8085 = vmatprep.subr.bf16.mxu0 0
    %8086 = vmatpush1.bf16.msra.mxu0 0
    %8087 = vmatprep.subr.bf16.mxu0 0
    %8088 = vmatpush1.bf16.msra.mxu0 0
    %8089 = vmatprep.subr.bf16.mxu0 0
    %8090 = vmatpush1.bf16.msra.mxu0 0
    %8091 = vmatprep.subr.bf16.mxu0 0
    %8092 = vmatpush1.bf16.msra.mxu0 0
    %8093 = vmatprep.subr.bf16.mxu0 0
    %8094 = vmatpush1.bf16.msra.mxu0 0
    %8095 = vmatprep.subr.bf16.mxu0 0
    %8096 = vmatpush1.bf16.msra.mxu0 0
    %8097 = vmatprep.subr.bf16.mxu0 0
    %8098 = vmatpush1.bf16.msra.mxu0 0
    %8099 = vmatprep.subr.bf16.mxu0 0
    %8100 = vmatpush1.bf16.msra.mxu0 0
    %8101 = vmatprep.mubr.bf16.mxu0 0
    %8102 = vmatmul.mubr.bf16.gmra.mrb[0].mxu0 %v8016
    %v8103 = vpop.f32.mrb[0].mxu0
    %v8104 = vadd.f32 0.0, %v8103
    %v8105 = vpop.f32.mrb[0].mxu0
    %v8106 = vpop.f32.mrb[0].mxu0
    %v8107 = vadd.f32 0.0, %v8106
    %v8108 = vpop.f32.mrb[0].mxu0
    %8109 = vmatprep.mubr.bf16.mxu0 0
    %8110 = vmatmul.mubr.bf16.gmra.mrb[0].mxu0 %v8017
    %v8111 = vpop.f32.mrb[0].mxu0
    %v8112 = vadd.f32 0.0, %v8111
    %v8113 = vpop.f32.mrb[0].mxu0
    %v8114 = vpop.f32.mrb[0].mxu0
    %v8115 = vpop.f32.mrb[0].mxu0
    %8116 = vdwg.mxu0
    %v8117 = vadd.f32 %v8007, %v8053
    %v8118 = vadd.f32 %v8010, %v8057
    %v8119 = vadd.f32 %v8013, %v8063
    %v8120 = vxor.u32 %v8117, 2147483648
    %v8121 = vxor.u32 %v8118, 2147483648
    %v8122 = vxor.u32 %v8119, 2147483648
    %v8123 = vmul.f32 %v8120, 1.442695
    %v8124 = vpow.pop %v8123
    %v8125 = vmul.f32 %v8121, 1.442695
    %v8126 = vpow.pop %v8125
    %v8127 = vmul.f32 %v8122, 1.442695
    %v8128 = vpow.pop %v8127
    %v8129 = vadd.f32 %v8124, 1.0
    %v8130 = vadd.f32 %v8126, 1.0
    %v8131 = vadd.f32 %v8128, 1.0
    %v8132 = vrcp.pop %v8129
    %v8133 = vmul.f32 1.0, %v8132
    %v8134 = vrcp.pop %v8130
    %v8135 = vmul.f32 1.0, %v8134
    %v8136 = vrcp.pop %v8131
    %v8137 = vmul.f32 1.0, %v8136
    %v8138 = vadd.f32 %v8008, %v8055
    %v8139 = vadd.f32 %v8011, %v8059
    %v8140 = vadd.f32 %v8014, %v8065
    %v8141 = vxor.u32 %v8138, 2147483648
    %v8142 = vxor.u32 %v8139, 2147483648
    %v8143 = vxor.u32 %v8140, 2147483648
    %v8144 = vmul.f32 %v8141, 1.442695
    %v8145 = vpow.pop %v8144
    %v8146 = vmul.f32 %v8142, 1.442695
    %v8147 = vpow.pop %v8146
    %v8148 = vmul.f32 %v8143, 1.442695
    %v8149 = vpow.pop %v8148
    %v8150 = vadd.f32 %v8145, 1.0
    %v8151 = vadd.f32 %v8147, 1.0
    %v8152 = vadd.f32 %v8149, 1.0
    %v8153 = vrcp.pop %v8150
    %v8154 = vmul.f32 1.0, %v8153
    %v8155 = vrcp.pop %v8151
    %v8156 = vmul.f32 1.0, %v8155
    %v8157 = vrcp.pop %v8152
    %v8158 = vmul.f32 1.0, %v8157
    %v8159 = vadd.f32 %v8104, %v2349
    %v8160 = vadd.f32 %v8107, %v2349
    %v8161 = vadd.f32 %v8112, %v2349
    %v8162 = vmul.f32 %v8133, %v8159
    %v8163 = vmul.f32 %v8135, %v8160
    %v8164 = vmul.f32 %v8137, %v8161
    %v8165 = vadd.f32 %v8009, %v8162
    %v8166 = vadd.f32 %v8012, %v8163
    %v8167 = vadd.f32 %v8015, %v8164
    %v8168 = vtanh.pop %v8165
    %v8169 = vtanh.pop %v8166
    %v8170 = vtanh.pop %v8167
    %v8171 = vsub.f32 1.0, %v8154
    %v8172 = vsub.f32 1.0, %v8156
    %v8173 = vsub.f32 1.0, %v8158
    %v8174 = vmul.f32 %v8171, %v8168
    %v8175 = vmul.f32 %v8172, %v8169
    %v8176 = vmul.f32 %v8173, %v8170
    %v8177 = vmul.f32 %v8154, %v8004
    %v8178 = vmul.f32 %v8156, %v8005
    %v8179 = vmul.f32 %v8158, %v8006
    %v8180 = vadd.f32 %v8174, %v8177
    %v8181 = vadd.f32 %v8175, %v8178
    %v8182 = vadd.f32 %v8176, %v8179
    %v8183 = vld [vmem:[#allocation2 + $0x990] sm:$0xff]
    %v8184 = vld [vmem:[#allocation2 + $0x998] sm:$0xff]
    %v8185 = vld [vmem:[#allocation2 + $0x9a0] sm:$0xff]
    %v8186 = vld [vmem:[#allocation2 + $0x9a8] sm:$0xff]
    %v8187 = vld [vmem:[#allocation2 + $0x9b0] sm:$0xff]
    %v8188 = vld [vmem:[#allocation2 + $0x9b8] sm:$0xff]
    %v8189 = vld [vmem:[#allocation2 + $0x9c0] sm:$0xff]
    %v8190 = vld [vmem:[#allocation2 + $0x9c8] sm:$0xff]
    %v8191 = vld [vmem:[#allocation2 + $0x9d0] sm:$0xff]
    %v8192 = vpack.c.bf16 %v8181, %v8180
    %v8193 = vpack.c.bf16 %v8182, %v8182
    %8194 = vmatprep.subr.bf16.mxu0 %v2157
    %8195 = vmatpush1.bf16.msra.mxu0 %v2156
    %8196 = vmatprep.subr.bf16.mxu0 %v2160
    %8197 = vmatpush1.bf16.msra.mxu0 %v2159
    %8198 = vmatprep.subr.bf16.mxu0 %v2163
    %8199 = vmatpush1.bf16.msra.mxu0 %v2162
    %8200 = vmatprep.subr.bf16.mxu0 %v2166
    %8201 = vmatpush1.bf16.msra.mxu0 %v2165
    %8202 = vmatprep.subr.bf16.mxu0 %v2169
    %8203 = vmatpush1.bf16.msra.mxu0 %v2168
    %8204 = vmatprep.subr.bf16.mxu0 %v2172
    %8205 = vmatpush1.bf16.msra.mxu0 %v2171
    %8206 = vmatprep.subr.bf16.mxu0 %v2175
    %8207 = vmatpush1.bf16.msra.mxu0 %v2174
    %8208 = vmatprep.subr.bf16.mxu0 %v2178
    %8209 = vmatpush1.bf16.msra.mxu0 %v2177
    %8210 = vmatprep.subr.bf16.mxu0 0
    %8211 = vmatpush1.bf16.msra.mxu0 0
    %8212 = vmatprep.subr.bf16.mxu0 0
    %8213 = vmatpush1.bf16.msra.mxu0 0
    %8214 = vmatprep.subr.bf16.mxu0 0
    %8215 = vmatpush1.bf16.msra.mxu0 0
    %8216 = vmatprep.subr.bf16.mxu0 0
    %8217 = vmatpush1.bf16.msra.mxu0 0
    %8218 = vmatprep.subr.bf16.mxu0 0
    %8219 = vmatpush1.bf16.msra.mxu0 0
    %8220 = vmatprep.subr.bf16.mxu0 0
    %8221 = vmatpush1.bf16.msra.mxu0 0
    %8222 = vmatprep.subr.bf16.mxu0 0
    %8223 = vmatpush1.bf16.msra.mxu0 0
    %8224 = vmatprep.subr.bf16.mxu0 0
    %8225 = vmatpush1.bf16.msra.mxu0 0
    %8226 = vmatprep.mubr.bf16.mxu0 0
    %8227 = vmatmul.mubr.bf16.gmra.mrb[0].mxu0 %v8192
    %v8228 = vpop.f32.mrb[0].mxu0
    %v8229 = vadd.f32 0.0, %v8228
    %v8230 = vpop.f32.mrb[0].mxu0
    %v8231 = vadd.f32 0.0, %v8230
    %v8232 = vpop.f32.mrb[0].mxu0
    %v8233 = vadd.f32 0.0, %v8232
    %v8234 = vpop.f32.mrb[0].mxu0
    %v8235 = vadd.f32 0.0, %v8234
    %8236 = vmatprep.mubr.bf16.mxu0 0
    %8237 = vmatmul.mubr.bf16.gmra.mrb[0].mxu0 %v8193
    %v8238 = vpop.f32.mrb[0].mxu0
    %v8239 = vadd.f32 0.0, %v8238
    %v8240 = vpop.f32.mrb[0].mxu0
    %v8241 = vadd.f32 0.0, %v8240
    %v8242 = vpop.f32.mrb[0].mxu0
    %v8243 = vpop.f32.mrb[0].mxu0
    %8244 = vdwg.mxu0
    %8245 = vmatprep.subr.bf16.mxu0 0
    %8246 = vmatpush1.bf16.msra.mxu0 %v2158
    %8247 = vmatprep.subr.bf16.mxu0 0
    %8248 = vmatpush1.bf16.msra.mxu0 %v2161
    %8249 = vmatprep.subr.bf16.mxu0 0
    %8250 = vmatpush1.bf16.msra.mxu0 %v2164
    %8251 = vmatprep.subr.bf16.mxu0 0
    %8252 = vmatpush1.bf16.msra.mxu0 %v2167
    %8253 = vmatprep.subr.bf16.mxu0 0
    %8254 = vmatpush1.bf16.msra.mxu0 %v2170
    %8255 = vmatprep.subr.bf16.mxu0 0
    %8256 = vmatpush1.bf16.msra.mxu0 %v2173
    %8257 = vmatprep.subr.bf16.mxu0 0
    %8258 = vmatpush1.bf16.msra.mxu0 %v2176
    %8259 = vmatprep.subr.bf16.mxu0 0
    %8260 = vmatpush1.bf16.msra.mxu0 %v2179
    %8261 = vmatprep.subr.bf16.mxu0 0
    %8262 = vmatpush1.bf16.msra.mxu0 0
    %8263 = vmatprep.subr.bf16.mxu0 0
    %8264 = vmatpush1.bf16.msra.mxu0 0
    %8265 = vmatprep.subr.bf16.mxu0 0
    %8266 = vmatpush1.bf16.msra.mxu0 0
    %8267 = vmatprep.subr.bf16.mxu0 0
    %8268 = vmatpush1.bf16.msra.mxu0 0
    %8269 = vmatprep.subr.bf16.mxu0 0
    %8270 = vmatpush1.bf16.msra.mxu0 0
    %8271 = vmatprep.subr.bf16.mxu0 0
    %8272 = vmatpush1.bf16.msra.mxu0 0
    %8273 = vmatprep.subr.bf16.mxu0 0
    %8274 = vmatpush1.bf16.msra.mxu0 0
    %8275 = vmatprep.subr.bf16.mxu0 0
    %8276 = vmatpush1.bf16.msra.mxu0 0
    %8277 = vmatprep.mubr.bf16.mxu0 0
    %8278 = vmatmul.mubr.bf16.gmra.mrb[0].mxu0 %v8192
    %v8279 = vpop.f32.mrb[0].mxu0
    %v8280 = vadd.f32 0.0, %v8279
    %v8281 = vpop.f32.mrb[0].mxu0
    %v8282 = vpop.f32.mrb[0].mxu0
    %v8283 = vadd.f32 0.0, %v8282
    %v8284 = vpop.f32.mrb[0].mxu0
    %8285 = vmatprep.mubr.bf16.mxu0 0
    %8286 = vmatmul.mubr.bf16.gmra.mrb[0].mxu0 %v8193
    %v8287 = vpop.f32.mrb[0].mxu0
    %v8288 = vadd.f32 0.0, %v8287
    %v8289 = vpop.f32.mrb[0].mxu0
    %v8290 = vpop.f32.mrb[0].mxu0
    %v8291 = vpop.f32.mrb[0].mxu0
    %8292 = vdwg.mxu0
    %v8293 = vadd.f32 %v8183, %v8229
    %v8294 = vadd.f32 %v8186, %v8233
    %v8295 = vadd.f32 %v8189, %v8239
    %v8296 = vxor.u32 %v8293, 2147483648
    %v8297 = vxor.u32 %v8294, 2147483648
    %v8298 = vxor.u32 %v8295, 2147483648
    %v8299 = vmul.f32 %v8296, 1.442695
    %v8300 = vpow.pop %v8299
    %v8301 = vmul.f32 %v8297, 1.442695
    %v8302 = vpow.pop %v8301
    %v8303 = vmul.f32 %v8298, 1.442695
    %v8304 = vpow.pop %v8303
    %v8305 = vadd.f32 %v8300, 1.0
    %v8306 = vadd.f32 %v8302, 1.0
    %v8307 = vadd.f32 %v8304, 1.0
    %v8308 = vrcp.pop %v8305
    %v8309 = vmul.f32 1.0, %v8308
    %v8310 = vrcp.pop %v8306
    %v8311 = vmul.f32 1.0, %v8310
    %v8312 = vrcp.pop %v8307
    %v8313 = vmul.f32 1.0, %v8312
    %v8314 = vadd.f32 %v8184, %v8231
    %v8315 = vadd.f32 %v8187, %v8235
    %v8316 = vadd.f32 %v8190, %v8241
    %v8317 = vxor.u32 %v8314, 2147483648
    %v8318 = vxor.u32 %v8315, 2147483648
    %v8319 = vxor.u32 %v8316, 2147483648
    %v8320 = vmul.f32 %v8317, 1.442695
    %v8321 = vpow.pop %v8320
    %v8322 = vmul.f32 %v8318, 1.442695
    %v8323 = vpow.pop %v8322
    %v8324 = vmul.f32 %v8319, 1.442695
    %v8325 = vpow.pop %v8324
    %v8326 = vadd.f32 %v8321, 1.0
    %v8327 = vadd.f32 %v8323, 1.0
    %v8328 = vadd.f32 %v8325, 1.0
    %v8329 = vrcp.pop %v8326
    %v8330 = vmul.f32 1.0, %v8329
    %v8331 = vrcp.pop %v8327
    %v8332 = vmul.f32 1.0, %v8331
    %v8333 = vrcp.pop %v8328
    %v8334 = vmul.f32 1.0, %v8333
    %v8335 = vadd.f32 %v8280, %v2349
    %v8336 = vadd.f32 %v8283, %v2349
    %v8337 = vadd.f32 %v8288, %v2349
    %v8338 = vmul.f32 %v8309, %v8335
    %v8339 = vmul.f32 %v8311, %v8336
    %v8340 = vmul.f32 %v8313, %v8337
    %v8341 = vadd.f32 %v8185, %v8338
    %v8342 = vadd.f32 %v8188, %v8339
    %v8343 = vadd.f32 %v8191, %v8340
    %v8344 = vtanh.pop %v8341
    %v8345 = vtanh.pop %v8342
    %v8346 = vtanh.pop %v8343
    %v8347 = vsub.f32 1.0, %v8330
    %v8348 = vsub.f32 1.0, %v8332
    %v8349 = vsub.f32 1.0, %v8334
    %v8350 = vmul.f32 %v8347, %v8344
    %v8351 = vmul.f32 %v8348, %v8345
    %v8352 = vmul.f32 %v8349, %v8346
    %v8353 = vmul.f32 %v8330, %v8180
    %v8354 = vmul.f32 %v8332, %v8181
    %v8355 = vmul.f32 %v8334, %v8182
    %v8356 = vadd.f32 %v8350, %v8353
    %v8357 = vadd.f32 %v8351, %v8354
    %v8358 = vadd.f32 %v8352, %v8355
    %v8359 = vld [vmem:[#allocation2 + $0x9d8] sm:$0xff]
    %v8360 = vld [vmem:[#allocation2 + $0x9e0] sm:$0xff]
    %v8361 = vld [vmem:[#allocation2 + $0x9e8] sm:$0xff]
    %v8362 = vld [vmem:[#allocation2 + $0x9f0] sm:$0xff]
    %v8363 = vld [vmem:[#allocation2 + $0x9f8] sm:$0xff]
    %v8364 = vld [vmem:[#allocation2 + $0xa00] sm:$0xff]
    %v8365 = vld [vmem:[#allocation2 + $0xa08] sm:$0xff]
    %v8366 = vld [vmem:[#allocation2 + $0xa10] sm:$0xff]
    %v8367 = vld [vmem:[#allocation2 + $0xa18] sm:$0xff]
    %v8368 = vpack.c.bf16 %v8357, %v8356
    %v8369 = vpack.c.bf16 %v8358, %v8358
    %8370 = vmatprep.subr.bf16.mxu0 %v2157
    %8371 = vmatpush1.bf16.msra.mxu0 %v2156
    %8372 = vmatprep.subr.bf16.mxu0 %v2160
    %8373 = vmatpush1.bf16.msra.mxu0 %v2159
    %8374 = vmatprep.subr.bf16.mxu0 %v2163
    %8375 = vmatpush1.bf16.msra.mxu0 %v2162
    %8376 = vmatprep.subr.bf16.mxu0 %v2166
    %8377 = vmatpush1.bf16.msra.mxu0 %v2165
    %8378 = vmatprep.subr.bf16.mxu0 %v2169
    %8379 = vmatpush1.bf16.msra.mxu0 %v2168
    %8380 = vmatprep.subr.bf16.mxu0 %v2172
    %8381 = vmatpush1.bf16.msra.mxu0 %v2171
    %8382 = vmatprep.subr.bf16.mxu0 %v2175
    %8383 = vmatpush1.bf16.msra.mxu0 %v2174
    %8384 = vmatprep.subr.bf16.mxu0 %v2178
    %8385 = vmatpush1.bf16.msra.mxu0 %v2177
    %8386 = vmatprep.subr.bf16.mxu0 0
    %8387 = vmatpush1.bf16.msra.mxu0 0
    %8388 = vmatprep.subr.bf16.mxu0 0
    %8389 = vmatpush1.bf16.msra.mxu0 0
    %8390 = vmatprep.subr.bf16.mxu0 0
    %8391 = vmatpush1.bf16.msra.mxu0 0
    %8392 = vmatprep.subr.bf16.mxu0 0
    %8393 = vmatpush1.bf16.msra.mxu0 0
    %8394 = vmatprep.subr.bf16.mxu0 0
    %8395 = vmatpush1.bf16.msra.mxu0 0
    %8396 = vmatprep.subr.bf16.mxu0 0
    %8397 = vmatpush1.bf16.msra.mxu0 0
    %8398 = vmatprep.subr.bf16.mxu0 0
    %8399 = vmatpush1.bf16.msra.mxu0 0
    %8400 = vmatprep.subr.bf16.mxu0 0
    %8401 = vmatpush1.bf16.msra.mxu0 0
    %8402 = vmatprep.mubr.bf16.mxu0 0
    %8403 = vmatmul.mubr.bf16.gmra.mrb[0].mxu0 %v8368
    %v8404 = vpop.f32.mrb[0].mxu0
    %v8405 = vadd.f32 0.0, %v8404
    %v8406 = vpop.f32.mrb[0].mxu0
    %v8407 = vadd.f32 0.0, %v8406
    %v8408 = vpop.f32.mrb[0].mxu0
    %v8409 = vadd.f32 0.0, %v8408
    %v8410 = vpop.f32.mrb[0].mxu0
    %v8411 = vadd.f32 0.0, %v8410
    %8412 = vmatprep.mubr.bf16.mxu0 0
    %8413 = vmatmul.mubr.bf16.gmra.mrb[0].mxu0 %v8369
    %v8414 = vpop.f32.mrb[0].mxu0
    %v8415 = vadd.f32 0.0, %v8414
    %v8416 = vpop.f32.mrb[0].mxu0
    %v8417 = vadd.f32 0.0, %v8416
    %v8418 = vpop.f32.mrb[0].mxu0
    %v8419 = vpop.f32.mrb[0].mxu0
    %8420 = vdwg.mxu0
    %8421 = vmatprep.subr.bf16.mxu0 0
    %8422 = vmatpush1.bf16.msra.mxu0 %v2158
    %8423 = vmatprep.subr.bf16.mxu0 0
    %8424 = vmatpush1.bf16.msra.mxu0 %v2161
    %8425 = vmatprep.subr.bf16.mxu0 0
    %8426 = vmatpush1.bf16.msra.mxu0 %v2164
    %8427 = vmatprep.subr.bf16.mxu0 0
    %8428 = vmatpush1.bf16.msra.mxu0 %v2167
    %8429 = vmatprep.subr.bf16.mxu0 0
    %8430 = vmatpush1.bf16.msra.mxu0 %v2170
    %8431 = vmatprep.subr.bf16.mxu0 0
    %8432 = vmatpush1.bf16.msra.mxu0 %v2173
    %8433 = vmatprep.subr.bf16.mxu0 0
    %8434 = vmatpush1.bf16.msra.mxu0 %v2176
    %8435 = vmatprep.subr.bf16.mxu0 0
    %8436 = vmatpush1.bf16.msra.mxu0 %v2179
    %8437 = vmatprep.subr.bf16.mxu0 0
    %8438 = vmatpush1.bf16.msra.mxu0 0
    %8439 = vmatprep.subr.bf16.mxu0 0
    %8440 = vmatpush1.bf16.msra.mxu0 0
    %8441 = vmatprep.subr.bf16.mxu0 0
    %8442 = vmatpush1.bf16.msra.mxu0 0
    %8443 = vmatprep.subr.bf16.mxu0 0
    %8444 = vmatpush1.bf16.msra.mxu0 0
    %8445 = vmatprep.subr.bf16.mxu0 0
    %8446 = vmatpush1.bf16.msra.mxu0 0
    %8447 = vmatprep.subr.bf16.mxu0 0
    %8448 = vmatpush1.bf16.msra.mxu0 0
    %8449 = vmatprep.subr.bf16.mxu0 0
    %8450 = vmatpush1.bf16.msra.mxu0 0
    %8451 = vmatprep.subr.bf16.mxu0 0
    %8452 = vmatpush1.bf16.msra.mxu0 0
    %8453 = vmatprep.mubr.bf16.mxu0 0
    %8454 = vmatmul.mubr.bf16.gmra.mrb[0].mxu0 %v8368
    %v8455 = vpop.f32.mrb[0].mxu0
    %v8456 = vadd.f32 0.0, %v8455
    %v8457 = vpop.f32.mrb[0].mxu0
    %v8458 = vpop.f32.mrb[0].mxu0
    %v8459 = vadd.f32 0.0, %v8458
    %v8460 = vpop.f32.mrb[0].mxu0
    %8461 = vmatprep.mubr.bf16.mxu0 0
    %8462 = vmatmul.mubr.bf16.gmra.mrb[0].mxu0 %v8369
    %v8463 = vpop.f32.mrb[0].mxu0
    %v8464 = vadd.f32 0.0, %v8463
    %v8465 = vpop.f32.mrb[0].mxu0
    %v8466 = vpop.f32.mrb[0].mxu0
    %v8467 = vpop.f32.mrb[0].mxu0
    %8468 = vdwg.mxu0
    %v8469 = vadd.f32 %v8359, %v8405
    %v8470 = vadd.f32 %v8362, %v8409
    %v8471 = vadd.f32 %v8365, %v8415
    %v8472 = vxor.u32 %v8469, 2147483648
    %v8473 = vxor.u32 %v8470, 2147483648
    %v8474 = vxor.u32 %v8471, 2147483648
    %v8475 = vmul.f32 %v8472, 1.442695
    %v8476 = vpow.pop %v8475
    %v8477 = vmul.f32 %v8473, 1.442695
    %v8478 = vpow.pop %v8477
    %v8479 = vmul.f32 %v8474, 1.442695
    %v8480 = vpow.pop %v8479
    %v8481 = vadd.f32 %v8476, 1.0
    %v8482 = vadd.f32 %v8478, 1.0
    %v8483 = vadd.f32 %v8480, 1.0
    %v8484 = vrcp.pop %v8481
    %v8485 = vmul.f32 1.0, %v8484
    %v8486 = vrcp.pop %v8482
    %v8487 = vmul.f32 1.0, %v8486
    %v8488 = vrcp.pop %v8483
    %v8489 = vmul.f32 1.0, %v8488
    %v8490 = vadd.f32 %v8360, %v8407
    %v8491 = vadd.f32 %v8363, %v8411
    %v8492 = vadd.f32 %v8366, %v8417
    %v8493 = vxor.u32 %v8490, 2147483648
    %v8494 = vxor.u32 %v8491, 2147483648
    %v8495 = vxor.u32 %v8492, 2147483648
    %v8496 = vmul.f32 %v8493, 1.442695
    %v8497 = vpow.pop %v8496
    %v8498 = vmul.f32 %v8494, 1.442695
    %v8499 = vpow.pop %v8498
    %v8500 = vmul.f32 %v8495, 1.442695
    %v8501 = vpow.pop %v8500
    %v8502 = vadd.f32 %v8497, 1.0
    %v8503 = vadd.f32 %v8499, 1.0
    %v8504 = vadd.f32 %v8501, 1.0
    %v8505 = vrcp.pop %v8502
    %v8506 = vmul.f32 1.0, %v8505
    %v8507 = vrcp.pop %v8503
    %v8508 = vmul.f32 1.0, %v8507
    %v8509 = vrcp.pop %v8504
    %v8510 = vmul.f32 1.0, %v8509
    %v8511 = vadd.f32 %v8456, %v2349
    %v8512 = vadd.f32 %v8459, %v2349
    %v8513 = vadd.f32 %v8464, %v2349
    %v8514 = vmul.f32 %v8485, %v8511
    %v8515 = vmul.f32 %v8487, %v8512
    %v8516 = vmul.f32 %v8489, %v8513
    %v8517 = vadd.f32 %v8361, %v8514
    %v8518 = vadd.f32 %v8364, %v8515
    %v8519 = vadd.f32 %v8367, %v8516
    %v8520 = vtanh.pop %v8517
    %v8521 = vtanh.pop %v8518
    %v8522 = vtanh.pop %v8519
    %v8523 = vsub.f32 1.0, %v8506
    %v8524 = vsub.f32 1.0, %v8508
    %v8525 = vsub.f32 1.0, %v8510
    %v8526 = vmul.f32 %v8523, %v8520
    %v8527 = vmul.f32 %v8524, %v8521
    %v8528 = vmul.f32 %v8525, %v8522
    %v8529 = vmul.f32 %v8506, %v8356
    %v8530 = vmul.f32 %v8508, %v8357
    %v8531 = vmul.f32 %v8510, %v8358
    %v8532 = vadd.f32 %v8526, %v8529
    %v8533 = vadd.f32 %v8527, %v8530
    %v8534 = vadd.f32 %v8528, %v8531
    %8535 = vst [vmem:[#allocation9] sm:$0xff] %v8532
    %8536 = vst [vmem:[#allocation9 + $0x8] sm:$0xff] %v8533
    %8537 = vst [vmem:[#allocation9 + $0x10] sm:$0xff] %v8534
    // Predicated region
    $region34: #{tpu_custom_call.1} parent=1 // pred_check
      _
    $region35: #{tpu_custom_call.1} parent=1 // pred_check_branch
      %8539 = sbr.rel (0) target = $region37
    $region36: #{tpu_custom_call.1} parent=1 // pred_region
      %s8541 = ssub.s32 384, 384
      %8542 = vsyncadd [#allocation5], %s8541
      %s8543 = sshll.u32 [#allocation9], 4
      %s8544 = int_to_ptr.vmem [resolvable:$true] %s8543
      %8549 = dma.vmem_to_hbm [thread:$0]  %s8544, 384, %s5, [#allocation5], 128, 128, 8
    $region37: #{tpu_custom_call.1} parent=1 // pred_fallthru
      _
    // Predicated region
    $region38: #{tpu_custom_call.1} parent=1 // pred_check
      _
    $region39: #{tpu_custom_call.1} parent=1 // pred_check_branch
      %8551 = sbr.rel (0) target = $region41
    $region40: #{tpu_custom_call.1} parent=1 // pred_region
      %8552 = dma.done [#allocation5], 384
    $region41: #{tpu_custom_call.1} parent=1 // pred_fallthru
      _
    %8553 = vsyncpa [#allocation4], 1
    %8554 = vsyncpa [#allocation7], 1
    %8555 = vsyncpa [#allocation5], 1

</llo_original>
